<compile_context>
chip_gen: v7x
topology: tpu7x:2x2x1
jax: 0.10.0
libtpu: 0.0.40
codegen_flags: <defaults>
</compile_context>

<pallas_src>
import math
import functools

import jax
import jax.numpy as jnp
from jax.experimental import pallas as pl
from jax.experimental.pallas import tpu as pltpu


def encoder_layer_kernel(
    src_ref,
    ln1_g_ref, ln1_b_ref,
    wqkv_ref, bqkv_ref,
    wo_h_ref, bo_ref,
    ln2_g_ref, ln2_b_ref,
    w1_ref, b1_ref, w2_ref, b2_ref,
    out_ref,
    *, n_head: int,
):
    eps = 1e-5
    x = src_ref[...].astype(jnp.float32)          # (S, D); batch dim squeezed by BlockSpec
    S, D = x.shape
    Dh = D // n_head
    inv_d = 1.0 / D

    def layer_norm(z, g, b):
        # Two-pass (mean-subtracted) stats: same 2 cross-lane reductions as the
        # one-pass E[x^2]-E[x]^2 form, without the cancellation hazard.
        mu = jnp.sum(z, axis=-1, keepdims=True) * inv_d
        zc = z - mu
        var = jnp.sum(zc * zc, axis=-1, keepdims=True) * inv_d
        return zc * jax.lax.rsqrt(var + eps) * g + b

    # ---- LayerNorm 1 (norm1) ----
    n1 = layer_norm(x, ln1_g_ref[...], ln1_b_ref[...])

    # ---- Fused Q/K/V projection: one (S,D) x (D,3D) MXU matmul, f32 accumulate ----
    qkv = jnp.dot(n1.astype(jnp.bfloat16), wqkv_ref[...],
                  preferred_element_type=jnp.float32) + bqkv_ref[...]      # (S, 3D) f32

    # ---- Head split via safe relayouts:
    #   (S, 3D) --minor 2-D transpose--> (3D, S) --leading-dim split--> (3H, Dh, S)
    qkv_t = qkv.T.reshape(3 * n_head, Dh, S)                               # (3H, Dh, S)

    scale = 1.0 / math.sqrt(Dh)
    # Q additionally needs (H, S, Dh); that's a cheap minor (last-two-dims) transpose.
    qh = (jnp.swapaxes(qkv_t[:n_head], 1, 2) * scale).astype(jnp.bfloat16)  # (H, S, Dh)
    kh_t = qkv_t[n_head:2 * n_head].astype(jnp.bfloat16)                    # (H, Dh, S)
    vh_t = qkv_t[2 * n_head:].astype(jnp.bfloat16)                          # (H, Dh, S)

    # ---- Head-batched attention; softmax statistics in f32 ----
    s = jnp.einsum("hqd,hdk->hqk", qh, kh_t,
                   preferred_element_type=jnp.float32)                      # (H, S, S)
    m = jnp.max(s, axis=-1, keepdims=True)
    e = jnp.exp(s - m)
    denom = jnp.sum(e, axis=-1, keepdims=True)                              # (H, S, 1) f32

    # Deferred normalization: PV with unnormalized exponentials, then scale the
    # (H, S, Dh) result by 1/denom (EUP approx reciprocal, f32).
    o = jnp.einsum("hqk,hdk->hqd", e.astype(jnp.bfloat16), vh_t,
                   preferred_element_type=jnp.float32)                      # (H, S, Dh)
    o = o * pl.reciprocal(denom, approx=True)

    # Output projection with the head-concat folded into the contraction:
    # Wo is pre-reshaped to (H, Dh, D) in the wrapper -> batched matmul + head-sum.
    attn_h = jnp.einsum("hqd,hdn->hqn", o.astype(jnp.bfloat16), wo_h_ref[...],
                        preferred_element_type=jnp.float32)                 # (H, S, D)
    attn = jnp.sum(attn_h, axis=0) + bo_ref[...]                            # (S, D)

    # ---- Residual 1 (dropout1 = identity at eval) ----
    x1 = x + attn

    # ---- Pre-LN feed-forward ----
    n2 = layer_norm(x1, ln2_g_ref[...], ln2_b_ref[...])
    h1 = jnp.dot(n2.astype(jnp.bfloat16), w1_ref[...],
                 preferred_element_type=jnp.float32) + b1_ref[...]
    h1 = jnp.maximum(h1, 0.0)                                               # ReLU
    y = jnp.dot(h1.astype(jnp.bfloat16), w2_ref[...],
                preferred_element_type=jnp.float32) + b2_ref[...]

    # ---- Residual 2 (dropout = identity at eval) ----
    out_ref[...] = (x1 + y).astype(out_ref.dtype)


def transformer_encoder_layer(src, params, n_head):
    B, S, D = src.shape
    F = params["w1"].shape[1]
    H = n_head
    Dh = D // H

    # One-time parameter re-packing on the host/XLA side (NOT in-kernel):
    wqkv = jnp.concatenate([params["wq"], params["wk"], params["wv"]], axis=1)  # (D, 3D) bf16
    bqkv = jnp.concatenate([params["bq"], params["bk"], params["bv"]], axis=1)  # (1, 3D) f32
    wo_h = params["wo"].reshape(H, Dh, D)                                       # (H, Dh, D) bf16

    # Per-generation VMEM ceiling with headroom (v7x: 64 MiB physical).
    try:
        cap = pltpu.get_tpu_info().vmem_capacity_bytes
        vmem_limit = min(int(cap * 0.8), 100 * 1024 * 1024)
    except Exception:
        vmem_limit = 32 * 1024 * 1024

    kernel = functools.partial(encoder_layer_kernel, n_head=n_head)
    operands = (src,
                params["ln1_g"], params["ln1_b"],
                wqkv, bqkv, wo_h, params["bo"],
                params["ln2_g"], params["ln2_b"],
                params["w1"], params["b1"], params["w2"], params["b2"])

    def run(single_buffer_weights):
        def const_spec(shape):
            nd = len(shape)
            idx = lambda b: (0,) * nd
            if single_buffer_weights:
                # Constant index map across the grid -> no need to double-buffer.
                return pl.BlockSpec(shape, idx, pipeline_mode=pl.Buffered(1))
            return pl.BlockSpec(shape, idx)

        in_specs = [
            # Leading batch dim squeezed out of the kernel view (None == pl.Squeezed()).
            pl.BlockSpec((None, S, D), lambda b: (b, 0, 0)),      # src
            const_spec((1, D)), const_spec((1, D)),               # ln1 gamma / beta
            const_spec((D, 3 * D)), const_spec((1, 3 * D)),       # fused Wqkv, bqkv
            const_spec((H, Dh, D)), const_spec((1, D)),           # Wo (head-major), bo
            const_spec((1, D)), const_spec((1, D)),               # ln2 gamma / beta
            const_spec((D, F)), const_spec((1, F)),               # W1, b1
            const_spec((F, D)), const_spec((1, D)),               # W2, b2
        ]
        out = pl.pallas_call(
            kernel,
            out_shape=jax.ShapeDtypeStruct((B, S, D), src.dtype),
            grid_spec=pltpu.PrefetchScalarGridSpec(
                num_scalar_prefetch=0,
                grid=(B,),
                in_specs=in_specs,
                out_specs=pl.BlockSpec((None, S, D), lambda b: (b, 0, 0)),
            ),
            compiler_params=pltpu.CompilerParams(
                dimension_semantics=("parallel",),   # batch axis shards across TCs (v7x)
                vmem_limit_bytes=vmem_limit),
        )(*operands)
        return jax.block_until_ready(out)

    try:
        return run(single_buffer_weights=True)
    except Exception:
        # TODO(synk): pipeline_mode=pl.Buffered(1) unsupported on this jax version;
        # fall back to default double-buffered weight specs.
        return run(single_buffer_weights=False)


def reference_forward(src, params, n_head):
    """Pure-JAX f32 reference mirroring the PyTorch module (eval mode)."""
    eps = 1e-5
    pr = {k: v.astype(jnp.float32) for k, v in params.items()}
    D = src.shape[-1]
    Dh = D // n_head

    def ln(x, g, b):
        mu = jnp.mean(x, -1, keepdims=True)
        var = jnp.mean((x - mu) ** 2, -1, keepdims=True)
        return (x - mu) / jnp.sqrt(var + eps) * g[0] + b[0]

    n1 = ln(src, pr["ln1_g"], pr["ln1_b"])
    q = n1 @ pr["wq"] + pr["bq"][0]
    k = n1 @ pr["wk"] + pr["bk"][0]
    v = n1 @ pr["wv"] + pr["bv"][0]
    B, S, _ = src.shape
    qh = q.reshape(B, S, n_head, Dh).transpose(0, 2, 1, 3)
    kh = k.reshape(B, S, n_head, Dh).transpose(0, 2, 1, 3)
    vh = v.reshape(B, S, n_head, Dh).transpose(0, 2, 1, 3)
    s = jnp.einsum("bhqd,bhkd->bhqk", qh, kh) / math.sqrt(Dh)
    p = jax.nn.softmax(s, axis=-1)
    o = jnp.einsum("bhqk,bhkd->bhqd", p, vh).transpose(0, 2, 1, 3).reshape(B, S, D)
    attn = o @ pr["wo"] + pr["bo"][0]
    x1 = src + attn
    n2 = ln(x1, pr["ln2_g"], pr["ln2_b"])
    h1 = jax.nn.relu(n2 @ pr["w1"] + pr["b1"][0])
    y = h1 @ pr["w2"] + pr["b2"][0]
    return x1 + y


def init_params(key, d_model, n_head, dim_feedforward):
    ks = jax.random.split(key, 8)
    sd = 0.02

    def w(k, shape):
        # Matmul weights stored in bfloat16 (halves weight DMA / VMEM footprint);
        # bf16 values are exactly representable in the f32 reference.
        return (sd * jax.random.normal(k, shape, dtype=jnp.float32)).astype(jnp.bfloat16)

    return {
        "ln1_g": jnp.ones((1, d_model), jnp.float32),
        "ln1_b": jnp.zeros((1, d_model), jnp.float32),
        "wq": w(ks[0], (d_model, d_model)), "bq": jnp.zeros((1, d_model), jnp.float32),
        "wk": w(ks[1], (d_model, d_model)), "bk": jnp.zeros((1, d_model), jnp.float32),
        "wv": w(ks[2], (d_model, d_model)), "bv": jnp.zeros((1, d_model), jnp.float32),
        "wo": w(ks[3], (d_model, d_model)), "bo": jnp.zeros((1, d_model), jnp.float32),
        "ln2_g": jnp.ones((1, d_model), jnp.float32),
        "ln2_b": jnp.zeros((1, d_model), jnp.float32),
        "w1": w(ks[4], (d_model, dim_feedforward)),
        "b1": (sd * jax.random.normal(ks[5], (1, dim_feedforward))).astype(jnp.float32),
        "w2": w(ks[6], (dim_feedforward, d_model)),
        "b2": (sd * jax.random.normal(ks[7], (1, d_model))).astype(jnp.float32),
    }


if __name__ == "__main__":
    # Lane-dense small config: d_model multiple of 128, 128 rows per grid step.
    B, S = 2, 128
    d_model, n_head, dim_feedforward = 128, 4, 256
    # dropout = 0.1 at construction, but forward is evaluated in eval mode -> identity.

    key = jax.random.PRNGKey(0)
    k_src, k_par = jax.random.split(key)
    src = jax.random.normal(k_src, (B, S, d_model), dtype=jnp.float32)
    params = init_params(k_par, d_model, n_head, dim_feedforward)

    out = transformer_encoder_layer(src, params, n_head)
    out = jax.block_until_ready(out)

    ref = reference_forward(src, params, n_head)
    assert out.shape == (B, S, d_model)
    # bf16 matmul inputs + approx reciprocal in the softmax denominator => slightly
    # looser tolerance vs the pure-f32 reference.
    assert jnp.allclose(out, ref, atol=2e-2, rtol=2e-2), "mismatch vs JAX reference"

    print("KERNEL_OK")
</pallas_src>

<mosaic_0001>
module attributes {stable_mosaic.version = 11 : i64} {
  func.func @encoder_layer_kernel(%arg0: i32, %arg1: memref<1x128x128xf32, #tpu.memory_space<vmem>>, %arg2: memref<1x128xf32, #tpu.memory_space<vmem>>, %arg3: memref<1x128xf32, #tpu.memory_space<vmem>>, %arg4: memref<128x384xbf16, #tpu.memory_space<vmem>>, %arg5: memref<1x384xf32, #tpu.memory_space<vmem>>, %arg6: memref<4x32x128xbf16, #tpu.memory_space<vmem>>, %arg7: memref<1x128xf32, #tpu.memory_space<vmem>>, %arg8: memref<1x128xf32, #tpu.memory_space<vmem>>, %arg9: memref<1x128xf32, #tpu.memory_space<vmem>>, %arg10: memref<128x256xbf16, #tpu.memory_space<vmem>>, %arg11: memref<1x256xf32, #tpu.memory_space<vmem>>, %arg12: memref<256x128xbf16, #tpu.memory_space<vmem>>, %arg13: memref<1x128xf32, #tpu.memory_space<vmem>>, %arg14: memref<1x128x128xf32, #tpu.memory_space<vmem>>) attributes {dimension_semantics = [#tpu.dimension_semantics<parallel>], iteration_bounds = array<i64: 2>, scalar_prefetch = 0 : i64, scratch_operands = 0 : i64, tpu.core_type = #tpu.core_type<tc>, window_params = [{transform_indices = @transform_0, window_bounds = array<i64: 1, 128, 128>}, {pipeline_mode = #tpu.pipeline_mode<synchronous>, transform_indices = @transform_1, window_bounds = array<i64: 1, 128>}, {pipeline_mode = #tpu.pipeline_mode<synchronous>, transform_indices = @transform_2, window_bounds = array<i64: 1, 128>}, {pipeline_mode = #tpu.pipeline_mode<synchronous>, transform_indices = @transform_3, window_bounds = array<i64: 128, 384>}, {pipeline_mode = #tpu.pipeline_mode<synchronous>, transform_indices = @transform_4, window_bounds = array<i64: 1, 384>}, {pipeline_mode = #tpu.pipeline_mode<synchronous>, transform_indices = @transform_5, window_bounds = array<i64: 4, 32, 128>}, {pipeline_mode = #tpu.pipeline_mode<synchronous>, transform_indices = @transform_6, window_bounds = array<i64: 1, 128>}, {pipeline_mode = #tpu.pipeline_mode<synchronous>, transform_indices = @transform_7, window_bounds = array<i64: 1, 128>}, {pipeline_mode = #tpu.pipeline_mode<synchronous>, transform_indices = @transform_8, window_bounds = array<i64: 1, 128>}, {pipeline_mode = #tpu.pipeline_mode<synchronous>, transform_indices = @transform_9, window_bounds = array<i64: 128, 256>}, {pipeline_mode = #tpu.pipeline_mode<synchronous>, transform_indices = @transform_10, window_bounds = array<i64: 1, 256>}, {pipeline_mode = #tpu.pipeline_mode<synchronous>, transform_indices = @transform_11, window_bounds = array<i64: 256, 128>}, {pipeline_mode = #tpu.pipeline_mode<synchronous>, transform_indices = @transform_12, window_bounds = array<i64: 1, 128>}, {transform_indices = @transform_13, window_bounds = array<i64: 1, 128, 128>}]} {
    %c0 = arith.constant 0 : index
    %c0_0 = arith.constant 0 : index
    %c0_1 = arith.constant 0 : index
    %0 = vector.load %arg1[%c0, %c0_0, %c0_1] : memref<1x128x128xf32, #tpu.memory_space<vmem>>, vector<1x128x128xf32>
    %1 = vector.shape_cast %0 : vector<1x128x128xf32> to vector<128x128xf32>
    %c0_2 = arith.constant 0 : index
    %c0_3 = arith.constant 0 : index
    %2 = vector.load %arg2[%c0_2, %c0_3] : memref<1x128xf32, #tpu.memory_space<vmem>>, vector<1x128xf32>
    %c0_4 = arith.constant 0 : index
    %c0_5 = arith.constant 0 : index
    %3 = vector.load %arg3[%c0_4, %c0_5] : memref<1x128xf32, #tpu.memory_space<vmem>>, vector<1x128xf32>
    %cst = arith.constant dense<0.000000e+00> : vector<128xf32>
    %4 = vector.multi_reduction <add>, %1, %cst [1] : vector<128x128xf32> to vector<128xf32>
    %5 = vector.shape_cast %4 : vector<128xf32> to vector<128x1xf32>
    %cst_6 = arith.constant 7.812500e-03 : f32
    %6 = vector.broadcast %cst_6 : f32 to vector<128x1xf32>
    %7 = arith.mulf %5, %6 : vector<128x1xf32>
    %8 = vector.broadcast %7 : vector<128x1xf32> to vector<128x128xf32>
    %9 = arith.subf %1, %8 : vector<128x128xf32>
    %10 = arith.mulf %9, %9 : vector<128x128xf32>
    %cst_7 = arith.constant dense<0.000000e+00> : vector<128xf32>
    %11 = vector.multi_reduction <add>, %10, %cst_7 [1] : vector<128x128xf32> to vector<128xf32>
    %12 = vector.shape_cast %11 : vector<128xf32> to vector<128x1xf32>
    %cst_8 = arith.constant 7.812500e-03 : f32
    %13 = vector.broadcast %cst_8 : f32 to vector<128x1xf32>
    %14 = arith.mulf %12, %13 : vector<128x1xf32>
    %cst_9 = arith.constant 9.99999974E-6 : f32
    %15 = vector.broadcast %cst_9 : f32 to vector<128x1xf32>
    %16 = arith.addf %14, %15 : vector<128x1xf32>
    %17 = math.rsqrt %16 : vector<128x1xf32>
    %18 = vector.broadcast %17 : vector<128x1xf32> to vector<128x128xf32>
    %19 = arith.mulf %9, %18 : vector<128x128xf32>
    %20 = vector.broadcast %2 : vector<1x128xf32> to vector<128x128xf32>
    %21 = arith.mulf %19, %20 : vector<128x128xf32>
    %22 = vector.broadcast %3 : vector<1x128xf32> to vector<128x128xf32>
    %23 = arith.addf %21, %22 : vector<128x128xf32>
    %24 = arith.truncf %23 : vector<128x128xf32> to vector<128x128xbf16>
    %c0_10 = arith.constant 0 : index
    %c0_11 = arith.constant 0 : index
    %25 = vector.load %arg4[%c0_10, %c0_11] : memref<128x384xbf16, #tpu.memory_space<vmem>>, vector<128x384xbf16>
    %cst_12 = arith.constant dense<0.000000e+00> : vector<128x384xf32>
    %26 = tpu.matmul %24, %25, %cst_12 {dimension_numbers = #tpu.dot_dimension_numbers<[1], [0], [0], [1], [0, 0, 1, 1], [], []>} : vector<128x128xbf16>, vector<128x384xbf16>, vector<128x384xf32> -> vector<128x384xf32>
    %c0_13 = arith.constant 0 : index
    %c0_14 = arith.constant 0 : index
    %27 = vector.load %arg5[%c0_13, %c0_14] : memref<1x384xf32, #tpu.memory_space<vmem>>, vector<1x384xf32>
    %28 = vector.broadcast %27 : vector<1x384xf32> to vector<128x384xf32>
    %29 = arith.addf %26, %28 : vector<128x384xf32>
    %30 = tpu.transpose %29, [1, 0] : vector<128x384xf32> -> vector<384x128xf32>
    %31 = vector.shape_cast %30 : vector<384x128xf32> to vector<12x32x128xf32>
    %32 = vector.extract_strided_slice %31 {offsets = [0, 0, 0], sizes = [4, 32, 128], strides = [1, 1, 1]} : vector<12x32x128xf32> to vector<4x32x128xf32>
    %33 = tpu.transpose %32, [0, 2, 1] : vector<4x32x128xf32> -> vector<4x128x32xf32>
    %cst_15 = arith.constant 0.176776692 : f32
    %34 = vector.broadcast %cst_15 : f32 to vector<4x128x32xf32>
    %35 = arith.mulf %33, %34 : vector<4x128x32xf32>
    %36 = arith.truncf %35 : vector<4x128x32xf32> to vector<4x128x32xbf16>
    %37 = vector.extract_strided_slice %31 {offsets = [4, 0, 0], sizes = [4, 32, 128], strides = [1, 1, 1]} : vector<12x32x128xf32> to vector<4x32x128xf32>
    %38 = arith.truncf %37 : vector<4x32x128xf32> to vector<4x32x128xbf16>
    %39 = vector.extract_strided_slice %31 {offsets = [8, 0, 0], sizes = [4, 32, 128], strides = [1, 1, 1]} : vector<12x32x128xf32> to vector<4x32x128xf32>
    %40 = arith.truncf %39 : vector<4x32x128xf32> to vector<4x32x128xbf16>
    "tpu.trace_start"() <{level = 10 : i32, message = "hqd,hdk->hqk"}> : () -> ()
    %cst_16 = arith.constant dense<0.000000e+00> : vector<4x128x128xf32>
    %41 = tpu.matmul %36, %38, %cst_16 {dimension_numbers = #tpu.dot_dimension_numbers<[2], [1], [1], [2], [0, 0, 0, 1, 1, 2], [0], [0]>} : vector<4x128x32xbf16>, vector<4x32x128xbf16>, vector<4x128x128xf32> -> vector<4x128x128xf32>
    "tpu.trace_stop"() : () -> ()
    %cst_17 = arith.constant dense<0xFF800000> : vector<4x128xf32>
    %42 = vector.multi_reduction <maximumf>, %41, %cst_17 [2] : vector<4x128x128xf32> to vector<4x128xf32>
    %43 = vector.shape_cast %42 : vector<4x128xf32> to vector<4x128x1xf32>
    %44 = vector.broadcast %43 : vector<4x128x1xf32> to vector<4x128x128xf32>
    %45 = arith.subf %41, %44 : vector<4x128x128xf32>
    %46 = math.exp %45 : vector<4x128x128xf32>
    %cst_18 = arith.constant dense<0.000000e+00> : vector<4x128xf32>
    %47 = vector.multi_reduction <add>, %46, %cst_18 [2] : vector<4x128x128xf32> to vector<4x128xf32>
    %48 = vector.shape_cast %47 : vector<4x128xf32> to vector<4x128x1xf32>
    %49 = arith.truncf %46 : vector<4x128x128xf32> to vector<4x128x128xbf16>
    "tpu.trace_start"() <{level = 10 : i32, message = "hqk,hdk->hqd"}> : () -> ()
    %cst_19 = arith.constant dense<0.000000e+00> : vector<4x128x32xf32>
    %50 = tpu.matmul %49, %40, %cst_19 {dimension_numbers = #tpu.dot_dimension_numbers<[2], [2], [1], [1], [0, 0, 0, 1, 1, 1], [0], [0]>} : vector<4x128x128xbf16>, vector<4x32x128xbf16>, vector<4x128x32xf32> -> vector<4x128x32xf32>
    "tpu.trace_stop"() : () -> ()
    %51 = tpu.reciprocal %48 {approx = true} : vector<4x128x1xf32> -> vector<4x128x1xf32>
    %52 = vector.broadcast %51 : vector<4x128x1xf32> to vector<4x128x32xf32>
    %53 = arith.mulf %50, %52 : vector<4x128x32xf32>
    %54 = arith.truncf %53 : vector<4x128x32xf32> to vector<4x128x32xbf16>
    %c0_20 = arith.constant 0 : index
    %c0_21 = arith.constant 0 : index
    %c0_22 = arith.constant 0 : index
    %55 = vector.load %arg6[%c0_20, %c0_21, %c0_22] : memref<4x32x128xbf16, #tpu.memory_space<vmem>>, vector<4x32x128xbf16>
    "tpu.trace_start"() <{level = 10 : i32, message = "hqd,hdn->hqn"}> : () -> ()
    %cst_23 = arith.constant dense<0.000000e+00> : vector<4x128x128xf32>
    %56 = tpu.matmul %54, %55, %cst_23 {dimension_numbers = #tpu.dot_dimension_numbers<[2], [1], [1], [2], [0, 0, 0, 1, 1, 2], [0], [0]>} : vector<4x128x32xbf16>, vector<4x32x128xbf16>, vector<4x128x128xf32> -> vector<4x128x128xf32>
    "tpu.trace_stop"() : () -> ()
    %cst_24 = arith.constant dense<0.000000e+00> : vector<128x128xf32>
    %57 = vector.multi_reduction <add>, %56, %cst_24 [0] : vector<4x128x128xf32> to vector<128x128xf32>
    %c0_25 = arith.constant 0 : index
    %c0_26 = arith.constant 0 : index
    %58 = vector.load %arg7[%c0_25, %c0_26] : memref<1x128xf32, #tpu.memory_space<vmem>>, vector<1x128xf32>
    %59 = vector.broadcast %58 : vector<1x128xf32> to vector<128x128xf32>
    %60 = arith.addf %57, %59 : vector<128x128xf32>
    %61 = arith.addf %1, %60 : vector<128x128xf32>
    %c0_27 = arith.constant 0 : index
    %c0_28 = arith.constant 0 : index
    %62 = vector.load %arg8[%c0_27, %c0_28] : memref<1x128xf32, #tpu.memory_space<vmem>>, vector<1x128xf32>
    %c0_29 = arith.constant 0 : index
    %c0_30 = arith.constant 0 : index
    %63 = vector.load %arg9[%c0_29, %c0_30] : memref<1x128xf32, #tpu.memory_space<vmem>>, vector<1x128xf32>
    %cst_31 = arith.constant dense<0.000000e+00> : vector<128xf32>
    %64 = vector.multi_reduction <add>, %61, %cst_31 [1] : vector<128x128xf32> to vector<128xf32>
    %65 = vector.shape_cast %64 : vector<128xf32> to vector<128x1xf32>
    %cst_32 = arith.constant 7.812500e-03 : f32
    %66 = vector.broadcast %cst_32 : f32 to vector<128x1xf32>
    %67 = arith.mulf %65, %66 : vector<128x1xf32>
    %68 = vector.broadcast %67 : vector<128x1xf32> to vector<128x128xf32>
    %69 = arith.subf %61, %68 : vector<128x128xf32>
    %70 = arith.mulf %69, %69 : vector<128x128xf32>
    %cst_33 = arith.constant dense<0.000000e+00> : vector<128xf32>
    %71 = vector.multi_reduction <add>, %70, %cst_33 [1] : vector<128x128xf32> to vector<128xf32>
    %72 = vector.shape_cast %71 : vector<128xf32> to vector<128x1xf32>
    %cst_34 = arith.constant 7.812500e-03 : f32
    %73 = vector.broadcast %cst_34 : f32 to vector<128x1xf32>
    %74 = arith.mulf %72, %73 : vector<128x1xf32>
    %cst_35 = arith.constant 9.99999974E-6 : f32
    %75 = vector.broadcast %cst_35 : f32 to vector<128x1xf32>
    %76 = arith.addf %74, %75 : vector<128x1xf32>
    %77 = math.rsqrt %76 : vector<128x1xf32>
    %78 = vector.broadcast %77 : vector<128x1xf32> to vector<128x128xf32>
    %79 = arith.mulf %69, %78 : vector<128x128xf32>
    %80 = vector.broadcast %62 : vector<1x128xf32> to vector<128x128xf32>
    %81 = arith.mulf %79, %80 : vector<128x128xf32>
    %82 = vector.broadcast %63 : vector<1x128xf32> to vector<128x128xf32>
    %83 = arith.addf %81, %82 : vector<128x128xf32>
    %84 = arith.truncf %83 : vector<128x128xf32> to vector<128x128xbf16>
    %c0_36 = arith.constant 0 : index
    %c0_37 = arith.constant 0 : index
    %85 = vector.load %arg10[%c0_36, %c0_37] : memref<128x256xbf16, #tpu.memory_space<vmem>>, vector<128x256xbf16>
    %cst_38 = arith.constant dense<0.000000e+00> : vector<128x256xf32>
    %86 = tpu.matmul %84, %85, %cst_38 {dimension_numbers = #tpu.dot_dimension_numbers<[1], [0], [0], [1], [0, 0, 1, 1], [], []>} : vector<128x128xbf16>, vector<128x256xbf16>, vector<128x256xf32> -> vector<128x256xf32>
    %c0_39 = arith.constant 0 : index
    %c0_40 = arith.constant 0 : index
    %87 = vector.load %arg11[%c0_39, %c0_40] : memref<1x256xf32, #tpu.memory_space<vmem>>, vector<1x256xf32>
    %88 = vector.broadcast %87 : vector<1x256xf32> to vector<128x256xf32>
    %89 = arith.addf %86, %88 : vector<128x256xf32>
    %cst_41 = arith.constant 0.000000e+00 : f32
    %90 = vector.broadcast %cst_41 : f32 to vector<128x256xf32>
    %91 = arith.maximumf %89, %90 : vector<128x256xf32>
    %92 = arith.truncf %91 : vector<128x256xf32> to vector<128x256xbf16>
    %c0_42 = arith.constant 0 : index
    %c0_43 = arith.constant 0 : index
    %93 = vector.load %arg12[%c0_42, %c0_43] : memref<256x128xbf16, #tpu.memory_space<vmem>>, vector<256x128xbf16>
    %cst_44 = arith.constant dense<0.000000e+00> : vector<128x128xf32>
    %94 = tpu.matmul %92, %93, %cst_44 {dimension_numbers = #tpu.dot_dimension_numbers<[1], [0], [0], [1], [0, 0, 1, 1], [], []>} : vector<128x256xbf16>, vector<256x128xbf16>, vector<128x128xf32> -> vector<128x128xf32>
    %c0_45 = arith.constant 0 : index
    %c0_46 = arith.constant 0 : index
    %95 = vector.load %arg13[%c0_45, %c0_46] : memref<1x128xf32, #tpu.memory_space<vmem>>, vector<1x128xf32>
    %96 = vector.broadcast %95 : vector<1x128xf32> to vector<128x128xf32>
    %97 = arith.addf %94, %96 : vector<128x128xf32>
    %98 = arith.addf %61, %97 : vector<128x128xf32>
    %c0_47 = arith.constant 0 : index
    %c0_48 = arith.constant 0 : index
    %c0_49 = arith.constant 0 : index
    %99 = vector.load %arg14[%c0_47, %c0_48, %c0_49] : memref<1x128x128xf32, #tpu.memory_space<vmem>>, vector<1x128x128xf32>
    %100 = vector.shape_cast %99 : vector<1x128x128xf32> to vector<128x128xf32>
    %101 = vector.shape_cast %98 : vector<128x128xf32> to vector<1x128x128xf32>
    tpu.vector_store %arg14[%c0_47, %c0_48, %c0_49], %101 {strides = array<i32>} : memref<1x128x128xf32, #tpu.memory_space<vmem>>, vector<1x128x128xf32>,
    return
  }
  func.func @transform_0(%arg0: i32) -> (i32, i32, i32) {
    %c0_i32 = arith.constant 0 : i32
    %c0_i32_0 = arith.constant 0 : i32
    %c0_i32_1 = arith.constant 0 : i32
    return %arg0, %c0_i32, %c0_i32_0 : i32, i32, i32
  }
  func.func @transform_1(%arg0: i32) -> (i32, i32) {
    %c0_i32 = arith.constant 0 : i32
    %c0_i32_0 = arith.constant 0 : i32
    %c0_i32_1 = arith.constant 0 : i32
    return %c0_i32, %c0_i32_0 : i32, i32
  }
  func.func @transform_2(%arg0: i32) -> (i32, i32) {
    %c0_i32 = arith.constant 0 : i32
    %c0_i32_0 = arith.constant 0 : i32
    %c0_i32_1 = arith.constant 0 : i32
    return %c0_i32, %c0_i32_0 : i32, i32
  }
  func.func @transform_3(%arg0: i32) -> (i32, i32) {
    %c0_i32 = arith.constant 0 : i32
    %c0_i32_0 = arith.constant 0 : i32
    %c0_i32_1 = arith.constant 0 : i32
    return %c0_i32, %c0_i32_0 : i32, i32
  }
  func.func @transform_4(%arg0: i32) -> (i32, i32) {
    %c0_i32 = arith.constant 0 : i32
    %c0_i32_0 = arith.constant 0 : i32
    %c0_i32_1 = arith.constant 0 : i32
    return %c0_i32, %c0_i32_0 : i32, i32
  }
  func.func @transform_5(%arg0: i32) -> (i32, i32, i32) {
    %c0_i32 = arith.constant 0 : i32
    %c0_i32_0 = arith.constant 0 : i32
    %c0_i32_1 = arith.constant 0 : i32
    %c0_i32_2 = arith.constant 0 : i32
    return %c0_i32, %c0_i32_0, %c0_i32_1 : i32, i32, i32
  }
  func.func @transform_6(%arg0: i32) -> (i32, i32) {
    %c0_i32 = arith.constant 0 : i32
    %c0_i32_0 = arith.constant 0 : i32
    %c0_i32_1 = arith.constant 0 : i32
    return %c0_i32, %c0_i32_0 : i32, i32
  }
  func.func @transform_7(%arg0: i32) -> (i32, i32) {
    %c0_i32 = arith.constant 0 : i32
    %c0_i32_0 = arith.constant 0 : i32
    %c0_i32_1 = arith.constant 0 : i32
    return %c0_i32, %c0_i32_0 : i32, i32
  }
  func.func @transform_8(%arg0: i32) -> (i32, i32) {
    %c0_i32 = arith.constant 0 : i32
    %c0_i32_0 = arith.constant 0 : i32
    %c0_i32_1 = arith.constant 0 : i32
    return %c0_i32, %c0_i32_0 : i32, i32
  }
  func.func @transform_9(%arg0: i32) -> (i32, i32) {
    %c0_i32 = arith.constant 0 : i32
    %c0_i32_0 = arith.constant 0 : i32
    %c0_i32_1 = arith.constant 0 : i32
    return %c0_i32, %c0_i32_0 : i32, i32
  }
  func.func @transform_10(%arg0: i32) -> (i32, i32) {
    %c0_i32 = arith.constant 0 : i32
    %c0_i32_0 = arith.constant 0 : i32
    %c0_i32_1 = arith.constant 0 : i32
    return %c0_i32, %c0_i32_0 : i32, i32
  }
  func.func @transform_11(%arg0: i32) -> (i32, i32) {
    %c0_i32 = arith.constant 0 : i32
    %c0_i32_0 = arith.constant 0 : i32
    %c0_i32_1 = arith.constant 0 : i32
    return %c0_i32, %c0_i32_0 : i32, i32
  }
  func.func @transform_12(%arg0: i32) -> (i32, i32) {
    %c0_i32 = arith.constant 0 : i32
    %c0_i32_0 = arith.constant 0 : i32
    %c0_i32_1 = arith.constant 0 : i32
    return %c0_i32, %c0_i32_0 : i32, i32
  }
  func.func @transform_13(%arg0: i32) -> (i32, i32, i32) {
    %c0_i32 = arith.constant 0 : i32
    %c0_i32_0 = arith.constant 0 : i32
    %c0_i32_1 = arith.constant 0 : i32
    return %arg0, %c0_i32, %c0_i32_0 : i32, i32, i32
  }
}

module attributes {stable_mosaic.version = 11 : i64} {
  func.func @encoder_layer_kernel(%arg0: i32, %arg1: memref<1x128x128xf32, #tpu.memory_space<vmem>>, %arg2: memref<1x128xf32, #tpu.memory_space<vmem>>, %arg3: memref<1x128xf32, #tpu.memory_space<vmem>>, %arg4: memref<128x384xbf16, #tpu.memory_space<vmem>>, %arg5: memref<1x384xf32, #tpu.memory_space<vmem>>, %arg6: memref<4x32x128xbf16, #tpu.memory_space<vmem>>, %arg7: memref<1x128xf32, #tpu.memory_space<vmem>>, %arg8: memref<1x128xf32, #tpu.memory_space<vmem>>, %arg9: memref<1x128xf32, #tpu.memory_space<vmem>>, %arg10: memref<128x256xbf16, #tpu.memory_space<vmem>>, %arg11: memref<1x256xf32, #tpu.memory_space<vmem>>, %arg12: memref<256x128xbf16, #tpu.memory_space<vmem>>, %arg13: memref<1x128xf32, #tpu.memory_space<vmem>>, %arg14: memref<1x128x128xf32, #tpu.memory_space<vmem>>) attributes {dimension_semantics = [#tpu.dimension_semantics<parallel>], iteration_bounds = array<i64: 2>, scalar_prefetch = 0 : i64, scratch_operands = 0 : i64, tpu.core_type = #tpu.core_type<tc>, window_params = [{transform_indices = @transform_0, window_bounds = array<i64: 1, 128, 128>}, {pipeline_mode = #tpu.pipeline_mode<synchronous>, transform_indices = @transform_1, window_bounds = array<i64: 1, 128>}, {pipeline_mode = #tpu.pipeline_mode<synchronous>, transform_indices = @transform_2, window_bounds = array<i64: 1, 128>}, {pipeline_mode = #tpu.pipeline_mode<synchronous>, transform_indices = @transform_3, window_bounds = array<i64: 128, 384>}, {pipeline_mode = #tpu.pipeline_mode<synchronous>, transform_indices = @transform_4, window_bounds = array<i64: 1, 384>}, {pipeline_mode = #tpu.pipeline_mode<synchronous>, transform_indices = @transform_5, window_bounds = array<i64: 4, 32, 128>}, {pipeline_mode = #tpu.pipeline_mode<synchronous>, transform_indices = @transform_6, window_bounds = array<i64: 1, 128>}, {pipeline_mode = #tpu.pipeline_mode<synchronous>, transform_indices = @transform_7, window_bounds = array<i64: 1, 128>}, {pipeline_mode = #tpu.pipeline_mode<synchronous>, transform_indices = @transform_8, window_bounds = array<i64: 1, 128>}, {pipeline_mode = #tpu.pipeline_mode<synchronous>, transform_indices = @transform_9, window_bounds = array<i64: 128, 256>}, {pipeline_mode = #tpu.pipeline_mode<synchronous>, transform_indices = @transform_10, window_bounds = array<i64: 1, 256>}, {pipeline_mode = #tpu.pipeline_mode<synchronous>, transform_indices = @transform_11, window_bounds = array<i64: 256, 128>}, {pipeline_mode = #tpu.pipeline_mode<synchronous>, transform_indices = @transform_12, window_bounds = array<i64: 1, 128>}, {transform_indices = @transform_13, window_bounds = array<i64: 1, 128, 128>}]} {
    %c0 = arith.constant 0 : index
    %c0_0 = arith.constant 0 : index
    %c0_1 = arith.constant 0 : index
    %0 = vector.load %arg1[%c0, %c0_0, %c0_1] : memref<1x128x128xf32, #tpu.memory_space<vmem>>, vector<1x128x128xf32>
    %1 = vector.shape_cast %0 : vector<1x128x128xf32> to vector<128x128xf32>
    %c0_2 = arith.constant 0 : index
    %c0_3 = arith.constant 0 : index
    %2 = vector.load %arg2[%c0_2, %c0_3] : memref<1x128xf32, #tpu.memory_space<vmem>>, vector<1x128xf32>
    %c0_4 = arith.constant 0 : index
    %c0_5 = arith.constant 0 : index
    %3 = vector.load %arg3[%c0_4, %c0_5] : memref<1x128xf32, #tpu.memory_space<vmem>>, vector<1x128xf32>
    %cst = arith.constant dense<0.000000e+00> : vector<128xf32>
    %4 = vector.multi_reduction <add>, %1, %cst [1] : vector<128x128xf32> to vector<128xf32>
    %5 = vector.shape_cast %4 : vector<128xf32> to vector<128x1xf32>
    %cst_6 = arith.constant 7.812500e-03 : f32
    %6 = vector.broadcast %cst_6 : f32 to vector<128x1xf32>
    %7 = arith.mulf %5, %6 : vector<128x1xf32>
    %8 = vector.broadcast %7 : vector<128x1xf32> to vector<128x128xf32>
    %9 = arith.subf %1, %8 : vector<128x128xf32>
    %10 = arith.mulf %9, %9 : vector<128x128xf32>
    %cst_7 = arith.constant dense<0.000000e+00> : vector<128xf32>
    %11 = vector.multi_reduction <add>, %10, %cst_7 [1] : vector<128x128xf32> to vector<128xf32>
    %12 = vector.shape_cast %11 : vector<128xf32> to vector<128x1xf32>
    %cst_8 = arith.constant 7.812500e-03 : f32
    %13 = vector.broadcast %cst_8 : f32 to vector<128x1xf32>
    %14 = arith.mulf %12, %13 : vector<128x1xf32>
    %cst_9 = arith.constant 9.99999974E-6 : f32
    %15 = vector.broadcast %cst_9 : f32 to vector<128x1xf32>
    %16 = arith.addf %14, %15 : vector<128x1xf32>
    %17 = math.rsqrt %16 : vector<128x1xf32>
    %18 = vector.broadcast %17 : vector<128x1xf32> to vector<128x128xf32>
    %19 = arith.mulf %9, %18 : vector<128x128xf32>
    %20 = vector.broadcast %2 : vector<1x128xf32> to vector<128x128xf32>
    %21 = arith.mulf %19, %20 : vector<128x128xf32>
    %22 = vector.broadcast %3 : vector<1x128xf32> to vector<128x128xf32>
    %23 = arith.addf %21, %22 : vector<128x128xf32>
    %24 = arith.truncf %23 : vector<128x128xf32> to vector<128x128xbf16>
    %c0_10 = arith.constant 0 : index
    %c0_11 = arith.constant 0 : index
    %25 = vector.load %arg4[%c0_10, %c0_11] : memref<128x384xbf16, #tpu.memory_space<vmem>>, vector<128x384xbf16>
    %cst_12 = arith.constant dense<0.000000e+00> : vector<128x384xf32>
    %26 = tpu.matmul %24, %25, %cst_12 {dimension_numbers = #tpu.dot_dimension_numbers<[1], [0], [0], [1], [0, 0, 1, 1], [], []>} : vector<128x128xbf16>, vector<128x384xbf16>, vector<128x384xf32> -> vector<128x384xf32>
    %c0_13 = arith.constant 0 : index
    %c0_14 = arith.constant 0 : index
    %27 = vector.load %arg5[%c0_13, %c0_14] : memref<1x384xf32, #tpu.memory_space<vmem>>, vector<1x384xf32>
    %28 = vector.broadcast %27 : vector<1x384xf32> to vector<128x384xf32>
    %29 = arith.addf %26, %28 : vector<128x384xf32>
    %30 = tpu.transpose %29, [1, 0] : vector<128x384xf32> -> vector<384x128xf32>
    %31 = vector.shape_cast %30 : vector<384x128xf32> to vector<12x32x128xf32>
    %32 = vector.extract_strided_slice %31 {offsets = [0, 0, 0], sizes = [4, 32, 128], strides = [1, 1, 1]} : vector<12x32x128xf32> to vector<4x32x128xf32>
    %33 = tpu.transpose %32, [0, 2, 1] : vector<4x32x128xf32> -> vector<4x128x32xf32>
    %cst_15 = arith.constant 0.176776692 : f32
    %34 = vector.broadcast %cst_15 : f32 to vector<4x128x32xf32>
    %35 = arith.mulf %33, %34 : vector<4x128x32xf32>
    %36 = arith.truncf %35 : vector<4x128x32xf32> to vector<4x128x32xbf16>
    %37 = vector.extract_strided_slice %31 {offsets = [4, 0, 0], sizes = [4, 32, 128], strides = [1, 1, 1]} : vector<12x32x128xf32> to vector<4x32x128xf32>
    %38 = arith.truncf %37 : vector<4x32x128xf32> to vector<4x32x128xbf16>
    %39 = vector.extract_strided_slice %31 {offsets = [8, 0, 0], sizes = [4, 32, 128], strides = [1, 1, 1]} : vector<12x32x128xf32> to vector<4x32x128xf32>
    %40 = arith.truncf %39 : vector<4x32x128xf32> to vector<4x32x128xbf16>
    "tpu.trace_start"() <{level = 10 : i32, message = "hqd,hdk->hqk"}> : () -> ()
    %cst_16 = arith.constant dense<0.000000e+00> : vector<4x128x128xf32>
    %41 = tpu.matmul %36, %38, %cst_16 {dimension_numbers = #tpu.dot_dimension_numbers<[2], [1], [1], [2], [0, 0, 0, 1, 1, 2], [0], [0]>} : vector<4x128x32xbf16>, vector<4x32x128xbf16>, vector<4x128x128xf32> -> vector<4x128x128xf32>
    "tpu.trace_stop"() : () -> ()
    %cst_17 = arith.constant dense<0xFF800000> : vector<4x128xf32>
    %42 = vector.multi_reduction <maximumf>, %41, %cst_17 [2] : vector<4x128x128xf32> to vector<4x128xf32>
    %43 = vector.shape_cast %42 : vector<4x128xf32> to vector<4x128x1xf32>
    %44 = vector.broadcast %43 : vector<4x128x1xf32> to vector<4x128x128xf32>
    %45 = arith.subf %41, %44 : vector<4x128x128xf32>
    %46 = math.exp %45 : vector<4x128x128xf32>
    %cst_18 = arith.constant dense<0.000000e+00> : vector<4x128xf32>
    %47 = vector.multi_reduction <add>, %46, %cst_18 [2] : vector<4x128x128xf32> to vector<4x128xf32>
    %48 = vector.shape_cast %47 : vector<4x128xf32> to vector<4x128x1xf32>
    %49 = arith.truncf %46 : vector<4x128x128xf32> to vector<4x128x128xbf16>
    "tpu.trace_start"() <{level = 10 : i32, message = "hqk,hdk->hqd"}> : () -> ()
    %cst_19 = arith.constant dense<0.000000e+00> : vector<4x128x32xf32>
    %50 = tpu.matmul %49, %40, %cst_19 {dimension_numbers = #tpu.dot_dimension_numbers<[2], [2], [1], [1], [0, 0, 0, 1, 1, 1], [0], [0]>} : vector<4x128x128xbf16>, vector<4x32x128xbf16>, vector<4x128x32xf32> -> vector<4x128x32xf32>
    "tpu.trace_stop"() : () -> ()
    %51 = tpu.reciprocal %48 {approx = true} : vector<4x128x1xf32> -> vector<4x128x1xf32>
    %52 = vector.broadcast %51 : vector<4x128x1xf32> to vector<4x128x32xf32>
    %53 = arith.mulf %50, %52 : vector<4x128x32xf32>
    %54 = arith.truncf %53 : vector<4x128x32xf32> to vector<4x128x32xbf16>
    %c0_20 = arith.constant 0 : index
    %c0_21 = arith.constant 0 : index
    %c0_22 = arith.constant 0 : index
    %55 = vector.load %arg6[%c0_20, %c0_21, %c0_22] : memref<4x32x128xbf16, #tpu.memory_space<vmem>>, vector<4x32x128xbf16>
    "tpu.trace_start"() <{level = 10 : i32, message = "hqd,hdn->hqn"}> : () -> ()
    %cst_23 = arith.constant dense<0.000000e+00> : vector<4x128x128xf32>
    %56 = tpu.matmul %54, %55, %cst_23 {dimension_numbers = #tpu.dot_dimension_numbers<[2], [1], [1], [2], [0, 0, 0, 1, 1, 2], [0], [0]>} : vector<4x128x32xbf16>, vector<4x32x128xbf16>, vector<4x128x128xf32> -> vector<4x128x128xf32>
    "tpu.trace_stop"() : () -> ()
    %cst_24 = arith.constant dense<0.000000e+00> : vector<128x128xf32>
    %57 = vector.multi_reduction <add>, %56, %cst_24 [0] : vector<4x128x128xf32> to vector<128x128xf32>
    %c0_25 = arith.constant 0 : index
    %c0_26 = arith.constant 0 : index
    %58 = vector.load %arg7[%c0_25, %c0_26] : memref<1x128xf32, #tpu.memory_space<vmem>>, vector<1x128xf32>
    %59 = vector.broadcast %58 : vector<1x128xf32> to vector<128x128xf32>
    %60 = arith.addf %57, %59 : vector<128x128xf32>
    %61 = arith.addf %1, %60 : vector<128x128xf32>
    %c0_27 = arith.constant 0 : index
    %c0_28 = arith.constant 0 : index
    %62 = vector.load %arg8[%c0_27, %c0_28] : memref<1x128xf32, #tpu.memory_space<vmem>>, vector<1x128xf32>
    %c0_29 = arith.constant 0 : index
    %c0_30 = arith.constant 0 : index
    %63 = vector.load %arg9[%c0_29, %c0_30] : memref<1x128xf32, #tpu.memory_space<vmem>>, vector<1x128xf32>
    %cst_31 = arith.constant dense<0.000000e+00> : vector<128xf32>
    %64 = vector.multi_reduction <add>, %61, %cst_31 [1] : vector<128x128xf32> to vector<128xf32>
    %65 = vector.shape_cast %64 : vector<128xf32> to vector<128x1xf32>
    %cst_32 = arith.constant 7.812500e-03 : f32
    %66 = vector.broadcast %cst_32 : f32 to vector<128x1xf32>
    %67 = arith.mulf %65, %66 : vector<128x1xf32>
    %68 = vector.broadcast %67 : vector<128x1xf32> to vector<128x128xf32>
    %69 = arith.subf %61, %68 : vector<128x128xf32>
    %70 = arith.mulf %69, %69 : vector<128x128xf32>
    %cst_33 = arith.constant dense<0.000000e+00> : vector<128xf32>
    %71 = vector.multi_reduction <add>, %70, %cst_33 [1] : vector<128x128xf32> to vector<128xf32>
    %72 = vector.shape_cast %71 : vector<128xf32> to vector<128x1xf32>
    %cst_34 = arith.constant 7.812500e-03 : f32
    %73 = vector.broadcast %cst_34 : f32 to vector<128x1xf32>
    %74 = arith.mulf %72, %73 : vector<128x1xf32>
    %cst_35 = arith.constant 9.99999974E-6 : f32
    %75 = vector.broadcast %cst_35 : f32 to vector<128x1xf32>
    %76 = arith.addf %74, %75 : vector<128x1xf32>
    %77 = math.rsqrt %76 : vector<128x1xf32>
    %78 = vector.broadcast %77 : vector<128x1xf32> to vector<128x128xf32>
    %79 = arith.mulf %69, %78 : vector<128x128xf32>
    %80 = vector.broadcast %62 : vector<1x128xf32> to vector<128x128xf32>
    %81 = arith.mulf %79, %80 : vector<128x128xf32>
    %82 = vector.broadcast %63 : vector<1x128xf32> to vector<128x128xf32>
    %83 = arith.addf %81, %82 : vector<128x128xf32>
    %84 = arith.truncf %83 : vector<128x128xf32> to vector<128x128xbf16>
    %c0_36 = arith.constant 0 : index
    %c0_37 = arith.constant 0 : index
    %85 = vector.load %arg10[%c0_36, %c0_37] : memref<128x256xbf16, #tpu.memory_space<vmem>>, vector<128x256xbf16>
    %cst_38 = arith.constant dense<0.000000e+00> : vector<128x256xf32>
    %86 = tpu.matmul %84, %85, %cst_38 {dimension_numbers = #tpu.dot_dimension_numbers<[1], [0], [0], [1], [0, 0, 1, 1], [], []>} : vector<128x128xbf16>, vector<128x256xbf16>, vector<128x256xf32> -> vector<128x256xf32>
    %c0_39 = arith.constant 0 : index
    %c0_40 = arith.constant 0 : index
    %87 = vector.load %arg11[%c0_39, %c0_40] : memref<1x256xf32, #tpu.memory_space<vmem>>, vector<1x256xf32>
    %88 = vector.broadcast %87 : vector<1x256xf32> to vector<128x256xf32>
    %89 = arith.addf %86, %88 : vector<128x256xf32>
    %cst_41 = arith.constant 0.000000e+00 : f32
    %90 = vector.broadcast %cst_41 : f32 to vector<128x256xf32>
    %91 = arith.maximumf %89, %90 : vector<128x256xf32>
    %92 = arith.truncf %91 : vector<128x256xf32> to vector<128x256xbf16>
    %c0_42 = arith.constant 0 : index
    %c0_43 = arith.constant 0 : index
    %93 = vector.load %arg12[%c0_42, %c0_43] : memref<256x128xbf16, #tpu.memory_space<vmem>>, vector<256x128xbf16>
    %cst_44 = arith.constant dense<0.000000e+00> : vector<128x128xf32>
    %94 = tpu.matmul %92, %93, %cst_44 {dimension_numbers = #tpu.dot_dimension_numbers<[1], [0], [0], [1], [0, 0, 1, 1], [], []>} : vector<128x256xbf16>, vector<256x128xbf16>, vector<128x128xf32> -> vector<128x128xf32>
    %c0_45 = arith.constant 0 : index
    %c0_46 = arith.constant 0 : index
    %95 = vector.load %arg13[%c0_45, %c0_46] : memref<1x128xf32, #tpu.memory_space<vmem>>, vector<1x128xf32>
    %96 = vector.broadcast %95 : vector<1x128xf32> to vector<128x128xf32>
    %97 = arith.addf %94, %96 : vector<128x128xf32>
    %98 = arith.addf %61, %97 : vector<128x128xf32>
    %c0_47 = arith.constant 0 : index
    %c0_48 = arith.constant 0 : index
    %c0_49 = arith.constant 0 : index
    %99 = vector.load %arg14[%c0_47, %c0_48, %c0_49] : memref<1x128x128xf32, #tpu.memory_space<vmem>>, vector<1x128x128xf32>
    %100 = vector.shape_cast %99 : vector<1x128x128xf32> to vector<128x128xf32>
    %101 = vector.shape_cast %98 : vector<128x128xf32> to vector<1x128x128xf32>
    tpu.vector_store %arg14[%c0_47, %c0_48, %c0_49], %101 {strides = array<i32>} : memref<1x128x128xf32, #tpu.memory_space<vmem>>, vector<1x128x128xf32>,
    return
  }
  func.func @transform_0(%arg0: i32) -> (i32, i32, i32) {
    %c0_i32 = arith.constant 0 : i32
    %c0_i32_0 = arith.constant 0 : i32
    %c0_i32_1 = arith.constant 0 : i32
    return %arg0, %c0_i32, %c0_i32_0 : i32, i32, i32
  }
  func.func @transform_1(%arg0: i32) -> (i32, i32) {
    %c0_i32 = arith.constant 0 : i32
    %c0_i32_0 = arith.constant 0 : i32
    %c0_i32_1 = arith.constant 0 : i32
    return %c0_i32, %c0_i32_0 : i32, i32
  }
  func.func @transform_2(%arg0: i32) -> (i32, i32) {
    %c0_i32 = arith.constant 0 : i32
    %c0_i32_0 = arith.constant 0 : i32
    %c0_i32_1 = arith.constant 0 : i32
    return %c0_i32, %c0_i32_0 : i32, i32
  }
  func.func @transform_3(%arg0: i32) -> (i32, i32) {
    %c0_i32 = arith.constant 0 : i32
    %c0_i32_0 = arith.constant 0 : i32
    %c0_i32_1 = arith.constant 0 : i32
    return %c0_i32, %c0_i32_0 : i32, i32
  }
  func.func @transform_4(%arg0: i32) -> (i32, i32) {
    %c0_i32 = arith.constant 0 : i32
    %c0_i32_0 = arith.constant 0 : i32
    %c0_i32_1 = arith.constant 0 : i32
    return %c0_i32, %c0_i32_0 : i32, i32
  }
  func.func @transform_5(%arg0: i32) -> (i32, i32, i32) {
    %c0_i32 = arith.constant 0 : i32
    %c0_i32_0 = arith.constant 0 : i32
    %c0_i32_1 = arith.constant 0 : i32
    %c0_i32_2 = arith.constant 0 : i32
    return %c0_i32, %c0_i32_0, %c0_i32_1 : i32, i32, i32
  }
  func.func @transform_6(%arg0: i32) -> (i32, i32) {
    %c0_i32 = arith.constant 0 : i32
    %c0_i32_0 = arith.constant 0 : i32
    %c0_i32_1 = arith.constant 0 : i32
    return %c0_i32, %c0_i32_0 : i32, i32
  }
  func.func @transform_7(%arg0: i32) -> (i32, i32) {
    %c0_i32 = arith.constant 0 : i32
    %c0_i32_0 = arith.constant 0 : i32
    %c0_i32_1 = arith.constant 0 : i32
    return %c0_i32, %c0_i32_0 : i32, i32
  }
  func.func @transform_8(%arg0: i32) -> (i32, i32) {
    %c0_i32 = arith.constant 0 : i32
    %c0_i32_0 = arith.constant 0 : i32
    %c0_i32_1 = arith.constant 0 : i32
    return %c0_i32, %c0_i32_0 : i32, i32
  }
  func.func @transform_9(%arg0: i32) -> (i32, i32) {
    %c0_i32 = arith.constant 0 : i32
    %c0_i32_0 = arith.constant 0 : i32
    %c0_i32_1 = arith.constant 0 : i32
    return %c0_i32, %c0_i32_0 : i32, i32
  }
  func.func @transform_10(%arg0: i32) -> (i32, i32) {
    %c0_i32 = arith.constant 0 : i32
    %c0_i32_0 = arith.constant 0 : i32
    %c0_i32_1 = arith.constant 0 : i32
    return %c0_i32, %c0_i32_0 : i32, i32
  }
  func.func @transform_11(%arg0: i32) -> (i32, i32) {
    %c0_i32 = arith.constant 0 : i32
    %c0_i32_0 = arith.constant 0 : i32
    %c0_i32_1 = arith.constant 0 : i32
    return %c0_i32, %c0_i32_0 : i32, i32
  }
  func.func @transform_12(%arg0: i32) -> (i32, i32) {
    %c0_i32 = arith.constant 0 : i32
    %c0_i32_0 = arith.constant 0 : i32
    %c0_i32_1 = arith.constant 0 : i32
    return %c0_i32, %c0_i32_0 : i32, i32
  }
  func.func @transform_13(%arg0: i32) -> (i32, i32, i32) {
    %c0_i32 = arith.constant 0 : i32
    %c0_i32_0 = arith.constant 0 : i32
    %c0_i32_1 = arith.constant 0 : i32
    return %arg0, %c0_i32, %c0_i32_0 : i32, i32, i32
  }
}

</mosaic_0001>

<llo_original>
// kernel: tpu_custom_call.1
$region0: #{tpu_custom_call.1}
  #allocation0 [shape = 'u32[]', space=smem, size = 0x4, offset = 0x4, fixed_abs, tag = 'smem constant byte address 0x4 - core index']
  #allocation1 [shape = 'u32[144,128]{1,0:T(1,128)}', space=vmem, size = 0x12000, scoped, tag = 'internal scratch']
  %s0 = inlined_call_operand.hbm [shape: f32[2,128,128], index: 0, kind: input, shape index: {}]
  %s1 = inlined_call_operand.vmem [shape: f32[1,128], index: 1, kind: input, shape index: {}]
  %s2 = inlined_call_operand.vmem [shape: f32[1,128], index: 2, kind: input, shape index: {}]
  %s3 = inlined_call_operand.hbm [shape: bf16[128,384], index: 3, kind: input, shape index: {}]
  %s4 = inlined_call_operand.vmem [shape: f32[1,384], index: 4, kind: input, shape index: {}]
  %s5 = inlined_call_operand.hbm [shape: bf16[4,32,128], index: 5, kind: input, shape index: {}]
  %s6 = inlined_call_operand.vmem [shape: f32[1,128], index: 6, kind: input, shape index: {}]
  %s7 = inlined_call_operand.vmem [shape: f32[1,128], index: 7, kind: input, shape index: {}]
  %s8 = inlined_call_operand.vmem [shape: f32[1,128], index: 8, kind: input, shape index: {}]
  %s9 = inlined_call_operand.hbm [shape: bf16[128,256], index: 9, kind: input, shape index: {}]
  %s10 = inlined_call_operand.vmem [shape: f32[1,256], index: 10, kind: input, shape index: {}]
  %s11 = inlined_call_operand.hbm [shape: bf16[256,128], index: 11, kind: input, shape index: {}]
  %s12 = inlined_call_operand.vmem [shape: f32[1,128], index: 12, kind: input, shape index: {}]
  %s13 = inlined_call_operand.hbm [shape: f32[2,128,128], index: 13, kind: output, shape index: {}]
  %s14 = sld [smem:[#allocation0]]
  $region105: #{tpu_custom_call.1} parent=0
    _
  %s16 = ssub.s32 1, %s14
  %s17 = scalar_select 0, %s16, %s14
  $region1: #{tpu_custom_call.1} parent=0
    #allocation2 [shape = 'u8[131072]{0}', space=vmem, size = 0x20000, scoped, tag = 'input window, operand 0']
    #allocation3 [shape = 's32[2]{0}', space=sflag, size = 0x8, scoped, tag = 'scoped memory for tpu_custom_call.1']
    #allocation4 [shape = 's32[2]{0}', space=sflag, size = 0x8, scoped, tag = 'scoped memory for tpu_custom_call.1']
    #allocation5 [shape = 'u8[98304]{0}', space=vmem, size = 0x18000, scoped, tag = 'input window, operand 3, single buffered']
    #allocation6 [shape = 's32[1]{0}', space=sflag, size = 0x4, scoped, tag = 'scoped memory for tpu_custom_call.1']
    #allocation7 [shape = 'u8[32768]{0}', space=vmem, size = 0x8000, scoped, tag = 'input window, operand 5, single buffered']
    #allocation8 [shape = 'u8[65536]{0}', space=vmem, size = 0x10000, scoped, tag = 'input window, operand 9, single buffered']
    #allocation9 [shape = 's32[1]{0}', space=sflag, size = 0x4, scoped, tag = 'scoped memory for tpu_custom_call.1']
    #allocation10 [shape = 'u8[65536]{0}', space=vmem, size = 0x10000, scoped, tag = 'input window, operand 11, single buffered']
    #allocation11 [shape = 'u8[131072]{0}', space=vmem, size = 0x20000, scoped, tag = 'output window, operand 0']
    %18 = vsyncpa [#allocation3], 0
    %s19 = scalar_lea.sflag [#allocation3], 1
    %20 = vsyncpa %s19, 0
    %21 = vsyncpa [#allocation6], 0
    %22 = vsyncpa [#allocation9], 0
    %23 = vsyncpa [#allocation4], 0
    %s24 = scalar_lea.sflag [#allocation4], 1
    %25 = vsyncpa %s24, 0
    loop: start=0, step=1, limit=4
    $region2: #{tpu_custom_call.1} parent=1 // loop_pre_header
      _
    $region3: #{tpu_custom_call.1} parent=1 // loop_header
      %s27 = sphi 0, %s31
      %p28 = scmp.ge.s32.totalorder %s27, 4
      %s37 = sphi 0, %s39
      %s40 = sphi 0, %s37
      %s41 = sphi 0, %s40
      %s57 = sphi 0, %s41
      %s61 = sphi 0, %s61
      %s63 = sphi 0, %s61
      %s64 = sphi 0, %s63
      %s78 = sphi 0, %s64
      %s82 = sphi 0, %s82
      %s84 = sphi 0, %s82
      %s85 = sphi 0, %s84
      %s99 = sphi 0, %s85
      %s103 = sphi 0, %s103
      %s105 = sphi 0, %s103
      %s106 = sphi 0, %s105
      %s120 = sphi 0, %s106
      %s124 = sphi 0, %s124
      %s126 = sphi 0, %s124
      %s127 = sphi 0, %s126
      %s141 = sphi 0, %s127
      %s145 = sphi 0, %s145
      %s147 = sphi 0, %s145
      %s148 = sphi 0, %s147
      %s162 = sphi 0, %s148
      %s166 = sphi 0, %s166
      %s168 = sphi 0, %s166
      %s169 = sphi 0, %s168
      %s183 = sphi 0, %s169
      %s187 = sphi 0, %s187
      %s189 = sphi 0, %s187
      %s190 = sphi 0, %s189
      %s204 = sphi 0, %s190
      %s208 = sphi 0, %s208
      %s210 = sphi 0, %s208
      %s211 = sphi 0, %s210
      %s225 = sphi 0, %s211
      %s229 = sphi 0, %s229
      %s231 = sphi 0, %s229
      %s232 = sphi 0, %s231
      %s246 = sphi 0, %s232
      %s250 = sphi 0, %s250
      %s252 = sphi 0, %s250
      %s253 = sphi 0, %s252
      %s267 = sphi 0, %s253
      %s271 = sphi 0, %s271
      %s273 = sphi 0, %s271
      %s274 = sphi 0, %s273
      %s288 = sphi 0, %s274
      %s292 = sphi 0, %s292
      %s294 = sphi 0, %s292
      %s295 = sphi 0, %s294
      %s309 = sphi 0, %s295
      %s315 = sphi 0, %s317
      %s318 = sphi 0, %s315
      %s319 = sphi 0, %s318
      %s335 = sphi 0, %s319
    $region4: #{tpu_custom_call.1} parent=1 // loop_header_branch
      %30 = sbr.rel (%p28) target = $region8
    $region5: #{tpu_custom_call.1} parent=1 // loop_body
      %s32 = ssub.s32 %s27, 1
      %s33 = ssub.s32 %s27, 2
      %s34 = sadd.s32 %s27, 1
      %s35 = ssub.s32 %s27, %s34
      %p36 = scmp.eq.s32.totalorder %s35, 0
      %s38 = sadd.s32 %s37, 1
      %s39 = scalar_select %p36, %s37, %s38
      %p42 = pneg %p36
      %p43 = scmp.eq.s32.totalorder %s27, 1
      %p44 = por %p42, %p43
      %p45 = scmp.ne.s32.totalorder %s37, %s40
      %p46 = scmp.eq.s32.totalorder %s27, 0
      %p47 = por %p45, %p46
      %p48 = scmp.ne.s32.totalorder %s37, %s40
      %p49 = scmp.eq.s32.totalorder %s32, 1
      %p50 = por %p48, %p49
      %p51 = scmp.ne.s32.totalorder %s40, %s41
      %p52 = scmp.eq.s32.totalorder %s32, 0
      %p53 = por %p51, %p52
      %p54 = scmp.ne.s32.totalorder %s40, %s41
      %p55 = scmp.eq.s32.totalorder %s33, 1
      %p56 = por %p54, %p55
      %p58 = scmp.ne.s32.totalorder %s41, %s57
      %p59 = scmp.eq.s32.totalorder %s33, 0
      %p60 = por %p58, %p59
      %s62 = sadd.s32 %s61, 1
      %p65 = scmp.eq.s32.totalorder %s27, 1
      %p66 = scmp.ne.s32.totalorder %s61, %s63
      %p67 = scmp.eq.s32.totalorder %s27, 0
      %p68 = por %p66, %p67
      %p69 = scmp.ne.s32.totalorder %s61, %s63
      %p70 = scmp.eq.s32.totalorder %s32, 1
      %p71 = por %p69, %p70
      %p72 = scmp.ne.s32.totalorder %s63, %s64
      %p73 = scmp.eq.s32.totalorder %s32, 0
      %p74 = por %p72, %p73
      %p75 = scmp.ne.s32.totalorder %s63, %s64
      %p76 = scmp.eq.s32.totalorder %s33, 1
      %p77 = por %p75, %p76
      %p79 = scmp.ne.s32.totalorder %s64, %s78
      %p80 = scmp.eq.s32.totalorder %s33, 0
      %p81 = por %p79, %p80
      %s83 = sadd.s32 %s82, 1
      %p86 = scmp.eq.s32.totalorder %s27, 1
      %p87 = scmp.ne.s32.totalorder %s82, %s84
      %p88 = scmp.eq.s32.totalorder %s27, 0
      %p89 = por %p87, %p88
      %p90 = scmp.ne.s32.totalorder %s82, %s84
      %p91 = scmp.eq.s32.totalorder %s32, 1
      %p92 = por %p90, %p91
      %p93 = scmp.ne.s32.totalorder %s84, %s85
      %p94 = scmp.eq.s32.totalorder %s32, 0
      %p95 = por %p93, %p94
      %p96 = scmp.ne.s32.totalorder %s84, %s85
      %p97 = scmp.eq.s32.totalorder %s33, 1
      %p98 = por %p96, %p97
      %p100 = scmp.ne.s32.totalorder %s85, %s99
      %p101 = scmp.eq.s32.totalorder %s33, 0
      %p102 = por %p100, %p101
      %s104 = sadd.s32 %s103, 1
      %p107 = scmp.eq.s32.totalorder %s27, 1
      %p108 = scmp.ne.s32.totalorder %s103, %s105
      %p109 = scmp.eq.s32.totalorder %s27, 0
      %p110 = por %p108, %p109
      %p111 = scmp.ne.s32.totalorder %s103, %s105
      %p112 = scmp.eq.s32.totalorder %s32, 1
      %p113 = por %p111, %p112
      %p114 = scmp.ne.s32.totalorder %s105, %s106
      %p115 = scmp.eq.s32.totalorder %s32, 0
      %p116 = por %p114, %p115
      %p117 = scmp.ne.s32.totalorder %s105, %s106
      %p118 = scmp.eq.s32.totalorder %s33, 1
      %p119 = por %p117, %p118
      %p121 = scmp.ne.s32.totalorder %s106, %s120
      %p122 = scmp.eq.s32.totalorder %s33, 0
      %p123 = por %p121, %p122
      %s125 = sadd.s32 %s124, 1
      %p128 = scmp.eq.s32.totalorder %s27, 1
      %p129 = scmp.ne.s32.totalorder %s124, %s126
      %p130 = scmp.eq.s32.totalorder %s27, 0
      %p131 = por %p129, %p130
      %p132 = scmp.ne.s32.totalorder %s124, %s126
      %p133 = scmp.eq.s32.totalorder %s32, 1
      %p134 = por %p132, %p133
      %p135 = scmp.ne.s32.totalorder %s126, %s127
      %p136 = scmp.eq.s32.totalorder %s32, 0
      %p137 = por %p135, %p136
      %p138 = scmp.ne.s32.totalorder %s126, %s127
      %p139 = scmp.eq.s32.totalorder %s33, 1
      %p140 = por %p138, %p139
      %p142 = scmp.ne.s32.totalorder %s127, %s141
      %p143 = scmp.eq.s32.totalorder %s33, 0
      %p144 = por %p142, %p143
      %s146 = sadd.s32 %s145, 1
      %p149 = scmp.eq.s32.totalorder %s27, 1
      %p150 = scmp.ne.s32.totalorder %s145, %s147
      %p151 = scmp.eq.s32.totalorder %s27, 0
      %p152 = por %p150, %p151
      %p153 = scmp.ne.s32.totalorder %s145, %s147
      %p154 = scmp.eq.s32.totalorder %s32, 1
      %p155 = por %p153, %p154
      %p156 = scmp.ne.s32.totalorder %s147, %s148
      %p157 = scmp.eq.s32.totalorder %s32, 0
      %p158 = por %p156, %p157
      %p159 = scmp.ne.s32.totalorder %s147, %s148
      %p160 = scmp.eq.s32.totalorder %s33, 1
      %p161 = por %p159, %p160
      %p163 = scmp.ne.s32.totalorder %s148, %s162
      %p164 = scmp.eq.s32.totalorder %s33, 0
      %p165 = por %p163, %p164
      %s167 = sadd.s32 %s166, 1
      %p170 = scmp.eq.s32.totalorder %s27, 1
      %p171 = scmp.ne.s32.totalorder %s166, %s168
      %p172 = scmp.eq.s32.totalorder %s27, 0
      %p173 = por %p171, %p172
      %p174 = scmp.ne.s32.totalorder %s166, %s168
      %p175 = scmp.eq.s32.totalorder %s32, 1
      %p176 = por %p174, %p175
      %p177 = scmp.ne.s32.totalorder %s168, %s169
      %p178 = scmp.eq.s32.totalorder %s32, 0
      %p179 = por %p177, %p178
      %p180 = scmp.ne.s32.totalorder %s168, %s169
      %p181 = scmp.eq.s32.totalorder %s33, 1
      %p182 = por %p180, %p181
      %p184 = scmp.ne.s32.totalorder %s169, %s183
      %p185 = scmp.eq.s32.totalorder %s33, 0
      %p186 = por %p184, %p185
      %s188 = sadd.s32 %s187, 1
      %p191 = scmp.eq.s32.totalorder %s27, 1
      %p192 = scmp.ne.s32.totalorder %s187, %s189
      %p193 = scmp.eq.s32.totalorder %s27, 0
      %p194 = por %p192, %p193
      %p195 = scmp.ne.s32.totalorder %s187, %s189
      %p196 = scmp.eq.s32.totalorder %s32, 1
      %p197 = por %p195, %p196
      %p198 = scmp.ne.s32.totalorder %s189, %s190
      %p199 = scmp.eq.s32.totalorder %s32, 0
      %p200 = por %p198, %p199
      %p201 = scmp.ne.s32.totalorder %s189, %s190
      %p202 = scmp.eq.s32.totalorder %s33, 1
      %p203 = por %p201, %p202
      %p205 = scmp.ne.s32.totalorder %s190, %s204
      %p206 = scmp.eq.s32.totalorder %s33, 0
      %p207 = por %p205, %p206
      %s209 = sadd.s32 %s208, 1
      %p212 = scmp.eq.s32.totalorder %s27, 1
      %p213 = scmp.ne.s32.totalorder %s208, %s210
      %p214 = scmp.eq.s32.totalorder %s27, 0
      %p215 = por %p213, %p214
      %p216 = scmp.ne.s32.totalorder %s208, %s210
      %p217 = scmp.eq.s32.totalorder %s32, 1
      %p218 = por %p216, %p217
      %p219 = scmp.ne.s32.totalorder %s210, %s211
      %p220 = scmp.eq.s32.totalorder %s32, 0
      %p221 = por %p219, %p220
      %p222 = scmp.ne.s32.totalorder %s210, %s211
      %p223 = scmp.eq.s32.totalorder %s33, 1
      %p224 = por %p222, %p223
      %p226 = scmp.ne.s32.totalorder %s211, %s225
      %p227 = scmp.eq.s32.totalorder %s33, 0
      %p228 = por %p226, %p227
      %s230 = sadd.s32 %s229, 1
      %p233 = scmp.eq.s32.totalorder %s27, 1
      %p234 = scmp.ne.s32.totalorder %s229, %s231
      %p235 = scmp.eq.s32.totalorder %s27, 0
      %p236 = por %p234, %p235
      %p237 = scmp.ne.s32.totalorder %s229, %s231
      %p238 = scmp.eq.s32.totalorder %s32, 1
      %p239 = por %p237, %p238
      %p240 = scmp.ne.s32.totalorder %s231, %s232
      %p241 = scmp.eq.s32.totalorder %s32, 0
      %p242 = por %p240, %p241
      %p243 = scmp.ne.s32.totalorder %s231, %s232
      %p244 = scmp.eq.s32.totalorder %s33, 1
      %p245 = por %p243, %p244
      %p247 = scmp.ne.s32.totalorder %s232, %s246
      %p248 = scmp.eq.s32.totalorder %s33, 0
      %p249 = por %p247, %p248
      %s251 = sadd.s32 %s250, 1
      %p254 = scmp.eq.s32.totalorder %s27, 1
      %p255 = scmp.ne.s32.totalorder %s250, %s252
      %p256 = scmp.eq.s32.totalorder %s27, 0
      %p257 = por %p255, %p256
      %p258 = scmp.ne.s32.totalorder %s250, %s252
      %p259 = scmp.eq.s32.totalorder %s32, 1
      %p260 = por %p258, %p259
      %p261 = scmp.ne.s32.totalorder %s252, %s253
      %p262 = scmp.eq.s32.totalorder %s32, 0
      %p263 = por %p261, %p262
      %p264 = scmp.ne.s32.totalorder %s252, %s253
      %p265 = scmp.eq.s32.totalorder %s33, 1
      %p266 = por %p264, %p265
      %p268 = scmp.ne.s32.totalorder %s253, %s267
      %p269 = scmp.eq.s32.totalorder %s33, 0
      %p270 = por %p268, %p269
      %s272 = sadd.s32 %s271, 1
      %p275 = scmp.eq.s32.totalorder %s27, 1
      %p276 = scmp.ne.s32.totalorder %s271, %s273
      %p277 = scmp.eq.s32.totalorder %s27, 0
      %p278 = por %p276, %p277
      %p279 = scmp.ne.s32.totalorder %s271, %s273
      %p280 = scmp.eq.s32.totalorder %s32, 1
      %p281 = por %p279, %p280
      %p282 = scmp.ne.s32.totalorder %s273, %s274
      %p283 = scmp.eq.s32.totalorder %s32, 0
      %p284 = por %p282, %p283
      %p285 = scmp.ne.s32.totalorder %s273, %s274
      %p286 = scmp.eq.s32.totalorder %s33, 1
      %p287 = por %p285, %p286
      %p289 = scmp.ne.s32.totalorder %s274, %s288
      %p290 = scmp.eq.s32.totalorder %s33, 0
      %p291 = por %p289, %p290
      %s293 = sadd.s32 %s292, 1
      %p296 = scmp.eq.s32.totalorder %s27, 1
      %p297 = scmp.ne.s32.totalorder %s292, %s294
      %p298 = scmp.eq.s32.totalorder %s27, 0
      %p299 = por %p297, %p298
      %p300 = scmp.ne.s32.totalorder %s292, %s294
      %p301 = scmp.eq.s32.totalorder %s32, 1
      %p302 = por %p300, %p301
      %p303 = scmp.ne.s32.totalorder %s294, %s295
      %p304 = scmp.eq.s32.totalorder %s32, 0
      %p305 = por %p303, %p304
      %p306 = scmp.ne.s32.totalorder %s294, %s295
      %p307 = scmp.eq.s32.totalorder %s33, 1
      %p308 = por %p306, %p307
      %p310 = scmp.ne.s32.totalorder %s295, %s309
      %p311 = scmp.eq.s32.totalorder %s33, 0
      %p312 = por %p310, %p311
      %s313 = ssub.s32 %s27, %s34
      %p314 = scmp.eq.s32.totalorder %s313, 0
      %s316 = sadd.s32 %s315, 1
      %s317 = scalar_select %p314, %s315, %s316
      %p320 = pneg %p314
      %p321 = scmp.eq.s32.totalorder %s27, 1
      %p322 = por %p320, %p321
      %p323 = scmp.ne.s32.totalorder %s315, %s318
      %p324 = scmp.eq.s32.totalorder %s27, 0
      %p325 = por %p323, %p324
      %p326 = scmp.ne.s32.totalorder %s315, %s318
      %p327 = scmp.eq.s32.totalorder %s32, 1
      %p328 = por %p326, %p327
      %p329 = scmp.ne.s32.totalorder %s318, %s319
      %p330 = scmp.eq.s32.totalorder %s32, 0
      %p331 = por %p329, %p330
      %p332 = scmp.ne.s32.totalorder %s318, %s319
      %p333 = scmp.eq.s32.totalorder %s33, 1
      %p334 = por %p332, %p333
      %p336 = scmp.ne.s32.totalorder %s319, %s335
      %p337 = scmp.eq.s32.totalorder %s33, 0
      %p338 = por %p336, %p337
      %p339 = scmp.le.s32.totalorder 1, %s27
      %p340 = scmp.lt.s32.totalorder %s27, 3
      %p341 = pnand %p339, %p340
      %p342 = pneg %p341
      // Predicated region
      $region9: #{tpu_custom_call.1} parent=5 // pred_check
        _
      $region10: #{tpu_custom_call.1} parent=5 // pred_check_branch
        %344 = sbr.rel (%p341) target = $region12
      $region11: #{tpu_custom_call.1} parent=5 // pred_region
        %s345 = ssub.s32 %s27, 1
        // Predicated region
        $region13: #{tpu_custom_call.1} parent=11 // pred_check
          %p346 = pneg %p74
        $region14: #{tpu_custom_call.1} parent=11 // pred_check_branch
          %348 = sbr.rel (%p346) target = $region16
        $region15: #{tpu_custom_call.1} parent=11 // pred_region
          _
        $region16: #{tpu_custom_call.1} parent=11 // pred_fallthru
          _
        // Predicated region
        $region17: #{tpu_custom_call.1} parent=11 // pred_check
          %p349 = pneg %p95
        $region18: #{tpu_custom_call.1} parent=11 // pred_check_branch
          %351 = sbr.rel (%p349) target = $region20
        $region19: #{tpu_custom_call.1} parent=11 // pred_region
          _
        $region20: #{tpu_custom_call.1} parent=11 // pred_fallthru
          _
        // Predicated region
        $region21: #{tpu_custom_call.1} parent=11 // pred_check
          %p352 = pneg %p116
        $region22: #{tpu_custom_call.1} parent=11 // pred_check_branch
          %354 = sbr.rel (%p352) target = $region24
        $region23: #{tpu_custom_call.1} parent=11 // pred_region
          %s356 = ssub.s32 3072, 3072
          %357 = vsyncadd [#allocation6], %s356
          %s358 = sshll.u32 [#allocation5], 4
          %s359 = int_to_ptr.vmem [resolvable:$true] %s358
          %364 = dma.hbm_to_vmem [thread:$0]  %s3, 3072, %s359, [#allocation6], 192, 192, 12
        $region24: #{tpu_custom_call.1} parent=11 // pred_fallthru
          _
        // Predicated region
        $region25: #{tpu_custom_call.1} parent=11 // pred_check
          %p365 = pneg %p137
        $region26: #{tpu_custom_call.1} parent=11 // pred_check_branch
          %367 = sbr.rel (%p365) target = $region28
        $region27: #{tpu_custom_call.1} parent=11 // pred_region
          _
        $region28: #{tpu_custom_call.1} parent=11 // pred_fallthru
          _
        // Predicated region
        $region29: #{tpu_custom_call.1} parent=11 // pred_check
          %p368 = pneg %p158
        $region30: #{tpu_custom_call.1} parent=11 // pred_check_branch
          %370 = sbr.rel (%p368) target = $region32
        $region31: #{tpu_custom_call.1} parent=11 // pred_region
          %s372 = ssub.s32 1024, 1024
          %373 = vsyncadd [#allocation6], %s372
          %s374 = sshll.u32 [#allocation7], 4
          %s375 = int_to_ptr.vmem [resolvable:$true] %s374
          %380 = dma.hbm_to_vmem [thread:$0]  %s5, 1024, %s375, [#allocation6], 64, 64, 4
        $region32: #{tpu_custom_call.1} parent=11 // pred_fallthru
          _
        // Predicated region
        $region33: #{tpu_custom_call.1} parent=11 // pred_check
          %p381 = pneg %p179
        $region34: #{tpu_custom_call.1} parent=11 // pred_check_branch
          %383 = sbr.rel (%p381) target = $region36
        $region35: #{tpu_custom_call.1} parent=11 // pred_region
          _
        $region36: #{tpu_custom_call.1} parent=11 // pred_fallthru
          _
        // Predicated region
        $region37: #{tpu_custom_call.1} parent=11 // pred_check
          %p384 = pneg %p200
        $region38: #{tpu_custom_call.1} parent=11 // pred_check_branch
          %386 = sbr.rel (%p384) target = $region40
        $region39: #{tpu_custom_call.1} parent=11 // pred_region
          _
        $region40: #{tpu_custom_call.1} parent=11 // pred_fallthru
          _
        // Predicated region
        $region41: #{tpu_custom_call.1} parent=11 // pred_check
          %p387 = pneg %p221
        $region42: #{tpu_custom_call.1} parent=11 // pred_check_branch
          %389 = sbr.rel (%p387) target = $region44
        $region43: #{tpu_custom_call.1} parent=11 // pred_region
          _
        $region44: #{tpu_custom_call.1} parent=11 // pred_fallthru
          _
        // Predicated region
        $region45: #{tpu_custom_call.1} parent=11 // pred_check
          %p390 = pneg %p242
        $region46: #{tpu_custom_call.1} parent=11 // pred_check_branch
          %392 = sbr.rel (%p390) target = $region48
        $region47: #{tpu_custom_call.1} parent=11 // pred_region
          %s394 = ssub.s32 2048, 2048
          %395 = vsyncadd [#allocation9], %s394
          %s396 = sshll.u32 [#allocation8], 4
          %s397 = int_to_ptr.vmem [resolvable:$true] %s396
          %402 = dma.hbm_to_vmem [thread:$0]  %s9, 2048, %s397, [#allocation9], 128, 128, 8
        $region48: #{tpu_custom_call.1} parent=11 // pred_fallthru
          _
        // Predicated region
        $region49: #{tpu_custom_call.1} parent=11 // pred_check
          %p403 = pneg %p263
        $region50: #{tpu_custom_call.1} parent=11 // pred_check_branch
          %405 = sbr.rel (%p403) target = $region52
        $region51: #{tpu_custom_call.1} parent=11 // pred_region
          _
        $region52: #{tpu_custom_call.1} parent=11 // pred_fallthru
          _
        // Predicated region
        $region53: #{tpu_custom_call.1} parent=11 // pred_check
          %p406 = pneg %p284
        $region54: #{tpu_custom_call.1} parent=11 // pred_check_branch
          %408 = sbr.rel (%p406) target = $region56
        $region55: #{tpu_custom_call.1} parent=11 // pred_region
          %s410 = ssub.s32 2048, 2048
          %411 = vsyncadd [#allocation9], %s410
          %s412 = sshll.u32 [#allocation10], 4
          %s413 = int_to_ptr.vmem [resolvable:$true] %s412
          %418 = dma.hbm_to_vmem [thread:$0]  %s11, 2048, %s413, [#allocation9], 64, 64, 4
        $region56: #{tpu_custom_call.1} parent=11 // pred_fallthru
          _
        // Predicated region
        $region57: #{tpu_custom_call.1} parent=11 // pred_check
          %p419 = pneg %p305
        $region58: #{tpu_custom_call.1} parent=11 // pred_check_branch
          %421 = sbr.rel (%p419) target = $region60
        $region59: #{tpu_custom_call.1} parent=11 // pred_region
          _
        $region60: #{tpu_custom_call.1} parent=11 // pred_fallthru
          _
      $region12: #{tpu_custom_call.1} parent=5 // pred_fallthru
        _
      %p422 = scmp.lt.s32.totalorder %s27, 2
      // Predicated region
      $region61: #{tpu_custom_call.1} parent=5 // pred_check
        %p423 = pneg %p422
      $region62: #{tpu_custom_call.1} parent=5 // pred_check_branch
        %425 = sbr.rel (%p423) target = $region64
      $region63: #{tpu_custom_call.1} parent=5 // pred_region
        // Predicated region
        $region65: #{tpu_custom_call.1} parent=63 // pred_check
          %p426 = pneg %p47
        $region66: #{tpu_custom_call.1} parent=63 // pred_check_branch
          %428 = sbr.rel (%p426) target = $region68
        $region67: #{tpu_custom_call.1} parent=63 // pred_region
          %s429 = sand.u32 %s37, 1
          %s430 = scalar_lea.sflag [#allocation3], %s429
          %s431 = sand.u32 %s37, 1
          %s432 = smul.addr %s431, 128
          %s433 = scalar_lea.vmem [#allocation2], %s432
          %s435 = ssub.s32 2048, 2048
          %436 = vsyncadd %s430, %s435
          %s437 = smul.addr %s27, 16
          %s438 = smul.addr %s437, 128
          %s439 = scalar_lea.hbm %s0, %s438
          %s440 = sshll.u32 %s433, 4
          %s441 = int_to_ptr.vmem [resolvable:$true] %s440
          %446 = dma.hbm_to_vmem [thread:$0]  %s439, 2048, %s441, %s430, 128, 128, 8
        $region68: #{tpu_custom_call.1} parent=63 // pred_fallthru
          _
      $region64: #{tpu_custom_call.1} parent=5 // pred_fallthru
        _
      %p447 = scmp.le.s32.totalorder 1, %s27
      %p448 = scmp.lt.s32.totalorder %s27, 3
      %p449 = pnand %p447, %p448
      %p450 = pneg %p449
      // Predicated region
      $region69: #{tpu_custom_call.1} parent=5 // pred_check
        _
      $region70: #{tpu_custom_call.1} parent=5 // pred_check_branch
        %452 = sbr.rel (%p449) target = $region72
      $region71: #{tpu_custom_call.1} parent=5 // pred_region
        %s453 = ssub.s32 %s27, 1
        %s454 = sand.u32 %s40, 1
        %s455 = scalar_lea.sflag [#allocation3], %s454
        %s456 = sand.u32 %s40, 1
        %s457 = smul.addr %s456, 128
        %s458 = scalar_lea.vmem [#allocation2], %s457
        // Predicated region
        $region73: #{tpu_custom_call.1} parent=71 // pred_check
          %p459 = pneg %p53
        $region74: #{tpu_custom_call.1} parent=71 // pred_check_branch
          %461 = sbr.rel (%p459) target = $region76
        $region75: #{tpu_custom_call.1} parent=71 // pred_region
          %462 = dma.done %s455, 2048
        $region76: #{tpu_custom_call.1} parent=71 // pred_fallthru
          _
        // Predicated region
        $region77: #{tpu_custom_call.1} parent=71 // pred_check
          %p463 = pneg %p116
        $region78: #{tpu_custom_call.1} parent=71 // pred_check_branch
          %465 = sbr.rel (%p463) target = $region80
        $region79: #{tpu_custom_call.1} parent=71 // pred_region
          %466 = dma.done [#allocation6], 3072
        $region80: #{tpu_custom_call.1} parent=71 // pred_fallthru
          _
        // Predicated region
        $region81: #{tpu_custom_call.1} parent=71 // pred_check
          %p467 = pneg %p158
        $region82: #{tpu_custom_call.1} parent=71 // pred_check_branch
          %469 = sbr.rel (%p467) target = $region84
        $region83: #{tpu_custom_call.1} parent=71 // pred_region
          %470 = dma.done [#allocation6], 1024
        $region84: #{tpu_custom_call.1} parent=71 // pred_fallthru
          _
        // Predicated region
        $region85: #{tpu_custom_call.1} parent=71 // pred_check
          %p471 = pneg %p242
        $region86: #{tpu_custom_call.1} parent=71 // pred_check_branch
          %473 = sbr.rel (%p471) target = $region88
        $region87: #{tpu_custom_call.1} parent=71 // pred_region
          %474 = dma.done [#allocation9], 2048
        $region88: #{tpu_custom_call.1} parent=71 // pred_fallthru
          _
        // Predicated region
        $region89: #{tpu_custom_call.1} parent=71 // pred_check
          %p475 = pneg %p284
        $region90: #{tpu_custom_call.1} parent=71 // pred_check_branch
          %477 = sbr.rel (%p475) target = $region92
        $region91: #{tpu_custom_call.1} parent=71 // pred_region
          %478 = dma.done [#allocation9], 2048
        $region92: #{tpu_custom_call.1} parent=71 // pred_fallthru
          _
        %s479 = sand.u32 %s40, 1
        %s480 = scalar_lea.sflag [#allocation3], %s479
        %s481 = sand.u32 %s40, 1
        %s482 = smul.addr %s481, 128
        %s483 = scalar_lea.vmem [#allocation2], %s482
        %p484 = pneg %p53
        %p485 = pneg %p50
        %p486 = pneg %p74
        %p487 = pneg %p71
        %p488 = pneg %p95
        %p489 = pneg %p92
        %p490 = pneg %p116
        %p491 = pneg %p113
        %p492 = pneg %p137
        %p493 = pneg %p134
        %p494 = pneg %p158
        %p495 = pneg %p155
        %p496 = pneg %p179
        %p497 = pneg %p176
        %p498 = pneg %p200
        %p499 = pneg %p197
        %p500 = pneg %p221
        %p501 = pneg %p218
        %p502 = pneg %p242
        %p503 = pneg %p239
        %p504 = pneg %p263
        %p505 = pneg %p260
        %p506 = pneg %p284
        %p507 = pneg %p281
        %p508 = pneg %p305
        %p509 = pneg %p302
        %p510 = pneg %p331
        %p511 = pneg %p328
        %s512 = sand.u32 %s318, 1
        %s513 = scalar_lea.sflag [#allocation4], %s512
        %s514 = sand.u32 %s318, 1
        %s515 = smul.addr %s514, 128
        %s516 = scalar_lea.vmem [#allocation11], %s515
        %v518 = vld [vmem:[%s458] sm:$0xff]
        %v519 = vld [vmem:[%s458 + $0x8] sm:$0xff]
        %v520 = vld [vmem:[%s458 + $0x10] sm:$0xff]
        %v521 = vld [vmem:[%s458 + $0x18] sm:$0xff]
        %v522 = vld [vmem:[%s458 + $0x20] sm:$0xff]
        %v523 = vld [vmem:[%s458 + $0x28] sm:$0xff]
        %v524 = vld [vmem:[%s458 + $0x30] sm:$0xff]
        %v525 = vld [vmem:[%s458 + $0x38] sm:$0xff]
        %v526 = vld [vmem:[%s458 + $0x40] sm:$0xff]
        %v527 = vld [vmem:[%s458 + $0x48] sm:$0xff]
        %v528 = vld [vmem:[%s458 + $0x50] sm:$0xff]
        %v529 = vld [vmem:[%s458 + $0x58] sm:$0xff]
        %v530 = vld [vmem:[%s458 + $0x60] sm:$0xff]
        %v531 = vld [vmem:[%s458 + $0x68] sm:$0xff]
        %v532 = vld [vmem:[%s458 + $0x70] sm:$0xff]
        %v533 = vld [vmem:[%s458 + $0x78] sm:$0xff]
        %v534 = vld [vmem:[%s1] sm:$0x1]
        %v535 = vld [vmem:[%s2] sm:$0x1]
        %536 = vadd.xlane.f32.xlu0 %v518
        %v537 = vpop.xlane.xlu0 %536
        %538 = vadd.xlane.f32.xlu0 %v519
        %v539 = vpop.xlane.xlu0 %538
        %540 = vadd.xlane.f32.xlu0 %v520
        %v541 = vpop.xlane.xlu0 %540
        %542 = vadd.xlane.f32.xlu0 %v521
        %v543 = vpop.xlane.xlu0 %542
        %544 = vadd.xlane.f32.xlu0 %v522
        %v545 = vpop.xlane.xlu0 %544
        %546 = vadd.xlane.f32.xlu0 %v523
        %v547 = vpop.xlane.xlu0 %546
        %548 = vadd.xlane.f32.xlu0 %v524
        %v549 = vpop.xlane.xlu0 %548
        %550 = vadd.xlane.f32.xlu0 %v525
        %v551 = vpop.xlane.xlu0 %550
        %552 = vadd.xlane.f32.xlu0 %v526
        %v553 = vpop.xlane.xlu0 %552
        %554 = vadd.xlane.f32.xlu0 %v527
        %v555 = vpop.xlane.xlu0 %554
        %556 = vadd.xlane.f32.xlu0 %v528
        %v557 = vpop.xlane.xlu0 %556
        %558 = vadd.xlane.f32.xlu0 %v529
        %v559 = vpop.xlane.xlu0 %558
        %560 = vadd.xlane.f32.xlu0 %v530
        %v561 = vpop.xlane.xlu0 %560
        %562 = vadd.xlane.f32.xlu0 %v531
        %v563 = vpop.xlane.xlu0 %562
        %564 = vadd.xlane.f32.xlu0 %v532
        %v565 = vpop.xlane.xlu0 %564
        %566 = vadd.xlane.f32.xlu0 %v533
        %v567 = vpop.xlane.xlu0 %566
        %v568 = vmul.f32 %v537, 0.0078125
        %v569 = vmul.f32 %v539, 0.0078125
        %v570 = vmul.f32 %v541, 0.0078125
        %v571 = vmul.f32 %v543, 0.0078125
        %v572 = vmul.f32 %v545, 0.0078125
        %v573 = vmul.f32 %v547, 0.0078125
        %v574 = vmul.f32 %v549, 0.0078125
        %v575 = vmul.f32 %v551, 0.0078125
        %v576 = vmul.f32 %v553, 0.0078125
        %v577 = vmul.f32 %v555, 0.0078125
        %v578 = vmul.f32 %v557, 0.0078125
        %v579 = vmul.f32 %v559, 0.0078125
        %v580 = vmul.f32 %v561, 0.0078125
        %v581 = vmul.f32 %v563, 0.0078125
        %v582 = vmul.f32 %v565, 0.0078125
        %v583 = vmul.f32 %v567, 0.0078125
        %v584 = vsub.f32 %v518, %v568
        %v585 = vsub.f32 %v519, %v569
        %v586 = vsub.f32 %v520, %v570
        %v587 = vsub.f32 %v521, %v571
        %v588 = vsub.f32 %v522, %v572
        %v589 = vsub.f32 %v523, %v573
        %v590 = vsub.f32 %v524, %v574
        %v591 = vsub.f32 %v525, %v575
        %v592 = vsub.f32 %v526, %v576
        %v593 = vsub.f32 %v527, %v577
        %v594 = vsub.f32 %v528, %v578
        %v595 = vsub.f32 %v529, %v579
        %v596 = vsub.f32 %v530, %v580
        %v597 = vsub.f32 %v531, %v581
        %v598 = vsub.f32 %v532, %v582
        %v599 = vsub.f32 %v533, %v583
        %v600 = vmul.f32 %v584, %v584
        %v601 = vmul.f32 %v585, %v585
        %v602 = vmul.f32 %v586, %v586
        %v603 = vmul.f32 %v587, %v587
        %v604 = vmul.f32 %v588, %v588
        %v605 = vmul.f32 %v589, %v589
        %v606 = vmul.f32 %v590, %v590
        %v607 = vmul.f32 %v591, %v591
        %v608 = vmul.f32 %v592, %v592
        %v609 = vmul.f32 %v593, %v593
        %v610 = vmul.f32 %v594, %v594
        %v611 = vmul.f32 %v595, %v595
        %v612 = vmul.f32 %v596, %v596
        %v613 = vmul.f32 %v597, %v597
        %v614 = vmul.f32 %v598, %v598
        %v615 = vmul.f32 %v599, %v599
        %616 = vadd.xlane.f32.xlu0 %v600
        %v617 = vpop.xlane.xlu0 %616
        %618 = vadd.xlane.f32.xlu0 %v601
        %v619 = vpop.xlane.xlu0 %618
        %620 = vadd.xlane.f32.xlu0 %v602
        %v621 = vpop.xlane.xlu0 %620
        %622 = vadd.xlane.f32.xlu0 %v603
        %v623 = vpop.xlane.xlu0 %622
        %624 = vadd.xlane.f32.xlu0 %v604
        %v625 = vpop.xlane.xlu0 %624
        %626 = vadd.xlane.f32.xlu0 %v605
        %v627 = vpop.xlane.xlu0 %626
        %628 = vadd.xlane.f32.xlu0 %v606
        %v629 = vpop.xlane.xlu0 %628
        %630 = vadd.xlane.f32.xlu0 %v607
        %v631 = vpop.xlane.xlu0 %630
        %632 = vadd.xlane.f32.xlu0 %v608
        %v633 = vpop.xlane.xlu0 %632
        %634 = vadd.xlane.f32.xlu0 %v609
        %v635 = vpop.xlane.xlu0 %634
        %636 = vadd.xlane.f32.xlu0 %v610
        %v637 = vpop.xlane.xlu0 %636
        %638 = vadd.xlane.f32.xlu0 %v611
        %v639 = vpop.xlane.xlu0 %638
        %640 = vadd.xlane.f32.xlu0 %v612
        %v641 = vpop.xlane.xlu0 %640
        %642 = vadd.xlane.f32.xlu0 %v613
        %v643 = vpop.xlane.xlu0 %642
        %644 = vadd.xlane.f32.xlu0 %v614
        %v645 = vpop.xlane.xlu0 %644
        %646 = vadd.xlane.f32.xlu0 %v615
        %v647 = vpop.xlane.xlu0 %646
        %v648 = vmul.f32 %v617, 0.0078125
        %v649 = vmul.f32 %v619, 0.0078125
        %v650 = vmul.f32 %v621, 0.0078125
        %v651 = vmul.f32 %v623, 0.0078125
        %v652 = vmul.f32 %v625, 0.0078125
        %v653 = vmul.f32 %v627, 0.0078125
        %v654 = vmul.f32 %v629, 0.0078125
        %v655 = vmul.f32 %v631, 0.0078125
        %v656 = vmul.f32 %v633, 0.0078125
        %v657 = vmul.f32 %v635, 0.0078125
        %v658 = vmul.f32 %v637, 0.0078125
        %v659 = vmul.f32 %v639, 0.0078125
        %v660 = vmul.f32 %v641, 0.0078125
        %v661 = vmul.f32 %v643, 0.0078125
        %v662 = vmul.f32 %v645, 0.0078125
        %v663 = vmul.f32 %v647, 0.0078125
        %v664 = vadd.f32 %v648, 1e-05
        %v665 = vadd.f32 %v649, 1e-05
        %v666 = vadd.f32 %v650, 1e-05
        %v667 = vadd.f32 %v651, 1e-05
        %v668 = vadd.f32 %v652, 1e-05
        %v669 = vadd.f32 %v653, 1e-05
        %v670 = vadd.f32 %v654, 1e-05
        %v671 = vadd.f32 %v655, 1e-05
        %v672 = vadd.f32 %v656, 1e-05
        %v673 = vadd.f32 %v657, 1e-05
        %v674 = vadd.f32 %v658, 1e-05
        %v675 = vadd.f32 %v659, 1e-05
        %v676 = vadd.f32 %v660, 1e-05
        %v677 = vadd.f32 %v661, 1e-05
        %v678 = vadd.f32 %v662, 1e-05
        %v679 = vadd.f32 %v663, 1e-05
        %v680 = vrsqrt.pop %v664
        %v681 = vrsqrt.pop %v665
        %v682 = vrsqrt.pop %v666
        %v683 = vrsqrt.pop %v667
        %v684 = vrsqrt.pop %v668
        %v685 = vrsqrt.pop %v669
        %v686 = vrsqrt.pop %v670
        %v687 = vrsqrt.pop %v671
        %v688 = vrsqrt.pop %v672
        %v689 = vrsqrt.pop %v673
        %v690 = vrsqrt.pop %v674
        %v691 = vrsqrt.pop %v675
        %v692 = vrsqrt.pop %v676
        %v693 = vrsqrt.pop %v677
        %v694 = vrsqrt.pop %v678
        %v695 = vrsqrt.pop %v679
        %v696 = vmul.f32 %v584, %v680
        %v697 = vmul.f32 %v585, %v681
        %v698 = vmul.f32 %v586, %v682
        %v699 = vmul.f32 %v587, %v683
        %v700 = vmul.f32 %v588, %v684
        %v701 = vmul.f32 %v589, %v685
        %v702 = vmul.f32 %v590, %v686
        %v703 = vmul.f32 %v591, %v687
        %v704 = vmul.f32 %v592, %v688
        %v705 = vmul.f32 %v593, %v689
        %v706 = vmul.f32 %v594, %v690
        %v707 = vmul.f32 %v595, %v691
        %v708 = vmul.f32 %v596, %v692
        %v709 = vmul.f32 %v597, %v693
        %v710 = vmul.f32 %v598, %v694
        %v711 = vmul.f32 %v599, %v695
        %v713 = vlaneseq
        %v714 = vshrl.u32 %v713, 7
        %v715 = vsub.s32 0, %v714
        %v716 = vrot.slane %v534, %v715
        %v718 = vmul.f32 %v696, %v716
        %v719 = vmul.f32 %v697, %v716
        %v720 = vmul.f32 %v698, %v716
        %v721 = vmul.f32 %v699, %v716
        %v722 = vmul.f32 %v700, %v716
        %v723 = vmul.f32 %v701, %v716
        %v724 = vmul.f32 %v702, %v716
        %v725 = vmul.f32 %v703, %v716
        %v726 = vmul.f32 %v704, %v716
        %v727 = vmul.f32 %v705, %v716
        %v728 = vmul.f32 %v706, %v716
        %v729 = vmul.f32 %v707, %v716
        %v730 = vmul.f32 %v708, %v716
        %v731 = vmul.f32 %v709, %v716
        %v732 = vmul.f32 %v710, %v716
        %v733 = vmul.f32 %v711, %v716
        %v735 = vlaneseq
        %v736 = vshrl.u32 %v735, 7
        %v737 = vsub.s32 0, %v736
        %v738 = vrot.slane %v535, %v737
        %v740 = vadd.f32 %v718, %v738
        %v741 = vadd.f32 %v719, %v738
        %v742 = vadd.f32 %v720, %v738
        %v743 = vadd.f32 %v721, %v738
        %v744 = vadd.f32 %v722, %v738
        %v745 = vadd.f32 %v723, %v738
        %v746 = vadd.f32 %v724, %v738
        %v747 = vadd.f32 %v725, %v738
        %v748 = vadd.f32 %v726, %v738
        %v749 = vadd.f32 %v727, %v738
        %v750 = vadd.f32 %v728, %v738
        %v751 = vadd.f32 %v729, %v738
        %v752 = vadd.f32 %v730, %v738
        %v753 = vadd.f32 %v731, %v738
        %v754 = vadd.f32 %v732, %v738
        %v755 = vadd.f32 %v733, %v738
        %v756 = vpack.c.bf16 %v741, %v740
        %v757 = vpack.c.bf16 %v743, %v742
        %v758 = vpack.c.bf16 %v745, %v744
        %v759 = vpack.c.bf16 %v747, %v746
        %v760 = vpack.c.bf16 %v749, %v748
        %v761 = vpack.c.bf16 %v751, %v750
        %v762 = vpack.c.bf16 %v753, %v752
        %v763 = vpack.c.bf16 %v755, %v754
        %v764 = vld [vmem:[#allocation5] sm:$0xff]
        %v765 = vld [vmem:[#allocation5 + $0x8] sm:$0xf]
        %v766 = vld [vmem:[#allocation5 + $0xc] sm:$0xff]
        %v767 = vld [vmem:[#allocation5 + $0x14] sm:$0xf]
        %v768 = vld [vmem:[#allocation5 + $0x18] sm:$0xff]
        %v769 = vld [vmem:[#allocation5 + $0x20] sm:$0xf]
        %v770 = vld [vmem:[#allocation5 + $0x24] sm:$0xff]
        %v771 = vld [vmem:[#allocation5 + $0x2c] sm:$0xf]
        %v772 = vld [vmem:[#allocation5 + $0x30] sm:$0xff]
        %v773 = vld [vmem:[#allocation5 + $0x38] sm:$0xf]
        %v774 = vld [vmem:[#allocation5 + $0x3c] sm:$0xff]
        %v775 = vld [vmem:[#allocation5 + $0x44] sm:$0xf]
        %v776 = vld [vmem:[#allocation5 + $0x48] sm:$0xff]
        %v777 = vld [vmem:[#allocation5 + $0x50] sm:$0xf]
        %v778 = vld [vmem:[#allocation5 + $0x54] sm:$0xff]
        %v779 = vld [vmem:[#allocation5 + $0x5c] sm:$0xf]
        %v780 = vld [vmem:[#allocation5 + $0x60] sm:$0xff]
        %v781 = vld [vmem:[#allocation5 + $0x68] sm:$0xf]
        %v782 = vld [vmem:[#allocation5 + $0x6c] sm:$0xff]
        %v783 = vld [vmem:[#allocation5 + $0x74] sm:$0xf]
        %v784 = vld [vmem:[#allocation5 + $0x78] sm:$0xff]
        %v785 = vld [vmem:[#allocation5 + $0x80] sm:$0xf]
        %v786 = vld [vmem:[#allocation5 + $0x84] sm:$0xff]
        %v787 = vld [vmem:[#allocation5 + $0x8c] sm:$0xf]
        %v788 = vld [vmem:[#allocation5 + $0x90] sm:$0xff]
        %v789 = vld [vmem:[#allocation5 + $0x98] sm:$0xf]
        %v790 = vld [vmem:[#allocation5 + $0x9c] sm:$0xff]
        %v791 = vld [vmem:[#allocation5 + $0xa4] sm:$0xf]
        %v792 = vld [vmem:[#allocation5 + $0xa8] sm:$0xff]
        %v793 = vld [vmem:[#allocation5 + $0xb0] sm:$0xf]
        %v794 = vld [vmem:[#allocation5 + $0xb4] sm:$0xff]
        %v795 = vld [vmem:[#allocation5 + $0xbc] sm:$0xf]
        %v796 = vld [vmem:[%s4] sm:$0x7]
        %v798 = vlaneseq
        %v799 = vshrl.u32 %v798, 7
        %v800 = vsub.s32 0, %v799
        %v801 = vrot.slane %v796, %v800
        %v802 = vlaneseq
        %v803 = vshrl.u32 %v802, 7
        %v804 = vsub.s32 1, %v803
        %v805 = vrot.slane %v796, %v804
        %v806 = vlaneseq
        %v807 = vshrl.u32 %v806, 7
        %v808 = vsub.s32 2, %v807
        %v809 = vrot.slane %v796, %v808
        %v845 = vunpack.c.l.b16 %v764
        %v846 = vunpack.c.h.b16 %v764
        %v847 = vunpack.c.l.b16 %v765
        %v848 = vunpack.c.l.b16 %v766
        %v849 = vunpack.c.h.b16 %v766
        %v850 = vunpack.c.l.b16 %v767
        %v851 = vunpack.c.l.b16 %v768
        %v852 = vunpack.c.h.b16 %v768
        %v853 = vunpack.c.l.b16 %v769
        %v854 = vunpack.c.l.b16 %v770
        %v855 = vunpack.c.h.b16 %v770
        %v856 = vunpack.c.l.b16 %v771
        %v857 = vunpack.c.l.b16 %v772
        %v858 = vunpack.c.h.b16 %v772
        %v859 = vunpack.c.l.b16 %v773
        %v860 = vunpack.c.l.b16 %v774
        %v861 = vunpack.c.h.b16 %v774
        %v862 = vunpack.c.l.b16 %v775
        %v863 = vunpack.c.l.b16 %v776
        %v864 = vunpack.c.h.b16 %v776
        %v865 = vunpack.c.l.b16 %v777
        %v866 = vunpack.c.l.b16 %v778
        %v867 = vunpack.c.h.b16 %v778
        %v868 = vunpack.c.l.b16 %v779
        %v869 = vunpack.c.l.b16 %v780
        %v870 = vunpack.c.h.b16 %v780
        %v871 = vunpack.c.l.b16 %v781
        %v872 = vunpack.c.l.b16 %v782
        %v873 = vunpack.c.h.b16 %v782
        %v874 = vunpack.c.l.b16 %v783
        %v875 = vunpack.c.l.b16 %v784
        %v876 = vunpack.c.h.b16 %v784
        %v877 = vunpack.c.l.b16 %v785
        %v878 = vunpack.c.l.b16 %v786
        %v879 = vunpack.c.h.b16 %v786
        %v880 = vunpack.c.l.b16 %v787
        %v881 = vunpack.c.l.b16 %v788
        %v882 = vunpack.c.h.b16 %v788
        %v883 = vunpack.c.l.b16 %v789
        %v884 = vunpack.c.l.b16 %v790
        %v885 = vunpack.c.h.b16 %v790
        %v886 = vunpack.c.l.b16 %v791
        %v887 = vunpack.c.l.b16 %v792
        %v888 = vunpack.c.h.b16 %v792
        %v889 = vunpack.c.l.b16 %v793
        %v890 = vunpack.c.l.b16 %v794
        %v891 = vunpack.c.h.b16 %v794
        %v892 = vunpack.c.l.b16 %v795
        %v893 = vpack.c.b16 %v848, %v845
        %v894 = vpack.c.b16 %v849, %v846
        %v895 = vpack.c.b16 %v850, %v847
        %v896 = vpack.c.b16 %v854, %v851
        %v897 = vpack.c.b16 %v855, %v852
        %v898 = vpack.c.b16 %v856, %v853
        %v899 = vpack.c.b16 %v860, %v857
        %v900 = vpack.c.b16 %v861, %v858
        %v901 = vpack.c.b16 %v862, %v859
        %v902 = vpack.c.b16 %v866, %v863
        %v903 = vpack.c.b16 %v867, %v864
        %v904 = vpack.c.b16 %v868, %v865
        %v905 = vpack.c.b16 %v872, %v869
        %v906 = vpack.c.b16 %v873, %v870
        %v907 = vpack.c.b16 %v874, %v871
        %v908 = vpack.c.b16 %v878, %v875
        %v909 = vpack.c.b16 %v879, %v876
        %v910 = vpack.c.b16 %v880, %v877
        %v911 = vpack.c.b16 %v884, %v881
        %v912 = vpack.c.b16 %v885, %v882
        %v913 = vpack.c.b16 %v886, %v883
        %v914 = vpack.c.b16 %v890, %v887
        %v915 = vpack.c.b16 %v891, %v888
        %v916 = vpack.c.b16 %v892, %v889
        %941 = vmatprep.subr.bf16.mxu0 %v894
        %942 = vmatpush1.bf16.msra.mxu0 %v893
        %943 = vmatprep.subr.bf16.mxu0 %v897
        %944 = vmatpush1.bf16.msra.mxu0 %v896
        %945 = vmatprep.subr.bf16.mxu0 %v900
        %946 = vmatpush1.bf16.msra.mxu0 %v899
        %947 = vmatprep.subr.bf16.mxu0 %v903
        %948 = vmatpush1.bf16.msra.mxu0 %v902
        %949 = vmatprep.subr.bf16.mxu0 %v906
        %950 = vmatpush1.bf16.msra.mxu0 %v905
        %951 = vmatprep.subr.bf16.mxu0 %v909
        %952 = vmatpush1.bf16.msra.mxu0 %v908
        %953 = vmatprep.subr.bf16.mxu0 %v912
        %954 = vmatpush1.bf16.msra.mxu0 %v911
        %955 = vmatprep.subr.bf16.mxu0 %v915
        %956 = vmatpush1.bf16.msra.mxu0 %v914
        %957 = vmatprep.subr.bf16.mxu0 0
        %958 = vmatpush1.bf16.msra.mxu0 0
        %959 = vmatprep.subr.bf16.mxu0 0
        %960 = vmatpush1.bf16.msra.mxu0 0
        %961 = vmatprep.subr.bf16.mxu0 0
        %962 = vmatpush1.bf16.msra.mxu0 0
        %963 = vmatprep.subr.bf16.mxu0 0
        %964 = vmatpush1.bf16.msra.mxu0 0
        %965 = vmatprep.subr.bf16.mxu0 0
        %966 = vmatpush1.bf16.msra.mxu0 0
        %967 = vmatprep.subr.bf16.mxu0 0
        %968 = vmatpush1.bf16.msra.mxu0 0
        %969 = vmatprep.subr.bf16.mxu0 0
        %970 = vmatpush1.bf16.msra.mxu0 0
        %971 = vmatprep.subr.bf16.mxu0 0
        %972 = vmatpush1.bf16.msra.mxu0 0
        %973 = vmatprep.mubr.bf16.mxu0 0
        %974 = vmatmul.mubr.bf16.gmra.mrb[0].mxu0 %v756
        %v975 = vpop.f32.mrb[0].mxu0
        %v976 = vadd.f32 %v801, %v975
        %v977 = vpop.f32.mrb[0].mxu0
        %v978 = vadd.f32 %v805, %v977
        %v979 = vpop.f32.mrb[0].mxu0
        %v980 = vadd.f32 %v801, %v979
        %v981 = vpop.f32.mrb[0].mxu0
        %v982 = vadd.f32 %v805, %v981
        %983 = vmatprep.mubr.bf16.mxu0 0
        %984 = vmatmul.mubr.bf16.gmra.mrb[0].mxu0 %v757
        %v985 = vpop.f32.mrb[0].mxu0
        %v986 = vadd.f32 %v801, %v985
        %v987 = vpop.f32.mrb[0].mxu0
        %v988 = vadd.f32 %v805, %v987
        %v989 = vpop.f32.mrb[0].mxu0
        %v990 = vadd.f32 %v801, %v989
        %v991 = vpop.f32.mrb[0].mxu0
        %v992 = vadd.f32 %v805, %v991
        %993 = vmatprep.mubr.bf16.mxu0 0
        %994 = vmatmul.mubr.bf16.gmra.mrb[0].mxu0 %v758
        %v995 = vpop.f32.mrb[0].mxu0
        %v996 = vadd.f32 %v801, %v995
        %v997 = vpop.f32.mrb[0].mxu0
        %v998 = vadd.f32 %v805, %v997
        %v999 = vpop.f32.mrb[0].mxu0
        %v1000 = vadd.f32 %v801, %v999
        %v1001 = vpop.f32.mrb[0].mxu0
        %v1002 = vadd.f32 %v805, %v1001
        %1003 = vmatprep.mubr.bf16.mxu0 0
        %1004 = vmatmul.mubr.bf16.gmra.mrb[0].mxu0 %v759
        %v1005 = vpop.f32.mrb[0].mxu0
        %v1006 = vadd.f32 %v801, %v1005
        %v1007 = vpop.f32.mrb[0].mxu0
        %v1008 = vadd.f32 %v805, %v1007
        %v1009 = vpop.f32.mrb[0].mxu0
        %v1010 = vadd.f32 %v801, %v1009
        %v1011 = vpop.f32.mrb[0].mxu0
        %v1012 = vadd.f32 %v805, %v1011
        %1013 = vmatprep.mubr.bf16.mxu0 0
        %1014 = vmatmul.mubr.bf16.gmra.mrb[0].mxu0 %v760
        %v1015 = vpop.f32.mrb[0].mxu0
        %v1016 = vadd.f32 %v801, %v1015
        %v1017 = vpop.f32.mrb[0].mxu0
        %v1018 = vadd.f32 %v805, %v1017
        %v1019 = vpop.f32.mrb[0].mxu0
        %v1020 = vadd.f32 %v801, %v1019
        %v1021 = vpop.f32.mrb[0].mxu0
        %v1022 = vadd.f32 %v805, %v1021
        %1023 = vmatprep.mubr.bf16.mxu0 0
        %1024 = vmatmul.mubr.bf16.gmra.mrb[0].mxu0 %v761
        %v1025 = vpop.f32.mrb[0].mxu0
        %v1026 = vadd.f32 %v801, %v1025
        %v1027 = vpop.f32.mrb[0].mxu0
        %v1028 = vadd.f32 %v805, %v1027
        %v1029 = vpop.f32.mrb[0].mxu0
        %v1030 = vadd.f32 %v801, %v1029
        %v1031 = vpop.f32.mrb[0].mxu0
        %v1032 = vadd.f32 %v805, %v1031
        %1033 = vmatprep.mubr.bf16.mxu0 0
        %1034 = vmatmul.mubr.bf16.gmra.mrb[0].mxu0 %v762
        %v1035 = vpop.f32.mrb[0].mxu0
        %v1036 = vadd.f32 %v801, %v1035
        %v1037 = vpop.f32.mrb[0].mxu0
        %v1038 = vadd.f32 %v805, %v1037
        %v1039 = vpop.f32.mrb[0].mxu0
        %v1040 = vadd.f32 %v801, %v1039
        %v1041 = vpop.f32.mrb[0].mxu0
        %v1042 = vadd.f32 %v805, %v1041
        %1043 = vmatprep.mubr.bf16.mxu0 0
        %1044 = vmatmul.mubr.bf16.gmra.mrb[0].mxu0 %v763
        %v1045 = vpop.f32.mrb[0].mxu0
        %v1046 = vadd.f32 %v801, %v1045
        %v1047 = vpop.f32.mrb[0].mxu0
        %v1048 = vadd.f32 %v805, %v1047
        %v1049 = vpop.f32.mrb[0].mxu0
        %v1050 = vadd.f32 %v801, %v1049
        %v1051 = vpop.f32.mrb[0].mxu0
        %v1052 = vadd.f32 %v805, %v1051
        %1053 = vdwg.mxu0
        %1054 = vmatprep.subr.bf16.mxu0 0
        %1055 = vmatpush1.bf16.msra.mxu0 %v895
        %1056 = vmatprep.subr.bf16.mxu0 0
        %1057 = vmatpush1.bf16.msra.mxu0 %v898
        %1058 = vmatprep.subr.bf16.mxu0 0
        %1059 = vmatpush1.bf16.msra.mxu0 %v901
        %1060 = vmatprep.subr.bf16.mxu0 0
        %1061 = vmatpush1.bf16.msra.mxu0 %v904
        %1062 = vmatprep.subr.bf16.mxu0 0
        %1063 = vmatpush1.bf16.msra.mxu0 %v907
        %1064 = vmatprep.subr.bf16.mxu0 0
        %1065 = vmatpush1.bf16.msra.mxu0 %v910
        %1066 = vmatprep.subr.bf16.mxu0 0
        %1067 = vmatpush1.bf16.msra.mxu0 %v913
        %1068 = vmatprep.subr.bf16.mxu0 0
        %1069 = vmatpush1.bf16.msra.mxu0 %v916
        %1070 = vmatprep.subr.bf16.mxu0 0
        %1071 = vmatpush1.bf16.msra.mxu0 0
        %1072 = vmatprep.subr.bf16.mxu0 0
        %1073 = vmatpush1.bf16.msra.mxu0 0
        %1074 = vmatprep.subr.bf16.mxu0 0
        %1075 = vmatpush1.bf16.msra.mxu0 0
        %1076 = vmatprep.subr.bf16.mxu0 0
        %1077 = vmatpush1.bf16.msra.mxu0 0
        %1078 = vmatprep.subr.bf16.mxu0 0
        %1079 = vmatpush1.bf16.msra.mxu0 0
        %1080 = vmatprep.subr.bf16.mxu0 0
        %1081 = vmatpush1.bf16.msra.mxu0 0
        %1082 = vmatprep.subr.bf16.mxu0 0
        %1083 = vmatpush1.bf16.msra.mxu0 0
        %1084 = vmatprep.subr.bf16.mxu0 0
        %1085 = vmatpush1.bf16.msra.mxu0 0
        %1086 = vmatprep.mubr.bf16.mxu0 0
        %1087 = vmatmul.mubr.bf16.gmra.mrb[0].mxu0 %v756
        %v1088 = vpop.f32.mrb[0].mxu0
        %v1089 = vadd.f32 %v809, %v1088
        %v1090 = vpop.f32.mrb[0].mxu0
        %v1091 = vpop.f32.mrb[0].mxu0
        %v1092 = vadd.f32 %v809, %v1091
        %v1093 = vpop.f32.mrb[0].mxu0
        %1094 = vmatprep.mubr.bf16.mxu0 0
        %1095 = vmatmul.mubr.bf16.gmra.mrb[0].mxu0 %v757
        %v1096 = vpop.f32.mrb[0].mxu0
        %v1097 = vadd.f32 %v809, %v1096
        %v1098 = vpop.f32.mrb[0].mxu0
        %v1099 = vpop.f32.mrb[0].mxu0
        %v1100 = vadd.f32 %v809, %v1099
        %v1101 = vpop.f32.mrb[0].mxu0
        %1102 = vmatprep.mubr.bf16.mxu0 0
        %1103 = vmatmul.mubr.bf16.gmra.mrb[0].mxu0 %v758
        %v1104 = vpop.f32.mrb[0].mxu0
        %v1105 = vadd.f32 %v809, %v1104
        %v1106 = vpop.f32.mrb[0].mxu0
        %v1107 = vpop.f32.mrb[0].mxu0
        %v1108 = vadd.f32 %v809, %v1107
        %v1109 = vpop.f32.mrb[0].mxu0
        %1110 = vmatprep.mubr.bf16.mxu0 0
        %1111 = vmatmul.mubr.bf16.gmra.mrb[0].mxu0 %v759
        %v1112 = vpop.f32.mrb[0].mxu0
        %v1113 = vadd.f32 %v809, %v1112
        %v1114 = vpop.f32.mrb[0].mxu0
        %v1115 = vpop.f32.mrb[0].mxu0
        %v1116 = vadd.f32 %v809, %v1115
        %v1117 = vpop.f32.mrb[0].mxu0
        %1118 = vmatprep.mubr.bf16.mxu0 0
        %1119 = vmatmul.mubr.bf16.gmra.mrb[0].mxu0 %v760
        %v1120 = vpop.f32.mrb[0].mxu0
        %v1121 = vadd.f32 %v809, %v1120
        %v1122 = vpop.f32.mrb[0].mxu0
        %v1123 = vpop.f32.mrb[0].mxu0
        %v1124 = vadd.f32 %v809, %v1123
        %v1125 = vpop.f32.mrb[0].mxu0
        %1126 = vmatprep.mubr.bf16.mxu0 0
        %1127 = vmatmul.mubr.bf16.gmra.mrb[0].mxu0 %v761
        %v1128 = vpop.f32.mrb[0].mxu0
        %v1129 = vadd.f32 %v809, %v1128
        %v1130 = vpop.f32.mrb[0].mxu0
        %v1131 = vpop.f32.mrb[0].mxu0
        %v1132 = vadd.f32 %v809, %v1131
        %v1133 = vpop.f32.mrb[0].mxu0
        %1134 = vmatprep.mubr.bf16.mxu0 0
        %1135 = vmatmul.mubr.bf16.gmra.mrb[0].mxu0 %v762
        %v1136 = vpop.f32.mrb[0].mxu0
        %v1137 = vadd.f32 %v809, %v1136
        %v1138 = vpop.f32.mrb[0].mxu0
        %v1139 = vpop.f32.mrb[0].mxu0
        %v1140 = vadd.f32 %v809, %v1139
        %v1141 = vpop.f32.mrb[0].mxu0
        %1142 = vmatprep.mubr.bf16.mxu0 0
        %1143 = vmatmul.mubr.bf16.gmra.mrb[0].mxu0 %v763
        %v1144 = vpop.f32.mrb[0].mxu0
        %v1145 = vadd.f32 %v809, %v1144
        %v1146 = vpop.f32.mrb[0].mxu0
        %v1147 = vpop.f32.mrb[0].mxu0
        %v1148 = vadd.f32 %v809, %v1147
        %v1149 = vpop.f32.mrb[0].mxu0
        %1150 = vdwg.mxu0
        %1151 = vxpose.xlu0.b32.start [1/16] %v976, 128
        %1152 = vxpose.xlu0.b32.cont [2/16] %v980, 128
        %1153 = vxpose.xlu0.b32.cont [3/16] %v986, 128
        %1154 = vxpose.xlu0.b32.cont [4/16] %v990, 128
        %1155 = vxpose.xlu0.b32.cont [5/16] %v996, 128
        %1156 = vxpose.xlu0.b32.cont [6/16] %v1000, 128
        %1157 = vxpose.xlu0.b32.cont [7/16] %v1006, 128
        %1158 = vxpose.xlu0.b32.cont [8/16] %v1010, 128
        %1159 = vxpose.xlu0.b32.cont [9/16] %v1016, 128
        %1160 = vxpose.xlu0.b32.cont [10/16] %v1020, 128
        %1161 = vxpose.xlu0.b32.cont [11/16] %v1026, 128
        %1162 = vxpose.xlu0.b32.cont [12/16] %v1030, 128
        %1163 = vxpose.xlu0.b32.cont [13/16] %v1036, 128
        %1164 = vxpose.xlu0.b32.cont [14/16] %v1040, 128
        %1165 = vxpose.xlu0.b32.cont [15/16] %v1046, 128
        %1166 = vxpose.xlu0.b32.end [16/16] %v1050, 128
        %v1167 = vpop.trf.xlu0
        %v1168 = vpop.trf.xlu0
        %v1169 = vpop.trf.xlu0
        %v1170 = vpop.trf.xlu0
        %v1171 = vpop.trf.xlu0
        %v1172 = vpop.trf.xlu0
        %v1173 = vpop.trf.xlu0
        %v1174 = vpop.trf.xlu0
        %v1175 = vpop.trf.xlu0
        %v1176 = vpop.trf.xlu0
        %v1177 = vpop.trf.xlu0
        %v1178 = vpop.trf.xlu0
        %v1179 = vpop.trf.xlu0
        %v1180 = vpop.trf.xlu0
        %v1181 = vpop.trf.xlu0
        %v1182 = vpop.trf.xlu0
        %1183 = vxpose.xlu0.b32.start [1/16] %v978, 128
        %1184 = vxpose.xlu0.b32.cont [2/16] %v982, 128
        %1185 = vxpose.xlu0.b32.cont [3/16] %v988, 128
        %1186 = vxpose.xlu0.b32.cont [4/16] %v992, 128
        %1187 = vxpose.xlu0.b32.cont [5/16] %v998, 128
        %1188 = vxpose.xlu0.b32.cont [6/16] %v1002, 128
        %1189 = vxpose.xlu0.b32.cont [7/16] %v1008, 128
        %1190 = vxpose.xlu0.b32.cont [8/16] %v1012, 128
        %1191 = vxpose.xlu0.b32.cont [9/16] %v1018, 128
        %1192 = vxpose.xlu0.b32.cont [10/16] %v1022, 128
        %1193 = vxpose.xlu0.b32.cont [11/16] %v1028, 128
        %1194 = vxpose.xlu0.b32.cont [12/16] %v1032, 128
        %1195 = vxpose.xlu0.b32.cont [13/16] %v1038, 128
        %1196 = vxpose.xlu0.b32.cont [14/16] %v1042, 128
        %1197 = vxpose.xlu0.b32.cont [15/16] %v1048, 128
        %1198 = vxpose.xlu0.b32.end [16/16] %v1052, 128
        %v1199 = vpop.trf.xlu0
        %v1200 = vpop.trf.xlu0
        %v1201 = vpop.trf.xlu0
        %v1202 = vpop.trf.xlu0
        %v1203 = vpop.trf.xlu0
        %v1204 = vpop.trf.xlu0
        %v1205 = vpop.trf.xlu0
        %v1206 = vpop.trf.xlu0
        %v1207 = vpop.trf.xlu0
        %v1208 = vpop.trf.xlu0
        %v1209 = vpop.trf.xlu0
        %v1210 = vpop.trf.xlu0
        %v1211 = vpop.trf.xlu0
        %v1212 = vpop.trf.xlu0
        %v1213 = vpop.trf.xlu0
        %v1214 = vpop.trf.xlu0
        %1215 = vxpose.xlu0.b32.start [1/16] %v1089, 128
        %1216 = vxpose.xlu0.b32.cont [2/16] %v1092, 128
        %1217 = vxpose.xlu0.b32.cont [3/16] %v1097, 128
        %1218 = vxpose.xlu0.b32.cont [4/16] %v1100, 128
        %1219 = vxpose.xlu0.b32.cont [5/16] %v1105, 128
        %1220 = vxpose.xlu0.b32.cont [6/16] %v1108, 128
        %1221 = vxpose.xlu0.b32.cont [7/16] %v1113, 128
        %1222 = vxpose.xlu0.b32.cont [8/16] %v1116, 128
        %1223 = vxpose.xlu0.b32.cont [9/16] %v1121, 128
        %1224 = vxpose.xlu0.b32.cont [10/16] %v1124, 128
        %1225 = vxpose.xlu0.b32.cont [11/16] %v1129, 128
        %1226 = vxpose.xlu0.b32.cont [12/16] %v1132, 128
        %1227 = vxpose.xlu0.b32.cont [13/16] %v1137, 128
        %1228 = vxpose.xlu0.b32.cont [14/16] %v1140, 128
        %1229 = vxpose.xlu0.b32.cont [15/16] %v1145, 128
        %1230 = vxpose.xlu0.b32.end [16/16] %v1148, 128
        %v1231 = vpop.trf.xlu0
        %v1232 = vpop.trf.xlu0
        %v1233 = vpop.trf.xlu0
        %v1234 = vpop.trf.xlu0
        %v1235 = vpop.trf.xlu0
        %v1236 = vpop.trf.xlu0
        %v1237 = vpop.trf.xlu0
        %v1238 = vpop.trf.xlu0
        %v1239 = vpop.trf.xlu0
        %v1240 = vpop.trf.xlu0
        %v1241 = vpop.trf.xlu0
        %v1242 = vpop.trf.xlu0
        %v1243 = vpop.trf.xlu0
        %v1244 = vpop.trf.xlu0
        %v1245 = vpop.trf.xlu0
        %v1246 = vpop.trf.xlu0
        %1247 = vxpose.xlu0.b32.start [1/16] %v1167, 128
        %1248 = vxpose.xlu0.b32.cont [2/16] %v1168, 128
        %1249 = vxpose.xlu0.b32.cont [3/16] %v1169, 128
        %1250 = vxpose.xlu0.b32.cont [4/16] %v1170, 128
        %1251 = vxpose.xlu0.b32.cont [5/16] 0.0, 128
        %1252 = vxpose.xlu0.b32.cont [6/16] 0.0, 128
        %1253 = vxpose.xlu0.b32.cont [7/16] 0.0, 128
        %1254 = vxpose.xlu0.b32.cont [8/16] 0.0, 128
        %1255 = vxpose.xlu0.b32.cont [9/16] 0.0, 128
        %1256 = vxpose.xlu0.b32.cont [10/16] 0.0, 128
        %1257 = vxpose.xlu0.b32.cont [11/16] 0.0, 128
        %1258 = vxpose.xlu0.b32.cont [12/16] 0.0, 128
        %1259 = vxpose.xlu0.b32.cont [13/16] 0.0, 128
        %1260 = vxpose.xlu0.b32.cont [14/16] 0.0, 128
        %1261 = vxpose.xlu0.b32.cont [15/16] 0.0, 128
        %1262 = vxpose.xlu0.b32.end [16/16] 0.0, 128
        %v1263 = vpop.trf.xlu0
        %v1264 = vpop.trf.xlu0
        %v1265 = vpop.trf.xlu0
        %v1266 = vpop.trf.xlu0
        %v1267 = vpop.trf.xlu0
        %v1268 = vpop.trf.xlu0
        %v1269 = vpop.trf.xlu0
        %v1270 = vpop.trf.xlu0
        %v1271 = vpop.trf.xlu0
        %v1272 = vpop.trf.xlu0
        %v1273 = vpop.trf.xlu0
        %v1274 = vpop.trf.xlu0
        %v1275 = vpop.trf.xlu0
        %v1276 = vpop.trf.xlu0
        %v1277 = vpop.trf.xlu0
        %v1278 = vpop.trf.xlu0
        %1279 = vxpose.xlu0.b32.start [1/16] %v1171, 128
        %1280 = vxpose.xlu0.b32.cont [2/16] %v1172, 128
        %1281 = vxpose.xlu0.b32.cont [3/16] %v1173, 128
        %1282 = vxpose.xlu0.b32.cont [4/16] %v1174, 128
        %1283 = vxpose.xlu0.b32.cont [5/16] 0.0, 128
        %1284 = vxpose.xlu0.b32.cont [6/16] 0.0, 128
        %1285 = vxpose.xlu0.b32.cont [7/16] 0.0, 128
        %1286 = vxpose.xlu0.b32.cont [8/16] 0.0, 128
        %1287 = vxpose.xlu0.b32.cont [9/16] 0.0, 128
        %1288 = vxpose.xlu0.b32.cont [10/16] 0.0, 128
        %1289 = vxpose.xlu0.b32.cont [11/16] 0.0, 128
        %1290 = vxpose.xlu0.b32.cont [12/16] 0.0, 128
        %1291 = vxpose.xlu0.b32.cont [13/16] 0.0, 128
        %1292 = vxpose.xlu0.b32.cont [14/16] 0.0, 128
        %1293 = vxpose.xlu0.b32.cont [15/16] 0.0, 128
        %1294 = vxpose.xlu0.b32.end [16/16] 0.0, 128
        %v1295 = vpop.trf.xlu0
        %v1296 = vpop.trf.xlu0
        %v1297 = vpop.trf.xlu0
        %v1298 = vpop.trf.xlu0
        %v1299 = vpop.trf.xlu0
        %v1300 = vpop.trf.xlu0
        %v1301 = vpop.trf.xlu0
        %v1302 = vpop.trf.xlu0
        %v1303 = vpop.trf.xlu0
        %v1304 = vpop.trf.xlu0
        %v1305 = vpop.trf.xlu0
        %v1306 = vpop.trf.xlu0
        %v1307 = vpop.trf.xlu0
        %v1308 = vpop.trf.xlu0
        %v1309 = vpop.trf.xlu0
        %v1310 = vpop.trf.xlu0
        %1311 = vxpose.xlu0.b32.start [1/16] %v1175, 128
        %1312 = vxpose.xlu0.b32.cont [2/16] %v1176, 128
        %1313 = vxpose.xlu0.b32.cont [3/16] %v1177, 128
        %1314 = vxpose.xlu0.b32.cont [4/16] %v1178, 128
        %1315 = vxpose.xlu0.b32.cont [5/16] 0.0, 128
        %1316 = vxpose.xlu0.b32.cont [6/16] 0.0, 128
        %1317 = vxpose.xlu0.b32.cont [7/16] 0.0, 128
        %1318 = vxpose.xlu0.b32.cont [8/16] 0.0, 128
        %1319 = vxpose.xlu0.b32.cont [9/16] 0.0, 128
        %1320 = vxpose.xlu0.b32.cont [10/16] 0.0, 128
        %1321 = vxpose.xlu0.b32.cont [11/16] 0.0, 128
        %1322 = vxpose.xlu0.b32.cont [12/16] 0.0, 128
        %1323 = vxpose.xlu0.b32.cont [13/16] 0.0, 128
        %1324 = vxpose.xlu0.b32.cont [14/16] 0.0, 128
        %1325 = vxpose.xlu0.b32.cont [15/16] 0.0, 128
        %1326 = vxpose.xlu0.b32.end [16/16] 0.0, 128
        %v1327 = vpop.trf.xlu0
        %v1328 = vpop.trf.xlu0
        %v1329 = vpop.trf.xlu0
        %v1330 = vpop.trf.xlu0
        %v1331 = vpop.trf.xlu0
        %v1332 = vpop.trf.xlu0
        %v1333 = vpop.trf.xlu0
        %v1334 = vpop.trf.xlu0
        %v1335 = vpop.trf.xlu0
        %v1336 = vpop.trf.xlu0
        %v1337 = vpop.trf.xlu0
        %v1338 = vpop.trf.xlu0
        %v1339 = vpop.trf.xlu0
        %v1340 = vpop.trf.xlu0
        %v1341 = vpop.trf.xlu0
        %v1342 = vpop.trf.xlu0
        %1343 = vxpose.xlu0.b32.start [1/16] %v1179, 128
        %1344 = vxpose.xlu0.b32.cont [2/16] %v1180, 128
        %1345 = vxpose.xlu0.b32.cont [3/16] %v1181, 128
        %1346 = vxpose.xlu0.b32.cont [4/16] %v1182, 128
        %1347 = vxpose.xlu0.b32.cont [5/16] 0.0, 128
        %1348 = vxpose.xlu0.b32.cont [6/16] 0.0, 128
        %1349 = vxpose.xlu0.b32.cont [7/16] 0.0, 128
        %1350 = vxpose.xlu0.b32.cont [8/16] 0.0, 128
        %1351 = vxpose.xlu0.b32.cont [9/16] 0.0, 128
        %1352 = vxpose.xlu0.b32.cont [10/16] 0.0, 128
        %1353 = vxpose.xlu0.b32.cont [11/16] 0.0, 128
        %1354 = vxpose.xlu0.b32.cont [12/16] 0.0, 128
        %1355 = vxpose.xlu0.b32.cont [13/16] 0.0, 128
        %1356 = vxpose.xlu0.b32.cont [14/16] 0.0, 128
        %1357 = vxpose.xlu0.b32.cont [15/16] 0.0, 128
        %1358 = vxpose.xlu0.b32.end [16/16] 0.0, 128
        %v1359 = vpop.trf.xlu0
        %v1360 = vpop.trf.xlu0
        %v1361 = vpop.trf.xlu0
        %v1362 = vpop.trf.xlu0
        %v1363 = vpop.trf.xlu0
        %v1364 = vpop.trf.xlu0
        %v1365 = vpop.trf.xlu0
        %v1366 = vpop.trf.xlu0
        %v1367 = vpop.trf.xlu0
        %v1368 = vpop.trf.xlu0
        %v1369 = vpop.trf.xlu0
        %v1370 = vpop.trf.xlu0
        %v1371 = vpop.trf.xlu0
        %v1372 = vpop.trf.xlu0
        %v1373 = vpop.trf.xlu0
        %v1374 = vpop.trf.xlu0
        %v1375 = vmul.f32 %v1263, 0.17677669
        %v1376 = vmul.f32 %v1264, 0.17677669
        %v1377 = vmul.f32 %v1265, 0.17677669
        %v1378 = vmul.f32 %v1266, 0.17677669
        %v1379 = vmul.f32 %v1267, 0.17677669
        %v1380 = vmul.f32 %v1268, 0.17677669
        %v1381 = vmul.f32 %v1269, 0.17677669
        %v1382 = vmul.f32 %v1270, 0.17677669
        %v1383 = vmul.f32 %v1271, 0.17677669
        %v1384 = vmul.f32 %v1272, 0.17677669
        %v1385 = vmul.f32 %v1273, 0.17677669
        %v1386 = vmul.f32 %v1274, 0.17677669
        %v1387 = vmul.f32 %v1275, 0.17677669
        %v1388 = vmul.f32 %v1276, 0.17677669
        %v1389 = vmul.f32 %v1277, 0.17677669
        %v1390 = vmul.f32 %v1278, 0.17677669
        %v1391 = vmul.f32 %v1295, 0.17677669
        %v1392 = vmul.f32 %v1296, 0.17677669
        %v1393 = vmul.f32 %v1297, 0.17677669
        %v1394 = vmul.f32 %v1298, 0.17677669
        %v1395 = vmul.f32 %v1299, 0.17677669
        %v1396 = vmul.f32 %v1300, 0.17677669
        %v1397 = vmul.f32 %v1301, 0.17677669
        %v1398 = vmul.f32 %v1302, 0.17677669
        %v1399 = vmul.f32 %v1303, 0.17677669
        %v1400 = vmul.f32 %v1304, 0.17677669
        %v1401 = vmul.f32 %v1305, 0.17677669
        %v1402 = vmul.f32 %v1306, 0.17677669
        %v1403 = vmul.f32 %v1307, 0.17677669
        %v1404 = vmul.f32 %v1308, 0.17677669
        %v1405 = vmul.f32 %v1309, 0.17677669
        %v1406 = vmul.f32 %v1310, 0.17677669
        %v1407 = vmul.f32 %v1327, 0.17677669
        %v1408 = vmul.f32 %v1328, 0.17677669
        %v1409 = vmul.f32 %v1329, 0.17677669
        %v1410 = vmul.f32 %v1330, 0.17677669
        %v1411 = vmul.f32 %v1331, 0.17677669
        %v1412 = vmul.f32 %v1332, 0.17677669
        %v1413 = vmul.f32 %v1333, 0.17677669
        %v1414 = vmul.f32 %v1334, 0.17677669
        %v1415 = vmul.f32 %v1335, 0.17677669
        %v1416 = vmul.f32 %v1336, 0.17677669
        %v1417 = vmul.f32 %v1337, 0.17677669
        %v1418 = vmul.f32 %v1338, 0.17677669
        %v1419 = vmul.f32 %v1339, 0.17677669
        %v1420 = vmul.f32 %v1340, 0.17677669
        %v1421 = vmul.f32 %v1341, 0.17677669
        %v1422 = vmul.f32 %v1342, 0.17677669
        %v1423 = vmul.f32 %v1359, 0.17677669
        %v1424 = vmul.f32 %v1360, 0.17677669
        %v1425 = vmul.f32 %v1361, 0.17677669
        %v1426 = vmul.f32 %v1362, 0.17677669
        %v1427 = vmul.f32 %v1363, 0.17677669
        %v1428 = vmul.f32 %v1364, 0.17677669
        %v1429 = vmul.f32 %v1365, 0.17677669
        %v1430 = vmul.f32 %v1366, 0.17677669
        %v1431 = vmul.f32 %v1367, 0.17677669
        %v1432 = vmul.f32 %v1368, 0.17677669
        %v1433 = vmul.f32 %v1369, 0.17677669
        %v1434 = vmul.f32 %v1370, 0.17677669
        %v1435 = vmul.f32 %v1371, 0.17677669
        %v1436 = vmul.f32 %v1372, 0.17677669
        %v1437 = vmul.f32 %v1373, 0.17677669
        %v1438 = vmul.f32 %v1374, 0.17677669
        %v1439 = vpack.c.bf16 %v1376, %v1375
        %v1440 = vpack.c.bf16 %v1378, %v1377
        %v1441 = vpack.c.bf16 %v1380, %v1379
        %v1442 = vpack.c.bf16 %v1382, %v1381
        %v1443 = vpack.c.bf16 %v1384, %v1383
        %v1444 = vpack.c.bf16 %v1386, %v1385
        %v1445 = vpack.c.bf16 %v1388, %v1387
        %v1446 = vpack.c.bf16 %v1390, %v1389
        %v1447 = vpack.c.bf16 %v1392, %v1391
        %v1448 = vpack.c.bf16 %v1394, %v1393
        %v1449 = vpack.c.bf16 %v1396, %v1395
        %v1450 = vpack.c.bf16 %v1398, %v1397
        %v1451 = vpack.c.bf16 %v1400, %v1399
        %v1452 = vpack.c.bf16 %v1402, %v1401
        %v1453 = vpack.c.bf16 %v1404, %v1403
        %v1454 = vpack.c.bf16 %v1406, %v1405
        %v1455 = vpack.c.bf16 %v1408, %v1407
        %v1456 = vpack.c.bf16 %v1410, %v1409
        %v1457 = vpack.c.bf16 %v1412, %v1411
        %v1458 = vpack.c.bf16 %v1414, %v1413
        %v1459 = vpack.c.bf16 %v1416, %v1415
        %v1460 = vpack.c.bf16 %v1418, %v1417
        %v1461 = vpack.c.bf16 %v1420, %v1419
        %v1462 = vpack.c.bf16 %v1422, %v1421
        %v1463 = vpack.c.bf16 %v1424, %v1423
        %v1464 = vpack.c.bf16 %v1426, %v1425
        %v1465 = vpack.c.bf16 %v1428, %v1427
        %v1466 = vpack.c.bf16 %v1430, %v1429
        %v1467 = vpack.c.bf16 %v1432, %v1431
        %v1468 = vpack.c.bf16 %v1434, %v1433
        %v1469 = vpack.c.bf16 %v1436, %v1435
        %v1470 = vpack.c.bf16 %v1438, %v1437
        %v1471 = vpack.c.bf16 %v1200, %v1199
        %v1472 = vpack.c.bf16 %v1202, %v1201
        %v1473 = vpack.c.bf16 %v1204, %v1203
        %v1474 = vpack.c.bf16 %v1206, %v1205
        %v1475 = vpack.c.bf16 %v1208, %v1207
        %v1476 = vpack.c.bf16 %v1210, %v1209
        %v1477 = vpack.c.bf16 %v1212, %v1211
        %v1478 = vpack.c.bf16 %v1214, %v1213
        %v1479 = vpack.c.bf16 %v1232, %v1231
        %v1480 = vpack.c.bf16 %v1234, %v1233
        %v1481 = vpack.c.bf16 %v1236, %v1235
        %v1482 = vpack.c.bf16 %v1238, %v1237
        %v1483 = vpack.c.bf16 %v1240, %v1239
        %v1484 = vpack.c.bf16 %v1242, %v1241
        %v1485 = vpack.c.bf16 %v1244, %v1243
        %v1486 = vpack.c.bf16 %v1246, %v1245
        %vm1487 = vcmask 261120
        %v1489 = vsel %vm1487, %v1439, 0
        %v1492 = vsel %vm1487, %v1440, 0
        %v1495 = vsel %vm1487, %v1441, 0
        %v1498 = vsel %vm1487, %v1442, 0
        %v1501 = vsel %vm1487, %v1443, 0
        %v1504 = vsel %vm1487, %v1444, 0
        %v1507 = vsel %vm1487, %v1445, 0
        %v1510 = vsel %vm1487, %v1446, 0
        %1512 = vmatprep.subr.bf16.mxu0 0
        %1513 = vmatpush1.bf16.msra.mxu0 %v1471
        %1514 = vmatprep.subr.bf16.mxu0 0
        %1515 = vmatpush1.bf16.msra.mxu0 %v1472
        %1516 = vmatprep.subr.bf16.mxu0 0
        %1517 = vmatpush1.bf16.msra.mxu0 0
        %1518 = vmatprep.subr.bf16.mxu0 0
        %1519 = vmatpush1.bf16.msra.mxu0 0
        %1520 = vmatprep.subr.bf16.mxu0 0
        %1521 = vmatpush1.bf16.msra.mxu0 0
        %1522 = vmatprep.subr.bf16.mxu0 0
        %1523 = vmatpush1.bf16.msra.mxu0 0
        %1524 = vmatprep.subr.bf16.mxu0 0
        %1525 = vmatpush1.bf16.msra.mxu0 0
        %1526 = vmatprep.subr.bf16.mxu0 0
        %1527 = vmatpush1.bf16.msra.mxu0 0
        %1528 = vmatprep.subr.bf16.mxu0 0
        %1529 = vmatpush1.bf16.msra.mxu0 0
        %1530 = vmatprep.subr.bf16.mxu0 0
        %1531 = vmatpush1.bf16.msra.mxu0 0
        %1532 = vmatprep.subr.bf16.mxu0 0
        %1533 = vmatpush1.bf16.msra.mxu0 0
        %1534 = vmatprep.subr.bf16.mxu0 0
        %1535 = vmatpush1.bf16.msra.mxu0 0
        %1536 = vmatprep.subr.bf16.mxu0 0
        %1537 = vmatpush1.bf16.msra.mxu0 0
        %1538 = vmatprep.subr.bf16.mxu0 0
        %1539 = vmatpush1.bf16.msra.mxu0 0
        %1540 = vmatprep.subr.bf16.mxu0 0
        %1541 = vmatpush1.bf16.msra.mxu0 0
        %1542 = vmatprep.subr.bf16.mxu0 0
        %1543 = vmatpush1.bf16.msra.mxu0 0
        %1544 = vmatprep.mubr.bf16.mxu0 0
        %1545 = vmatmul.mubr.bf16.gmra.mrb[0].mxu0 %v1489
        %v1546 = vpop.f32.mrb[0].mxu0
        %v1547 = vadd.f32 0.0, %v1546
        %v1548 = vpop.f32.mrb[0].mxu0
        %v1549 = vpop.f32.mrb[0].mxu0
        %v1550 = vadd.f32 0.0, %v1549
        %v1551 = vpop.f32.mrb[0].mxu0
        %1552 = vmatprep.mubr.bf16.mxu0 0
        %1553 = vmatmul.mubr.bf16.gmra.mrb[0].mxu0 %v1492
        %v1554 = vpop.f32.mrb[0].mxu0
        %v1555 = vadd.f32 0.0, %v1554
        %v1556 = vpop.f32.mrb[0].mxu0
        %v1557 = vpop.f32.mrb[0].mxu0
        %v1558 = vadd.f32 0.0, %v1557
        %v1559 = vpop.f32.mrb[0].mxu0
        %1560 = vmatprep.mubr.bf16.mxu0 0
        %1561 = vmatmul.mubr.bf16.gmra.mrb[0].mxu0 %v1495
        %v1562 = vpop.f32.mrb[0].mxu0
        %v1563 = vadd.f32 0.0, %v1562
        %v1564 = vpop.f32.mrb[0].mxu0
        %v1565 = vpop.f32.mrb[0].mxu0
        %v1566 = vadd.f32 0.0, %v1565
        %v1567 = vpop.f32.mrb[0].mxu0
        %1568 = vmatprep.mubr.bf16.mxu0 0
        %1569 = vmatmul.mubr.bf16.gmra.mrb[0].mxu0 %v1498
        %v1570 = vpop.f32.mrb[0].mxu0
        %v1571 = vadd.f32 0.0, %v1570
        %v1572 = vpop.f32.mrb[0].mxu0
        %v1573 = vpop.f32.mrb[0].mxu0
        %v1574 = vadd.f32 0.0, %v1573
        %v1575 = vpop.f32.mrb[0].mxu0
        %1576 = vmatprep.mubr.bf16.mxu0 0
        %1577 = vmatmul.mubr.bf16.gmra.mrb[0].mxu0 %v1501
        %v1578 = vpop.f32.mrb[0].mxu0
        %v1579 = vadd.f32 0.0, %v1578
        %v1580 = vpop.f32.mrb[0].mxu0
        %v1581 = vpop.f32.mrb[0].mxu0
        %v1582 = vadd.f32 0.0, %v1581
        %v1583 = vpop.f32.mrb[0].mxu0
        %1584 = vmatprep.mubr.bf16.mxu0 0
        %1585 = vmatmul.mubr.bf16.gmra.mrb[0].mxu0 %v1504
        %v1586 = vpop.f32.mrb[0].mxu0
        %v1587 = vadd.f32 0.0, %v1586
        %v1588 = vpop.f32.mrb[0].mxu0
        %v1589 = vpop.f32.mrb[0].mxu0
        %v1590 = vadd.f32 0.0, %v1589
        %v1591 = vpop.f32.mrb[0].mxu0
        %1592 = vmatprep.mubr.bf16.mxu0 0
        %1593 = vmatmul.mubr.bf16.gmra.mrb[0].mxu0 %v1507
        %v1594 = vpop.f32.mrb[0].mxu0
        %v1595 = vadd.f32 0.0, %v1594
        %v1596 = vpop.f32.mrb[0].mxu0
        %v1597 = vpop.f32.mrb[0].mxu0
        %v1598 = vadd.f32 0.0, %v1597
        %v1599 = vpop.f32.mrb[0].mxu0
        %1600 = vmatprep.mubr.bf16.mxu0 0
        %1601 = vmatmul.mubr.bf16.gmra.mrb[0].mxu0 %v1510
        %v1602 = vpop.f32.mrb[0].mxu0
        %v1603 = vadd.f32 0.0, %v1602
        %v1604 = vpop.f32.mrb[0].mxu0
        %v1605 = vpop.f32.mrb[0].mxu0
        %v1606 = vadd.f32 0.0, %v1605
        %v1607 = vpop.f32.mrb[0].mxu0
        %1608 = vdwg.mxu0
        %v1610 = vsel %vm1487, %v1447, 0
        %v1613 = vsel %vm1487, %v1448, 0
        %v1616 = vsel %vm1487, %v1449, 0
        %v1619 = vsel %vm1487, %v1450, 0
        %v1622 = vsel %vm1487, %v1451, 0
        %v1625 = vsel %vm1487, %v1452, 0
        %v1628 = vsel %vm1487, %v1453, 0
        %v1631 = vsel %vm1487, %v1454, 0
        %1633 = vmatprep.subr.bf16.mxu0 0
        %1634 = vmatpush1.bf16.msra.mxu0 %v1473
        %1635 = vmatprep.subr.bf16.mxu0 0
        %1636 = vmatpush1.bf16.msra.mxu0 %v1474
        %1637 = vmatprep.subr.bf16.mxu0 0
        %1638 = vmatpush1.bf16.msra.mxu0 0
        %1639 = vmatprep.subr.bf16.mxu0 0
        %1640 = vmatpush1.bf16.msra.mxu0 0
        %1641 = vmatprep.subr.bf16.mxu0 0
        %1642 = vmatpush1.bf16.msra.mxu0 0
        %1643 = vmatprep.subr.bf16.mxu0 0
        %1644 = vmatpush1.bf16.msra.mxu0 0
        %1645 = vmatprep.subr.bf16.mxu0 0
        %1646 = vmatpush1.bf16.msra.mxu0 0
        %1647 = vmatprep.subr.bf16.mxu0 0
        %1648 = vmatpush1.bf16.msra.mxu0 0
        %1649 = vmatprep.subr.bf16.mxu0 0
        %1650 = vmatpush1.bf16.msra.mxu0 0
        %1651 = vmatprep.subr.bf16.mxu0 0
        %1652 = vmatpush1.bf16.msra.mxu0 0
        %1653 = vmatprep.subr.bf16.mxu0 0
        %1654 = vmatpush1.bf16.msra.mxu0 0
        %1655 = vmatprep.subr.bf16.mxu0 0
        %1656 = vmatpush1.bf16.msra.mxu0 0
        %1657 = vmatprep.subr.bf16.mxu0 0
        %1658 = vmatpush1.bf16.msra.mxu0 0
        %1659 = vmatprep.subr.bf16.mxu0 0
        %1660 = vmatpush1.bf16.msra.mxu0 0
        %1661 = vmatprep.subr.bf16.mxu0 0
        %1662 = vmatpush1.bf16.msra.mxu0 0
        %1663 = vmatprep.subr.bf16.mxu0 0
        %1664 = vmatpush1.bf16.msra.mxu0 0
        %1665 = vmatprep.mubr.bf16.mxu0 0
        %1666 = vmatmul.mubr.bf16.gmra.mrb[0].mxu0 %v1610
        %v1667 = vpop.f32.mrb[0].mxu0
        %v1668 = vadd.f32 0.0, %v1667
        %v1669 = vpop.f32.mrb[0].mxu0
        %v1670 = vpop.f32.mrb[0].mxu0
        %v1671 = vadd.f32 0.0, %v1670
        %v1672 = vpop.f32.mrb[0].mxu0
        %1673 = vmatprep.mubr.bf16.mxu0 0
        %1674 = vmatmul.mubr.bf16.gmra.mrb[0].mxu0 %v1613
        %v1675 = vpop.f32.mrb[0].mxu0
        %v1676 = vadd.f32 0.0, %v1675
        %v1677 = vpop.f32.mrb[0].mxu0
        %v1678 = vpop.f32.mrb[0].mxu0
        %v1679 = vadd.f32 0.0, %v1678
        %v1680 = vpop.f32.mrb[0].mxu0
        %1681 = vmatprep.mubr.bf16.mxu0 0
        %1682 = vmatmul.mubr.bf16.gmra.mrb[0].mxu0 %v1616
        %v1683 = vpop.f32.mrb[0].mxu0
        %v1684 = vadd.f32 0.0, %v1683
        %v1685 = vpop.f32.mrb[0].mxu0
        %v1686 = vpop.f32.mrb[0].mxu0
        %v1687 = vadd.f32 0.0, %v1686
        %v1688 = vpop.f32.mrb[0].mxu0
        %1689 = vmatprep.mubr.bf16.mxu0 0
        %1690 = vmatmul.mubr.bf16.gmra.mrb[0].mxu0 %v1619
        %v1691 = vpop.f32.mrb[0].mxu0
        %v1692 = vadd.f32 0.0, %v1691
        %v1693 = vpop.f32.mrb[0].mxu0
        %v1694 = vpop.f32.mrb[0].mxu0
        %v1695 = vadd.f32 0.0, %v1694
        %v1696 = vpop.f32.mrb[0].mxu0
        %1697 = vmatprep.mubr.bf16.mxu0 0
        %1698 = vmatmul.mubr.bf16.gmra.mrb[0].mxu0 %v1622
        %v1699 = vpop.f32.mrb[0].mxu0
        %v1700 = vadd.f32 0.0, %v1699
        %v1701 = vpop.f32.mrb[0].mxu0
        %v1702 = vpop.f32.mrb[0].mxu0
        %v1703 = vadd.f32 0.0, %v1702
        %v1704 = vpop.f32.mrb[0].mxu0
        %1705 = vmatprep.mubr.bf16.mxu0 0
        %1706 = vmatmul.mubr.bf16.gmra.mrb[0].mxu0 %v1625
        %v1707 = vpop.f32.mrb[0].mxu0
        %v1708 = vadd.f32 0.0, %v1707
        %v1709 = vpop.f32.mrb[0].mxu0
        %v1710 = vpop.f32.mrb[0].mxu0
        %v1711 = vadd.f32 0.0, %v1710
        %v1712 = vpop.f32.mrb[0].mxu0
        %1713 = vmatprep.mubr.bf16.mxu0 0
        %1714 = vmatmul.mubr.bf16.gmra.mrb[0].mxu0 %v1628
        %v1715 = vpop.f32.mrb[0].mxu0
        %v1716 = vadd.f32 0.0, %v1715
        %v1717 = vpop.f32.mrb[0].mxu0
        %v1718 = vpop.f32.mrb[0].mxu0
        %v1719 = vadd.f32 0.0, %v1718
        %v1720 = vpop.f32.mrb[0].mxu0
        %1721 = vmatprep.mubr.bf16.mxu0 0
        %1722 = vmatmul.mubr.bf16.gmra.mrb[0].mxu0 %v1631
        %v1723 = vpop.f32.mrb[0].mxu0
        %v1724 = vadd.f32 0.0, %v1723
        %v1725 = vpop.f32.mrb[0].mxu0
        %v1726 = vpop.f32.mrb[0].mxu0
        %v1727 = vadd.f32 0.0, %v1726
        %v1728 = vpop.f32.mrb[0].mxu0
        %1729 = vdwg.mxu0
        %v1731 = vsel %vm1487, %v1455, 0
        %v1734 = vsel %vm1487, %v1456, 0
        %v1737 = vsel %vm1487, %v1457, 0
        %v1740 = vsel %vm1487, %v1458, 0
        %v1743 = vsel %vm1487, %v1459, 0
        %v1746 = vsel %vm1487, %v1460, 0
        %v1749 = vsel %vm1487, %v1461, 0
        %v1752 = vsel %vm1487, %v1462, 0
        %1754 = vmatprep.subr.bf16.mxu0 0
        %1755 = vmatpush1.bf16.msra.mxu0 %v1475
        %1756 = vmatprep.subr.bf16.mxu0 0
        %1757 = vmatpush1.bf16.msra.mxu0 %v1476
        %1758 = vmatprep.subr.bf16.mxu0 0
        %1759 = vmatpush1.bf16.msra.mxu0 0
        %1760 = vmatprep.subr.bf16.mxu0 0
        %1761 = vmatpush1.bf16.msra.mxu0 0
        %1762 = vmatprep.subr.bf16.mxu0 0
        %1763 = vmatpush1.bf16.msra.mxu0 0
        %1764 = vmatprep.subr.bf16.mxu0 0
        %1765 = vmatpush1.bf16.msra.mxu0 0
        %1766 = vmatprep.subr.bf16.mxu0 0
        %1767 = vmatpush1.bf16.msra.mxu0 0
        %1768 = vmatprep.subr.bf16.mxu0 0
        %1769 = vmatpush1.bf16.msra.mxu0 0
        %1770 = vmatprep.subr.bf16.mxu0 0
        %1771 = vmatpush1.bf16.msra.mxu0 0
        %1772 = vmatprep.subr.bf16.mxu0 0
        %1773 = vmatpush1.bf16.msra.mxu0 0
        %1774 = vmatprep.subr.bf16.mxu0 0
        %1775 = vmatpush1.bf16.msra.mxu0 0
        %1776 = vmatprep.subr.bf16.mxu0 0
        %1777 = vmatpush1.bf16.msra.mxu0 0
        %1778 = vmatprep.subr.bf16.mxu0 0
        %1779 = vmatpush1.bf16.msra.mxu0 0
        %1780 = vmatprep.subr.bf16.mxu0 0
        %1781 = vmatpush1.bf16.msra.mxu0 0
        %1782 = vmatprep.subr.bf16.mxu0 0
        %1783 = vmatpush1.bf16.msra.mxu0 0
        %1784 = vmatprep.subr.bf16.mxu0 0
        %1785 = vmatpush1.bf16.msra.mxu0 0
        %1786 = vmatprep.mubr.bf16.mxu0 0
        %1787 = vmatmul.mubr.bf16.gmra.mrb[0].mxu0 %v1731
        %v1788 = vpop.f32.mrb[0].mxu0
        %v1789 = vadd.f32 0.0, %v1788
        %v1790 = vpop.f32.mrb[0].mxu0
        %v1791 = vpop.f32.mrb[0].mxu0
        %v1792 = vadd.f32 0.0, %v1791
        %v1793 = vpop.f32.mrb[0].mxu0
        %1794 = vmatprep.mubr.bf16.mxu0 0
        %1795 = vmatmul.mubr.bf16.gmra.mrb[0].mxu0 %v1734
        %v1796 = vpop.f32.mrb[0].mxu0
        %v1797 = vadd.f32 0.0, %v1796
        %v1798 = vpop.f32.mrb[0].mxu0
        %v1799 = vpop.f32.mrb[0].mxu0
        %v1800 = vadd.f32 0.0, %v1799
        %v1801 = vpop.f32.mrb[0].mxu0
        %1802 = vmatprep.mubr.bf16.mxu0 0
        %1803 = vmatmul.mubr.bf16.gmra.mrb[0].mxu0 %v1737
        %v1804 = vpop.f32.mrb[0].mxu0
        %v1805 = vadd.f32 0.0, %v1804
        %v1806 = vpop.f32.mrb[0].mxu0
        %v1807 = vpop.f32.mrb[0].mxu0
        %v1808 = vadd.f32 0.0, %v1807
        %v1809 = vpop.f32.mrb[0].mxu0
        %1810 = vmatprep.mubr.bf16.mxu0 0
        %1811 = vmatmul.mubr.bf16.gmra.mrb[0].mxu0 %v1740
        %v1812 = vpop.f32.mrb[0].mxu0
        %v1813 = vadd.f32 0.0, %v1812
        %v1814 = vpop.f32.mrb[0].mxu0
        %v1815 = vpop.f32.mrb[0].mxu0
        %v1816 = vadd.f32 0.0, %v1815
        %v1817 = vpop.f32.mrb[0].mxu0
        %1818 = vmatprep.mubr.bf16.mxu0 0
        %1819 = vmatmul.mubr.bf16.gmra.mrb[0].mxu0 %v1743
        %v1820 = vpop.f32.mrb[0].mxu0
        %v1821 = vadd.f32 0.0, %v1820
        %v1822 = vpop.f32.mrb[0].mxu0
        %v1823 = vpop.f32.mrb[0].mxu0
        %v1824 = vadd.f32 0.0, %v1823
        %v1825 = vpop.f32.mrb[0].mxu0
        %1826 = vmatprep.mubr.bf16.mxu0 0
        %1827 = vmatmul.mubr.bf16.gmra.mrb[0].mxu0 %v1746
        %v1828 = vpop.f32.mrb[0].mxu0
        %v1829 = vadd.f32 0.0, %v1828
        %v1830 = vpop.f32.mrb[0].mxu0
        %v1831 = vpop.f32.mrb[0].mxu0
        %v1832 = vadd.f32 0.0, %v1831
        %v1833 = vpop.f32.mrb[0].mxu0
        %1834 = vmatprep.mubr.bf16.mxu0 0
        %1835 = vmatmul.mubr.bf16.gmra.mrb[0].mxu0 %v1749
        %v1836 = vpop.f32.mrb[0].mxu0
        %v1837 = vadd.f32 0.0, %v1836
        %v1838 = vpop.f32.mrb[0].mxu0
        %v1839 = vpop.f32.mrb[0].mxu0
        %v1840 = vadd.f32 0.0, %v1839
        %v1841 = vpop.f32.mrb[0].mxu0
        %1842 = vmatprep.mubr.bf16.mxu0 0
        %1843 = vmatmul.mubr.bf16.gmra.mrb[0].mxu0 %v1752
        %v1844 = vpop.f32.mrb[0].mxu0
        %v1845 = vadd.f32 0.0, %v1844
        %v1846 = vpop.f32.mrb[0].mxu0
        %v1847 = vpop.f32.mrb[0].mxu0
        %v1848 = vadd.f32 0.0, %v1847
        %v1849 = vpop.f32.mrb[0].mxu0
        %1850 = vdwg.mxu0
        %v1852 = vsel %vm1487, %v1463, 0
        %v1855 = vsel %vm1487, %v1464, 0
        %v1858 = vsel %vm1487, %v1465, 0
        %v1861 = vsel %vm1487, %v1466, 0
        %v1864 = vsel %vm1487, %v1467, 0
        %v1867 = vsel %vm1487, %v1468, 0
        %v1870 = vsel %vm1487, %v1469, 0
        %v1873 = vsel %vm1487, %v1470, 0
        %1875 = vmatprep.subr.bf16.mxu0 0
        %1876 = vmatpush1.bf16.msra.mxu0 %v1477
        %1877 = vmatprep.subr.bf16.mxu0 0
        %1878 = vmatpush1.bf16.msra.mxu0 %v1478
        %1879 = vmatprep.subr.bf16.mxu0 0
        %1880 = vmatpush1.bf16.msra.mxu0 0
        %1881 = vmatprep.subr.bf16.mxu0 0
        %1882 = vmatpush1.bf16.msra.mxu0 0
        %1883 = vmatprep.subr.bf16.mxu0 0
        %1884 = vmatpush1.bf16.msra.mxu0 0
        %1885 = vmatprep.subr.bf16.mxu0 0
        %1886 = vmatpush1.bf16.msra.mxu0 0
        %1887 = vmatprep.subr.bf16.mxu0 0
        %1888 = vmatpush1.bf16.msra.mxu0 0
        %1889 = vmatprep.subr.bf16.mxu0 0
        %1890 = vmatpush1.bf16.msra.mxu0 0
        %1891 = vmatprep.subr.bf16.mxu0 0
        %1892 = vmatpush1.bf16.msra.mxu0 0
        %1893 = vmatprep.subr.bf16.mxu0 0
        %1894 = vmatpush1.bf16.msra.mxu0 0
        %1895 = vmatprep.subr.bf16.mxu0 0
        %1896 = vmatpush1.bf16.msra.mxu0 0
        %1897 = vmatprep.subr.bf16.mxu0 0
        %1898 = vmatpush1.bf16.msra.mxu0 0
        %1899 = vmatprep.subr.bf16.mxu0 0
        %1900 = vmatpush1.bf16.msra.mxu0 0
        %1901 = vmatprep.subr.bf16.mxu0 0
        %1902 = vmatpush1.bf16.msra.mxu0 0
        %1903 = vmatprep.subr.bf16.mxu0 0
        %1904 = vmatpush1.bf16.msra.mxu0 0
        %1905 = vmatprep.subr.bf16.mxu0 0
        %1906 = vmatpush1.bf16.msra.mxu0 0
        %1907 = vmatprep.mubr.bf16.mxu0 0
        %1908 = vmatmul.mubr.bf16.gmra.mrb[0].mxu0 %v1852
        %v1909 = vpop.f32.mrb[0].mxu0
        %v1910 = vadd.f32 0.0, %v1909
        %v1911 = vpop.f32.mrb[0].mxu0
        %v1912 = vpop.f32.mrb[0].mxu0
        %v1913 = vadd.f32 0.0, %v1912
        %v1914 = vpop.f32.mrb[0].mxu0
        %1915 = vmatprep.mubr.bf16.mxu0 0
        %1916 = vmatmul.mubr.bf16.gmra.mrb[0].mxu0 %v1855
        %v1917 = vpop.f32.mrb[0].mxu0
        %v1918 = vadd.f32 0.0, %v1917
        %v1919 = vpop.f32.mrb[0].mxu0
        %v1920 = vpop.f32.mrb[0].mxu0
        %v1921 = vadd.f32 0.0, %v1920
        %v1922 = vpop.f32.mrb[0].mxu0
        %1923 = vmatprep.mubr.bf16.mxu0 0
        %1924 = vmatmul.mubr.bf16.gmra.mrb[0].mxu0 %v1858
        %v1925 = vpop.f32.mrb[0].mxu0
        %v1926 = vadd.f32 0.0, %v1925
        %v1927 = vpop.f32.mrb[0].mxu0
        %v1928 = vpop.f32.mrb[0].mxu0
        %v1929 = vadd.f32 0.0, %v1928
        %v1930 = vpop.f32.mrb[0].mxu0
        %1931 = vmatprep.mubr.bf16.mxu0 0
        %1932 = vmatmul.mubr.bf16.gmra.mrb[0].mxu0 %v1861
        %v1933 = vpop.f32.mrb[0].mxu0
        %v1934 = vadd.f32 0.0, %v1933
        %v1935 = vpop.f32.mrb[0].mxu0
        %v1936 = vpop.f32.mrb[0].mxu0
        %v1937 = vadd.f32 0.0, %v1936
        %v1938 = vpop.f32.mrb[0].mxu0
        %1939 = vmatprep.mubr.bf16.mxu0 0
        %1940 = vmatmul.mubr.bf16.gmra.mrb[0].mxu0 %v1864
        %v1941 = vpop.f32.mrb[0].mxu0
        %v1942 = vadd.f32 0.0, %v1941
        %v1943 = vpop.f32.mrb[0].mxu0
        %v1944 = vpop.f32.mrb[0].mxu0
        %v1945 = vadd.f32 0.0, %v1944
        %v1946 = vpop.f32.mrb[0].mxu0
        %1947 = vmatprep.mubr.bf16.mxu0 0
        %1948 = vmatmul.mubr.bf16.gmra.mrb[0].mxu0 %v1867
        %v1949 = vpop.f32.mrb[0].mxu0
        %v1950 = vadd.f32 0.0, %v1949
        %v1951 = vpop.f32.mrb[0].mxu0
        %v1952 = vpop.f32.mrb[0].mxu0
        %v1953 = vadd.f32 0.0, %v1952
        %v1954 = vpop.f32.mrb[0].mxu0
        %1955 = vmatprep.mubr.bf16.mxu0 0
        %1956 = vmatmul.mubr.bf16.gmra.mrb[0].mxu0 %v1870
        %v1957 = vpop.f32.mrb[0].mxu0
        %v1958 = vadd.f32 0.0, %v1957
        %v1959 = vpop.f32.mrb[0].mxu0
        %v1960 = vpop.f32.mrb[0].mxu0
        %v1961 = vadd.f32 0.0, %v1960
        %v1962 = vpop.f32.mrb[0].mxu0
        %1963 = vmatprep.mubr.bf16.mxu0 0
        %1964 = vmatmul.mubr.bf16.gmra.mrb[0].mxu0 %v1873
        %v1965 = vpop.f32.mrb[0].mxu0
        %v1966 = vadd.f32 0.0, %v1965
        %v1967 = vpop.f32.mrb[0].mxu0
        %v1968 = vpop.f32.mrb[0].mxu0
        %v1969 = vadd.f32 0.0, %v1968
        %v1970 = vpop.f32.mrb[0].mxu0
        %1971 = vdwg.mxu0
        %1972 = vmax.xlane.f32.xlu0 %v1547
        %v1973 = vpop.xlane.xlu0 %1972
        %1974 = vmax.xlane.f32.xlu0 %v1550
        %v1975 = vpop.xlane.xlu0 %1974
        %1976 = vmax.xlane.f32.xlu0 %v1555
        %v1977 = vpop.xlane.xlu0 %1976
        %1978 = vmax.xlane.f32.xlu0 %v1558
        %v1979 = vpop.xlane.xlu0 %1978
        %1980 = vmax.xlane.f32.xlu0 %v1563
        %v1981 = vpop.xlane.xlu0 %1980
        %1982 = vmax.xlane.f32.xlu0 %v1566
        %v1983 = vpop.xlane.xlu0 %1982
        %1984 = vmax.xlane.f32.xlu0 %v1571
        %v1985 = vpop.xlane.xlu0 %1984
        %1986 = vmax.xlane.f32.xlu0 %v1574
        %v1987 = vpop.xlane.xlu0 %1986
        %1988 = vmax.xlane.f32.xlu0 %v1579
        %v1989 = vpop.xlane.xlu0 %1988
        %1990 = vmax.xlane.f32.xlu0 %v1582
        %v1991 = vpop.xlane.xlu0 %1990
        %1992 = vmax.xlane.f32.xlu0 %v1587
        %v1993 = vpop.xlane.xlu0 %1992
        %1994 = vmax.xlane.f32.xlu0 %v1590
        %v1995 = vpop.xlane.xlu0 %1994
        %1996 = vmax.xlane.f32.xlu0 %v1595
        %v1997 = vpop.xlane.xlu0 %1996
        %1998 = vmax.xlane.f32.xlu0 %v1598
        %v1999 = vpop.xlane.xlu0 %1998
        %2000 = vmax.xlane.f32.xlu0 %v1603
        %v2001 = vpop.xlane.xlu0 %2000
        %2002 = vmax.xlane.f32.xlu0 %v1606
        %v2003 = vpop.xlane.xlu0 %2002
        %2004 = vmax.xlane.f32.xlu0 %v1668
        %v2005 = vpop.xlane.xlu0 %2004
        %2006 = vmax.xlane.f32.xlu0 %v1671
        %v2007 = vpop.xlane.xlu0 %2006
        %2008 = vmax.xlane.f32.xlu0 %v1676
        %v2009 = vpop.xlane.xlu0 %2008
        %2010 = vmax.xlane.f32.xlu0 %v1679
        %v2011 = vpop.xlane.xlu0 %2010
        %2012 = vmax.xlane.f32.xlu0 %v1684
        %v2013 = vpop.xlane.xlu0 %2012
        %2014 = vmax.xlane.f32.xlu0 %v1687
        %v2015 = vpop.xlane.xlu0 %2014
        %2016 = vmax.xlane.f32.xlu0 %v1692
        %v2017 = vpop.xlane.xlu0 %2016
        %2018 = vmax.xlane.f32.xlu0 %v1695
        %v2019 = vpop.xlane.xlu0 %2018
        %2020 = vmax.xlane.f32.xlu0 %v1700
        %v2021 = vpop.xlane.xlu0 %2020
        %2022 = vmax.xlane.f32.xlu0 %v1703
        %v2023 = vpop.xlane.xlu0 %2022
        %2024 = vmax.xlane.f32.xlu0 %v1708
        %v2025 = vpop.xlane.xlu0 %2024
        %2026 = vmax.xlane.f32.xlu0 %v1711
        %v2027 = vpop.xlane.xlu0 %2026
        %2028 = vmax.xlane.f32.xlu0 %v1716
        %v2029 = vpop.xlane.xlu0 %2028
        %2030 = vmax.xlane.f32.xlu0 %v1719
        %v2031 = vpop.xlane.xlu0 %2030
        %2032 = vmax.xlane.f32.xlu0 %v1724
        %v2033 = vpop.xlane.xlu0 %2032
        %2034 = vmax.xlane.f32.xlu0 %v1727
        %v2035 = vpop.xlane.xlu0 %2034
        %2036 = vmax.xlane.f32.xlu0 %v1789
        %v2037 = vpop.xlane.xlu0 %2036
        %2038 = vmax.xlane.f32.xlu0 %v1792
        %v2039 = vpop.xlane.xlu0 %2038
        %2040 = vmax.xlane.f32.xlu0 %v1797
        %v2041 = vpop.xlane.xlu0 %2040
        %2042 = vmax.xlane.f32.xlu0 %v1800
        %v2043 = vpop.xlane.xlu0 %2042
        %2044 = vmax.xlane.f32.xlu0 %v1805
        %v2045 = vpop.xlane.xlu0 %2044
        %2046 = vmax.xlane.f32.xlu0 %v1808
        %v2047 = vpop.xlane.xlu0 %2046
        %2048 = vmax.xlane.f32.xlu0 %v1813
        %v2049 = vpop.xlane.xlu0 %2048
        %2050 = vmax.xlane.f32.xlu0 %v1816
        %v2051 = vpop.xlane.xlu0 %2050
        %2052 = vmax.xlane.f32.xlu0 %v1821
        %v2053 = vpop.xlane.xlu0 %2052
        %2054 = vmax.xlane.f32.xlu0 %v1824
        %v2055 = vpop.xlane.xlu0 %2054
        %2056 = vmax.xlane.f32.xlu0 %v1829
        %v2057 = vpop.xlane.xlu0 %2056
        %2058 = vmax.xlane.f32.xlu0 %v1832
        %v2059 = vpop.xlane.xlu0 %2058
        %2060 = vmax.xlane.f32.xlu0 %v1837
        %v2061 = vpop.xlane.xlu0 %2060
        %2062 = vmax.xlane.f32.xlu0 %v1840
        %v2063 = vpop.xlane.xlu0 %2062
        %2064 = vmax.xlane.f32.xlu0 %v1845
        %v2065 = vpop.xlane.xlu0 %2064
        %2066 = vmax.xlane.f32.xlu0 %v1848
        %v2067 = vpop.xlane.xlu0 %2066
        %2068 = vmax.xlane.f32.xlu0 %v1910
        %v2069 = vpop.xlane.xlu0 %2068
        %2070 = vmax.xlane.f32.xlu0 %v1913
        %v2071 = vpop.xlane.xlu0 %2070
        %2072 = vmax.xlane.f32.xlu0 %v1918
        %v2073 = vpop.xlane.xlu0 %2072
        %2074 = vmax.xlane.f32.xlu0 %v1921
        %v2075 = vpop.xlane.xlu0 %2074
        %2076 = vmax.xlane.f32.xlu0 %v1926
        %v2077 = vpop.xlane.xlu0 %2076
        %2078 = vmax.xlane.f32.xlu0 %v1929
        %v2079 = vpop.xlane.xlu0 %2078
        %2080 = vmax.xlane.f32.xlu0 %v1934
        %v2081 = vpop.xlane.xlu0 %2080
        %2082 = vmax.xlane.f32.xlu0 %v1937
        %v2083 = vpop.xlane.xlu0 %2082
        %2084 = vmax.xlane.f32.xlu0 %v1942
        %v2085 = vpop.xlane.xlu0 %2084
        %2086 = vmax.xlane.f32.xlu0 %v1945
        %v2087 = vpop.xlane.xlu0 %2086
        %2088 = vmax.xlane.f32.xlu0 %v1950
        %v2089 = vpop.xlane.xlu0 %2088
        %2090 = vmax.xlane.f32.xlu0 %v1953
        %v2091 = vpop.xlane.xlu0 %2090
        %2092 = vmax.xlane.f32.xlu0 %v1958
        %v2093 = vpop.xlane.xlu0 %2092
        %2094 = vmax.xlane.f32.xlu0 %v1961
        %v2095 = vpop.xlane.xlu0 %2094
        %2096 = vmax.xlane.f32.xlu0 %v1966
        %v2097 = vpop.xlane.xlu0 %2096
        %2098 = vmax.xlane.f32.xlu0 %v1969
        %v2099 = vpop.xlane.xlu0 %2098
        %v2100 = vsub.f32 %v1547, %v1973
        %v2101 = vsub.f32 %v1550, %v1975
        %v2102 = vsub.f32 %v1555, %v1977
        %v2103 = vsub.f32 %v1558, %v1979
        %v2104 = vsub.f32 %v1563, %v1981
        %v2105 = vsub.f32 %v1566, %v1983
        %v2106 = vsub.f32 %v1571, %v1985
        %v2107 = vsub.f32 %v1574, %v1987
        %v2108 = vsub.f32 %v1579, %v1989
        %v2109 = vsub.f32 %v1582, %v1991
        %v2110 = vsub.f32 %v1587, %v1993
        %v2111 = vsub.f32 %v1590, %v1995
        %v2112 = vsub.f32 %v1595, %v1997
        %v2113 = vsub.f32 %v1598, %v1999
        %v2114 = vsub.f32 %v1603, %v2001
        %v2115 = vsub.f32 %v1606, %v2003
        %v2116 = vsub.f32 %v1668, %v2005
        %v2117 = vsub.f32 %v1671, %v2007
        %v2118 = vsub.f32 %v1676, %v2009
        %v2119 = vsub.f32 %v1679, %v2011
        %v2120 = vsub.f32 %v1684, %v2013
        %v2121 = vsub.f32 %v1687, %v2015
        %v2122 = vsub.f32 %v1692, %v2017
        %v2123 = vsub.f32 %v1695, %v2019
        %v2124 = vsub.f32 %v1700, %v2021
        %v2125 = vsub.f32 %v1703, %v2023
        %v2126 = vsub.f32 %v1708, %v2025
        %v2127 = vsub.f32 %v1711, %v2027
        %v2128 = vsub.f32 %v1716, %v2029
        %v2129 = vsub.f32 %v1719, %v2031
        %v2130 = vsub.f32 %v1724, %v2033
        %v2131 = vsub.f32 %v1727, %v2035
        %v2132 = vsub.f32 %v1789, %v2037
        %v2133 = vsub.f32 %v1792, %v2039
        %v2134 = vsub.f32 %v1797, %v2041
        %v2135 = vsub.f32 %v1800, %v2043
        %v2136 = vsub.f32 %v1805, %v2045
        %v2137 = vsub.f32 %v1808, %v2047
        %v2138 = vsub.f32 %v1813, %v2049
        %v2139 = vsub.f32 %v1816, %v2051
        %v2140 = vsub.f32 %v1821, %v2053
        %v2141 = vsub.f32 %v1824, %v2055
        %v2142 = vsub.f32 %v1829, %v2057
        %v2143 = vsub.f32 %v1832, %v2059
        %v2144 = vsub.f32 %v1837, %v2061
        %v2145 = vsub.f32 %v1840, %v2063
        %v2146 = vsub.f32 %v1845, %v2065
        %v2147 = vsub.f32 %v1848, %v2067
        %v2148 = vsub.f32 %v1910, %v2069
        %v2149 = vsub.f32 %v1913, %v2071
        %v2150 = vsub.f32 %v1918, %v2073
        %v2151 = vsub.f32 %v1921, %v2075
        %v2152 = vsub.f32 %v1926, %v2077
        %v2153 = vsub.f32 %v1929, %v2079
        %v2154 = vsub.f32 %v1934, %v2081
        %v2155 = vsub.f32 %v1937, %v2083
        %v2156 = vsub.f32 %v1942, %v2085
        %v2157 = vsub.f32 %v1945, %v2087
        %v2158 = vsub.f32 %v1950, %v2089
        %v2159 = vsub.f32 %v1953, %v2091
        %v2160 = vsub.f32 %v1958, %v2093
        %v2161 = vsub.f32 %v1961, %v2095
        %v2162 = vsub.f32 %v1966, %v2097
        %v2163 = vsub.f32 %v1969, %v2099
        %v2164 = vmul.f32 %v2100, 1.442695
        %v2165 = vpow.pop %v2164
        %v2166 = vmul.f32 %v2101, 1.442695
        %v2167 = vpow.pop %v2166
        %v2168 = vmul.f32 %v2102, 1.442695
        %v2169 = vpow.pop %v2168
        %v2170 = vmul.f32 %v2103, 1.442695
        %v2171 = vpow.pop %v2170
        %v2172 = vmul.f32 %v2104, 1.442695
        %v2173 = vpow.pop %v2172
        %v2174 = vmul.f32 %v2105, 1.442695
        %v2175 = vpow.pop %v2174
        %v2176 = vmul.f32 %v2106, 1.442695
        %v2177 = vpow.pop %v2176
        %v2178 = vmul.f32 %v2107, 1.442695
        %v2179 = vpow.pop %v2178
        %v2180 = vmul.f32 %v2108, 1.442695
        %v2181 = vpow.pop %v2180
        %v2182 = vmul.f32 %v2109, 1.442695
        %v2183 = vpow.pop %v2182
        %v2184 = vmul.f32 %v2110, 1.442695
        %v2185 = vpow.pop %v2184
        %v2186 = vmul.f32 %v2111, 1.442695
        %v2187 = vpow.pop %v2186
        %v2188 = vmul.f32 %v2112, 1.442695
        %v2189 = vpow.pop %v2188
        %v2190 = vmul.f32 %v2113, 1.442695
        %v2191 = vpow.pop %v2190
        %v2192 = vmul.f32 %v2114, 1.442695
        %v2193 = vpow.pop %v2192
        %v2194 = vmul.f32 %v2115, 1.442695
        %v2195 = vpow.pop %v2194
        %v2196 = vmul.f32 %v2116, 1.442695
        %v2197 = vpow.pop %v2196
        %v2198 = vmul.f32 %v2117, 1.442695
        %v2199 = vpow.pop %v2198
        %v2200 = vmul.f32 %v2118, 1.442695
        %v2201 = vpow.pop %v2200
        %v2202 = vmul.f32 %v2119, 1.442695
        %v2203 = vpow.pop %v2202
        %v2204 = vmul.f32 %v2120, 1.442695
        %v2205 = vpow.pop %v2204
        %v2206 = vmul.f32 %v2121, 1.442695
        %v2207 = vpow.pop %v2206
        %v2208 = vmul.f32 %v2122, 1.442695
        %v2209 = vpow.pop %v2208
        %v2210 = vmul.f32 %v2123, 1.442695
        %v2211 = vpow.pop %v2210
        %v2212 = vmul.f32 %v2124, 1.442695
        %v2213 = vpow.pop %v2212
        %v2214 = vmul.f32 %v2125, 1.442695
        %v2215 = vpow.pop %v2214
        %v2216 = vmul.f32 %v2126, 1.442695
        %v2217 = vpow.pop %v2216
        %v2218 = vmul.f32 %v2127, 1.442695
        %v2219 = vpow.pop %v2218
        %v2220 = vmul.f32 %v2128, 1.442695
        %v2221 = vpow.pop %v2220
        %v2222 = vmul.f32 %v2129, 1.442695
        %v2223 = vpow.pop %v2222
        %v2224 = vmul.f32 %v2130, 1.442695
        %v2225 = vpow.pop %v2224
        %v2226 = vmul.f32 %v2131, 1.442695
        %v2227 = vpow.pop %v2226
        %v2228 = vmul.f32 %v2132, 1.442695
        %v2229 = vpow.pop %v2228
        %v2230 = vmul.f32 %v2133, 1.442695
        %v2231 = vpow.pop %v2230
        %v2232 = vmul.f32 %v2134, 1.442695
        %v2233 = vpow.pop %v2232
        %v2234 = vmul.f32 %v2135, 1.442695
        %v2235 = vpow.pop %v2234
        %v2236 = vmul.f32 %v2136, 1.442695
        %v2237 = vpow.pop %v2236
        %v2238 = vmul.f32 %v2137, 1.442695
        %v2239 = vpow.pop %v2238
        %v2240 = vmul.f32 %v2138, 1.442695
        %v2241 = vpow.pop %v2240
        %v2242 = vmul.f32 %v2139, 1.442695
        %v2243 = vpow.pop %v2242
        %v2244 = vmul.f32 %v2140, 1.442695
        %v2245 = vpow.pop %v2244
        %v2246 = vmul.f32 %v2141, 1.442695
        %v2247 = vpow.pop %v2246
        %v2248 = vmul.f32 %v2142, 1.442695
        %v2249 = vpow.pop %v2248
        %v2250 = vmul.f32 %v2143, 1.442695
        %v2251 = vpow.pop %v2250
        %v2252 = vmul.f32 %v2144, 1.442695
        %v2253 = vpow.pop %v2252
        %v2254 = vmul.f32 %v2145, 1.442695
        %v2255 = vpow.pop %v2254
        %v2256 = vmul.f32 %v2146, 1.442695
        %v2257 = vpow.pop %v2256
        %v2258 = vmul.f32 %v2147, 1.442695
        %v2259 = vpow.pop %v2258
        %v2260 = vmul.f32 %v2148, 1.442695
        %v2261 = vpow.pop %v2260
        %v2262 = vmul.f32 %v2149, 1.442695
        %v2263 = vpow.pop %v2262
        %v2264 = vmul.f32 %v2150, 1.442695
        %v2265 = vpow.pop %v2264
        %v2266 = vmul.f32 %v2151, 1.442695
        %v2267 = vpow.pop %v2266
        %v2268 = vmul.f32 %v2152, 1.442695
        %v2269 = vpow.pop %v2268
        %v2270 = vmul.f32 %v2153, 1.442695
        %v2271 = vpow.pop %v2270
        %v2272 = vmul.f32 %v2154, 1.442695
        %v2273 = vpow.pop %v2272
        %v2274 = vmul.f32 %v2155, 1.442695
        %v2275 = vpow.pop %v2274
        %v2276 = vmul.f32 %v2156, 1.442695
        %v2277 = vpow.pop %v2276
        %v2278 = vmul.f32 %v2157, 1.442695
        %v2279 = vpow.pop %v2278
        %v2280 = vmul.f32 %v2158, 1.442695
        %v2281 = vpow.pop %v2280
        %v2282 = vmul.f32 %v2159, 1.442695
        %v2283 = vpow.pop %v2282
        %v2284 = vmul.f32 %v2160, 1.442695
        %v2285 = vpow.pop %v2284
        %v2286 = vmul.f32 %v2161, 1.442695
        %v2287 = vpow.pop %v2286
        %v2288 = vmul.f32 %v2162, 1.442695
        %v2289 = vpow.pop %v2288
        %v2290 = vmul.f32 %v2163, 1.442695
        %v2291 = vpow.pop %v2290
        %2292 = vadd.xlane.f32.xlu0 %v2165
        %v2293 = vpop.xlane.xlu0 %2292
        %2294 = vadd.xlane.f32.xlu0 %v2167
        %v2295 = vpop.xlane.xlu0 %2294
        %2296 = vadd.xlane.f32.xlu0 %v2169
        %v2297 = vpop.xlane.xlu0 %2296
        %2298 = vadd.xlane.f32.xlu0 %v2171
        %v2299 = vpop.xlane.xlu0 %2298
        %2300 = vadd.xlane.f32.xlu0 %v2173
        %v2301 = vpop.xlane.xlu0 %2300
        %2302 = vadd.xlane.f32.xlu0 %v2175
        %v2303 = vpop.xlane.xlu0 %2302
        %2304 = vadd.xlane.f32.xlu0 %v2177
        %v2305 = vpop.xlane.xlu0 %2304
        %2306 = vadd.xlane.f32.xlu0 %v2179
        %v2307 = vpop.xlane.xlu0 %2306
        %2308 = vadd.xlane.f32.xlu0 %v2181
        %v2309 = vpop.xlane.xlu0 %2308
        %2310 = vadd.xlane.f32.xlu0 %v2183
        %v2311 = vpop.xlane.xlu0 %2310
        %2312 = vadd.xlane.f32.xlu0 %v2185
        %v2313 = vpop.xlane.xlu0 %2312
        %2314 = vadd.xlane.f32.xlu0 %v2187
        %v2315 = vpop.xlane.xlu0 %2314
        %2316 = vadd.xlane.f32.xlu0 %v2189
        %v2317 = vpop.xlane.xlu0 %2316
        %2318 = vadd.xlane.f32.xlu0 %v2191
        %v2319 = vpop.xlane.xlu0 %2318
        %2320 = vadd.xlane.f32.xlu0 %v2193
        %v2321 = vpop.xlane.xlu0 %2320
        %2322 = vadd.xlane.f32.xlu0 %v2195
        %v2323 = vpop.xlane.xlu0 %2322
        %2324 = vadd.xlane.f32.xlu0 %v2197
        %v2325 = vpop.xlane.xlu0 %2324
        %2326 = vadd.xlane.f32.xlu0 %v2199
        %v2327 = vpop.xlane.xlu0 %2326
        %2328 = vadd.xlane.f32.xlu0 %v2201
        %v2329 = vpop.xlane.xlu0 %2328
        %2330 = vadd.xlane.f32.xlu0 %v2203
        %v2331 = vpop.xlane.xlu0 %2330
        %2332 = vadd.xlane.f32.xlu0 %v2205
        %v2333 = vpop.xlane.xlu0 %2332
        %2334 = vadd.xlane.f32.xlu0 %v2207
        %v2335 = vpop.xlane.xlu0 %2334
        %2336 = vadd.xlane.f32.xlu0 %v2209
        %v2337 = vpop.xlane.xlu0 %2336
        %2338 = vadd.xlane.f32.xlu0 %v2211
        %v2339 = vpop.xlane.xlu0 %2338
        %2340 = vadd.xlane.f32.xlu0 %v2213
        %v2341 = vpop.xlane.xlu0 %2340
        %2342 = vadd.xlane.f32.xlu0 %v2215
        %v2343 = vpop.xlane.xlu0 %2342
        %2344 = vadd.xlane.f32.xlu0 %v2217
        %v2345 = vpop.xlane.xlu0 %2344
        %2346 = vadd.xlane.f32.xlu0 %v2219
        %v2347 = vpop.xlane.xlu0 %2346
        %2348 = vadd.xlane.f32.xlu0 %v2221
        %v2349 = vpop.xlane.xlu0 %2348
        %2350 = vadd.xlane.f32.xlu0 %v2223
        %v2351 = vpop.xlane.xlu0 %2350
        %2352 = vadd.xlane.f32.xlu0 %v2225
        %v2353 = vpop.xlane.xlu0 %2352
        %2354 = vadd.xlane.f32.xlu0 %v2227
        %v2355 = vpop.xlane.xlu0 %2354
        %2356 = vadd.xlane.f32.xlu0 %v2229
        %v2357 = vpop.xlane.xlu0 %2356
        %2358 = vadd.xlane.f32.xlu0 %v2231
        %v2359 = vpop.xlane.xlu0 %2358
        %2360 = vadd.xlane.f32.xlu0 %v2233
        %v2361 = vpop.xlane.xlu0 %2360
        %2362 = vadd.xlane.f32.xlu0 %v2235
        %v2363 = vpop.xlane.xlu0 %2362
        %2364 = vadd.xlane.f32.xlu0 %v2237
        %v2365 = vpop.xlane.xlu0 %2364
        %2366 = vadd.xlane.f32.xlu0 %v2239
        %v2367 = vpop.xlane.xlu0 %2366
        %2368 = vadd.xlane.f32.xlu0 %v2241
        %v2369 = vpop.xlane.xlu0 %2368
        %2370 = vadd.xlane.f32.xlu0 %v2243
        %v2371 = vpop.xlane.xlu0 %2370
        %2372 = vadd.xlane.f32.xlu0 %v2245
        %v2373 = vpop.xlane.xlu0 %2372
        %2374 = vadd.xlane.f32.xlu0 %v2247
        %v2375 = vpop.xlane.xlu0 %2374
        %2376 = vadd.xlane.f32.xlu0 %v2249
        %v2377 = vpop.xlane.xlu0 %2376
        %2378 = vadd.xlane.f32.xlu0 %v2251
        %v2379 = vpop.xlane.xlu0 %2378
        %2380 = vadd.xlane.f32.xlu0 %v2253
        %v2381 = vpop.xlane.xlu0 %2380
        %2382 = vadd.xlane.f32.xlu0 %v2255
        %v2383 = vpop.xlane.xlu0 %2382
        %2384 = vadd.xlane.f32.xlu0 %v2257
        %v2385 = vpop.xlane.xlu0 %2384
        %2386 = vadd.xlane.f32.xlu0 %v2259
        %v2387 = vpop.xlane.xlu0 %2386
        %2388 = vadd.xlane.f32.xlu0 %v2261
        %v2389 = vpop.xlane.xlu0 %2388
        %2390 = vadd.xlane.f32.xlu0 %v2263
        %v2391 = vpop.xlane.xlu0 %2390
        %2392 = vadd.xlane.f32.xlu0 %v2265
        %v2393 = vpop.xlane.xlu0 %2392
        %2394 = vadd.xlane.f32.xlu0 %v2267
        %v2395 = vpop.xlane.xlu0 %2394
        %2396 = vadd.xlane.f32.xlu0 %v2269
        %v2397 = vpop.xlane.xlu0 %2396
        %2398 = vadd.xlane.f32.xlu0 %v2271
        %v2399 = vpop.xlane.xlu0 %2398
        %2400 = vadd.xlane.f32.xlu0 %v2273
        %v2401 = vpop.xlane.xlu0 %2400
        %2402 = vadd.xlane.f32.xlu0 %v2275
        %v2403 = vpop.xlane.xlu0 %2402
        %2404 = vadd.xlane.f32.xlu0 %v2277
        %v2405 = vpop.xlane.xlu0 %2404
        %2406 = vadd.xlane.f32.xlu0 %v2279
        %v2407 = vpop.xlane.xlu0 %2406
        %2408 = vadd.xlane.f32.xlu0 %v2281
        %v2409 = vpop.xlane.xlu0 %2408
        %2410 = vadd.xlane.f32.xlu0 %v2283
        %v2411 = vpop.xlane.xlu0 %2410
        %2412 = vadd.xlane.f32.xlu0 %v2285
        %v2413 = vpop.xlane.xlu0 %2412
        %2414 = vadd.xlane.f32.xlu0 %v2287
        %v2415 = vpop.xlane.xlu0 %2414
        %2416 = vadd.xlane.f32.xlu0 %v2289
        %v2417 = vpop.xlane.xlu0 %2416
        %2418 = vadd.xlane.f32.xlu0 %v2291
        %v2419 = vpop.xlane.xlu0 %2418
        %v2420 = vpack.c.bf16 %v2167, %v2165
        %v2421 = vpack.c.bf16 %v2171, %v2169
        %v2422 = vpack.c.bf16 %v2175, %v2173
        %v2423 = vpack.c.bf16 %v2179, %v2177
        %v2424 = vpack.c.bf16 %v2183, %v2181
        %v2425 = vpack.c.bf16 %v2187, %v2185
        %v2426 = vpack.c.bf16 %v2191, %v2189
        %v2427 = vpack.c.bf16 %v2195, %v2193
        %v2428 = vpack.c.bf16 %v2199, %v2197
        %v2429 = vpack.c.bf16 %v2203, %v2201
        %v2430 = vpack.c.bf16 %v2207, %v2205
        %v2431 = vpack.c.bf16 %v2211, %v2209
        %v2432 = vpack.c.bf16 %v2215, %v2213
        %v2433 = vpack.c.bf16 %v2219, %v2217
        %v2434 = vpack.c.bf16 %v2223, %v2221
        %v2435 = vpack.c.bf16 %v2227, %v2225
        %v2436 = vpack.c.bf16 %v2231, %v2229
        %v2437 = vpack.c.bf16 %v2235, %v2233
        %v2438 = vpack.c.bf16 %v2239, %v2237
        %v2439 = vpack.c.bf16 %v2243, %v2241
        %v2440 = vpack.c.bf16 %v2247, %v2245
        %v2441 = vpack.c.bf16 %v2251, %v2249
        %v2442 = vpack.c.bf16 %v2255, %v2253
        %v2443 = vpack.c.bf16 %v2259, %v2257
        %v2444 = vpack.c.bf16 %v2263, %v2261
        %v2445 = vpack.c.bf16 %v2267, %v2265
        %v2446 = vpack.c.bf16 %v2271, %v2269
        %v2447 = vpack.c.bf16 %v2275, %v2273
        %v2448 = vpack.c.bf16 %v2279, %v2277
        %v2449 = vpack.c.bf16 %v2283, %v2281
        %v2450 = vpack.c.bf16 %v2287, %v2285
        %v2451 = vpack.c.bf16 %v2291, %v2289
        %2452 = vmatprep.subr.bf16.mxu0 0
        %2453 = vmatpush1.bf16.xpose.msra.mxu0 %v1479
        %2454 = vmatprep.subr.bf16.mxu0 0
        %2455 = vmatpush1.bf16.xpose.msra.mxu0 %v1480
        %2456 = vmatprep.subr.bf16.mxu0 0
        %2457 = vmatpush1.bf16.xpose.msra.mxu0 0
        %2458 = vmatprep.subr.bf16.mxu0 0
        %2459 = vmatpush1.bf16.xpose.msra.mxu0 0
        %2460 = vmatprep.subr.bf16.mxu0 0
        %2461 = vmatpush1.bf16.xpose.msra.mxu0 0
        %2462 = vmatprep.subr.bf16.mxu0 0
        %2463 = vmatpush1.bf16.xpose.msra.mxu0 0
        %2464 = vmatprep.subr.bf16.mxu0 0
        %2465 = vmatpush1.bf16.xpose.msra.mxu0 0
        %2466 = vmatprep.subr.bf16.mxu0 0
        %2467 = vmatpush1.bf16.xpose.msra.mxu0 0
        %2468 = vmatprep.subr.bf16.mxu0 0
        %2469 = vmatpush1.bf16.xpose.msra.mxu0 0
        %2470 = vmatprep.subr.bf16.mxu0 0
        %2471 = vmatpush1.bf16.xpose.msra.mxu0 0
        %2472 = vmatprep.subr.bf16.mxu0 0
        %2473 = vmatpush1.bf16.xpose.msra.mxu0 0
        %2474 = vmatprep.subr.bf16.mxu0 0
        %2475 = vmatpush1.bf16.xpose.msra.mxu0 0
        %2476 = vmatprep.subr.bf16.mxu0 0
        %2477 = vmatpush1.bf16.xpose.msra.mxu0 0
        %2478 = vmatprep.subr.bf16.mxu0 0
        %2479 = vmatpush1.bf16.xpose.msra.mxu0 0
        %2480 = vmatprep.subr.bf16.mxu0 0
        %2481 = vmatpush1.bf16.xpose.msra.mxu0 0
        %2482 = vmatprep.subr.bf16.mxu0 0
        %2483 = vmatpush1.bf16.xpose.msra.mxu0 0
        %2484 = vmatprep.mubr.bf16.mxu0 0
        %2485 = vmatmul.mubr.bf16.gmra.mrb[0].mxu0 %v2420
        %v2486 = vpop.f32.mrb[0].mxu0
        %v2487 = vadd.f32 0.0, %v2486
        %v2488 = vpop.f32.mrb[0].mxu0
        %v2489 = vpop.f32.mrb[0].mxu0
        %v2490 = vadd.f32 0.0, %v2489
        %v2491 = vpop.f32.mrb[0].mxu0
        %2492 = vmatprep.mubr.bf16.mxu0 0
        %2493 = vmatmul.mubr.bf16.gmra.mrb[0].mxu0 %v2421
        %v2494 = vpop.f32.mrb[0].mxu0
        %v2495 = vadd.f32 0.0, %v2494
        %v2496 = vpop.f32.mrb[0].mxu0
        %v2497 = vpop.f32.mrb[0].mxu0
        %v2498 = vadd.f32 0.0, %v2497
        %v2499 = vpop.f32.mrb[0].mxu0
        %2500 = vmatprep.mubr.bf16.mxu0 0
        %2501 = vmatmul.mubr.bf16.gmra.mrb[0].mxu0 %v2422
        %v2502 = vpop.f32.mrb[0].mxu0
        %v2503 = vadd.f32 0.0, %v2502
        %v2504 = vpop.f32.mrb[0].mxu0
        %v2505 = vpop.f32.mrb[0].mxu0
        %v2506 = vadd.f32 0.0, %v2505
        %v2507 = vpop.f32.mrb[0].mxu0
        %2508 = vmatprep.mubr.bf16.mxu0 0
        %2509 = vmatmul.mubr.bf16.gmra.mrb[0].mxu0 %v2423
        %v2510 = vpop.f32.mrb[0].mxu0
        %v2511 = vadd.f32 0.0, %v2510
        %v2512 = vpop.f32.mrb[0].mxu0
        %v2513 = vpop.f32.mrb[0].mxu0
        %v2514 = vadd.f32 0.0, %v2513
        %v2515 = vpop.f32.mrb[0].mxu0
        %2516 = vmatprep.mubr.bf16.mxu0 0
        %2517 = vmatmul.mubr.bf16.gmra.mrb[0].mxu0 %v2424
        %v2518 = vpop.f32.mrb[0].mxu0
        %v2519 = vadd.f32 0.0, %v2518
        %v2520 = vpop.f32.mrb[0].mxu0
        %v2521 = vpop.f32.mrb[0].mxu0
        %v2522 = vadd.f32 0.0, %v2521
        %v2523 = vpop.f32.mrb[0].mxu0
        %2524 = vmatprep.mubr.bf16.mxu0 0
        %2525 = vmatmul.mubr.bf16.gmra.mrb[0].mxu0 %v2425
        %v2526 = vpop.f32.mrb[0].mxu0
        %v2527 = vadd.f32 0.0, %v2526
        %v2528 = vpop.f32.mrb[0].mxu0
        %v2529 = vpop.f32.mrb[0].mxu0
        %v2530 = vadd.f32 0.0, %v2529
        %v2531 = vpop.f32.mrb[0].mxu0
        %2532 = vmatprep.mubr.bf16.mxu0 0
        %2533 = vmatmul.mubr.bf16.gmra.mrb[0].mxu0 %v2426
        %v2534 = vpop.f32.mrb[0].mxu0
        %v2535 = vadd.f32 0.0, %v2534
        %v2536 = vpop.f32.mrb[0].mxu0
        %v2537 = vpop.f32.mrb[0].mxu0
        %v2538 = vadd.f32 0.0, %v2537
        %v2539 = vpop.f32.mrb[0].mxu0
        %2540 = vmatprep.mubr.bf16.mxu0 0
        %2541 = vmatmul.mubr.bf16.gmra.mrb[0].mxu0 %v2427
        %v2542 = vpop.f32.mrb[0].mxu0
        %v2543 = vadd.f32 0.0, %v2542
        %v2544 = vpop.f32.mrb[0].mxu0
        %v2545 = vpop.f32.mrb[0].mxu0
        %v2546 = vadd.f32 0.0, %v2545
        %v2547 = vpop.f32.mrb[0].mxu0
        %2548 = vdwg.mxu0
        %2549 = vmatprep.subr.bf16.mxu0 0
        %2550 = vmatpush1.bf16.xpose.msra.mxu0 %v1481
        %2551 = vmatprep.subr.bf16.mxu0 0
        %2552 = vmatpush1.bf16.xpose.msra.mxu0 %v1482
        %2553 = vmatprep.subr.bf16.mxu0 0
        %2554 = vmatpush1.bf16.xpose.msra.mxu0 0
        %2555 = vmatprep.subr.bf16.mxu0 0
        %2556 = vmatpush1.bf16.xpose.msra.mxu0 0
        %2557 = vmatprep.subr.bf16.mxu0 0
        %2558 = vmatpush1.bf16.xpose.msra.mxu0 0
        %2559 = vmatprep.subr.bf16.mxu0 0
        %2560 = vmatpush1.bf16.xpose.msra.mxu0 0
        %2561 = vmatprep.subr.bf16.mxu0 0
        %2562 = vmatpush1.bf16.xpose.msra.mxu0 0
        %2563 = vmatprep.subr.bf16.mxu0 0
        %2564 = vmatpush1.bf16.xpose.msra.mxu0 0
        %2565 = vmatprep.subr.bf16.mxu0 0
        %2566 = vmatpush1.bf16.xpose.msra.mxu0 0
        %2567 = vmatprep.subr.bf16.mxu0 0
        %2568 = vmatpush1.bf16.xpose.msra.mxu0 0
        %2569 = vmatprep.subr.bf16.mxu0 0
        %2570 = vmatpush1.bf16.xpose.msra.mxu0 0
        %2571 = vmatprep.subr.bf16.mxu0 0
        %2572 = vmatpush1.bf16.xpose.msra.mxu0 0
        %2573 = vmatprep.subr.bf16.mxu0 0
        %2574 = vmatpush1.bf16.xpose.msra.mxu0 0
        %2575 = vmatprep.subr.bf16.mxu0 0
        %2576 = vmatpush1.bf16.xpose.msra.mxu0 0
        %2577 = vmatprep.subr.bf16.mxu0 0
        %2578 = vmatpush1.bf16.xpose.msra.mxu0 0
        %2579 = vmatprep.subr.bf16.mxu0 0
        %2580 = vmatpush1.bf16.xpose.msra.mxu0 0
        %2581 = vmatprep.mubr.bf16.mxu0 0
        %2582 = vmatmul.mubr.bf16.gmra.mrb[0].mxu0 %v2428
        %v2583 = vpop.f32.mrb[0].mxu0
        %v2584 = vadd.f32 0.0, %v2583
        %v2585 = vpop.f32.mrb[0].mxu0
        %v2586 = vpop.f32.mrb[0].mxu0
        %v2587 = vadd.f32 0.0, %v2586
        %v2588 = vpop.f32.mrb[0].mxu0
        %2589 = vmatprep.mubr.bf16.mxu0 0
        %2590 = vmatmul.mubr.bf16.gmra.mrb[0].mxu0 %v2429
        %v2591 = vpop.f32.mrb[0].mxu0
        %v2592 = vadd.f32 0.0, %v2591
        %v2593 = vpop.f32.mrb[0].mxu0
        %v2594 = vpop.f32.mrb[0].mxu0
        %v2595 = vadd.f32 0.0, %v2594
        %v2596 = vpop.f32.mrb[0].mxu0
        %2597 = vmatprep.mubr.bf16.mxu0 0
        %2598 = vmatmul.mubr.bf16.gmra.mrb[0].mxu0 %v2430
        %v2599 = vpop.f32.mrb[0].mxu0
        %v2600 = vadd.f32 0.0, %v2599
        %v2601 = vpop.f32.mrb[0].mxu0
        %v2602 = vpop.f32.mrb[0].mxu0
        %v2603 = vadd.f32 0.0, %v2602
        %v2604 = vpop.f32.mrb[0].mxu0
        %2605 = vmatprep.mubr.bf16.mxu0 0
        %2606 = vmatmul.mubr.bf16.gmra.mrb[0].mxu0 %v2431
        %v2607 = vpop.f32.mrb[0].mxu0
        %v2608 = vadd.f32 0.0, %v2607
        %v2609 = vpop.f32.mrb[0].mxu0
        %v2610 = vpop.f32.mrb[0].mxu0
        %v2611 = vadd.f32 0.0, %v2610
        %v2612 = vpop.f32.mrb[0].mxu0
        %2613 = vmatprep.mubr.bf16.mxu0 0
        %2614 = vmatmul.mubr.bf16.gmra.mrb[0].mxu0 %v2432
        %v2615 = vpop.f32.mrb[0].mxu0
        %v2616 = vadd.f32 0.0, %v2615
        %v2617 = vpop.f32.mrb[0].mxu0
        %v2618 = vpop.f32.mrb[0].mxu0
        %v2619 = vadd.f32 0.0, %v2618
        %v2620 = vpop.f32.mrb[0].mxu0
        %2621 = vmatprep.mubr.bf16.mxu0 0
        %2622 = vmatmul.mubr.bf16.gmra.mrb[0].mxu0 %v2433
        %v2623 = vpop.f32.mrb[0].mxu0
        %v2624 = vadd.f32 0.0, %v2623
        %v2625 = vpop.f32.mrb[0].mxu0
        %v2626 = vpop.f32.mrb[0].mxu0
        %v2627 = vadd.f32 0.0, %v2626
        %v2628 = vpop.f32.mrb[0].mxu0
        %2629 = vmatprep.mubr.bf16.mxu0 0
        %2630 = vmatmul.mubr.bf16.gmra.mrb[0].mxu0 %v2434
        %v2631 = vpop.f32.mrb[0].mxu0
        %v2632 = vadd.f32 0.0, %v2631
        %v2633 = vpop.f32.mrb[0].mxu0
        %v2634 = vpop.f32.mrb[0].mxu0
        %v2635 = vadd.f32 0.0, %v2634
        %v2636 = vpop.f32.mrb[0].mxu0
        %2637 = vmatprep.mubr.bf16.mxu0 0
        %2638 = vmatmul.mubr.bf16.gmra.mrb[0].mxu0 %v2435
        %v2639 = vpop.f32.mrb[0].mxu0
        %v2640 = vadd.f32 0.0, %v2639
        %v2641 = vpop.f32.mrb[0].mxu0
        %v2642 = vpop.f32.mrb[0].mxu0
        %v2643 = vadd.f32 0.0, %v2642
        %v2644 = vpop.f32.mrb[0].mxu0
        %2645 = vdwg.mxu0
        %2646 = vmatprep.subr.bf16.mxu0 0
        %2647 = vmatpush1.bf16.xpose.msra.mxu0 %v1483
        %2648 = vmatprep.subr.bf16.mxu0 0
        %2649 = vmatpush1.bf16.xpose.msra.mxu0 %v1484
        %2650 = vmatprep.subr.bf16.mxu0 0
        %2651 = vmatpush1.bf16.xpose.msra.mxu0 0
        %2652 = vmatprep.subr.bf16.mxu0 0
        %2653 = vmatpush1.bf16.xpose.msra.mxu0 0
        %2654 = vmatprep.subr.bf16.mxu0 0
        %2655 = vmatpush1.bf16.xpose.msra.mxu0 0
        %2656 = vmatprep.subr.bf16.mxu0 0
        %2657 = vmatpush1.bf16.xpose.msra.mxu0 0
        %2658 = vmatprep.subr.bf16.mxu0 0
        %2659 = vmatpush1.bf16.xpose.msra.mxu0 0
        %2660 = vmatprep.subr.bf16.mxu0 0
        %2661 = vmatpush1.bf16.xpose.msra.mxu0 0
        %2662 = vmatprep.subr.bf16.mxu0 0
        %2663 = vmatpush1.bf16.xpose.msra.mxu0 0
        %2664 = vmatprep.subr.bf16.mxu0 0
        %2665 = vmatpush1.bf16.xpose.msra.mxu0 0
        %2666 = vmatprep.subr.bf16.mxu0 0
        %2667 = vmatpush1.bf16.xpose.msra.mxu0 0
        %2668 = vmatprep.subr.bf16.mxu0 0
        %2669 = vmatpush1.bf16.xpose.msra.mxu0 0
        %2670 = vmatprep.subr.bf16.mxu0 0
        %2671 = vmatpush1.bf16.xpose.msra.mxu0 0
        %2672 = vmatprep.subr.bf16.mxu0 0
        %2673 = vmatpush1.bf16.xpose.msra.mxu0 0
        %2674 = vmatprep.subr.bf16.mxu0 0
        %2675 = vmatpush1.bf16.xpose.msra.mxu0 0
        %2676 = vmatprep.subr.bf16.mxu0 0
        %2677 = vmatpush1.bf16.xpose.msra.mxu0 0
        %2678 = vmatprep.mubr.bf16.mxu0 0
        %2679 = vmatmul.mubr.bf16.gmra.mrb[0].mxu0 %v2436
        %v2680 = vpop.f32.mrb[0].mxu0
        %v2681 = vadd.f32 0.0, %v2680
        %v2682 = vpop.f32.mrb[0].mxu0
        %v2683 = vpop.f32.mrb[0].mxu0
        %v2684 = vadd.f32 0.0, %v2683
        %v2685 = vpop.f32.mrb[0].mxu0
        %2686 = vmatprep.mubr.bf16.mxu0 0
        %2687 = vmatmul.mubr.bf16.gmra.mrb[0].mxu0 %v2437
        %v2688 = vpop.f32.mrb[0].mxu0
        %v2689 = vadd.f32 0.0, %v2688
        %v2690 = vpop.f32.mrb[0].mxu0
        %v2691 = vpop.f32.mrb[0].mxu0
        %v2692 = vadd.f32 0.0, %v2691
        %v2693 = vpop.f32.mrb[0].mxu0
        %2694 = vmatprep.mubr.bf16.mxu0 0
        %2695 = vmatmul.mubr.bf16.gmra.mrb[0].mxu0 %v2438
        %v2696 = vpop.f32.mrb[0].mxu0
        %v2697 = vadd.f32 0.0, %v2696
        %v2698 = vpop.f32.mrb[0].mxu0
        %v2699 = vpop.f32.mrb[0].mxu0
        %v2700 = vadd.f32 0.0, %v2699
        %v2701 = vpop.f32.mrb[0].mxu0
        %2702 = vmatprep.mubr.bf16.mxu0 0
        %2703 = vmatmul.mubr.bf16.gmra.mrb[0].mxu0 %v2439
        %v2704 = vpop.f32.mrb[0].mxu0
        %v2705 = vadd.f32 0.0, %v2704
        %v2706 = vpop.f32.mrb[0].mxu0
        %v2707 = vpop.f32.mrb[0].mxu0
        %v2708 = vadd.f32 0.0, %v2707
        %v2709 = vpop.f32.mrb[0].mxu0
        %2710 = vmatprep.mubr.bf16.mxu0 0
        %2711 = vmatmul.mubr.bf16.gmra.mrb[0].mxu0 %v2440
        %v2712 = vpop.f32.mrb[0].mxu0
        %v2713 = vadd.f32 0.0, %v2712
        %v2714 = vpop.f32.mrb[0].mxu0
        %v2715 = vpop.f32.mrb[0].mxu0
        %v2716 = vadd.f32 0.0, %v2715
        %v2717 = vpop.f32.mrb[0].mxu0
        %2718 = vmatprep.mubr.bf16.mxu0 0
        %2719 = vmatmul.mubr.bf16.gmra.mrb[0].mxu0 %v2441
        %v2720 = vpop.f32.mrb[0].mxu0
        %v2721 = vadd.f32 0.0, %v2720
        %v2722 = vpop.f32.mrb[0].mxu0
        %v2723 = vpop.f32.mrb[0].mxu0
        %v2724 = vadd.f32 0.0, %v2723
        %v2725 = vpop.f32.mrb[0].mxu0
        %2726 = vmatprep.mubr.bf16.mxu0 0
        %2727 = vmatmul.mubr.bf16.gmra.mrb[0].mxu0 %v2442
        %v2728 = vpop.f32.mrb[0].mxu0
        %v2729 = vadd.f32 0.0, %v2728
        %v2730 = vpop.f32.mrb[0].mxu0
        %v2731 = vpop.f32.mrb[0].mxu0
        %v2732 = vadd.f32 0.0, %v2731
        %v2733 = vpop.f32.mrb[0].mxu0
        %2734 = vmatprep.mubr.bf16.mxu0 0
        %2735 = vmatmul.mubr.bf16.gmra.mrb[0].mxu0 %v2443
        %v2736 = vpop.f32.mrb[0].mxu0
        %v2737 = vadd.f32 0.0, %v2736
        %v2738 = vpop.f32.mrb[0].mxu0
        %v2739 = vpop.f32.mrb[0].mxu0
        %v2740 = vadd.f32 0.0, %v2739
        %v2741 = vpop.f32.mrb[0].mxu0
        %2742 = vdwg.mxu0
        %2743 = vmatprep.subr.bf16.mxu0 0
        %2744 = vmatpush1.bf16.xpose.msra.mxu0 %v1485
        %2745 = vmatprep.subr.bf16.mxu0 0
        %2746 = vmatpush1.bf16.xpose.msra.mxu0 %v1486
        %2747 = vmatprep.subr.bf16.mxu0 0
        %2748 = vmatpush1.bf16.xpose.msra.mxu0 0
        %2749 = vmatprep.subr.bf16.mxu0 0
        %2750 = vmatpush1.bf16.xpose.msra.mxu0 0
        %2751 = vmatprep.subr.bf16.mxu0 0
        %2752 = vmatpush1.bf16.xpose.msra.mxu0 0
        %2753 = vmatprep.subr.bf16.mxu0 0
        %2754 = vmatpush1.bf16.xpose.msra.mxu0 0
        %2755 = vmatprep.subr.bf16.mxu0 0
        %2756 = vmatpush1.bf16.xpose.msra.mxu0 0
        %2757 = vmatprep.subr.bf16.mxu0 0
        %2758 = vmatpush1.bf16.xpose.msra.mxu0 0
        %2759 = vmatprep.subr.bf16.mxu0 0
        %2760 = vmatpush1.bf16.xpose.msra.mxu0 0
        %2761 = vmatprep.subr.bf16.mxu0 0
        %2762 = vmatpush1.bf16.xpose.msra.mxu0 0
        %2763 = vmatprep.subr.bf16.mxu0 0
        %2764 = vmatpush1.bf16.xpose.msra.mxu0 0
        %2765 = vmatprep.subr.bf16.mxu0 0
        %2766 = vmatpush1.bf16.xpose.msra.mxu0 0
        %2767 = vmatprep.subr.bf16.mxu0 0
        %2768 = vmatpush1.bf16.xpose.msra.mxu0 0
        %2769 = vmatprep.subr.bf16.mxu0 0
        %2770 = vmatpush1.bf16.xpose.msra.mxu0 0
        %2771 = vmatprep.subr.bf16.mxu0 0
        %2772 = vmatpush1.bf16.xpose.msra.mxu0 0
        %2773 = vmatprep.subr.bf16.mxu0 0
        %2774 = vmatpush1.bf16.xpose.msra.mxu0 0
        %2775 = vmatprep.mubr.bf16.mxu0 0
        %2776 = vmatmul.mubr.bf16.gmra.mrb[0].mxu0 %v2444
        %v2777 = vpop.f32.mrb[0].mxu0
        %v2778 = vadd.f32 0.0, %v2777
        %v2779 = vpop.f32.mrb[0].mxu0
        %v2780 = vpop.f32.mrb[0].mxu0
        %v2781 = vadd.f32 0.0, %v2780
        %v2782 = vpop.f32.mrb[0].mxu0
        %2783 = vmatprep.mubr.bf16.mxu0 0
        %2784 = vmatmul.mubr.bf16.gmra.mrb[0].mxu0 %v2445
        %v2785 = vpop.f32.mrb[0].mxu0
        %v2786 = vadd.f32 0.0, %v2785
        %v2787 = vpop.f32.mrb[0].mxu0
        %v2788 = vpop.f32.mrb[0].mxu0
        %v2789 = vadd.f32 0.0, %v2788
        %v2790 = vpop.f32.mrb[0].mxu0
        %2791 = vmatprep.mubr.bf16.mxu0 0
        %2792 = vmatmul.mubr.bf16.gmra.mrb[0].mxu0 %v2446
        %v2793 = vpop.f32.mrb[0].mxu0
        %v2794 = vadd.f32 0.0, %v2793
        %v2795 = vpop.f32.mrb[0].mxu0
        %v2796 = vpop.f32.mrb[0].mxu0
        %v2797 = vadd.f32 0.0, %v2796
        %v2798 = vpop.f32.mrb[0].mxu0
        %2799 = vmatprep.mubr.bf16.mxu0 0
        %2800 = vmatmul.mubr.bf16.gmra.mrb[0].mxu0 %v2447
        %v2801 = vpop.f32.mrb[0].mxu0
        %v2802 = vadd.f32 0.0, %v2801
        %v2803 = vpop.f32.mrb[0].mxu0
        %v2804 = vpop.f32.mrb[0].mxu0
        %v2805 = vadd.f32 0.0, %v2804
        %v2806 = vpop.f32.mrb[0].mxu0
        %2807 = vmatprep.mubr.bf16.mxu0 0
        %2808 = vmatmul.mubr.bf16.gmra.mrb[0].mxu0 %v2448
        %v2809 = vpop.f32.mrb[0].mxu0
        %v2810 = vadd.f32 0.0, %v2809
        %v2811 = vpop.f32.mrb[0].mxu0
        %v2812 = vpop.f32.mrb[0].mxu0
        %v2813 = vadd.f32 0.0, %v2812
        %v2814 = vpop.f32.mrb[0].mxu0
        %2815 = vmatprep.mubr.bf16.mxu0 0
        %2816 = vmatmul.mubr.bf16.gmra.mrb[0].mxu0 %v2449
        %v2817 = vpop.f32.mrb[0].mxu0
        %v2818 = vadd.f32 0.0, %v2817
        %v2819 = vpop.f32.mrb[0].mxu0
        %v2820 = vpop.f32.mrb[0].mxu0
        %v2821 = vadd.f32 0.0, %v2820
        %v2822 = vpop.f32.mrb[0].mxu0
        %2823 = vmatprep.mubr.bf16.mxu0 0
        %2824 = vmatmul.mubr.bf16.gmra.mrb[0].mxu0 %v2450
        %v2825 = vpop.f32.mrb[0].mxu0
        %v2826 = vadd.f32 0.0, %v2825
        %v2827 = vpop.f32.mrb[0].mxu0
        %v2828 = vpop.f32.mrb[0].mxu0
        %v2829 = vadd.f32 0.0, %v2828
        %v2830 = vpop.f32.mrb[0].mxu0
        %2831 = vmatprep.mubr.bf16.mxu0 0
        %2832 = vmatmul.mubr.bf16.gmra.mrb[0].mxu0 %v2451
        %v2833 = vpop.f32.mrb[0].mxu0
        %v2834 = vadd.f32 0.0, %v2833
        %v2835 = vpop.f32.mrb[0].mxu0
        %v2836 = vpop.f32.mrb[0].mxu0
        %v2837 = vadd.f32 0.0, %v2836
        %v2838 = vpop.f32.mrb[0].mxu0
        %2839 = vdwg.mxu0
        %v2840 = vrcp.pop %v2293
        %v2841 = vrcp.pop %v2295
        %v2842 = vrcp.pop %v2297
        %v2843 = vrcp.pop %v2299
        %v2844 = vrcp.pop %v2301
        %v2845 = vrcp.pop %v2303
        %v2846 = vrcp.pop %v2305
        %v2847 = vrcp.pop %v2307
        %v2848 = vrcp.pop %v2309
        %v2849 = vrcp.pop %v2311
        %v2850 = vrcp.pop %v2313
        %v2851 = vrcp.pop %v2315
        %v2852 = vrcp.pop %v2317
        %v2853 = vrcp.pop %v2319
        %v2854 = vrcp.pop %v2321
        %v2855 = vrcp.pop %v2323
        %v2856 = vrcp.pop %v2325
        %v2857 = vrcp.pop %v2327
        %v2858 = vrcp.pop %v2329
        %v2859 = vrcp.pop %v2331
        %v2860 = vrcp.pop %v2333
        %v2861 = vrcp.pop %v2335
        %v2862 = vrcp.pop %v2337
        %v2863 = vrcp.pop %v2339
        %v2864 = vrcp.pop %v2341
        %v2865 = vrcp.pop %v2343
        %v2866 = vrcp.pop %v2345
        %v2867 = vrcp.pop %v2347
        %v2868 = vrcp.pop %v2349
        %v2869 = vrcp.pop %v2351
        %v2870 = vrcp.pop %v2353
        %v2871 = vrcp.pop %v2355
        %v2872 = vrcp.pop %v2357
        %v2873 = vrcp.pop %v2359
        %v2874 = vrcp.pop %v2361
        %v2875 = vrcp.pop %v2363
        %v2876 = vrcp.pop %v2365
        %v2877 = vrcp.pop %v2367
        %v2878 = vrcp.pop %v2369
        %v2879 = vrcp.pop %v2371
        %v2880 = vrcp.pop %v2373
        %v2881 = vrcp.pop %v2375
        %v2882 = vrcp.pop %v2377
        %v2883 = vrcp.pop %v2379
        %v2884 = vrcp.pop %v2381
        %v2885 = vrcp.pop %v2383
        %v2886 = vrcp.pop %v2385
        %v2887 = vrcp.pop %v2387
        %v2888 = vrcp.pop %v2389
        %v2889 = vrcp.pop %v2391
        %v2890 = vrcp.pop %v2393
        %v2891 = vrcp.pop %v2395
        %v2892 = vrcp.pop %v2397
        %v2893 = vrcp.pop %v2399
        %v2894 = vrcp.pop %v2401
        %v2895 = vrcp.pop %v2403
        %v2896 = vrcp.pop %v2405
        %v2897 = vrcp.pop %v2407
        %v2898 = vrcp.pop %v2409
        %v2899 = vrcp.pop %v2411
        %v2900 = vrcp.pop %v2413
        %v2901 = vrcp.pop %v2415
        %v2902 = vrcp.pop %v2417
        %v2903 = vrcp.pop %v2419
        %v2904 = vmul.f32 %v2487, %v2840
        %v2905 = vmul.f32 %v2490, %v2841
        %v2906 = vmul.f32 %v2495, %v2842
        %v2907 = vmul.f32 %v2498, %v2843
        %v2908 = vmul.f32 %v2503, %v2844
        %v2909 = vmul.f32 %v2506, %v2845
        %v2910 = vmul.f32 %v2511, %v2846
        %v2911 = vmul.f32 %v2514, %v2847
        %v2912 = vmul.f32 %v2519, %v2848
        %v2913 = vmul.f32 %v2522, %v2849
        %v2914 = vmul.f32 %v2527, %v2850
        %v2915 = vmul.f32 %v2530, %v2851
        %v2916 = vmul.f32 %v2535, %v2852
        %v2917 = vmul.f32 %v2538, %v2853
        %v2918 = vmul.f32 %v2543, %v2854
        %v2919 = vmul.f32 %v2546, %v2855
        %v2920 = vmul.f32 %v2584, %v2856
        %v2921 = vmul.f32 %v2587, %v2857
        %v2922 = vmul.f32 %v2592, %v2858
        %v2923 = vmul.f32 %v2595, %v2859
        %v2924 = vmul.f32 %v2600, %v2860
        %v2925 = vmul.f32 %v2603, %v2861
        %v2926 = vmul.f32 %v2608, %v2862
        %v2927 = vmul.f32 %v2611, %v2863
        %v2928 = vmul.f32 %v2616, %v2864
        %v2929 = vmul.f32 %v2619, %v2865
        %v2930 = vmul.f32 %v2624, %v2866
        %v2931 = vmul.f32 %v2627, %v2867
        %v2932 = vmul.f32 %v2632, %v2868
        %v2933 = vmul.f32 %v2635, %v2869
        %v2934 = vmul.f32 %v2640, %v2870
        %v2935 = vmul.f32 %v2643, %v2871
        %v2936 = vmul.f32 %v2681, %v2872
        %v2937 = vmul.f32 %v2684, %v2873
        %v2938 = vmul.f32 %v2689, %v2874
        %v2939 = vmul.f32 %v2692, %v2875
        %v2940 = vmul.f32 %v2697, %v2876
        %v2941 = vmul.f32 %v2700, %v2877
        %v2942 = vmul.f32 %v2705, %v2878
        %v2943 = vmul.f32 %v2708, %v2879
        %v2944 = vmul.f32 %v2713, %v2880
        %v2945 = vmul.f32 %v2716, %v2881
        %v2946 = vmul.f32 %v2721, %v2882
        %v2947 = vmul.f32 %v2724, %v2883
        %v2948 = vmul.f32 %v2729, %v2884
        %v2949 = vmul.f32 %v2732, %v2885
        %v2950 = vmul.f32 %v2737, %v2886
        %v2951 = vmul.f32 %v2740, %v2887
        %v2952 = vmul.f32 %v2778, %v2888
        %v2953 = vmul.f32 %v2781, %v2889
        %v2954 = vmul.f32 %v2786, %v2890
        %v2955 = vmul.f32 %v2789, %v2891
        %v2956 = vmul.f32 %v2794, %v2892
        %v2957 = vmul.f32 %v2797, %v2893
        %v2958 = vmul.f32 %v2802, %v2894
        %v2959 = vmul.f32 %v2805, %v2895
        %v2960 = vmul.f32 %v2810, %v2896
        %v2961 = vmul.f32 %v2813, %v2897
        %v2962 = vmul.f32 %v2818, %v2898
        %v2963 = vmul.f32 %v2821, %v2899
        %v2964 = vmul.f32 %v2826, %v2900
        %v2965 = vmul.f32 %v2829, %v2901
        %v2966 = vmul.f32 %v2834, %v2902
        %v2967 = vmul.f32 %v2837, %v2903
        %v2968 = vpack.c.bf16 %v2905, %v2904
        %v2969 = vpack.c.bf16 %v2907, %v2906
        %v2970 = vpack.c.bf16 %v2909, %v2908
        %v2971 = vpack.c.bf16 %v2911, %v2910
        %v2972 = vpack.c.bf16 %v2913, %v2912
        %v2973 = vpack.c.bf16 %v2915, %v2914
        %v2974 = vpack.c.bf16 %v2917, %v2916
        %v2975 = vpack.c.bf16 %v2919, %v2918
        %v2976 = vpack.c.bf16 %v2921, %v2920
        %v2977 = vpack.c.bf16 %v2923, %v2922
        %v2978 = vpack.c.bf16 %v2925, %v2924
        %v2979 = vpack.c.bf16 %v2927, %v2926
        %v2980 = vpack.c.bf16 %v2929, %v2928
        %v2981 = vpack.c.bf16 %v2931, %v2930
        %v2982 = vpack.c.bf16 %v2933, %v2932
        %v2983 = vpack.c.bf16 %v2935, %v2934
        %v2984 = vpack.c.bf16 %v2937, %v2936
        %v2985 = vpack.c.bf16 %v2939, %v2938
        %v2986 = vpack.c.bf16 %v2941, %v2940
        %v2987 = vpack.c.bf16 %v2943, %v2942
        %v2988 = vpack.c.bf16 %v2945, %v2944
        %v2989 = vpack.c.bf16 %v2947, %v2946
        %v2990 = vpack.c.bf16 %v2949, %v2948
        %v2991 = vpack.c.bf16 %v2951, %v2950
        %v2992 = vpack.c.bf16 %v2953, %v2952
        %v2993 = vpack.c.bf16 %v2955, %v2954
        %v2994 = vpack.c.bf16 %v2957, %v2956
        %v2995 = vpack.c.bf16 %v2959, %v2958
        %v2996 = vpack.c.bf16 %v2961, %v2960
        %v2997 = vpack.c.bf16 %v2963, %v2962
        %v2998 = vpack.c.bf16 %v2965, %v2964
        %v2999 = vpack.c.bf16 %v2967, %v2966
        %v3000 = vld [vmem:[#allocation7] sm:$0xf]
        %v3001 = vld [vmem:[#allocation7 + $0x4] sm:$0xf]
        %v3002 = vld [vmem:[#allocation7 + $0x8] sm:$0xf]
        %v3003 = vld [vmem:[#allocation7 + $0xc] sm:$0xf]
        %v3004 = vld [vmem:[#allocation7 + $0x10] sm:$0xf]
        %v3005 = vld [vmem:[#allocation7 + $0x14] sm:$0xf]
        %v3006 = vld [vmem:[#allocation7 + $0x18] sm:$0xf]
        %v3007 = vld [vmem:[#allocation7 + $0x1c] sm:$0xf]
        %v3008 = vld [vmem:[#allocation7 + $0x20] sm:$0xf]
        %v3009 = vld [vmem:[#allocation7 + $0x24] sm:$0xf]
        %v3010 = vld [vmem:[#allocation7 + $0x28] sm:$0xf]
        %v3011 = vld [vmem:[#allocation7 + $0x2c] sm:$0xf]
        %v3012 = vld [vmem:[#allocation7 + $0x30] sm:$0xf]
        %v3013 = vld [vmem:[#allocation7 + $0x34] sm:$0xf]
        %v3014 = vld [vmem:[#allocation7 + $0x38] sm:$0xf]
        %v3015 = vld [vmem:[#allocation7 + $0x3c] sm:$0xf]
        %v3020 = vunpack.c.l.b16 %v3000
        %v3021 = vunpack.c.l.b16 %v3001
        %v3022 = vunpack.c.l.b16 %v3002
        %v3023 = vunpack.c.l.b16 %v3003
        %v3024 = vpack.c.b16 %v3021, %v3020
        %v3025 = vpack.c.b16 %v3023, %v3022
        %v3029 = vsel %vm1487, %v2968, 0
        %v3032 = vsel %vm1487, %v2969, 0
        %v3035 = vsel %vm1487, %v2970, 0
        %v3038 = vsel %vm1487, %v2971, 0
        %v3041 = vsel %vm1487, %v2972, 0
        %v3044 = vsel %vm1487, %v2973, 0
        %v3047 = vsel %vm1487, %v2974, 0
        %v3050 = vsel %vm1487, %v2975, 0
        %3052 = vmatprep.subr.bf16.mxu0 0
        %3053 = vmatpush1.bf16.msra.mxu0 %v3024
        %3054 = vmatprep.subr.bf16.mxu0 0
        %3055 = vmatpush1.bf16.msra.mxu0 %v3025
        %3056 = vmatprep.subr.bf16.mxu0 0
        %3057 = vmatpush1.bf16.msra.mxu0 0
        %3058 = vmatprep.subr.bf16.mxu0 0
        %3059 = vmatpush1.bf16.msra.mxu0 0
        %3060 = vmatprep.subr.bf16.mxu0 0
        %3061 = vmatpush1.bf16.msra.mxu0 0
        %3062 = vmatprep.subr.bf16.mxu0 0
        %3063 = vmatpush1.bf16.msra.mxu0 0
        %3064 = vmatprep.subr.bf16.mxu0 0
        %3065 = vmatpush1.bf16.msra.mxu0 0
        %3066 = vmatprep.subr.bf16.mxu0 0
        %3067 = vmatpush1.bf16.msra.mxu0 0
        %3068 = vmatprep.subr.bf16.mxu0 0
        %3069 = vmatpush1.bf16.msra.mxu0 0
        %3070 = vmatprep.subr.bf16.mxu0 0
        %3071 = vmatpush1.bf16.msra.mxu0 0
        %3072 = vmatprep.subr.bf16.mxu0 0
        %3073 = vmatpush1.bf16.msra.mxu0 0
        %3074 = vmatprep.subr.bf16.mxu0 0
        %3075 = vmatpush1.bf16.msra.mxu0 0
        %3076 = vmatprep.subr.bf16.mxu0 0
        %3077 = vmatpush1.bf16.msra.mxu0 0
        %3078 = vmatprep.subr.bf16.mxu0 0
        %3079 = vmatpush1.bf16.msra.mxu0 0
        %3080 = vmatprep.subr.bf16.mxu0 0
        %3081 = vmatpush1.bf16.msra.mxu0 0
        %3082 = vmatprep.subr.bf16.mxu0 0
        %3083 = vmatpush1.bf16.msra.mxu0 0
        %3084 = vmatprep.mubr.bf16.mxu0 0
        %3085 = vmatmul.mubr.bf16.gmra.mrb[0].mxu0 %v3029
        %v3086 = vpop.f32.mrb[0].mxu0
        %v3087 = vadd.f32 0.0, %v3086
        %v3088 = vpop.f32.mrb[0].mxu0
        %v3089 = vpop.f32.mrb[0].mxu0
        %v3090 = vadd.f32 0.0, %v3089
        %v3091 = vpop.f32.mrb[0].mxu0
        %3092 = vmatprep.mubr.bf16.mxu0 0
        %3093 = vmatmul.mubr.bf16.gmra.mrb[0].mxu0 %v3032
        %v3094 = vpop.f32.mrb[0].mxu0
        %v3095 = vadd.f32 0.0, %v3094
        %v3096 = vpop.f32.mrb[0].mxu0
        %v3097 = vpop.f32.mrb[0].mxu0
        %v3098 = vadd.f32 0.0, %v3097
        %v3099 = vpop.f32.mrb[0].mxu0
        %3100 = vmatprep.mubr.bf16.mxu0 0
        %3101 = vmatmul.mubr.bf16.gmra.mrb[0].mxu0 %v3035
        %v3102 = vpop.f32.mrb[0].mxu0
        %v3103 = vadd.f32 0.0, %v3102
        %v3104 = vpop.f32.mrb[0].mxu0
        %v3105 = vpop.f32.mrb[0].mxu0
        %v3106 = vadd.f32 0.0, %v3105
        %v3107 = vpop.f32.mrb[0].mxu0
        %3108 = vmatprep.mubr.bf16.mxu0 0
        %3109 = vmatmul.mubr.bf16.gmra.mrb[0].mxu0 %v3038
        %v3110 = vpop.f32.mrb[0].mxu0
        %v3111 = vadd.f32 0.0, %v3110
        %v3112 = vpop.f32.mrb[0].mxu0
        %v3113 = vpop.f32.mrb[0].mxu0
        %v3114 = vadd.f32 0.0, %v3113
        %v3115 = vpop.f32.mrb[0].mxu0
        %3116 = vmatprep.mubr.bf16.mxu0 0
        %3117 = vmatmul.mubr.bf16.gmra.mrb[0].mxu0 %v3041
        %v3118 = vpop.f32.mrb[0].mxu0
        %v3119 = vadd.f32 0.0, %v3118
        %v3120 = vpop.f32.mrb[0].mxu0
        %v3121 = vpop.f32.mrb[0].mxu0
        %v3122 = vadd.f32 0.0, %v3121
        %v3123 = vpop.f32.mrb[0].mxu0
        %3124 = vmatprep.mubr.bf16.mxu0 0
        %3125 = vmatmul.mubr.bf16.gmra.mrb[0].mxu0 %v3044
        %v3126 = vpop.f32.mrb[0].mxu0
        %v3127 = vadd.f32 0.0, %v3126
        %v3128 = vpop.f32.mrb[0].mxu0
        %v3129 = vpop.f32.mrb[0].mxu0
        %v3130 = vadd.f32 0.0, %v3129
        %v3131 = vpop.f32.mrb[0].mxu0
        %3132 = vmatprep.mubr.bf16.mxu0 0
        %3133 = vmatmul.mubr.bf16.gmra.mrb[0].mxu0 %v3047
        %v3134 = vpop.f32.mrb[0].mxu0
        %v3135 = vadd.f32 0.0, %v3134
        %v3136 = vpop.f32.mrb[0].mxu0
        %v3137 = vpop.f32.mrb[0].mxu0
        %v3138 = vadd.f32 0.0, %v3137
        %v3139 = vpop.f32.mrb[0].mxu0
        %3140 = vmatprep.mubr.bf16.mxu0 0
        %3141 = vmatmul.mubr.bf16.gmra.mrb[0].mxu0 %v3050
        %v3142 = vpop.f32.mrb[0].mxu0
        %v3143 = vadd.f32 0.0, %v3142
        %v3144 = vpop.f32.mrb[0].mxu0
        %v3145 = vpop.f32.mrb[0].mxu0
        %v3146 = vadd.f32 0.0, %v3145
        %v3147 = vpop.f32.mrb[0].mxu0
        %3148 = vdwg.mxu0
        %v3153 = vunpack.c.l.b16 %v3004
        %v3154 = vunpack.c.l.b16 %v3005
        %v3155 = vunpack.c.l.b16 %v3006
        %v3156 = vunpack.c.l.b16 %v3007
        %v3157 = vpack.c.b16 %v3154, %v3153
        %v3158 = vpack.c.b16 %v3156, %v3155
        %v3162 = vsel %vm1487, %v2976, 0
        %v3165 = vsel %vm1487, %v2977, 0
        %v3168 = vsel %vm1487, %v2978, 0
        %v3171 = vsel %vm1487, %v2979, 0
        %v3174 = vsel %vm1487, %v2980, 0
        %v3177 = vsel %vm1487, %v2981, 0
        %v3180 = vsel %vm1487, %v2982, 0
        %v3183 = vsel %vm1487, %v2983, 0
        %3185 = vmatprep.subr.bf16.mxu0 0
        %3186 = vmatpush1.bf16.msra.mxu0 %v3157
        %3187 = vmatprep.subr.bf16.mxu0 0
        %3188 = vmatpush1.bf16.msra.mxu0 %v3158
        %3189 = vmatprep.subr.bf16.mxu0 0
        %3190 = vmatpush1.bf16.msra.mxu0 0
        %3191 = vmatprep.subr.bf16.mxu0 0
        %3192 = vmatpush1.bf16.msra.mxu0 0
        %3193 = vmatprep.subr.bf16.mxu0 0
        %3194 = vmatpush1.bf16.msra.mxu0 0
        %3195 = vmatprep.subr.bf16.mxu0 0
        %3196 = vmatpush1.bf16.msra.mxu0 0
        %3197 = vmatprep.subr.bf16.mxu0 0
        %3198 = vmatpush1.bf16.msra.mxu0 0
        %3199 = vmatprep.subr.bf16.mxu0 0
        %3200 = vmatpush1.bf16.msra.mxu0 0
        %3201 = vmatprep.subr.bf16.mxu0 0
        %3202 = vmatpush1.bf16.msra.mxu0 0
        %3203 = vmatprep.subr.bf16.mxu0 0
        %3204 = vmatpush1.bf16.msra.mxu0 0
        %3205 = vmatprep.subr.bf16.mxu0 0
        %3206 = vmatpush1.bf16.msra.mxu0 0
        %3207 = vmatprep.subr.bf16.mxu0 0
        %3208 = vmatpush1.bf16.msra.mxu0 0
        %3209 = vmatprep.subr.bf16.mxu0 0
        %3210 = vmatpush1.bf16.msra.mxu0 0
        %3211 = vmatprep.subr.bf16.mxu0 0
        %3212 = vmatpush1.bf16.msra.mxu0 0
        %3213 = vmatprep.subr.bf16.mxu0 0
        %3214 = vmatpush1.bf16.msra.mxu0 0
        %3215 = vmatprep.subr.bf16.mxu0 0
        %3216 = vmatpush1.bf16.msra.mxu0 0
        %3217 = vmatprep.mubr.bf16.mxu0 0
        %3218 = vmatmul.mubr.bf16.gmra.mrb[0].mxu0 %v3162
        %v3219 = vpop.f32.mrb[0].mxu0
        %v3220 = vadd.f32 0.0, %v3219
        %v3221 = vpop.f32.mrb[0].mxu0
        %v3222 = vpop.f32.mrb[0].mxu0
        %v3223 = vadd.f32 0.0, %v3222
        %v3224 = vpop.f32.mrb[0].mxu0
        %3225 = vmatprep.mubr.bf16.mxu0 0
        %3226 = vmatmul.mubr.bf16.gmra.mrb[0].mxu0 %v3165
        %v3227 = vpop.f32.mrb[0].mxu0
        %v3228 = vadd.f32 0.0, %v3227
        %v3229 = vpop.f32.mrb[0].mxu0
        %v3230 = vpop.f32.mrb[0].mxu0
        %v3231 = vadd.f32 0.0, %v3230
        %v3232 = vpop.f32.mrb[0].mxu0
        %3233 = vmatprep.mubr.bf16.mxu0 0
        %3234 = vmatmul.mubr.bf16.gmra.mrb[0].mxu0 %v3168
        %v3235 = vpop.f32.mrb[0].mxu0
        %v3236 = vadd.f32 0.0, %v3235
        %v3237 = vpop.f32.mrb[0].mxu0
        %v3238 = vpop.f32.mrb[0].mxu0
        %v3239 = vadd.f32 0.0, %v3238
        %v3240 = vpop.f32.mrb[0].mxu0
        %3241 = vmatprep.mubr.bf16.mxu0 0
        %3242 = vmatmul.mubr.bf16.gmra.mrb[0].mxu0 %v3171
        %v3243 = vpop.f32.mrb[0].mxu0
        %v3244 = vadd.f32 0.0, %v3243
        %v3245 = vpop.f32.mrb[0].mxu0
        %v3246 = vpop.f32.mrb[0].mxu0
        %v3247 = vadd.f32 0.0, %v3246
        %v3248 = vpop.f32.mrb[0].mxu0
        %3249 = vmatprep.mubr.bf16.mxu0 0
        %3250 = vmatmul.mubr.bf16.gmra.mrb[0].mxu0 %v3174
        %v3251 = vpop.f32.mrb[0].mxu0
        %v3252 = vadd.f32 0.0, %v3251
        %v3253 = vpop.f32.mrb[0].mxu0
        %v3254 = vpop.f32.mrb[0].mxu0
        %v3255 = vadd.f32 0.0, %v3254
        %v3256 = vpop.f32.mrb[0].mxu0
        %3257 = vmatprep.mubr.bf16.mxu0 0
        %3258 = vmatmul.mubr.bf16.gmra.mrb[0].mxu0 %v3177
        %v3259 = vpop.f32.mrb[0].mxu0
        %v3260 = vadd.f32 0.0, %v3259
        %v3261 = vpop.f32.mrb[0].mxu0
        %v3262 = vpop.f32.mrb[0].mxu0
        %v3263 = vadd.f32 0.0, %v3262
        %v3264 = vpop.f32.mrb[0].mxu0
        %3265 = vmatprep.mubr.bf16.mxu0 0
        %3266 = vmatmul.mubr.bf16.gmra.mrb[0].mxu0 %v3180
        %v3267 = vpop.f32.mrb[0].mxu0
        %v3268 = vadd.f32 0.0, %v3267
        %v3269 = vpop.f32.mrb[0].mxu0
        %v3270 = vpop.f32.mrb[0].mxu0
        %v3271 = vadd.f32 0.0, %v3270
        %v3272 = vpop.f32.mrb[0].mxu0
        %3273 = vmatprep.mubr.bf16.mxu0 0
        %3274 = vmatmul.mubr.bf16.gmra.mrb[0].mxu0 %v3183
        %v3275 = vpop.f32.mrb[0].mxu0
        %v3276 = vadd.f32 0.0, %v3275
        %v3277 = vpop.f32.mrb[0].mxu0
        %v3278 = vpop.f32.mrb[0].mxu0
        %v3279 = vadd.f32 0.0, %v3278
        %v3280 = vpop.f32.mrb[0].mxu0
        %3281 = vdwg.mxu0
        %v3286 = vunpack.c.l.b16 %v3008
        %v3287 = vunpack.c.l.b16 %v3009
        %v3288 = vunpack.c.l.b16 %v3010
        %v3289 = vunpack.c.l.b16 %v3011
        %v3290 = vpack.c.b16 %v3287, %v3286
        %v3291 = vpack.c.b16 %v3289, %v3288
        %v3295 = vsel %vm1487, %v2984, 0
        %v3298 = vsel %vm1487, %v2985, 0
        %v3301 = vsel %vm1487, %v2986, 0
        %v3304 = vsel %vm1487, %v2987, 0
        %v3307 = vsel %vm1487, %v2988, 0
        %v3310 = vsel %vm1487, %v2989, 0
        %v3313 = vsel %vm1487, %v2990, 0
        %v3316 = vsel %vm1487, %v2991, 0
        %3318 = vmatprep.subr.bf16.mxu0 0
        %3319 = vmatpush1.bf16.msra.mxu0 %v3290
        %3320 = vmatprep.subr.bf16.mxu0 0
        %3321 = vmatpush1.bf16.msra.mxu0 %v3291
        %3322 = vmatprep.subr.bf16.mxu0 0
        %3323 = vmatpush1.bf16.msra.mxu0 0
        %3324 = vmatprep.subr.bf16.mxu0 0
        %3325 = vmatpush1.bf16.msra.mxu0 0
        %3326 = vmatprep.subr.bf16.mxu0 0
        %3327 = vmatpush1.bf16.msra.mxu0 0
        %3328 = vmatprep.subr.bf16.mxu0 0
        %3329 = vmatpush1.bf16.msra.mxu0 0
        %3330 = vmatprep.subr.bf16.mxu0 0
        %3331 = vmatpush1.bf16.msra.mxu0 0
        %3332 = vmatprep.subr.bf16.mxu0 0
        %3333 = vmatpush1.bf16.msra.mxu0 0
        %3334 = vmatprep.subr.bf16.mxu0 0
        %3335 = vmatpush1.bf16.msra.mxu0 0
        %3336 = vmatprep.subr.bf16.mxu0 0
        %3337 = vmatpush1.bf16.msra.mxu0 0
        %3338 = vmatprep.subr.bf16.mxu0 0
        %3339 = vmatpush1.bf16.msra.mxu0 0
        %3340 = vmatprep.subr.bf16.mxu0 0
        %3341 = vmatpush1.bf16.msra.mxu0 0
        %3342 = vmatprep.subr.bf16.mxu0 0
        %3343 = vmatpush1.bf16.msra.mxu0 0
        %3344 = vmatprep.subr.bf16.mxu0 0
        %3345 = vmatpush1.bf16.msra.mxu0 0
        %3346 = vmatprep.subr.bf16.mxu0 0
        %3347 = vmatpush1.bf16.msra.mxu0 0
        %3348 = vmatprep.subr.bf16.mxu0 0
        %3349 = vmatpush1.bf16.msra.mxu0 0
        %3350 = vmatprep.mubr.bf16.mxu0 0
        %3351 = vmatmul.mubr.bf16.gmra.mrb[0].mxu0 %v3295
        %v3352 = vpop.f32.mrb[0].mxu0
        %v3353 = vadd.f32 0.0, %v3352
        %v3354 = vpop.f32.mrb[0].mxu0
        %v3355 = vpop.f32.mrb[0].mxu0
        %v3356 = vadd.f32 0.0, %v3355
        %v3357 = vpop.f32.mrb[0].mxu0
        %3358 = vmatprep.mubr.bf16.mxu0 0
        %3359 = vmatmul.mubr.bf16.gmra.mrb[0].mxu0 %v3298
        %v3360 = vpop.f32.mrb[0].mxu0
        %v3361 = vadd.f32 0.0, %v3360
        %v3362 = vpop.f32.mrb[0].mxu0
        %v3363 = vpop.f32.mrb[0].mxu0
        %v3364 = vadd.f32 0.0, %v3363
        %v3365 = vpop.f32.mrb[0].mxu0
        %3366 = vmatprep.mubr.bf16.mxu0 0
        %3367 = vmatmul.mubr.bf16.gmra.mrb[0].mxu0 %v3301
        %v3368 = vpop.f32.mrb[0].mxu0
        %v3369 = vadd.f32 0.0, %v3368
        %v3370 = vpop.f32.mrb[0].mxu0
        %v3371 = vpop.f32.mrb[0].mxu0
        %v3372 = vadd.f32 0.0, %v3371
        %v3373 = vpop.f32.mrb[0].mxu0
        %3374 = vmatprep.mubr.bf16.mxu0 0
        %3375 = vmatmul.mubr.bf16.gmra.mrb[0].mxu0 %v3304
        %v3376 = vpop.f32.mrb[0].mxu0
        %v3377 = vadd.f32 0.0, %v3376
        %v3378 = vpop.f32.mrb[0].mxu0
        %v3379 = vpop.f32.mrb[0].mxu0
        %v3380 = vadd.f32 0.0, %v3379
        %v3381 = vpop.f32.mrb[0].mxu0
        %3382 = vmatprep.mubr.bf16.mxu0 0
        %3383 = vmatmul.mubr.bf16.gmra.mrb[0].mxu0 %v3307
        %v3384 = vpop.f32.mrb[0].mxu0
        %v3385 = vadd.f32 0.0, %v3384
        %v3386 = vpop.f32.mrb[0].mxu0
        %v3387 = vpop.f32.mrb[0].mxu0
        %v3388 = vadd.f32 0.0, %v3387
        %v3389 = vpop.f32.mrb[0].mxu0
        %3390 = vmatprep.mubr.bf16.mxu0 0
        %3391 = vmatmul.mubr.bf16.gmra.mrb[0].mxu0 %v3310
        %v3392 = vpop.f32.mrb[0].mxu0
        %v3393 = vadd.f32 0.0, %v3392
        %v3394 = vpop.f32.mrb[0].mxu0
        %v3395 = vpop.f32.mrb[0].mxu0
        %v3396 = vadd.f32 0.0, %v3395
        %v3397 = vpop.f32.mrb[0].mxu0
        %3398 = vmatprep.mubr.bf16.mxu0 0
        %3399 = vmatmul.mubr.bf16.gmra.mrb[0].mxu0 %v3313
        %v3400 = vpop.f32.mrb[0].mxu0
        %v3401 = vadd.f32 0.0, %v3400
        %v3402 = vpop.f32.mrb[0].mxu0
        %v3403 = vpop.f32.mrb[0].mxu0
        %v3404 = vadd.f32 0.0, %v3403
        %v3405 = vpop.f32.mrb[0].mxu0
        %3406 = vmatprep.mubr.bf16.mxu0 0
        %3407 = vmatmul.mubr.bf16.gmra.mrb[0].mxu0 %v3316
        %v3408 = vpop.f32.mrb[0].mxu0
        %v3409 = vadd.f32 0.0, %v3408
        %v3410 = vpop.f32.mrb[0].mxu0
        %v3411 = vpop.f32.mrb[0].mxu0
        %v3412 = vadd.f32 0.0, %v3411
        %v3413 = vpop.f32.mrb[0].mxu0
        %3414 = vdwg.mxu0
        %v3419 = vunpack.c.l.b16 %v3012
        %v3420 = vunpack.c.l.b16 %v3013
        %v3421 = vunpack.c.l.b16 %v3014
        %v3422 = vunpack.c.l.b16 %v3015
        %v3423 = vpack.c.b16 %v3420, %v3419
        %v3424 = vpack.c.b16 %v3422, %v3421
        %v3428 = vsel %vm1487, %v2992, 0
        %v3431 = vsel %vm1487, %v2993, 0
        %v3434 = vsel %vm1487, %v2994, 0
        %v3437 = vsel %vm1487, %v2995, 0
        %v3440 = vsel %vm1487, %v2996, 0
        %v3443 = vsel %vm1487, %v2997, 0
        %v3446 = vsel %vm1487, %v2998, 0
        %v3449 = vsel %vm1487, %v2999, 0
        %3451 = vmatprep.subr.bf16.mxu0 0
        %3452 = vmatpush1.bf16.msra.mxu0 %v3423
        %3453 = vmatprep.subr.bf16.mxu0 0
        %3454 = vmatpush1.bf16.msra.mxu0 %v3424
        %3455 = vmatprep.subr.bf16.mxu0 0
        %3456 = vmatpush1.bf16.msra.mxu0 0
        %3457 = vmatprep.subr.bf16.mxu0 0
        %3458 = vmatpush1.bf16.msra.mxu0 0
        %3459 = vmatprep.subr.bf16.mxu0 0
        %3460 = vmatpush1.bf16.msra.mxu0 0
        %3461 = vmatprep.subr.bf16.mxu0 0
        %3462 = vmatpush1.bf16.msra.mxu0 0
        %3463 = vmatprep.subr.bf16.mxu0 0
        %3464 = vmatpush1.bf16.msra.mxu0 0
        %3465 = vmatprep.subr.bf16.mxu0 0
        %3466 = vmatpush1.bf16.msra.mxu0 0
        %3467 = vmatprep.subr.bf16.mxu0 0
        %3468 = vmatpush1.bf16.msra.mxu0 0
        %3469 = vmatprep.subr.bf16.mxu0 0
        %3470 = vmatpush1.bf16.msra.mxu0 0
        %3471 = vmatprep.subr.bf16.mxu0 0
        %3472 = vmatpush1.bf16.msra.mxu0 0
        %3473 = vmatprep.subr.bf16.mxu0 0
        %3474 = vmatpush1.bf16.msra.mxu0 0
        %3475 = vmatprep.subr.bf16.mxu0 0
        %3476 = vmatpush1.bf16.msra.mxu0 0
        %3477 = vmatprep.subr.bf16.mxu0 0
        %3478 = vmatpush1.bf16.msra.mxu0 0
        %3479 = vmatprep.subr.bf16.mxu0 0
        %3480 = vmatpush1.bf16.msra.mxu0 0
        %3481 = vmatprep.subr.bf16.mxu0 0
        %3482 = vmatpush1.bf16.msra.mxu0 0
        %3483 = vmatprep.mubr.bf16.mxu0 0
        %3484 = vmatmul.mubr.bf16.gmra.mrb[0].mxu0 %v3428
        %v3485 = vpop.f32.mrb[0].mxu0
        %v3486 = vadd.f32 0.0, %v3485
        %v3487 = vpop.f32.mrb[0].mxu0
        %v3488 = vpop.f32.mrb[0].mxu0
        %v3489 = vadd.f32 0.0, %v3488
        %v3490 = vpop.f32.mrb[0].mxu0
        %3491 = vmatprep.mubr.bf16.mxu0 0
        %3492 = vmatmul.mubr.bf16.gmra.mrb[0].mxu0 %v3431
        %v3493 = vpop.f32.mrb[0].mxu0
        %v3494 = vadd.f32 0.0, %v3493
        %v3495 = vpop.f32.mrb[0].mxu0
        %v3496 = vpop.f32.mrb[0].mxu0
        %v3497 = vadd.f32 0.0, %v3496
        %v3498 = vpop.f32.mrb[0].mxu0
        %3499 = vmatprep.mubr.bf16.mxu0 0
        %3500 = vmatmul.mubr.bf16.gmra.mrb[0].mxu0 %v3434
        %v3501 = vpop.f32.mrb[0].mxu0
        %v3502 = vadd.f32 0.0, %v3501
        %v3503 = vpop.f32.mrb[0].mxu0
        %v3504 = vpop.f32.mrb[0].mxu0
        %v3505 = vadd.f32 0.0, %v3504
        %v3506 = vpop.f32.mrb[0].mxu0
        %3507 = vmatprep.mubr.bf16.mxu0 0
        %3508 = vmatmul.mubr.bf16.gmra.mrb[0].mxu0 %v3437
        %v3509 = vpop.f32.mrb[0].mxu0
        %v3510 = vadd.f32 0.0, %v3509
        %v3511 = vpop.f32.mrb[0].mxu0
        %v3512 = vpop.f32.mrb[0].mxu0
        %v3513 = vadd.f32 0.0, %v3512
        %v3514 = vpop.f32.mrb[0].mxu0
        %3515 = vmatprep.mubr.bf16.mxu0 0
        %3516 = vmatmul.mubr.bf16.gmra.mrb[0].mxu0 %v3440
        %v3517 = vpop.f32.mrb[0].mxu0
        %v3518 = vadd.f32 0.0, %v3517
        %v3519 = vpop.f32.mrb[0].mxu0
        %v3520 = vpop.f32.mrb[0].mxu0
        %v3521 = vadd.f32 0.0, %v3520
        %v3522 = vpop.f32.mrb[0].mxu0
        %3523 = vmatprep.mubr.bf16.mxu0 0
        %3524 = vmatmul.mubr.bf16.gmra.mrb[0].mxu0 %v3443
        %v3525 = vpop.f32.mrb[0].mxu0
        %v3526 = vadd.f32 0.0, %v3525
        %v3527 = vpop.f32.mrb[0].mxu0
        %v3528 = vpop.f32.mrb[0].mxu0
        %v3529 = vadd.f32 0.0, %v3528
        %v3530 = vpop.f32.mrb[0].mxu0
        %3531 = vmatprep.mubr.bf16.mxu0 0
        %3532 = vmatmul.mubr.bf16.gmra.mrb[0].mxu0 %v3446
        %v3533 = vpop.f32.mrb[0].mxu0
        %v3534 = vadd.f32 0.0, %v3533
        %v3535 = vpop.f32.mrb[0].mxu0
        %v3536 = vpop.f32.mrb[0].mxu0
        %v3537 = vadd.f32 0.0, %v3536
        %v3538 = vpop.f32.mrb[0].mxu0
        %3539 = vmatprep.mubr.bf16.mxu0 0
        %3540 = vmatmul.mubr.bf16.gmra.mrb[0].mxu0 %v3449
        %v3541 = vpop.f32.mrb[0].mxu0
        %v3542 = vadd.f32 0.0, %v3541
        %v3543 = vpop.f32.mrb[0].mxu0
        %v3544 = vpop.f32.mrb[0].mxu0
        %v3545 = vadd.f32 0.0, %v3544
        %v3546 = vpop.f32.mrb[0].mxu0
        %3547 = vdwg.mxu0
        %v3548 = vadd.f32 %v3087, %v3220
        %v3549 = vadd.f32 %v3548, %v3353
        %v3550 = vadd.f32 %v3549, %v3486
        %v3551 = vadd.f32 %v3090, %v3223
        %v3552 = vadd.f32 %v3551, %v3356
        %v3553 = vadd.f32 %v3552, %v3489
        %v3554 = vadd.f32 %v3095, %v3228
        %v3555 = vadd.f32 %v3554, %v3361
        %v3556 = vadd.f32 %v3555, %v3494
        %v3557 = vadd.f32 %v3098, %v3231
        %v3558 = vadd.f32 %v3557, %v3364
        %v3559 = vadd.f32 %v3558, %v3497
        %v3560 = vadd.f32 %v3103, %v3236
        %v3561 = vadd.f32 %v3560, %v3369
        %v3562 = vadd.f32 %v3561, %v3502
        %v3563 = vadd.f32 %v3106, %v3239
        %v3564 = vadd.f32 %v3563, %v3372
        %v3565 = vadd.f32 %v3564, %v3505
        %v3566 = vadd.f32 %v3111, %v3244
        %v3567 = vadd.f32 %v3566, %v3377
        %v3568 = vadd.f32 %v3567, %v3510
        %v3569 = vadd.f32 %v3114, %v3247
        %v3570 = vadd.f32 %v3569, %v3380
        %v3571 = vadd.f32 %v3570, %v3513
        %v3572 = vadd.f32 %v3119, %v3252
        %v3573 = vadd.f32 %v3572, %v3385
        %v3574 = vadd.f32 %v3573, %v3518
        %v3575 = vadd.f32 %v3122, %v3255
        %v3576 = vadd.f32 %v3575, %v3388
        %v3577 = vadd.f32 %v3576, %v3521
        %v3578 = vadd.f32 %v3127, %v3260
        %v3579 = vadd.f32 %v3578, %v3393
        %v3580 = vadd.f32 %v3579, %v3526
        %v3581 = vadd.f32 %v3130, %v3263
        %v3582 = vadd.f32 %v3581, %v3396
        %v3583 = vadd.f32 %v3582, %v3529
        %v3584 = vadd.f32 %v3135, %v3268
        %v3585 = vadd.f32 %v3584, %v3401
        %v3586 = vadd.f32 %v3585, %v3534
        %v3587 = vadd.f32 %v3138, %v3271
        %v3588 = vadd.f32 %v3587, %v3404
        %v3589 = vadd.f32 %v3588, %v3537
        %v3590 = vadd.f32 %v3143, %v3276
        %v3591 = vadd.f32 %v3590, %v3409
        %v3592 = vadd.f32 %v3591, %v3542
        %v3593 = vadd.f32 %v3146, %v3279
        %v3594 = vadd.f32 %v3593, %v3412
        %v3595 = vadd.f32 %v3594, %v3545
        %v3596 = vld [vmem:[%s6] sm:$0x1]
        %v3598 = vlaneseq
        %v3599 = vshrl.u32 %v3598, 7
        %v3600 = vsub.s32 0, %v3599
        %v3601 = vrot.slane %v3596, %v3600
        %v3603 = vadd.f32 %v3550, %v3601
        %v3604 = vadd.f32 %v3553, %v3601
        %v3605 = vadd.f32 %v3556, %v3601
        %v3606 = vadd.f32 %v3559, %v3601
        %v3607 = vadd.f32 %v3562, %v3601
        %v3608 = vadd.f32 %v3565, %v3601
        %v3609 = vadd.f32 %v3568, %v3601
        %v3610 = vadd.f32 %v3571, %v3601
        %v3611 = vadd.f32 %v3574, %v3601
        %v3612 = vadd.f32 %v3577, %v3601
        %v3613 = vadd.f32 %v3580, %v3601
        %v3614 = vadd.f32 %v3583, %v3601
        %v3615 = vadd.f32 %v3586, %v3601
        %v3616 = vadd.f32 %v3589, %v3601
        %v3617 = vadd.f32 %v3592, %v3601
        %v3618 = vadd.f32 %v3595, %v3601
        %v3619 = vadd.f32 %v518, %v3603
        %v3620 = vadd.f32 %v519, %v3604
        %v3621 = vadd.f32 %v520, %v3605
        %v3622 = vadd.f32 %v521, %v3606
        %v3623 = vadd.f32 %v522, %v3607
        %v3624 = vadd.f32 %v523, %v3608
        %v3625 = vadd.f32 %v524, %v3609
        %v3626 = vadd.f32 %v525, %v3610
        %v3627 = vadd.f32 %v526, %v3611
        %v3628 = vadd.f32 %v527, %v3612
        %v3629 = vadd.f32 %v528, %v3613
        %v3630 = vadd.f32 %v529, %v3614
        %v3631 = vadd.f32 %v530, %v3615
        %v3632 = vadd.f32 %v531, %v3616
        %v3633 = vadd.f32 %v532, %v3617
        %v3634 = vadd.f32 %v533, %v3618
        %v3635 = vld [vmem:[%s7] sm:$0x1]
        %v3636 = vld [vmem:[%s8] sm:$0x1]
        %3637 = vadd.xlane.f32.xlu0 %v3619
        %v3638 = vpop.xlane.xlu0 %3637
        %3639 = vadd.xlane.f32.xlu0 %v3620
        %v3640 = vpop.xlane.xlu0 %3639
        %3641 = vadd.xlane.f32.xlu0 %v3621
        %v3642 = vpop.xlane.xlu0 %3641
        %3643 = vadd.xlane.f32.xlu0 %v3622
        %v3644 = vpop.xlane.xlu0 %3643
        %3645 = vadd.xlane.f32.xlu0 %v3623
        %v3646 = vpop.xlane.xlu0 %3645
        %3647 = vadd.xlane.f32.xlu0 %v3624
        %v3648 = vpop.xlane.xlu0 %3647
        %3649 = vadd.xlane.f32.xlu0 %v3625
        %v3650 = vpop.xlane.xlu0 %3649
        %3651 = vadd.xlane.f32.xlu0 %v3626
        %v3652 = vpop.xlane.xlu0 %3651
        %3653 = vadd.xlane.f32.xlu0 %v3627
        %v3654 = vpop.xlane.xlu0 %3653
        %3655 = vadd.xlane.f32.xlu0 %v3628
        %v3656 = vpop.xlane.xlu0 %3655
        %3657 = vadd.xlane.f32.xlu0 %v3629
        %v3658 = vpop.xlane.xlu0 %3657
        %3659 = vadd.xlane.f32.xlu0 %v3630
        %v3660 = vpop.xlane.xlu0 %3659
        %3661 = vadd.xlane.f32.xlu0 %v3631
        %v3662 = vpop.xlane.xlu0 %3661
        %3663 = vadd.xlane.f32.xlu0 %v3632
        %v3664 = vpop.xlane.xlu0 %3663
        %3665 = vadd.xlane.f32.xlu0 %v3633
        %v3666 = vpop.xlane.xlu0 %3665
        %3667 = vadd.xlane.f32.xlu0 %v3634
        %v3668 = vpop.xlane.xlu0 %3667
        %v3669 = vmul.f32 %v3638, 0.0078125
        %v3670 = vmul.f32 %v3640, 0.0078125
        %v3671 = vmul.f32 %v3642, 0.0078125
        %v3672 = vmul.f32 %v3644, 0.0078125
        %v3673 = vmul.f32 %v3646, 0.0078125
        %v3674 = vmul.f32 %v3648, 0.0078125
        %v3675 = vmul.f32 %v3650, 0.0078125
        %v3676 = vmul.f32 %v3652, 0.0078125
        %v3677 = vmul.f32 %v3654, 0.0078125
        %v3678 = vmul.f32 %v3656, 0.0078125
        %v3679 = vmul.f32 %v3658, 0.0078125
        %v3680 = vmul.f32 %v3660, 0.0078125
        %v3681 = vmul.f32 %v3662, 0.0078125
        %v3682 = vmul.f32 %v3664, 0.0078125
        %v3683 = vmul.f32 %v3666, 0.0078125
        %v3684 = vmul.f32 %v3668, 0.0078125
        %v3685 = vsub.f32 %v3619, %v3669
        %v3686 = vsub.f32 %v3620, %v3670
        %v3687 = vsub.f32 %v3621, %v3671
        %v3688 = vsub.f32 %v3622, %v3672
        %v3689 = vsub.f32 %v3623, %v3673
        %v3690 = vsub.f32 %v3624, %v3674
        %v3691 = vsub.f32 %v3625, %v3675
        %v3692 = vsub.f32 %v3626, %v3676
        %v3693 = vsub.f32 %v3627, %v3677
        %v3694 = vsub.f32 %v3628, %v3678
        %v3695 = vsub.f32 %v3629, %v3679
        %v3696 = vsub.f32 %v3630, %v3680
        %v3697 = vsub.f32 %v3631, %v3681
        %v3698 = vsub.f32 %v3632, %v3682
        %v3699 = vsub.f32 %v3633, %v3683
        %v3700 = vsub.f32 %v3634, %v3684
        %v3701 = vmul.f32 %v3685, %v3685
        %v3702 = vmul.f32 %v3686, %v3686
        %v3703 = vmul.f32 %v3687, %v3687
        %v3704 = vmul.f32 %v3688, %v3688
        %v3705 = vmul.f32 %v3689, %v3689
        %v3706 = vmul.f32 %v3690, %v3690
        %v3707 = vmul.f32 %v3691, %v3691
        %v3708 = vmul.f32 %v3692, %v3692
        %v3709 = vmul.f32 %v3693, %v3693
        %v3710 = vmul.f32 %v3694, %v3694
        %v3711 = vmul.f32 %v3695, %v3695
        %v3712 = vmul.f32 %v3696, %v3696
        %v3713 = vmul.f32 %v3697, %v3697
        %v3714 = vmul.f32 %v3698, %v3698
        %v3715 = vmul.f32 %v3699, %v3699
        %v3716 = vmul.f32 %v3700, %v3700
        %3717 = vadd.xlane.f32.xlu0 %v3701
        %v3718 = vpop.xlane.xlu0 %3717
        %3719 = vadd.xlane.f32.xlu0 %v3702
        %v3720 = vpop.xlane.xlu0 %3719
        %3721 = vadd.xlane.f32.xlu0 %v3703
        %v3722 = vpop.xlane.xlu0 %3721
        %3723 = vadd.xlane.f32.xlu0 %v3704
        %v3724 = vpop.xlane.xlu0 %3723
        %3725 = vadd.xlane.f32.xlu0 %v3705
        %v3726 = vpop.xlane.xlu0 %3725
        %3727 = vadd.xlane.f32.xlu0 %v3706
        %v3728 = vpop.xlane.xlu0 %3727
        %3729 = vadd.xlane.f32.xlu0 %v3707
        %v3730 = vpop.xlane.xlu0 %3729
        %3731 = vadd.xlane.f32.xlu0 %v3708
        %v3732 = vpop.xlane.xlu0 %3731
        %3733 = vadd.xlane.f32.xlu0 %v3709
        %v3734 = vpop.xlane.xlu0 %3733
        %3735 = vadd.xlane.f32.xlu0 %v3710
        %v3736 = vpop.xlane.xlu0 %3735
        %3737 = vadd.xlane.f32.xlu0 %v3711
        %v3738 = vpop.xlane.xlu0 %3737
        %3739 = vadd.xlane.f32.xlu0 %v3712
        %v3740 = vpop.xlane.xlu0 %3739
        %3741 = vadd.xlane.f32.xlu0 %v3713
        %v3742 = vpop.xlane.xlu0 %3741
        %3743 = vadd.xlane.f32.xlu0 %v3714
        %v3744 = vpop.xlane.xlu0 %3743
        %3745 = vadd.xlane.f32.xlu0 %v3715
        %v3746 = vpop.xlane.xlu0 %3745
        %3747 = vadd.xlane.f32.xlu0 %v3716
        %v3748 = vpop.xlane.xlu0 %3747
        %v3749 = vmul.f32 %v3718, 0.0078125
        %v3750 = vmul.f32 %v3720, 0.0078125
        %v3751 = vmul.f32 %v3722, 0.0078125
        %v3752 = vmul.f32 %v3724, 0.0078125
        %v3753 = vmul.f32 %v3726, 0.0078125
        %v3754 = vmul.f32 %v3728, 0.0078125
        %v3755 = vmul.f32 %v3730, 0.0078125
        %v3756 = vmul.f32 %v3732, 0.0078125
        %v3757 = vmul.f32 %v3734, 0.0078125
        %v3758 = vmul.f32 %v3736, 0.0078125
        %v3759 = vmul.f32 %v3738, 0.0078125
        %v3760 = vmul.f32 %v3740, 0.0078125
        %v3761 = vmul.f32 %v3742, 0.0078125
        %v3762 = vmul.f32 %v3744, 0.0078125
        %v3763 = vmul.f32 %v3746, 0.0078125
        %v3764 = vmul.f32 %v3748, 0.0078125
        %v3765 = vadd.f32 %v3749, 1e-05
        %v3766 = vadd.f32 %v3750, 1e-05
        %v3767 = vadd.f32 %v3751, 1e-05
        %v3768 = vadd.f32 %v3752, 1e-05
        %v3769 = vadd.f32 %v3753, 1e-05
        %v3770 = vadd.f32 %v3754, 1e-05
        %v3771 = vadd.f32 %v3755, 1e-05
        %v3772 = vadd.f32 %v3756, 1e-05
        %v3773 = vadd.f32 %v3757, 1e-05
        %v3774 = vadd.f32 %v3758, 1e-05
        %v3775 = vadd.f32 %v3759, 1e-05
        %v3776 = vadd.f32 %v3760, 1e-05
        %v3777 = vadd.f32 %v3761, 1e-05
        %v3778 = vadd.f32 %v3762, 1e-05
        %v3779 = vadd.f32 %v3763, 1e-05
        %v3780 = vadd.f32 %v3764, 1e-05
        %v3781 = vrsqrt.pop %v3765
        %v3782 = vrsqrt.pop %v3766
        %v3783 = vrsqrt.pop %v3767
        %v3784 = vrsqrt.pop %v3768
        %v3785 = vrsqrt.pop %v3769
        %v3786 = vrsqrt.pop %v3770
        %v3787 = vrsqrt.pop %v3771
        %v3788 = vrsqrt.pop %v3772
        %v3789 = vrsqrt.pop %v3773
        %v3790 = vrsqrt.pop %v3774
        %v3791 = vrsqrt.pop %v3775
        %v3792 = vrsqrt.pop %v3776
        %v3793 = vrsqrt.pop %v3777
        %v3794 = vrsqrt.pop %v3778
        %v3795 = vrsqrt.pop %v3779
        %v3796 = vrsqrt.pop %v3780
        %v3797 = vmul.f32 %v3685, %v3781
        %v3798 = vmul.f32 %v3686, %v3782
        %v3799 = vmul.f32 %v3687, %v3783
        %v3800 = vmul.f32 %v3688, %v3784
        %v3801 = vmul.f32 %v3689, %v3785
        %v3802 = vmul.f32 %v3690, %v3786
        %v3803 = vmul.f32 %v3691, %v3787
        %v3804 = vmul.f32 %v3692, %v3788
        %v3805 = vmul.f32 %v3693, %v3789
        %v3806 = vmul.f32 %v3694, %v3790
        %v3807 = vmul.f32 %v3695, %v3791
        %v3808 = vmul.f32 %v3696, %v3792
        %v3809 = vmul.f32 %v3697, %v3793
        %v3810 = vmul.f32 %v3698, %v3794
        %v3811 = vmul.f32 %v3699, %v3795
        %v3812 = vmul.f32 %v3700, %v3796
        %v3814 = vlaneseq
        %v3815 = vshrl.u32 %v3814, 7
        %v3816 = vsub.s32 0, %v3815
        %v3817 = vrot.slane %v3635, %v3816
        %v3819 = vmul.f32 %v3797, %v3817
        %v3820 = vmul.f32 %v3798, %v3817
        %v3821 = vmul.f32 %v3799, %v3817
        %v3822 = vmul.f32 %v3800, %v3817
        %v3823 = vmul.f32 %v3801, %v3817
        %v3824 = vmul.f32 %v3802, %v3817
        %v3825 = vmul.f32 %v3803, %v3817
        %v3826 = vmul.f32 %v3804, %v3817
        %v3827 = vmul.f32 %v3805, %v3817
        %v3828 = vmul.f32 %v3806, %v3817
        %v3829 = vmul.f32 %v3807, %v3817
        %v3830 = vmul.f32 %v3808, %v3817
        %v3831 = vmul.f32 %v3809, %v3817
        %v3832 = vmul.f32 %v3810, %v3817
        %v3833 = vmul.f32 %v3811, %v3817
        %v3834 = vmul.f32 %v3812, %v3817
        %v3836 = vlaneseq
        %v3837 = vshrl.u32 %v3836, 7
        %v3838 = vsub.s32 0, %v3837
        %v3839 = vrot.slane %v3636, %v3838
        %v3841 = vadd.f32 %v3819, %v3839
        %v3842 = vadd.f32 %v3820, %v3839
        %v3843 = vadd.f32 %v3821, %v3839
        %v3844 = vadd.f32 %v3822, %v3839
        %v3845 = vadd.f32 %v3823, %v3839
        %v3846 = vadd.f32 %v3824, %v3839
        %v3847 = vadd.f32 %v3825, %v3839
        %v3848 = vadd.f32 %v3826, %v3839
        %v3849 = vadd.f32 %v3827, %v3839
        %v3850 = vadd.f32 %v3828, %v3839
        %v3851 = vadd.f32 %v3829, %v3839
        %v3852 = vadd.f32 %v3830, %v3839
        %v3853 = vadd.f32 %v3831, %v3839
        %v3854 = vadd.f32 %v3832, %v3839
        %v3855 = vadd.f32 %v3833, %v3839
        %v3856 = vadd.f32 %v3834, %v3839
        %v3857 = vpack.c.bf16 %v3842, %v3841
        %v3858 = vpack.c.bf16 %v3844, %v3843
        %v3859 = vpack.c.bf16 %v3846, %v3845
        %v3860 = vpack.c.bf16 %v3848, %v3847
        %v3861 = vpack.c.bf16 %v3850, %v3849
        %v3862 = vpack.c.bf16 %v3852, %v3851
        %v3863 = vpack.c.bf16 %v3854, %v3853
        %v3864 = vpack.c.bf16 %v3856, %v3855
        %v3865 = vld [vmem:[#allocation8] sm:$0xff]
        %v3866 = vld [vmem:[#allocation8 + $0x8] sm:$0xff]
        %v3867 = vld [vmem:[#allocation8 + $0x10] sm:$0xff]
        %v3868 = vld [vmem:[#allocation8 + $0x18] sm:$0xff]
        %v3869 = vld [vmem:[#allocation8 + $0x20] sm:$0xff]
        %v3870 = vld [vmem:[#allocation8 + $0x28] sm:$0xff]
        %v3871 = vld [vmem:[#allocation8 + $0x30] sm:$0xff]
        %v3872 = vld [vmem:[#allocation8 + $0x38] sm:$0xff]
        %v3873 = vld [vmem:[#allocation8 + $0x40] sm:$0xff]
        %v3874 = vld [vmem:[#allocation8 + $0x48] sm:$0xff]
        %v3875 = vld [vmem:[#allocation8 + $0x50] sm:$0xff]
        %v3876 = vld [vmem:[#allocation8 + $0x58] sm:$0xff]
        %v3877 = vld [vmem:[#allocation8 + $0x60] sm:$0xff]
        %v3878 = vld [vmem:[#allocation8 + $0x68] sm:$0xff]
        %v3879 = vld [vmem:[#allocation8 + $0x70] sm:$0xff]
        %v3880 = vld [vmem:[#allocation8 + $0x78] sm:$0xff]
        %v3881 = vld [vmem:[%s10] sm:$0x3]
        %v3883 = vlaneseq
        %v3884 = vshrl.u32 %v3883, 7
        %v3885 = vsub.s32 0, %v3884
        %v3886 = vrot.slane %v3881, %v3885
        %v3887 = vlaneseq
        %v3888 = vshrl.u32 %v3887, 7
        %v3889 = vsub.s32 1, %v3888
        %v3890 = vrot.slane %v3881, %v3889
        %v3909 = vunpack.c.l.b16 %v3865
        %v3910 = vunpack.c.h.b16 %v3865
        %v3911 = vunpack.c.l.b16 %v3866
        %v3912 = vunpack.c.h.b16 %v3866
        %v3913 = vunpack.c.l.b16 %v3867
        %v3914 = vunpack.c.h.b16 %v3867
        %v3915 = vunpack.c.l.b16 %v3868
        %v3916 = vunpack.c.h.b16 %v3868
        %v3917 = vunpack.c.l.b16 %v3869
        %v3918 = vunpack.c.h.b16 %v3869
        %v3919 = vunpack.c.l.b16 %v3870
        %v3920 = vunpack.c.h.b16 %v3870
        %v3921 = vunpack.c.l.b16 %v3871
        %v3922 = vunpack.c.h.b16 %v3871
        %v3923 = vunpack.c.l.b16 %v3872
        %v3924 = vunpack.c.h.b16 %v3872
        %v3925 = vunpack.c.l.b16 %v3873
        %v3926 = vunpack.c.h.b16 %v3873
        %v3927 = vunpack.c.l.b16 %v3874
        %v3928 = vunpack.c.h.b16 %v3874
        %v3929 = vunpack.c.l.b16 %v3875
        %v3930 = vunpack.c.h.b16 %v3875
        %v3931 = vunpack.c.l.b16 %v3876
        %v3932 = vunpack.c.h.b16 %v3876
        %v3933 = vunpack.c.l.b16 %v3877
        %v3934 = vunpack.c.h.b16 %v3877
        %v3935 = vunpack.c.l.b16 %v3878
        %v3936 = vunpack.c.h.b16 %v3878
        %v3937 = vunpack.c.l.b16 %v3879
        %v3938 = vunpack.c.h.b16 %v3879
        %v3939 = vunpack.c.l.b16 %v3880
        %v3940 = vunpack.c.h.b16 %v3880
        %v3941 = vpack.c.b16 %v3911, %v3909
        %v3942 = vpack.c.b16 %v3912, %v3910
        %v3943 = vpack.c.b16 %v3915, %v3913
        %v3944 = vpack.c.b16 %v3916, %v3914
        %v3945 = vpack.c.b16 %v3919, %v3917
        %v3946 = vpack.c.b16 %v3920, %v3918
        %v3947 = vpack.c.b16 %v3923, %v3921
        %v3948 = vpack.c.b16 %v3924, %v3922
        %v3949 = vpack.c.b16 %v3927, %v3925
        %v3950 = vpack.c.b16 %v3928, %v3926
        %v3951 = vpack.c.b16 %v3931, %v3929
        %v3952 = vpack.c.b16 %v3932, %v3930
        %v3953 = vpack.c.b16 %v3935, %v3933
        %v3954 = vpack.c.b16 %v3936, %v3934
        %v3955 = vpack.c.b16 %v3939, %v3937
        %v3956 = vpack.c.b16 %v3940, %v3938
        %3973 = vmatprep.subr.bf16.mxu0 %v3942
        %3974 = vmatpush1.bf16.msra.mxu0 %v3941
        %3975 = vmatprep.subr.bf16.mxu0 %v3944
        %3976 = vmatpush1.bf16.msra.mxu0 %v3943
        %3977 = vmatprep.subr.bf16.mxu0 %v3946
        %3978 = vmatpush1.bf16.msra.mxu0 %v3945
        %3979 = vmatprep.subr.bf16.mxu0 %v3948
        %3980 = vmatpush1.bf16.msra.mxu0 %v3947
        %3981 = vmatprep.subr.bf16.mxu0 %v3950
        %3982 = vmatpush1.bf16.msra.mxu0 %v3949
        %3983 = vmatprep.subr.bf16.mxu0 %v3952
        %3984 = vmatpush1.bf16.msra.mxu0 %v3951
        %3985 = vmatprep.subr.bf16.mxu0 %v3954
        %3986 = vmatpush1.bf16.msra.mxu0 %v3953
        %3987 = vmatprep.subr.bf16.mxu0 %v3956
        %3988 = vmatpush1.bf16.msra.mxu0 %v3955
        %3989 = vmatprep.subr.bf16.mxu0 0
        %3990 = vmatpush1.bf16.msra.mxu0 0
        %3991 = vmatprep.subr.bf16.mxu0 0
        %3992 = vmatpush1.bf16.msra.mxu0 0
        %3993 = vmatprep.subr.bf16.mxu0 0
        %3994 = vmatpush1.bf16.msra.mxu0 0
        %3995 = vmatprep.subr.bf16.mxu0 0
        %3996 = vmatpush1.bf16.msra.mxu0 0
        %3997 = vmatprep.subr.bf16.mxu0 0
        %3998 = vmatpush1.bf16.msra.mxu0 0
        %3999 = vmatprep.subr.bf16.mxu0 0
        %4000 = vmatpush1.bf16.msra.mxu0 0
        %4001 = vmatprep.subr.bf16.mxu0 0
        %4002 = vmatpush1.bf16.msra.mxu0 0
        %4003 = vmatprep.subr.bf16.mxu0 0
        %4004 = vmatpush1.bf16.msra.mxu0 0
        %4005 = vmatprep.mubr.bf16.mxu0 0
        %4006 = vmatmul.mubr.bf16.gmra.mrb[0].mxu0 %v3857
        %v4007 = vpop.f32.mrb[0].mxu0
        %v4008 = vadd.f32 %v3886, %v4007
        %v4009 = vpop.f32.mrb[0].mxu0
        %v4010 = vadd.f32 %v3890, %v4009
        %v4011 = vpop.f32.mrb[0].mxu0
        %v4012 = vadd.f32 %v3886, %v4011
        %v4013 = vpop.f32.mrb[0].mxu0
        %v4014 = vadd.f32 %v3890, %v4013
        %4015 = vmatprep.mubr.bf16.mxu0 0
        %4016 = vmatmul.mubr.bf16.gmra.mrb[0].mxu0 %v3858
        %v4017 = vpop.f32.mrb[0].mxu0
        %v4018 = vadd.f32 %v3886, %v4017
        %v4019 = vpop.f32.mrb[0].mxu0
        %v4020 = vadd.f32 %v3890, %v4019
        %v4021 = vpop.f32.mrb[0].mxu0
        %v4022 = vadd.f32 %v3886, %v4021
        %v4023 = vpop.f32.mrb[0].mxu0
        %v4024 = vadd.f32 %v3890, %v4023
        %4025 = vmatprep.mubr.bf16.mxu0 0
        %4026 = vmatmul.mubr.bf16.gmra.mrb[0].mxu0 %v3859
        %v4027 = vpop.f32.mrb[0].mxu0
        %v4028 = vadd.f32 %v3886, %v4027
        %v4029 = vpop.f32.mrb[0].mxu0
        %v4030 = vadd.f32 %v3890, %v4029
        %v4031 = vpop.f32.mrb[0].mxu0
        %v4032 = vadd.f32 %v3886, %v4031
        %v4033 = vpop.f32.mrb[0].mxu0
        %v4034 = vadd.f32 %v3890, %v4033
        %4035 = vmatprep.mubr.bf16.mxu0 0
        %4036 = vmatmul.mubr.bf16.gmra.mrb[0].mxu0 %v3860
        %v4037 = vpop.f32.mrb[0].mxu0
        %v4038 = vadd.f32 %v3886, %v4037
        %v4039 = vpop.f32.mrb[0].mxu0
        %v4040 = vadd.f32 %v3890, %v4039
        %v4041 = vpop.f32.mrb[0].mxu0
        %v4042 = vadd.f32 %v3886, %v4041
        %v4043 = vpop.f32.mrb[0].mxu0
        %v4044 = vadd.f32 %v3890, %v4043
        %4045 = vmatprep.mubr.bf16.mxu0 0
        %4046 = vmatmul.mubr.bf16.gmra.mrb[0].mxu0 %v3861
        %v4047 = vpop.f32.mrb[0].mxu0
        %v4048 = vadd.f32 %v3886, %v4047
        %v4049 = vpop.f32.mrb[0].mxu0
        %v4050 = vadd.f32 %v3890, %v4049
        %v4051 = vpop.f32.mrb[0].mxu0
        %v4052 = vadd.f32 %v3886, %v4051
        %v4053 = vpop.f32.mrb[0].mxu0
        %v4054 = vadd.f32 %v3890, %v4053
        %4055 = vmatprep.mubr.bf16.mxu0 0
        %4056 = vmatmul.mubr.bf16.gmra.mrb[0].mxu0 %v3862
        %v4057 = vpop.f32.mrb[0].mxu0
        %v4058 = vadd.f32 %v3886, %v4057
        %v4059 = vpop.f32.mrb[0].mxu0
        %v4060 = vadd.f32 %v3890, %v4059
        %v4061 = vpop.f32.mrb[0].mxu0
        %v4062 = vadd.f32 %v3886, %v4061
        %v4063 = vpop.f32.mrb[0].mxu0
        %v4064 = vadd.f32 %v3890, %v4063
        %4065 = vmatprep.mubr.bf16.mxu0 0
        %4066 = vmatmul.mubr.bf16.gmra.mrb[0].mxu0 %v3863
        %v4067 = vpop.f32.mrb[0].mxu0
        %v4068 = vadd.f32 %v3886, %v4067
        %v4069 = vpop.f32.mrb[0].mxu0
        %v4070 = vadd.f32 %v3890, %v4069
        %v4071 = vpop.f32.mrb[0].mxu0
        %v4072 = vadd.f32 %v3886, %v4071
        %v4073 = vpop.f32.mrb[0].mxu0
        %v4074 = vadd.f32 %v3890, %v4073
        %4075 = vmatprep.mubr.bf16.mxu0 0
        %4076 = vmatmul.mubr.bf16.gmra.mrb[0].mxu0 %v3864
        %v4077 = vpop.f32.mrb[0].mxu0
        %v4078 = vadd.f32 %v3886, %v4077
        %v4079 = vpop.f32.mrb[0].mxu0
        %v4080 = vadd.f32 %v3890, %v4079
        %v4081 = vpop.f32.mrb[0].mxu0
        %v4082 = vadd.f32 %v3886, %v4081
        %v4083 = vpop.f32.mrb[0].mxu0
        %v4084 = vadd.f32 %v3890, %v4083
        %4085 = vdwg.mxu0
        %v4086 = vmax.f32 %v4008, 0.0
        %v4087 = vmax.f32 %v4010, 0.0
        %v4088 = vmax.f32 %v4012, 0.0
        %v4089 = vmax.f32 %v4014, 0.0
        %v4090 = vmax.f32 %v4018, 0.0
        %v4091 = vmax.f32 %v4020, 0.0
        %v4092 = vmax.f32 %v4022, 0.0
        %v4093 = vmax.f32 %v4024, 0.0
        %v4094 = vmax.f32 %v4028, 0.0
        %v4095 = vmax.f32 %v4030, 0.0
        %v4096 = vmax.f32 %v4032, 0.0
        %v4097 = vmax.f32 %v4034, 0.0
        %v4098 = vmax.f32 %v4038, 0.0
        %v4099 = vmax.f32 %v4040, 0.0
        %v4100 = vmax.f32 %v4042, 0.0
        %v4101 = vmax.f32 %v4044, 0.0
        %v4102 = vmax.f32 %v4048, 0.0
        %v4103 = vmax.f32 %v4050, 0.0
        %v4104 = vmax.f32 %v4052, 0.0
        %v4105 = vmax.f32 %v4054, 0.0
        %v4106 = vmax.f32 %v4058, 0.0
        %v4107 = vmax.f32 %v4060, 0.0
        %v4108 = vmax.f32 %v4062, 0.0
        %v4109 = vmax.f32 %v4064, 0.0
        %v4110 = vmax.f32 %v4068, 0.0
        %v4111 = vmax.f32 %v4070, 0.0
        %v4112 = vmax.f32 %v4072, 0.0
        %v4113 = vmax.f32 %v4074, 0.0
        %v4114 = vmax.f32 %v4078, 0.0
        %v4115 = vmax.f32 %v4080, 0.0
        %v4116 = vmax.f32 %v4082, 0.0
        %v4117 = vmax.f32 %v4084, 0.0
        %v4118 = vpack.c.bf16 %v4088, %v4086
        %v4119 = vpack.c.bf16 %v4089, %v4087
        %v4120 = vpack.c.bf16 %v4092, %v4090
        %v4121 = vpack.c.bf16 %v4093, %v4091
        %v4122 = vpack.c.bf16 %v4096, %v4094
        %v4123 = vpack.c.bf16 %v4097, %v4095
        %v4124 = vpack.c.bf16 %v4100, %v4098
        %v4125 = vpack.c.bf16 %v4101, %v4099
        %v4126 = vpack.c.bf16 %v4104, %v4102
        %v4127 = vpack.c.bf16 %v4105, %v4103
        %v4128 = vpack.c.bf16 %v4108, %v4106
        %v4129 = vpack.c.bf16 %v4109, %v4107
        %v4130 = vpack.c.bf16 %v4112, %v4110
        %v4131 = vpack.c.bf16 %v4113, %v4111
        %v4132 = vpack.c.bf16 %v4116, %v4114
        %v4133 = vpack.c.bf16 %v4117, %v4115
        %v4134 = vld [vmem:[#allocation10] sm:$0xf]
        %v4135 = vld [vmem:[#allocation10 + $0x4] sm:$0xf]
        %v4136 = vld [vmem:[#allocation10 + $0x8] sm:$0xf]
        %v4137 = vld [vmem:[#allocation10 + $0xc] sm:$0xf]
        %v4138 = vld [vmem:[#allocation10 + $0x10] sm:$0xf]
        %v4139 = vld [vmem:[#allocation10 + $0x14] sm:$0xf]
        %v4140 = vld [vmem:[#allocation10 + $0x18] sm:$0xf]
        %v4141 = vld [vmem:[#allocation10 + $0x1c] sm:$0xf]
        %v4142 = vld [vmem:[#allocation10 + $0x20] sm:$0xf]
        %v4143 = vld [vmem:[#allocation10 + $0x24] sm:$0xf]
        %v4144 = vld [vmem:[#allocation10 + $0x28] sm:$0xf]
        %v4145 = vld [vmem:[#allocation10 + $0x2c] sm:$0xf]
        %v4146 = vld [vmem:[#allocation10 + $0x30] sm:$0xf]
        %v4147 = vld [vmem:[#allocation10 + $0x34] sm:$0xf]
        %v4148 = vld [vmem:[#allocation10 + $0x38] sm:$0xf]
        %v4149 = vld [vmem:[#allocation10 + $0x3c] sm:$0xf]
        %v4150 = vld [vmem:[#allocation10 + $0x40] sm:$0xf]
        %v4151 = vld [vmem:[#allocation10 + $0x44] sm:$0xf]
        %v4152 = vld [vmem:[#allocation10 + $0x48] sm:$0xf]
        %v4153 = vld [vmem:[#allocation10 + $0x4c] sm:$0xf]
        %v4154 = vld [vmem:[#allocation10 + $0x50] sm:$0xf]
        %v4155 = vld [vmem:[#allocation10 + $0x54] sm:$0xf]
        %v4156 = vld [vmem:[#allocation10 + $0x58] sm:$0xf]
        %v4157 = vld [vmem:[#allocation10 + $0x5c] sm:$0xf]
        %v4158 = vld [vmem:[#allocation10 + $0x60] sm:$0xf]
        %v4159 = vld [vmem:[#allocation10 + $0x64] sm:$0xf]
        %v4160 = vld [vmem:[#allocation10 + $0x68] sm:$0xf]
        %v4161 = vld [vmem:[#allocation10 + $0x6c] sm:$0xf]
        %v4162 = vld [vmem:[#allocation10 + $0x70] sm:$0xf]
        %v4163 = vld [vmem:[#allocation10 + $0x74] sm:$0xf]
        %v4164 = vld [vmem:[#allocation10 + $0x78] sm:$0xf]
        %v4165 = vld [vmem:[#allocation10 + $0x7c] sm:$0xf]
        %v4166 = vld [vmem:[%s12] sm:$0x1]
        %v4168 = vlaneseq
        %v4169 = vshrl.u32 %v4168, 7
        %v4170 = vsub.s32 0, %v4169
        %v4171 = vrot.slane %v4166, %v4170
        %v4205 = vunpack.c.l.b16 %v4134
        %v4206 = vunpack.c.l.b16 %v4135
        %v4207 = vunpack.c.l.b16 %v4136
        %v4208 = vunpack.c.l.b16 %v4137
        %v4209 = vunpack.c.l.b16 %v4138
        %v4210 = vunpack.c.l.b16 %v4139
        %v4211 = vunpack.c.l.b16 %v4140
        %v4212 = vunpack.c.l.b16 %v4141
        %v4213 = vunpack.c.l.b16 %v4142
        %v4214 = vunpack.c.l.b16 %v4143
        %v4215 = vunpack.c.l.b16 %v4144
        %v4216 = vunpack.c.l.b16 %v4145
        %v4217 = vunpack.c.l.b16 %v4146
        %v4218 = vunpack.c.l.b16 %v4147
        %v4219 = vunpack.c.l.b16 %v4148
        %v4220 = vunpack.c.l.b16 %v4149
        %v4221 = vunpack.c.l.b16 %v4150
        %v4222 = vunpack.c.l.b16 %v4151
        %v4223 = vunpack.c.l.b16 %v4152
        %v4224 = vunpack.c.l.b16 %v4153
        %v4225 = vunpack.c.l.b16 %v4154
        %v4226 = vunpack.c.l.b16 %v4155
        %v4227 = vunpack.c.l.b16 %v4156
        %v4228 = vunpack.c.l.b16 %v4157
        %v4229 = vunpack.c.l.b16 %v4158
        %v4230 = vunpack.c.l.b16 %v4159
        %v4231 = vunpack.c.l.b16 %v4160
        %v4232 = vunpack.c.l.b16 %v4161
        %v4233 = vunpack.c.l.b16 %v4162
        %v4234 = vunpack.c.l.b16 %v4163
        %v4235 = vunpack.c.l.b16 %v4164
        %v4236 = vunpack.c.l.b16 %v4165
        %v4237 = vpack.c.b16 %v4206, %v4205
        %v4238 = vpack.c.b16 %v4208, %v4207
        %v4239 = vpack.c.b16 %v4210, %v4209
        %v4240 = vpack.c.b16 %v4212, %v4211
        %v4241 = vpack.c.b16 %v4214, %v4213
        %v4242 = vpack.c.b16 %v4216, %v4215
        %v4243 = vpack.c.b16 %v4218, %v4217
        %v4244 = vpack.c.b16 %v4220, %v4219
        %v4245 = vpack.c.b16 %v4222, %v4221
        %v4246 = vpack.c.b16 %v4224, %v4223
        %v4247 = vpack.c.b16 %v4226, %v4225
        %v4248 = vpack.c.b16 %v4228, %v4227
        %v4249 = vpack.c.b16 %v4230, %v4229
        %v4250 = vpack.c.b16 %v4232, %v4231
        %v4251 = vpack.c.b16 %v4234, %v4233
        %v4252 = vpack.c.b16 %v4236, %v4235
        %4269 = vmatprep.subr.bf16.mxu0 0
        %4270 = vmatpush1.bf16.msra.mxu0 %v4237
        %4271 = vmatprep.subr.bf16.mxu0 0
        %4272 = vmatpush1.bf16.msra.mxu0 %v4238
        %4273 = vmatprep.subr.bf16.mxu0 0
        %4274 = vmatpush1.bf16.msra.mxu0 %v4239
        %4275 = vmatprep.subr.bf16.mxu0 0
        %4276 = vmatpush1.bf16.msra.mxu0 %v4240
        %4277 = vmatprep.subr.bf16.mxu0 0
        %4278 = vmatpush1.bf16.msra.mxu0 %v4241
        %4279 = vmatprep.subr.bf16.mxu0 0
        %4280 = vmatpush1.bf16.msra.mxu0 %v4242
        %4281 = vmatprep.subr.bf16.mxu0 0
        %4282 = vmatpush1.bf16.msra.mxu0 %v4243
        %4283 = vmatprep.subr.bf16.mxu0 0
        %4284 = vmatpush1.bf16.msra.mxu0 %v4244
        %4285 = vmatprep.subr.bf16.mxu0 0
        %4286 = vmatpush1.bf16.msra.mxu0 %v4245
        %4287 = vmatprep.subr.bf16.mxu0 0
        %4288 = vmatpush1.bf16.msra.mxu0 %v4246
        %4289 = vmatprep.subr.bf16.mxu0 0
        %4290 = vmatpush1.bf16.msra.mxu0 %v4247
        %4291 = vmatprep.subr.bf16.mxu0 0
        %4292 = vmatpush1.bf16.msra.mxu0 %v4248
        %4293 = vmatprep.subr.bf16.mxu0 0
        %4294 = vmatpush1.bf16.msra.mxu0 %v4249
        %4295 = vmatprep.subr.bf16.mxu0 0
        %4296 = vmatpush1.bf16.msra.mxu0 %v4250
        %4297 = vmatprep.subr.bf16.mxu0 0
        %4298 = vmatpush1.bf16.msra.mxu0 %v4251
        %4299 = vmatprep.subr.bf16.mxu0 0
        %4300 = vmatpush1.bf16.msra.mxu0 %v4252
        %4301 = vmatprep.mubr.bf16.mxu0 %v4119
        %4302 = vmatmul.mubr.bf16.gmra.mrb[0].mxu0 %v4118
        %v4303 = vpop.f32.mrb[0].mxu0
        %v4304 = vadd.f32 %v4171, %v4303
        %v4305 = vpop.f32.mrb[0].mxu0
        %v4306 = vpop.f32.mrb[0].mxu0
        %v4307 = vadd.f32 %v4171, %v4306
        %v4308 = vpop.f32.mrb[0].mxu0
        %4309 = vmatprep.mubr.bf16.mxu0 %v4121
        %4310 = vmatmul.mubr.bf16.gmra.mrb[0].mxu0 %v4120
        %v4311 = vpop.f32.mrb[0].mxu0
        %v4312 = vadd.f32 %v4171, %v4311
        %v4313 = vpop.f32.mrb[0].mxu0
        %v4314 = vpop.f32.mrb[0].mxu0
        %v4315 = vadd.f32 %v4171, %v4314
        %v4316 = vpop.f32.mrb[0].mxu0
        %4317 = vmatprep.mubr.bf16.mxu0 %v4123
        %4318 = vmatmul.mubr.bf16.gmra.mrb[0].mxu0 %v4122
        %v4319 = vpop.f32.mrb[0].mxu0
        %v4320 = vadd.f32 %v4171, %v4319
        %v4321 = vpop.f32.mrb[0].mxu0
        %v4322 = vpop.f32.mrb[0].mxu0
        %v4323 = vadd.f32 %v4171, %v4322
        %v4324 = vpop.f32.mrb[0].mxu0
        %4325 = vmatprep.mubr.bf16.mxu0 %v4125
        %4326 = vmatmul.mubr.bf16.gmra.mrb[0].mxu0 %v4124
        %v4327 = vpop.f32.mrb[0].mxu0
        %v4328 = vadd.f32 %v4171, %v4327
        %v4329 = vpop.f32.mrb[0].mxu0
        %v4330 = vpop.f32.mrb[0].mxu0
        %v4331 = vadd.f32 %v4171, %v4330
        %v4332 = vpop.f32.mrb[0].mxu0
        %4333 = vmatprep.mubr.bf16.mxu0 %v4127
        %4334 = vmatmul.mubr.bf16.gmra.mrb[0].mxu0 %v4126
        %v4335 = vpop.f32.mrb[0].mxu0
        %v4336 = vadd.f32 %v4171, %v4335
        %v4337 = vpop.f32.mrb[0].mxu0
        %v4338 = vpop.f32.mrb[0].mxu0
        %v4339 = vadd.f32 %v4171, %v4338
        %v4340 = vpop.f32.mrb[0].mxu0
        %4341 = vmatprep.mubr.bf16.mxu0 %v4129
        %4342 = vmatmul.mubr.bf16.gmra.mrb[0].mxu0 %v4128
        %v4343 = vpop.f32.mrb[0].mxu0
        %v4344 = vadd.f32 %v4171, %v4343
        %v4345 = vpop.f32.mrb[0].mxu0
        %v4346 = vpop.f32.mrb[0].mxu0
        %v4347 = vadd.f32 %v4171, %v4346
        %v4348 = vpop.f32.mrb[0].mxu0
        %4349 = vmatprep.mubr.bf16.mxu0 %v4131
        %4350 = vmatmul.mubr.bf16.gmra.mrb[0].mxu0 %v4130
        %v4351 = vpop.f32.mrb[0].mxu0
        %v4352 = vadd.f32 %v4171, %v4351
        %v4353 = vpop.f32.mrb[0].mxu0
        %v4354 = vpop.f32.mrb[0].mxu0
        %v4355 = vadd.f32 %v4171, %v4354
        %v4356 = vpop.f32.mrb[0].mxu0
        %4357 = vmatprep.mubr.bf16.mxu0 %v4133
        %4358 = vmatmul.mubr.bf16.gmra.mrb[0].mxu0 %v4132
        %v4359 = vpop.f32.mrb[0].mxu0
        %v4360 = vadd.f32 %v4171, %v4359
        %v4361 = vpop.f32.mrb[0].mxu0
        %v4362 = vpop.f32.mrb[0].mxu0
        %v4363 = vadd.f32 %v4171, %v4362
        %v4364 = vpop.f32.mrb[0].mxu0
        %4365 = vdwg.mxu0
        %v4366 = vadd.f32 %v3619, %v4304
        %v4367 = vadd.f32 %v3620, %v4307
        %v4368 = vadd.f32 %v3621, %v4312
        %v4369 = vadd.f32 %v3622, %v4315
        %v4370 = vadd.f32 %v3623, %v4320
        %v4371 = vadd.f32 %v3624, %v4323
        %v4372 = vadd.f32 %v3625, %v4328
        %v4373 = vadd.f32 %v3626, %v4331
        %v4374 = vadd.f32 %v3627, %v4336
        %v4375 = vadd.f32 %v3628, %v4339
        %v4376 = vadd.f32 %v3629, %v4344
        %v4377 = vadd.f32 %v3630, %v4347
        %v4378 = vadd.f32 %v3631, %v4352
        %v4379 = vadd.f32 %v3632, %v4355
        %v4380 = vadd.f32 %v3633, %v4360
        %v4381 = vadd.f32 %v3634, %v4363
        %4382 = vst [vmem:[%s516] sm:$0xff] %v4366
        %4383 = vst [vmem:[%s516 + $0x8] sm:$0xff] %v4367
        %4384 = vst [vmem:[%s516 + $0x10] sm:$0xff] %v4368
        %4385 = vst [vmem:[%s516 + $0x18] sm:$0xff] %v4369
        %4386 = vst [vmem:[%s516 + $0x20] sm:$0xff] %v4370
        %4387 = vst [vmem:[%s516 + $0x28] sm:$0xff] %v4371
        %4388 = vst [vmem:[%s516 + $0x30] sm:$0xff] %v4372
        %4389 = vst [vmem:[%s516 + $0x38] sm:$0xff] %v4373
        %4390 = vst [vmem:[%s516 + $0x40] sm:$0xff] %v4374
        %4391 = vst [vmem:[%s516 + $0x48] sm:$0xff] %v4375
        %4392 = vst [vmem:[%s516 + $0x50] sm:$0xff] %v4376
        %4393 = vst [vmem:[%s516 + $0x58] sm:$0xff] %v4377
        %4394 = vst [vmem:[%s516 + $0x60] sm:$0xff] %v4378
        %4395 = vst [vmem:[%s516 + $0x68] sm:$0xff] %v4379
        %4396 = vst [vmem:[%s516 + $0x70] sm:$0xff] %v4380
        %4397 = vst [vmem:[%s516 + $0x78] sm:$0xff] %v4381
        %s4398 = sand.u32 %s318, 1
        %s4399 = scalar_lea.sflag [#allocation4], %s4398
        %s4400 = sand.u32 %s318, 1
        %s4401 = smul.addr %s4400, 128
        %s4402 = scalar_lea.vmem [#allocation11], %s4401
        // Predicated region
        $region93: #{tpu_custom_call.1} parent=71 // pred_check
          %p4403 = pneg %p328
        $region94: #{tpu_custom_call.1} parent=71 // pred_check_branch
          %4405 = sbr.rel (%p4403) target = $region96
        $region95: #{tpu_custom_call.1} parent=71 // pred_region
          %s4407 = ssub.s32 2048, 2048
          %4408 = vsyncadd %s4399, %s4407
          %s4409 = smul.addr %s32, 16
          %s4410 = smul.addr %s4409, 128
          %s4411 = scalar_lea.hbm %s13, %s4410
          %s4412 = sshll.u32 %s4402, 4
          %s4413 = int_to_ptr.vmem [resolvable:$true] %s4412
          %4418 = dma.vmem_to_hbm [thread:$0]  %s4413, 2048, %s4411, %s4399, 128, 128, 8
        $region96: #{tpu_custom_call.1} parent=71 // pred_fallthru
          _
      $region72: #{tpu_custom_call.1} parent=5 // pred_fallthru
        _
      %p4419 = scmp.le.s32.totalorder 2, %s27
      // Predicated region
      $region97: #{tpu_custom_call.1} parent=5 // pred_check
        %p4420 = pneg %p4419
      $region98: #{tpu_custom_call.1} parent=5 // pred_check_branch
        %4422 = sbr.rel (%p4420) target = $region100
      $region99: #{tpu_custom_call.1} parent=5 // pred_region
        %s4423 = ssub.s32 %s27, 2
        // Predicated region
        $region101: #{tpu_custom_call.1} parent=99 // pred_check
          %p4424 = pneg %p334
        $region102: #{tpu_custom_call.1} parent=99 // pred_check_branch
          %4426 = sbr.rel (%p4424) target = $region104
        $region103: #{tpu_custom_call.1} parent=99 // pred_region
          %s4427 = sand.u32 %s319, 1
          %s4428 = scalar_lea.sflag [#allocation4], %s4427
          %s4429 = sand.u32 %s319, 1
          %s4430 = smul.addr %s4429, 128
          %s4431 = scalar_lea.vmem [#allocation11], %s4430
          %4432 = dma.done %s4428, 2048
        $region104: #{tpu_custom_call.1} parent=99 // pred_fallthru
          _
      $region100: #{tpu_custom_call.1} parent=5 // pred_fallthru
        _
    $region6: #{tpu_custom_call.1} parent=1 // loop_footer
      %s31 = sadd.s32 1, %s27
    $region7: #{tpu_custom_call.1} parent=1 // loop_footer_branch
      %26 = sbr.rel target = $region3
    $region8: #{tpu_custom_call.1} parent=1 // loop_exit
      _
    %4433 = vsyncpa [#allocation3], 1
    %s4434 = scalar_lea.sflag [#allocation3], 1
    %4435 = vsyncpa %s4434, 1
    %4436 = vsyncpa [#allocation6], 1
    %4437 = vsyncpa [#allocation9], 1
    %4438 = vsyncpa [#allocation4], 1
    %s4439 = scalar_lea.sflag [#allocation4], 1
    %4440 = vsyncpa %s4439, 1

// kernel: tpu_custom_call.1
$region0: #{tpu_custom_call.1}
  #allocation0 [shape = 'u32[]', space=smem, size = 0x4, offset = 0x4, fixed_abs, tag = 'smem constant byte address 0x4 - core index']
  #allocation1 [shape = 'u32[144,128]{1,0:T(1,128)}', space=vmem, size = 0x12000, scoped, tag = 'internal scratch']
  %s0 = inlined_call_operand.hbm [shape: f32[2,128,128], index: 0, kind: input, shape index: {}]
  %s1 = inlined_call_operand.vmem [shape: f32[1,128], index: 1, kind: input, shape index: {}]
  %s2 = inlined_call_operand.vmem [shape: f32[1,128], index: 2, kind: input, shape index: {}]
  %s3 = inlined_call_operand.hbm [shape: bf16[128,384], index: 3, kind: input, shape index: {}]
  %s4 = inlined_call_operand.vmem [shape: f32[1,384], index: 4, kind: input, shape index: {}]
  %s5 = inlined_call_operand.hbm [shape: bf16[4,32,128], index: 5, kind: input, shape index: {}]
  %s6 = inlined_call_operand.vmem [shape: f32[1,128], index: 6, kind: input, shape index: {}]
  %s7 = inlined_call_operand.vmem [shape: f32[1,128], index: 7, kind: input, shape index: {}]
  %s8 = inlined_call_operand.vmem [shape: f32[1,128], index: 8, kind: input, shape index: {}]
  %s9 = inlined_call_operand.hbm [shape: bf16[128,256], index: 9, kind: input, shape index: {}]
  %s10 = inlined_call_operand.vmem [shape: f32[1,256], index: 10, kind: input, shape index: {}]
  %s11 = inlined_call_operand.hbm [shape: bf16[256,128], index: 11, kind: input, shape index: {}]
  %s12 = inlined_call_operand.vmem [shape: f32[1,128], index: 12, kind: input, shape index: {}]
  %s13 = inlined_call_operand.hbm [shape: f32[2,128,128], index: 13, kind: output, shape index: {}]
  %s14 = sld [smem:[#allocation0]]
  $region105: #{tpu_custom_call.1} parent=0
    _
  %s16 = ssub.s32 1, %s14
  %s17 = scalar_select 0, %s16, %s14
  $region1: #{tpu_custom_call.1} parent=0
    #allocation2 [shape = 'u8[131072]{0}', space=vmem, size = 0x20000, scoped, tag = 'input window, operand 0']
    #allocation3 [shape = 's32[2]{0}', space=sflag, size = 0x8, scoped, tag = 'scoped memory for tpu_custom_call.1']
    #allocation4 [shape = 's32[2]{0}', space=sflag, size = 0x8, scoped, tag = 'scoped memory for tpu_custom_call.1']
    #allocation5 [shape = 'u8[98304]{0}', space=vmem, size = 0x18000, scoped, tag = 'input window, operand 3, single buffered']
    #allocation6 [shape = 's32[1]{0}', space=sflag, size = 0x4, scoped, tag = 'scoped memory for tpu_custom_call.1']
    #allocation7 [shape = 'u8[32768]{0}', space=vmem, size = 0x8000, scoped, tag = 'input window, operand 5, single buffered']
    #allocation8 [shape = 'u8[65536]{0}', space=vmem, size = 0x10000, scoped, tag = 'input window, operand 9, single buffered']
    #allocation9 [shape = 's32[1]{0}', space=sflag, size = 0x4, scoped, tag = 'scoped memory for tpu_custom_call.1']
    #allocation10 [shape = 'u8[65536]{0}', space=vmem, size = 0x10000, scoped, tag = 'input window, operand 11, single buffered']
    #allocation11 [shape = 'u8[131072]{0}', space=vmem, size = 0x20000, scoped, tag = 'output window, operand 0']
    %18 = vsyncpa [#allocation3], 0
    %s19 = scalar_lea.sflag [#allocation3], 1
    %20 = vsyncpa %s19, 0
    %21 = vsyncpa [#allocation6], 0
    %22 = vsyncpa [#allocation9], 0
    %23 = vsyncpa [#allocation4], 0
    %s24 = scalar_lea.sflag [#allocation4], 1
    %25 = vsyncpa %s24, 0
    loop: start=0, step=1, limit=4
    $region2: #{tpu_custom_call.1} parent=1 // loop_pre_header
      _
    $region3: #{tpu_custom_call.1} parent=1 // loop_header
      %s27 = sphi 0, %s31
      %p28 = scmp.ge.s32.totalorder %s27, 4
      %s37 = sphi 0, %s39
      %s40 = sphi 0, %s37
      %s41 = sphi 0, %s40
      %s57 = sphi 0, %s41
      %s61 = sphi 0, %s61
      %s63 = sphi 0, %s61
      %s64 = sphi 0, %s63
      %s78 = sphi 0, %s64
      %s82 = sphi 0, %s82
      %s84 = sphi 0, %s82
      %s85 = sphi 0, %s84
      %s99 = sphi 0, %s85
      %s103 = sphi 0, %s103
      %s105 = sphi 0, %s103
      %s106 = sphi 0, %s105
      %s120 = sphi 0, %s106
      %s124 = sphi 0, %s124
      %s126 = sphi 0, %s124
      %s127 = sphi 0, %s126
      %s141 = sphi 0, %s127
      %s145 = sphi 0, %s145
      %s147 = sphi 0, %s145
      %s148 = sphi 0, %s147
      %s162 = sphi 0, %s148
      %s166 = sphi 0, %s166
      %s168 = sphi 0, %s166
      %s169 = sphi 0, %s168
      %s183 = sphi 0, %s169
      %s187 = sphi 0, %s187
      %s189 = sphi 0, %s187
      %s190 = sphi 0, %s189
      %s204 = sphi 0, %s190
      %s208 = sphi 0, %s208
      %s210 = sphi 0, %s208
      %s211 = sphi 0, %s210
      %s225 = sphi 0, %s211
      %s229 = sphi 0, %s229
      %s231 = sphi 0, %s229
      %s232 = sphi 0, %s231
      %s246 = sphi 0, %s232
      %s250 = sphi 0, %s250
      %s252 = sphi 0, %s250
      %s253 = sphi 0, %s252
      %s267 = sphi 0, %s253
      %s271 = sphi 0, %s271
      %s273 = sphi 0, %s271
      %s274 = sphi 0, %s273
      %s288 = sphi 0, %s274
      %s292 = sphi 0, %s292
      %s294 = sphi 0, %s292
      %s295 = sphi 0, %s294
      %s309 = sphi 0, %s295
      %s315 = sphi 0, %s317
      %s318 = sphi 0, %s315
      %s319 = sphi 0, %s318
      %s335 = sphi 0, %s319
    $region4: #{tpu_custom_call.1} parent=1 // loop_header_branch
      %30 = sbr.rel (%p28) target = $region8
    $region5: #{tpu_custom_call.1} parent=1 // loop_body
      %s32 = ssub.s32 %s27, 1
      %s33 = ssub.s32 %s27, 2
      %s34 = sadd.s32 %s27, 1
      %s35 = ssub.s32 %s27, %s34
      %p36 = scmp.eq.s32.totalorder %s35, 0
      %s38 = sadd.s32 %s37, 1
      %s39 = scalar_select %p36, %s37, %s38
      %p42 = pneg %p36
      %p43 = scmp.eq.s32.totalorder %s27, 1
      %p44 = por %p42, %p43
      %p45 = scmp.ne.s32.totalorder %s37, %s40
      %p46 = scmp.eq.s32.totalorder %s27, 0
      %p47 = por %p45, %p46
      %p48 = scmp.ne.s32.totalorder %s37, %s40
      %p49 = scmp.eq.s32.totalorder %s32, 1
      %p50 = por %p48, %p49
      %p51 = scmp.ne.s32.totalorder %s40, %s41
      %p52 = scmp.eq.s32.totalorder %s32, 0
      %p53 = por %p51, %p52
      %p54 = scmp.ne.s32.totalorder %s40, %s41
      %p55 = scmp.eq.s32.totalorder %s33, 1
      %p56 = por %p54, %p55
      %p58 = scmp.ne.s32.totalorder %s41, %s57
      %p59 = scmp.eq.s32.totalorder %s33, 0
      %p60 = por %p58, %p59
      %s62 = sadd.s32 %s61, 1
      %p65 = scmp.eq.s32.totalorder %s27, 1
      %p66 = scmp.ne.s32.totalorder %s61, %s63
      %p67 = scmp.eq.s32.totalorder %s27, 0
      %p68 = por %p66, %p67
      %p69 = scmp.ne.s32.totalorder %s61, %s63
      %p70 = scmp.eq.s32.totalorder %s32, 1
      %p71 = por %p69, %p70
      %p72 = scmp.ne.s32.totalorder %s63, %s64
      %p73 = scmp.eq.s32.totalorder %s32, 0
      %p74 = por %p72, %p73
      %p75 = scmp.ne.s32.totalorder %s63, %s64
      %p76 = scmp.eq.s32.totalorder %s33, 1
      %p77 = por %p75, %p76
      %p79 = scmp.ne.s32.totalorder %s64, %s78
      %p80 = scmp.eq.s32.totalorder %s33, 0
      %p81 = por %p79, %p80
      %s83 = sadd.s32 %s82, 1
      %p86 = scmp.eq.s32.totalorder %s27, 1
      %p87 = scmp.ne.s32.totalorder %s82, %s84
      %p88 = scmp.eq.s32.totalorder %s27, 0
      %p89 = por %p87, %p88
      %p90 = scmp.ne.s32.totalorder %s82, %s84
      %p91 = scmp.eq.s32.totalorder %s32, 1
      %p92 = por %p90, %p91
      %p93 = scmp.ne.s32.totalorder %s84, %s85
      %p94 = scmp.eq.s32.totalorder %s32, 0
      %p95 = por %p93, %p94
      %p96 = scmp.ne.s32.totalorder %s84, %s85
      %p97 = scmp.eq.s32.totalorder %s33, 1
      %p98 = por %p96, %p97
      %p100 = scmp.ne.s32.totalorder %s85, %s99
      %p101 = scmp.eq.s32.totalorder %s33, 0
      %p102 = por %p100, %p101
      %s104 = sadd.s32 %s103, 1
      %p107 = scmp.eq.s32.totalorder %s27, 1
      %p108 = scmp.ne.s32.totalorder %s103, %s105
      %p109 = scmp.eq.s32.totalorder %s27, 0
      %p110 = por %p108, %p109
      %p111 = scmp.ne.s32.totalorder %s103, %s105
      %p112 = scmp.eq.s32.totalorder %s32, 1
      %p113 = por %p111, %p112
      %p114 = scmp.ne.s32.totalorder %s105, %s106
      %p115 = scmp.eq.s32.totalorder %s32, 0
      %p116 = por %p114, %p115
      %p117 = scmp.ne.s32.totalorder %s105, %s106
      %p118 = scmp.eq.s32.totalorder %s33, 1
      %p119 = por %p117, %p118
      %p121 = scmp.ne.s32.totalorder %s106, %s120
      %p122 = scmp.eq.s32.totalorder %s33, 0
      %p123 = por %p121, %p122
      %s125 = sadd.s32 %s124, 1
      %p128 = scmp.eq.s32.totalorder %s27, 1
      %p129 = scmp.ne.s32.totalorder %s124, %s126
      %p130 = scmp.eq.s32.totalorder %s27, 0
      %p131 = por %p129, %p130
      %p132 = scmp.ne.s32.totalorder %s124, %s126
      %p133 = scmp.eq.s32.totalorder %s32, 1
      %p134 = por %p132, %p133
      %p135 = scmp.ne.s32.totalorder %s126, %s127
      %p136 = scmp.eq.s32.totalorder %s32, 0
      %p137 = por %p135, %p136
      %p138 = scmp.ne.s32.totalorder %s126, %s127
      %p139 = scmp.eq.s32.totalorder %s33, 1
      %p140 = por %p138, %p139
      %p142 = scmp.ne.s32.totalorder %s127, %s141
      %p143 = scmp.eq.s32.totalorder %s33, 0
      %p144 = por %p142, %p143
      %s146 = sadd.s32 %s145, 1
      %p149 = scmp.eq.s32.totalorder %s27, 1
      %p150 = scmp.ne.s32.totalorder %s145, %s147
      %p151 = scmp.eq.s32.totalorder %s27, 0
      %p152 = por %p150, %p151
      %p153 = scmp.ne.s32.totalorder %s145, %s147
      %p154 = scmp.eq.s32.totalorder %s32, 1
      %p155 = por %p153, %p154
      %p156 = scmp.ne.s32.totalorder %s147, %s148
      %p157 = scmp.eq.s32.totalorder %s32, 0
      %p158 = por %p156, %p157
      %p159 = scmp.ne.s32.totalorder %s147, %s148
      %p160 = scmp.eq.s32.totalorder %s33, 1
      %p161 = por %p159, %p160
      %p163 = scmp.ne.s32.totalorder %s148, %s162
      %p164 = scmp.eq.s32.totalorder %s33, 0
      %p165 = por %p163, %p164
      %s167 = sadd.s32 %s166, 1
      %p170 = scmp.eq.s32.totalorder %s27, 1
      %p171 = scmp.ne.s32.totalorder %s166, %s168
      %p172 = scmp.eq.s32.totalorder %s27, 0
      %p173 = por %p171, %p172
      %p174 = scmp.ne.s32.totalorder %s166, %s168
      %p175 = scmp.eq.s32.totalorder %s32, 1
      %p176 = por %p174, %p175
      %p177 = scmp.ne.s32.totalorder %s168, %s169
      %p178 = scmp.eq.s32.totalorder %s32, 0
      %p179 = por %p177, %p178
      %p180 = scmp.ne.s32.totalorder %s168, %s169
      %p181 = scmp.eq.s32.totalorder %s33, 1
      %p182 = por %p180, %p181
      %p184 = scmp.ne.s32.totalorder %s169, %s183
      %p185 = scmp.eq.s32.totalorder %s33, 0
      %p186 = por %p184, %p185
      %s188 = sadd.s32 %s187, 1
      %p191 = scmp.eq.s32.totalorder %s27, 1
      %p192 = scmp.ne.s32.totalorder %s187, %s189
      %p193 = scmp.eq.s32.totalorder %s27, 0
      %p194 = por %p192, %p193
      %p195 = scmp.ne.s32.totalorder %s187, %s189
      %p196 = scmp.eq.s32.totalorder %s32, 1
      %p197 = por %p195, %p196
      %p198 = scmp.ne.s32.totalorder %s189, %s190
      %p199 = scmp.eq.s32.totalorder %s32, 0
      %p200 = por %p198, %p199
      %p201 = scmp.ne.s32.totalorder %s189, %s190
      %p202 = scmp.eq.s32.totalorder %s33, 1
      %p203 = por %p201, %p202
      %p205 = scmp.ne.s32.totalorder %s190, %s204
      %p206 = scmp.eq.s32.totalorder %s33, 0
      %p207 = por %p205, %p206
      %s209 = sadd.s32 %s208, 1
      %p212 = scmp.eq.s32.totalorder %s27, 1
      %p213 = scmp.ne.s32.totalorder %s208, %s210
      %p214 = scmp.eq.s32.totalorder %s27, 0
      %p215 = por %p213, %p214
      %p216 = scmp.ne.s32.totalorder %s208, %s210
      %p217 = scmp.eq.s32.totalorder %s32, 1
      %p218 = por %p216, %p217
      %p219 = scmp.ne.s32.totalorder %s210, %s211
      %p220 = scmp.eq.s32.totalorder %s32, 0
      %p221 = por %p219, %p220
      %p222 = scmp.ne.s32.totalorder %s210, %s211
      %p223 = scmp.eq.s32.totalorder %s33, 1
      %p224 = por %p222, %p223
      %p226 = scmp.ne.s32.totalorder %s211, %s225
      %p227 = scmp.eq.s32.totalorder %s33, 0
      %p228 = por %p226, %p227
      %s230 = sadd.s32 %s229, 1
      %p233 = scmp.eq.s32.totalorder %s27, 1
      %p234 = scmp.ne.s32.totalorder %s229, %s231
      %p235 = scmp.eq.s32.totalorder %s27, 0
      %p236 = por %p234, %p235
      %p237 = scmp.ne.s32.totalorder %s229, %s231
      %p238 = scmp.eq.s32.totalorder %s32, 1
      %p239 = por %p237, %p238
      %p240 = scmp.ne.s32.totalorder %s231, %s232
      %p241 = scmp.eq.s32.totalorder %s32, 0
      %p242 = por %p240, %p241
      %p243 = scmp.ne.s32.totalorder %s231, %s232
      %p244 = scmp.eq.s32.totalorder %s33, 1
      %p245 = por %p243, %p244
      %p247 = scmp.ne.s32.totalorder %s232, %s246
      %p248 = scmp.eq.s32.totalorder %s33, 0
      %p249 = por %p247, %p248
      %s251 = sadd.s32 %s250, 1
      %p254 = scmp.eq.s32.totalorder %s27, 1
      %p255 = scmp.ne.s32.totalorder %s250, %s252
      %p256 = scmp.eq.s32.totalorder %s27, 0
      %p257 = por %p255, %p256
      %p258 = scmp.ne.s32.totalorder %s250, %s252
      %p259 = scmp.eq.s32.totalorder %s32, 1
      %p260 = por %p258, %p259
      %p261 = scmp.ne.s32.totalorder %s252, %s253
      %p262 = scmp.eq.s32.totalorder %s32, 0
      %p263 = por %p261, %p262
      %p264 = scmp.ne.s32.totalorder %s252, %s253
      %p265 = scmp.eq.s32.totalorder %s33, 1
      %p266 = por %p264, %p265
      %p268 = scmp.ne.s32.totalorder %s253, %s267
      %p269 = scmp.eq.s32.totalorder %s33, 0
      %p270 = por %p268, %p269
      %s272 = sadd.s32 %s271, 1
      %p275 = scmp.eq.s32.totalorder %s27, 1
      %p276 = scmp.ne.s32.totalorder %s271, %s273
      %p277 = scmp.eq.s32.totalorder %s27, 0
      %p278 = por %p276, %p277
      %p279 = scmp.ne.s32.totalorder %s271, %s273
      %p280 = scmp.eq.s32.totalorder %s32, 1
      %p281 = por %p279, %p280
      %p282 = scmp.ne.s32.totalorder %s273, %s274
      %p283 = scmp.eq.s32.totalorder %s32, 0
      %p284 = por %p282, %p283
      %p285 = scmp.ne.s32.totalorder %s273, %s274
      %p286 = scmp.eq.s32.totalorder %s33, 1
      %p287 = por %p285, %p286
      %p289 = scmp.ne.s32.totalorder %s274, %s288
      %p290 = scmp.eq.s32.totalorder %s33, 0
      %p291 = por %p289, %p290
      %s293 = sadd.s32 %s292, 1
      %p296 = scmp.eq.s32.totalorder %s27, 1
      %p297 = scmp.ne.s32.totalorder %s292, %s294
      %p298 = scmp.eq.s32.totalorder %s27, 0
      %p299 = por %p297, %p298
      %p300 = scmp.ne.s32.totalorder %s292, %s294
      %p301 = scmp.eq.s32.totalorder %s32, 1
      %p302 = por %p300, %p301
      %p303 = scmp.ne.s32.totalorder %s294, %s295
      %p304 = scmp.eq.s32.totalorder %s32, 0
      %p305 = por %p303, %p304
      %p306 = scmp.ne.s32.totalorder %s294, %s295
      %p307 = scmp.eq.s32.totalorder %s33, 1
      %p308 = por %p306, %p307
      %p310 = scmp.ne.s32.totalorder %s295, %s309
      %p311 = scmp.eq.s32.totalorder %s33, 0
      %p312 = por %p310, %p311
      %s313 = ssub.s32 %s27, %s34
      %p314 = scmp.eq.s32.totalorder %s313, 0
      %s316 = sadd.s32 %s315, 1
      %s317 = scalar_select %p314, %s315, %s316
      %p320 = pneg %p314
      %p321 = scmp.eq.s32.totalorder %s27, 1
      %p322 = por %p320, %p321
      %p323 = scmp.ne.s32.totalorder %s315, %s318
      %p324 = scmp.eq.s32.totalorder %s27, 0
      %p325 = por %p323, %p324
      %p326 = scmp.ne.s32.totalorder %s315, %s318
      %p327 = scmp.eq.s32.totalorder %s32, 1
      %p328 = por %p326, %p327
      %p329 = scmp.ne.s32.totalorder %s318, %s319
      %p330 = scmp.eq.s32.totalorder %s32, 0
      %p331 = por %p329, %p330
      %p332 = scmp.ne.s32.totalorder %s318, %s319
      %p333 = scmp.eq.s32.totalorder %s33, 1
      %p334 = por %p332, %p333
      %p336 = scmp.ne.s32.totalorder %s319, %s335
      %p337 = scmp.eq.s32.totalorder %s33, 0
      %p338 = por %p336, %p337
      %p339 = scmp.le.s32.totalorder 1, %s27
      %p340 = scmp.lt.s32.totalorder %s27, 3
      %p341 = pnand %p339, %p340
      %p342 = pneg %p341
      // Predicated region
      $region9: #{tpu_custom_call.1} parent=5 // pred_check
        _
      $region10: #{tpu_custom_call.1} parent=5 // pred_check_branch
        %344 = sbr.rel (%p341) target = $region12
      $region11: #{tpu_custom_call.1} parent=5 // pred_region
        %s345 = ssub.s32 %s27, 1
        // Predicated region
        $region13: #{tpu_custom_call.1} parent=11 // pred_check
          %p346 = pneg %p74
        $region14: #{tpu_custom_call.1} parent=11 // pred_check_branch
          %348 = sbr.rel (%p346) target = $region16
        $region15: #{tpu_custom_call.1} parent=11 // pred_region
          _
        $region16: #{tpu_custom_call.1} parent=11 // pred_fallthru
          _
        // Predicated region
        $region17: #{tpu_custom_call.1} parent=11 // pred_check
          %p349 = pneg %p95
        $region18: #{tpu_custom_call.1} parent=11 // pred_check_branch
          %351 = sbr.rel (%p349) target = $region20
        $region19: #{tpu_custom_call.1} parent=11 // pred_region
          _
        $region20: #{tpu_custom_call.1} parent=11 // pred_fallthru
          _
        // Predicated region
        $region21: #{tpu_custom_call.1} parent=11 // pred_check
          %p352 = pneg %p116
        $region22: #{tpu_custom_call.1} parent=11 // pred_check_branch
          %354 = sbr.rel (%p352) target = $region24
        $region23: #{tpu_custom_call.1} parent=11 // pred_region
          %s356 = ssub.s32 3072, 3072
          %357 = vsyncadd [#allocation6], %s356
          %s358 = sshll.u32 [#allocation5], 4
          %s359 = int_to_ptr.vmem [resolvable:$true] %s358
          %364 = dma.hbm_to_vmem [thread:$0]  %s3, 3072, %s359, [#allocation6], 192, 192, 12
        $region24: #{tpu_custom_call.1} parent=11 // pred_fallthru
          _
        // Predicated region
        $region25: #{tpu_custom_call.1} parent=11 // pred_check
          %p365 = pneg %p137
        $region26: #{tpu_custom_call.1} parent=11 // pred_check_branch
          %367 = sbr.rel (%p365) target = $region28
        $region27: #{tpu_custom_call.1} parent=11 // pred_region
          _
        $region28: #{tpu_custom_call.1} parent=11 // pred_fallthru
          _
        // Predicated region
        $region29: #{tpu_custom_call.1} parent=11 // pred_check
          %p368 = pneg %p158
        $region30: #{tpu_custom_call.1} parent=11 // pred_check_branch
          %370 = sbr.rel (%p368) target = $region32
        $region31: #{tpu_custom_call.1} parent=11 // pred_region
          %s372 = ssub.s32 1024, 1024
          %373 = vsyncadd [#allocation6], %s372
          %s374 = sshll.u32 [#allocation7], 4
          %s375 = int_to_ptr.vmem [resolvable:$true] %s374
          %380 = dma.hbm_to_vmem [thread:$0]  %s5, 1024, %s375, [#allocation6], 64, 64, 4
        $region32: #{tpu_custom_call.1} parent=11 // pred_fallthru
          _
        // Predicated region
        $region33: #{tpu_custom_call.1} parent=11 // pred_check
          %p381 = pneg %p179
        $region34: #{tpu_custom_call.1} parent=11 // pred_check_branch
          %383 = sbr.rel (%p381) target = $region36
        $region35: #{tpu_custom_call.1} parent=11 // pred_region
          _
        $region36: #{tpu_custom_call.1} parent=11 // pred_fallthru
          _
        // Predicated region
        $region37: #{tpu_custom_call.1} parent=11 // pred_check
          %p384 = pneg %p200
        $region38: #{tpu_custom_call.1} parent=11 // pred_check_branch
          %386 = sbr.rel (%p384) target = $region40
        $region39: #{tpu_custom_call.1} parent=11 // pred_region
          _
        $region40: #{tpu_custom_call.1} parent=11 // pred_fallthru
          _
        // Predicated region
        $region41: #{tpu_custom_call.1} parent=11 // pred_check
          %p387 = pneg %p221
        $region42: #{tpu_custom_call.1} parent=11 // pred_check_branch
          %389 = sbr.rel (%p387) target = $region44
        $region43: #{tpu_custom_call.1} parent=11 // pred_region
          _
        $region44: #{tpu_custom_call.1} parent=11 // pred_fallthru
          _
        // Predicated region
        $region45: #{tpu_custom_call.1} parent=11 // pred_check
          %p390 = pneg %p242
        $region46: #{tpu_custom_call.1} parent=11 // pred_check_branch
          %392 = sbr.rel (%p390) target = $region48
        $region47: #{tpu_custom_call.1} parent=11 // pred_region
          %s394 = ssub.s32 2048, 2048
          %395 = vsyncadd [#allocation9], %s394
          %s396 = sshll.u32 [#allocation8], 4
          %s397 = int_to_ptr.vmem [resolvable:$true] %s396
          %402 = dma.hbm_to_vmem [thread:$0]  %s9, 2048, %s397, [#allocation9], 128, 128, 8
        $region48: #{tpu_custom_call.1} parent=11 // pred_fallthru
          _
        // Predicated region
        $region49: #{tpu_custom_call.1} parent=11 // pred_check
          %p403 = pneg %p263
        $region50: #{tpu_custom_call.1} parent=11 // pred_check_branch
          %405 = sbr.rel (%p403) target = $region52
        $region51: #{tpu_custom_call.1} parent=11 // pred_region
          _
        $region52: #{tpu_custom_call.1} parent=11 // pred_fallthru
          _
        // Predicated region
        $region53: #{tpu_custom_call.1} parent=11 // pred_check
          %p406 = pneg %p284
        $region54: #{tpu_custom_call.1} parent=11 // pred_check_branch
          %408 = sbr.rel (%p406) target = $region56
        $region55: #{tpu_custom_call.1} parent=11 // pred_region
          %s410 = ssub.s32 2048, 2048
          %411 = vsyncadd [#allocation9], %s410
          %s412 = sshll.u32 [#allocation10], 4
          %s413 = int_to_ptr.vmem [resolvable:$true] %s412
          %418 = dma.hbm_to_vmem [thread:$0]  %s11, 2048, %s413, [#allocation9], 64, 64, 4
        $region56: #{tpu_custom_call.1} parent=11 // pred_fallthru
          _
        // Predicated region
        $region57: #{tpu_custom_call.1} parent=11 // pred_check
          %p419 = pneg %p305
        $region58: #{tpu_custom_call.1} parent=11 // pred_check_branch
          %421 = sbr.rel (%p419) target = $region60
        $region59: #{tpu_custom_call.1} parent=11 // pred_region
          _
        $region60: #{tpu_custom_call.1} parent=11 // pred_fallthru
          _
      $region12: #{tpu_custom_call.1} parent=5 // pred_fallthru
        _
      %p422 = scmp.lt.s32.totalorder %s27, 2
      // Predicated region
      $region61: #{tpu_custom_call.1} parent=5 // pred_check
        %p423 = pneg %p422
      $region62: #{tpu_custom_call.1} parent=5 // pred_check_branch
        %425 = sbr.rel (%p423) target = $region64
      $region63: #{tpu_custom_call.1} parent=5 // pred_region
        // Predicated region
        $region65: #{tpu_custom_call.1} parent=63 // pred_check
          %p426 = pneg %p47
        $region66: #{tpu_custom_call.1} parent=63 // pred_check_branch
          %428 = sbr.rel (%p426) target = $region68
        $region67: #{tpu_custom_call.1} parent=63 // pred_region
          %s429 = sand.u32 %s37, 1
          %s430 = scalar_lea.sflag [#allocation3], %s429
          %s431 = sand.u32 %s37, 1
          %s432 = smul.addr %s431, 128
          %s433 = scalar_lea.vmem [#allocation2], %s432
          %s435 = ssub.s32 2048, 2048
          %436 = vsyncadd %s430, %s435
          %s437 = smul.addr %s27, 16
          %s438 = smul.addr %s437, 128
          %s439 = scalar_lea.hbm %s0, %s438
          %s440 = sshll.u32 %s433, 4
          %s441 = int_to_ptr.vmem [resolvable:$true] %s440
          %446 = dma.hbm_to_vmem [thread:$0]  %s439, 2048, %s441, %s430, 128, 128, 8
        $region68: #{tpu_custom_call.1} parent=63 // pred_fallthru
          _
      $region64: #{tpu_custom_call.1} parent=5 // pred_fallthru
        _
      %p447 = scmp.le.s32.totalorder 1, %s27
      %p448 = scmp.lt.s32.totalorder %s27, 3
      %p449 = pnand %p447, %p448
      %p450 = pneg %p449
      // Predicated region
      $region69: #{tpu_custom_call.1} parent=5 // pred_check
        _
      $region70: #{tpu_custom_call.1} parent=5 // pred_check_branch
        %452 = sbr.rel (%p449) target = $region72
      $region71: #{tpu_custom_call.1} parent=5 // pred_region
        %s453 = ssub.s32 %s27, 1
        %s454 = sand.u32 %s40, 1
        %s455 = scalar_lea.sflag [#allocation3], %s454
        %s456 = sand.u32 %s40, 1
        %s457 = smul.addr %s456, 128
        %s458 = scalar_lea.vmem [#allocation2], %s457
        // Predicated region
        $region73: #{tpu_custom_call.1} parent=71 // pred_check
          %p459 = pneg %p53
        $region74: #{tpu_custom_call.1} parent=71 // pred_check_branch
          %461 = sbr.rel (%p459) target = $region76
        $region75: #{tpu_custom_call.1} parent=71 // pred_region
          %462 = dma.done %s455, 2048
        $region76: #{tpu_custom_call.1} parent=71 // pred_fallthru
          _
        // Predicated region
        $region77: #{tpu_custom_call.1} parent=71 // pred_check
          %p463 = pneg %p116
        $region78: #{tpu_custom_call.1} parent=71 // pred_check_branch
          %465 = sbr.rel (%p463) target = $region80
        $region79: #{tpu_custom_call.1} parent=71 // pred_region
          %466 = dma.done [#allocation6], 3072
        $region80: #{tpu_custom_call.1} parent=71 // pred_fallthru
          _
        // Predicated region
        $region81: #{tpu_custom_call.1} parent=71 // pred_check
          %p467 = pneg %p158
        $region82: #{tpu_custom_call.1} parent=71 // pred_check_branch
          %469 = sbr.rel (%p467) target = $region84
        $region83: #{tpu_custom_call.1} parent=71 // pred_region
          %470 = dma.done [#allocation6], 1024
        $region84: #{tpu_custom_call.1} parent=71 // pred_fallthru
          _
        // Predicated region
        $region85: #{tpu_custom_call.1} parent=71 // pred_check
          %p471 = pneg %p242
        $region86: #{tpu_custom_call.1} parent=71 // pred_check_branch
          %473 = sbr.rel (%p471) target = $region88
        $region87: #{tpu_custom_call.1} parent=71 // pred_region
          %474 = dma.done [#allocation9], 2048
        $region88: #{tpu_custom_call.1} parent=71 // pred_fallthru
          _
        // Predicated region
        $region89: #{tpu_custom_call.1} parent=71 // pred_check
          %p475 = pneg %p284
        $region90: #{tpu_custom_call.1} parent=71 // pred_check_branch
          %477 = sbr.rel (%p475) target = $region92
        $region91: #{tpu_custom_call.1} parent=71 // pred_region
          %478 = dma.done [#allocation9], 2048
        $region92: #{tpu_custom_call.1} parent=71 // pred_fallthru
          _
        %s479 = sand.u32 %s40, 1
        %s480 = scalar_lea.sflag [#allocation3], %s479
        %s481 = sand.u32 %s40, 1
        %s482 = smul.addr %s481, 128
        %s483 = scalar_lea.vmem [#allocation2], %s482
        %p484 = pneg %p53
        %p485 = pneg %p50
        %p486 = pneg %p74
        %p487 = pneg %p71
        %p488 = pneg %p95
        %p489 = pneg %p92
        %p490 = pneg %p116
        %p491 = pneg %p113
        %p492 = pneg %p137
        %p493 = pneg %p134
        %p494 = pneg %p158
        %p495 = pneg %p155
        %p496 = pneg %p179
        %p497 = pneg %p176
        %p498 = pneg %p200
        %p499 = pneg %p197
        %p500 = pneg %p221
        %p501 = pneg %p218
        %p502 = pneg %p242
        %p503 = pneg %p239
        %p504 = pneg %p263
        %p505 = pneg %p260
        %p506 = pneg %p284
        %p507 = pneg %p281
        %p508 = pneg %p305
        %p509 = pneg %p302
        %p510 = pneg %p331
        %p511 = pneg %p328
        %s512 = sand.u32 %s318, 1
        %s513 = scalar_lea.sflag [#allocation4], %s512
        %s514 = sand.u32 %s318, 1
        %s515 = smul.addr %s514, 128
        %s516 = scalar_lea.vmem [#allocation11], %s515
        %v518 = vld [vmem:[%s458] sm:$0xff]
        %v519 = vld [vmem:[%s458 + $0x8] sm:$0xff]
        %v520 = vld [vmem:[%s458 + $0x10] sm:$0xff]
        %v521 = vld [vmem:[%s458 + $0x18] sm:$0xff]
        %v522 = vld [vmem:[%s458 + $0x20] sm:$0xff]
        %v523 = vld [vmem:[%s458 + $0x28] sm:$0xff]
        %v524 = vld [vmem:[%s458 + $0x30] sm:$0xff]
        %v525 = vld [vmem:[%s458 + $0x38] sm:$0xff]
        %v526 = vld [vmem:[%s458 + $0x40] sm:$0xff]
        %v527 = vld [vmem:[%s458 + $0x48] sm:$0xff]
        %v528 = vld [vmem:[%s458 + $0x50] sm:$0xff]
        %v529 = vld [vmem:[%s458 + $0x58] sm:$0xff]
        %v530 = vld [vmem:[%s458 + $0x60] sm:$0xff]
        %v531 = vld [vmem:[%s458 + $0x68] sm:$0xff]
        %v532 = vld [vmem:[%s458 + $0x70] sm:$0xff]
        %v533 = vld [vmem:[%s458 + $0x78] sm:$0xff]
        %v534 = vld [vmem:[%s1] sm:$0x1]
        %v535 = vld [vmem:[%s2] sm:$0x1]
        %536 = vadd.xlane.f32.xlu0 %v518
        %v537 = vpop.xlane.xlu0 %536
        %538 = vadd.xlane.f32.xlu0 %v519
        %v539 = vpop.xlane.xlu0 %538
        %540 = vadd.xlane.f32.xlu0 %v520
        %v541 = vpop.xlane.xlu0 %540
        %542 = vadd.xlane.f32.xlu0 %v521
        %v543 = vpop.xlane.xlu0 %542
        %544 = vadd.xlane.f32.xlu0 %v522
        %v545 = vpop.xlane.xlu0 %544
        %546 = vadd.xlane.f32.xlu0 %v523
        %v547 = vpop.xlane.xlu0 %546
        %548 = vadd.xlane.f32.xlu0 %v524
        %v549 = vpop.xlane.xlu0 %548
        %550 = vadd.xlane.f32.xlu0 %v525
        %v551 = vpop.xlane.xlu0 %550
        %552 = vadd.xlane.f32.xlu0 %v526
        %v553 = vpop.xlane.xlu0 %552
        %554 = vadd.xlane.f32.xlu0 %v527
        %v555 = vpop.xlane.xlu0 %554
        %556 = vadd.xlane.f32.xlu0 %v528
        %v557 = vpop.xlane.xlu0 %556
        %558 = vadd.xlane.f32.xlu0 %v529
        %v559 = vpop.xlane.xlu0 %558
        %560 = vadd.xlane.f32.xlu0 %v530
        %v561 = vpop.xlane.xlu0 %560
        %562 = vadd.xlane.f32.xlu0 %v531
        %v563 = vpop.xlane.xlu0 %562
        %564 = vadd.xlane.f32.xlu0 %v532
        %v565 = vpop.xlane.xlu0 %564
        %566 = vadd.xlane.f32.xlu0 %v533
        %v567 = vpop.xlane.xlu0 %566
        %v568 = vmul.f32 %v537, 0.0078125
        %v569 = vmul.f32 %v539, 0.0078125
        %v570 = vmul.f32 %v541, 0.0078125
        %v571 = vmul.f32 %v543, 0.0078125
        %v572 = vmul.f32 %v545, 0.0078125
        %v573 = vmul.f32 %v547, 0.0078125
        %v574 = vmul.f32 %v549, 0.0078125
        %v575 = vmul.f32 %v551, 0.0078125
        %v576 = vmul.f32 %v553, 0.0078125
        %v577 = vmul.f32 %v555, 0.0078125
        %v578 = vmul.f32 %v557, 0.0078125
        %v579 = vmul.f32 %v559, 0.0078125
        %v580 = vmul.f32 %v561, 0.0078125
        %v581 = vmul.f32 %v563, 0.0078125
        %v582 = vmul.f32 %v565, 0.0078125
        %v583 = vmul.f32 %v567, 0.0078125
        %v584 = vsub.f32 %v518, %v568
        %v585 = vsub.f32 %v519, %v569
        %v586 = vsub.f32 %v520, %v570
        %v587 = vsub.f32 %v521, %v571
        %v588 = vsub.f32 %v522, %v572
        %v589 = vsub.f32 %v523, %v573
        %v590 = vsub.f32 %v524, %v574
        %v591 = vsub.f32 %v525, %v575
        %v592 = vsub.f32 %v526, %v576
        %v593 = vsub.f32 %v527, %v577
        %v594 = vsub.f32 %v528, %v578
        %v595 = vsub.f32 %v529, %v579
        %v596 = vsub.f32 %v530, %v580
        %v597 = vsub.f32 %v531, %v581
        %v598 = vsub.f32 %v532, %v582
        %v599 = vsub.f32 %v533, %v583
        %v600 = vmul.f32 %v584, %v584
        %v601 = vmul.f32 %v585, %v585
        %v602 = vmul.f32 %v586, %v586
        %v603 = vmul.f32 %v587, %v587
        %v604 = vmul.f32 %v588, %v588
        %v605 = vmul.f32 %v589, %v589
        %v606 = vmul.f32 %v590, %v590
        %v607 = vmul.f32 %v591, %v591
        %v608 = vmul.f32 %v592, %v592
        %v609 = vmul.f32 %v593, %v593
        %v610 = vmul.f32 %v594, %v594
        %v611 = vmul.f32 %v595, %v595
        %v612 = vmul.f32 %v596, %v596
        %v613 = vmul.f32 %v597, %v597
        %v614 = vmul.f32 %v598, %v598
        %v615 = vmul.f32 %v599, %v599
        %616 = vadd.xlane.f32.xlu0 %v600
        %v617 = vpop.xlane.xlu0 %616
        %618 = vadd.xlane.f32.xlu0 %v601
        %v619 = vpop.xlane.xlu0 %618
        %620 = vadd.xlane.f32.xlu0 %v602
        %v621 = vpop.xlane.xlu0 %620
        %622 = vadd.xlane.f32.xlu0 %v603
        %v623 = vpop.xlane.xlu0 %622
        %624 = vadd.xlane.f32.xlu0 %v604
        %v625 = vpop.xlane.xlu0 %624
        %626 = vadd.xlane.f32.xlu0 %v605
        %v627 = vpop.xlane.xlu0 %626
        %628 = vadd.xlane.f32.xlu0 %v606
        %v629 = vpop.xlane.xlu0 %628
        %630 = vadd.xlane.f32.xlu0 %v607
        %v631 = vpop.xlane.xlu0 %630
        %632 = vadd.xlane.f32.xlu0 %v608
        %v633 = vpop.xlane.xlu0 %632
        %634 = vadd.xlane.f32.xlu0 %v609
        %v635 = vpop.xlane.xlu0 %634
        %636 = vadd.xlane.f32.xlu0 %v610
        %v637 = vpop.xlane.xlu0 %636
        %638 = vadd.xlane.f32.xlu0 %v611
        %v639 = vpop.xlane.xlu0 %638
        %640 = vadd.xlane.f32.xlu0 %v612
        %v641 = vpop.xlane.xlu0 %640
        %642 = vadd.xlane.f32.xlu0 %v613
        %v643 = vpop.xlane.xlu0 %642
        %644 = vadd.xlane.f32.xlu0 %v614
        %v645 = vpop.xlane.xlu0 %644
        %646 = vadd.xlane.f32.xlu0 %v615
        %v647 = vpop.xlane.xlu0 %646
        %v648 = vmul.f32 %v617, 0.0078125
        %v649 = vmul.f32 %v619, 0.0078125
        %v650 = vmul.f32 %v621, 0.0078125
        %v651 = vmul.f32 %v623, 0.0078125
        %v652 = vmul.f32 %v625, 0.0078125
        %v653 = vmul.f32 %v627, 0.0078125
        %v654 = vmul.f32 %v629, 0.0078125
        %v655 = vmul.f32 %v631, 0.0078125
        %v656 = vmul.f32 %v633, 0.0078125
        %v657 = vmul.f32 %v635, 0.0078125
        %v658 = vmul.f32 %v637, 0.0078125
        %v659 = vmul.f32 %v639, 0.0078125
        %v660 = vmul.f32 %v641, 0.0078125
        %v661 = vmul.f32 %v643, 0.0078125
        %v662 = vmul.f32 %v645, 0.0078125
        %v663 = vmul.f32 %v647, 0.0078125
        %v664 = vadd.f32 %v648, 1e-05
        %v665 = vadd.f32 %v649, 1e-05
        %v666 = vadd.f32 %v650, 1e-05
        %v667 = vadd.f32 %v651, 1e-05
        %v668 = vadd.f32 %v652, 1e-05
        %v669 = vadd.f32 %v653, 1e-05
        %v670 = vadd.f32 %v654, 1e-05
        %v671 = vadd.f32 %v655, 1e-05
        %v672 = vadd.f32 %v656, 1e-05
        %v673 = vadd.f32 %v657, 1e-05
        %v674 = vadd.f32 %v658, 1e-05
        %v675 = vadd.f32 %v659, 1e-05
        %v676 = vadd.f32 %v660, 1e-05
        %v677 = vadd.f32 %v661, 1e-05
        %v678 = vadd.f32 %v662, 1e-05
        %v679 = vadd.f32 %v663, 1e-05
        %v680 = vrsqrt.pop %v664
        %v681 = vrsqrt.pop %v665
        %v682 = vrsqrt.pop %v666
        %v683 = vrsqrt.pop %v667
        %v684 = vrsqrt.pop %v668
        %v685 = vrsqrt.pop %v669
        %v686 = vrsqrt.pop %v670
        %v687 = vrsqrt.pop %v671
        %v688 = vrsqrt.pop %v672
        %v689 = vrsqrt.pop %v673
        %v690 = vrsqrt.pop %v674
        %v691 = vrsqrt.pop %v675
        %v692 = vrsqrt.pop %v676
        %v693 = vrsqrt.pop %v677
        %v694 = vrsqrt.pop %v678
        %v695 = vrsqrt.pop %v679
        %v696 = vmul.f32 %v584, %v680
        %v697 = vmul.f32 %v585, %v681
        %v698 = vmul.f32 %v586, %v682
        %v699 = vmul.f32 %v587, %v683
        %v700 = vmul.f32 %v588, %v684
        %v701 = vmul.f32 %v589, %v685
        %v702 = vmul.f32 %v590, %v686
        %v703 = vmul.f32 %v591, %v687
        %v704 = vmul.f32 %v592, %v688
        %v705 = vmul.f32 %v593, %v689
        %v706 = vmul.f32 %v594, %v690
        %v707 = vmul.f32 %v595, %v691
        %v708 = vmul.f32 %v596, %v692
        %v709 = vmul.f32 %v597, %v693
        %v710 = vmul.f32 %v598, %v694
        %v711 = vmul.f32 %v599, %v695
        %v713 = vlaneseq
        %v714 = vshrl.u32 %v713, 7
        %v715 = vsub.s32 0, %v714
        %v716 = vrot.slane %v534, %v715
        %v718 = vmul.f32 %v696, %v716
        %v719 = vmul.f32 %v697, %v716
        %v720 = vmul.f32 %v698, %v716
        %v721 = vmul.f32 %v699, %v716
        %v722 = vmul.f32 %v700, %v716
        %v723 = vmul.f32 %v701, %v716
        %v724 = vmul.f32 %v702, %v716
        %v725 = vmul.f32 %v703, %v716
        %v726 = vmul.f32 %v704, %v716
        %v727 = vmul.f32 %v705, %v716
        %v728 = vmul.f32 %v706, %v716
        %v729 = vmul.f32 %v707, %v716
        %v730 = vmul.f32 %v708, %v716
        %v731 = vmul.f32 %v709, %v716
        %v732 = vmul.f32 %v710, %v716
        %v733 = vmul.f32 %v711, %v716
        %v735 = vlaneseq
        %v736 = vshrl.u32 %v735, 7
        %v737 = vsub.s32 0, %v736
        %v738 = vrot.slane %v535, %v737
        %v740 = vadd.f32 %v718, %v738
        %v741 = vadd.f32 %v719, %v738
        %v742 = vadd.f32 %v720, %v738
        %v743 = vadd.f32 %v721, %v738
        %v744 = vadd.f32 %v722, %v738
        %v745 = vadd.f32 %v723, %v738
        %v746 = vadd.f32 %v724, %v738
        %v747 = vadd.f32 %v725, %v738
        %v748 = vadd.f32 %v726, %v738
        %v749 = vadd.f32 %v727, %v738
        %v750 = vadd.f32 %v728, %v738
        %v751 = vadd.f32 %v729, %v738
        %v752 = vadd.f32 %v730, %v738
        %v753 = vadd.f32 %v731, %v738
        %v754 = vadd.f32 %v732, %v738
        %v755 = vadd.f32 %v733, %v738
        %v756 = vpack.c.bf16 %v741, %v740
        %v757 = vpack.c.bf16 %v743, %v742
        %v758 = vpack.c.bf16 %v745, %v744
        %v759 = vpack.c.bf16 %v747, %v746
        %v760 = vpack.c.bf16 %v749, %v748
        %v761 = vpack.c.bf16 %v751, %v750
        %v762 = vpack.c.bf16 %v753, %v752
        %v763 = vpack.c.bf16 %v755, %v754
        %v764 = vld [vmem:[#allocation5] sm:$0xff]
        %v765 = vld [vmem:[#allocation5 + $0x8] sm:$0xf]
        %v766 = vld [vmem:[#allocation5 + $0xc] sm:$0xff]
        %v767 = vld [vmem:[#allocation5 + $0x14] sm:$0xf]
        %v768 = vld [vmem:[#allocation5 + $0x18] sm:$0xff]
        %v769 = vld [vmem:[#allocation5 + $0x20] sm:$0xf]
        %v770 = vld [vmem:[#allocation5 + $0x24] sm:$0xff]
        %v771 = vld [vmem:[#allocation5 + $0x2c] sm:$0xf]
        %v772 = vld [vmem:[#allocation5 + $0x30] sm:$0xff]
        %v773 = vld [vmem:[#allocation5 + $0x38] sm:$0xf]
        %v774 = vld [vmem:[#allocation5 + $0x3c] sm:$0xff]
        %v775 = vld [vmem:[#allocation5 + $0x44] sm:$0xf]
        %v776 = vld [vmem:[#allocation5 + $0x48] sm:$0xff]
        %v777 = vld [vmem:[#allocation5 + $0x50] sm:$0xf]
        %v778 = vld [vmem:[#allocation5 + $0x54] sm:$0xff]
        %v779 = vld [vmem:[#allocation5 + $0x5c] sm:$0xf]
        %v780 = vld [vmem:[#allocation5 + $0x60] sm:$0xff]
        %v781 = vld [vmem:[#allocation5 + $0x68] sm:$0xf]
        %v782 = vld [vmem:[#allocation5 + $0x6c] sm:$0xff]
        %v783 = vld [vmem:[#allocation5 + $0x74] sm:$0xf]
        %v784 = vld [vmem:[#allocation5 + $0x78] sm:$0xff]
        %v785 = vld [vmem:[#allocation5 + $0x80] sm:$0xf]
        %v786 = vld [vmem:[#allocation5 + $0x84] sm:$0xff]
        %v787 = vld [vmem:[#allocation5 + $0x8c] sm:$0xf]
        %v788 = vld [vmem:[#allocation5 + $0x90] sm:$0xff]
        %v789 = vld [vmem:[#allocation5 + $0x98] sm:$0xf]
        %v790 = vld [vmem:[#allocation5 + $0x9c] sm:$0xff]
        %v791 = vld [vmem:[#allocation5 + $0xa4] sm:$0xf]
        %v792 = vld [vmem:[#allocation5 + $0xa8] sm:$0xff]
        %v793 = vld [vmem:[#allocation5 + $0xb0] sm:$0xf]
        %v794 = vld [vmem:[#allocation5 + $0xb4] sm:$0xff]
        %v795 = vld [vmem:[#allocation5 + $0xbc] sm:$0xf]
        %v796 = vld [vmem:[%s4] sm:$0x7]
        %v798 = vlaneseq
        %v799 = vshrl.u32 %v798, 7
        %v800 = vsub.s32 0, %v799
        %v801 = vrot.slane %v796, %v800
        %v802 = vlaneseq
        %v803 = vshrl.u32 %v802, 7
        %v804 = vsub.s32 1, %v803
        %v805 = vrot.slane %v796, %v804
        %v806 = vlaneseq
        %v807 = vshrl.u32 %v806, 7
        %v808 = vsub.s32 2, %v807
        %v809 = vrot.slane %v796, %v808
        %v845 = vunpack.c.l.b16 %v764
        %v846 = vunpack.c.h.b16 %v764
        %v847 = vunpack.c.l.b16 %v765
        %v848 = vunpack.c.l.b16 %v766
        %v849 = vunpack.c.h.b16 %v766
        %v850 = vunpack.c.l.b16 %v767
        %v851 = vunpack.c.l.b16 %v768
        %v852 = vunpack.c.h.b16 %v768
        %v853 = vunpack.c.l.b16 %v769
        %v854 = vunpack.c.l.b16 %v770
        %v855 = vunpack.c.h.b16 %v770
        %v856 = vunpack.c.l.b16 %v771
        %v857 = vunpack.c.l.b16 %v772
        %v858 = vunpack.c.h.b16 %v772
        %v859 = vunpack.c.l.b16 %v773
        %v860 = vunpack.c.l.b16 %v774
        %v861 = vunpack.c.h.b16 %v774
        %v862 = vunpack.c.l.b16 %v775
        %v863 = vunpack.c.l.b16 %v776
        %v864 = vunpack.c.h.b16 %v776
        %v865 = vunpack.c.l.b16 %v777
        %v866 = vunpack.c.l.b16 %v778
        %v867 = vunpack.c.h.b16 %v778
        %v868 = vunpack.c.l.b16 %v779
        %v869 = vunpack.c.l.b16 %v780
        %v870 = vunpack.c.h.b16 %v780
        %v871 = vunpack.c.l.b16 %v781
        %v872 = vunpack.c.l.b16 %v782
        %v873 = vunpack.c.h.b16 %v782
        %v874 = vunpack.c.l.b16 %v783
        %v875 = vunpack.c.l.b16 %v784
        %v876 = vunpack.c.h.b16 %v784
        %v877 = vunpack.c.l.b16 %v785
        %v878 = vunpack.c.l.b16 %v786
        %v879 = vunpack.c.h.b16 %v786
        %v880 = vunpack.c.l.b16 %v787
        %v881 = vunpack.c.l.b16 %v788
        %v882 = vunpack.c.h.b16 %v788
        %v883 = vunpack.c.l.b16 %v789
        %v884 = vunpack.c.l.b16 %v790
        %v885 = vunpack.c.h.b16 %v790
        %v886 = vunpack.c.l.b16 %v791
        %v887 = vunpack.c.l.b16 %v792
        %v888 = vunpack.c.h.b16 %v792
        %v889 = vunpack.c.l.b16 %v793
        %v890 = vunpack.c.l.b16 %v794
        %v891 = vunpack.c.h.b16 %v794
        %v892 = vunpack.c.l.b16 %v795
        %v893 = vpack.c.b16 %v848, %v845
        %v894 = vpack.c.b16 %v849, %v846
        %v895 = vpack.c.b16 %v850, %v847
        %v896 = vpack.c.b16 %v854, %v851
        %v897 = vpack.c.b16 %v855, %v852
        %v898 = vpack.c.b16 %v856, %v853
        %v899 = vpack.c.b16 %v860, %v857
        %v900 = vpack.c.b16 %v861, %v858
        %v901 = vpack.c.b16 %v862, %v859
        %v902 = vpack.c.b16 %v866, %v863
        %v903 = vpack.c.b16 %v867, %v864
        %v904 = vpack.c.b16 %v868, %v865
        %v905 = vpack.c.b16 %v872, %v869
        %v906 = vpack.c.b16 %v873, %v870
        %v907 = vpack.c.b16 %v874, %v871
        %v908 = vpack.c.b16 %v878, %v875
        %v909 = vpack.c.b16 %v879, %v876
        %v910 = vpack.c.b16 %v880, %v877
        %v911 = vpack.c.b16 %v884, %v881
        %v912 = vpack.c.b16 %v885, %v882
        %v913 = vpack.c.b16 %v886, %v883
        %v914 = vpack.c.b16 %v890, %v887
        %v915 = vpack.c.b16 %v891, %v888
        %v916 = vpack.c.b16 %v892, %v889
        %941 = vmatprep.subr.bf16.mxu0 %v894
        %942 = vmatpush1.bf16.msra.mxu0 %v893
        %943 = vmatprep.subr.bf16.mxu0 %v897
        %944 = vmatpush1.bf16.msra.mxu0 %v896
        %945 = vmatprep.subr.bf16.mxu0 %v900
        %946 = vmatpush1.bf16.msra.mxu0 %v899
        %947 = vmatprep.subr.bf16.mxu0 %v903
        %948 = vmatpush1.bf16.msra.mxu0 %v902
        %949 = vmatprep.subr.bf16.mxu0 %v906
        %950 = vmatpush1.bf16.msra.mxu0 %v905
        %951 = vmatprep.subr.bf16.mxu0 %v909
        %952 = vmatpush1.bf16.msra.mxu0 %v908
        %953 = vmatprep.subr.bf16.mxu0 %v912
        %954 = vmatpush1.bf16.msra.mxu0 %v911
        %955 = vmatprep.subr.bf16.mxu0 %v915
        %956 = vmatpush1.bf16.msra.mxu0 %v914
        %957 = vmatprep.subr.bf16.mxu0 0
        %958 = vmatpush1.bf16.msra.mxu0 0
        %959 = vmatprep.subr.bf16.mxu0 0
        %960 = vmatpush1.bf16.msra.mxu0 0
        %961 = vmatprep.subr.bf16.mxu0 0
        %962 = vmatpush1.bf16.msra.mxu0 0
        %963 = vmatprep.subr.bf16.mxu0 0
        %964 = vmatpush1.bf16.msra.mxu0 0
        %965 = vmatprep.subr.bf16.mxu0 0
        %966 = vmatpush1.bf16.msra.mxu0 0
        %967 = vmatprep.subr.bf16.mxu0 0
        %968 = vmatpush1.bf16.msra.mxu0 0
        %969 = vmatprep.subr.bf16.mxu0 0
        %970 = vmatpush1.bf16.msra.mxu0 0
        %971 = vmatprep.subr.bf16.mxu0 0
        %972 = vmatpush1.bf16.msra.mxu0 0
        %973 = vmatprep.mubr.bf16.mxu0 0
        %974 = vmatmul.mubr.bf16.gmra.mrb[0].mxu0 %v756
        %v975 = vpop.f32.mrb[0].mxu0
        %v976 = vadd.f32 %v801, %v975
        %v977 = vpop.f32.mrb[0].mxu0
        %v978 = vadd.f32 %v805, %v977
        %v979 = vpop.f32.mrb[0].mxu0
        %v980 = vadd.f32 %v801, %v979
        %v981 = vpop.f32.mrb[0].mxu0
        %v982 = vadd.f32 %v805, %v981
        %983 = vmatprep.mubr.bf16.mxu0 0
        %984 = vmatmul.mubr.bf16.gmra.mrb[0].mxu0 %v757
        %v985 = vpop.f32.mrb[0].mxu0
        %v986 = vadd.f32 %v801, %v985
        %v987 = vpop.f32.mrb[0].mxu0
        %v988 = vadd.f32 %v805, %v987
        %v989 = vpop.f32.mrb[0].mxu0
        %v990 = vadd.f32 %v801, %v989
        %v991 = vpop.f32.mrb[0].mxu0
        %v992 = vadd.f32 %v805, %v991
        %993 = vmatprep.mubr.bf16.mxu0 0
        %994 = vmatmul.mubr.bf16.gmra.mrb[0].mxu0 %v758
        %v995 = vpop.f32.mrb[0].mxu0
        %v996 = vadd.f32 %v801, %v995
        %v997 = vpop.f32.mrb[0].mxu0
        %v998 = vadd.f32 %v805, %v997
        %v999 = vpop.f32.mrb[0].mxu0
        %v1000 = vadd.f32 %v801, %v999
        %v1001 = vpop.f32.mrb[0].mxu0
        %v1002 = vadd.f32 %v805, %v1001
        %1003 = vmatprep.mubr.bf16.mxu0 0
        %1004 = vmatmul.mubr.bf16.gmra.mrb[0].mxu0 %v759
        %v1005 = vpop.f32.mrb[0].mxu0
        %v1006 = vadd.f32 %v801, %v1005
        %v1007 = vpop.f32.mrb[0].mxu0
        %v1008 = vadd.f32 %v805, %v1007
        %v1009 = vpop.f32.mrb[0].mxu0
        %v1010 = vadd.f32 %v801, %v1009
        %v1011 = vpop.f32.mrb[0].mxu0
        %v1012 = vadd.f32 %v805, %v1011
        %1013 = vmatprep.mubr.bf16.mxu0 0
        %1014 = vmatmul.mubr.bf16.gmra.mrb[0].mxu0 %v760
        %v1015 = vpop.f32.mrb[0].mxu0
        %v1016 = vadd.f32 %v801, %v1015
        %v1017 = vpop.f32.mrb[0].mxu0
        %v1018 = vadd.f32 %v805, %v1017
        %v1019 = vpop.f32.mrb[0].mxu0
        %v1020 = vadd.f32 %v801, %v1019
        %v1021 = vpop.f32.mrb[0].mxu0
        %v1022 = vadd.f32 %v805, %v1021
        %1023 = vmatprep.mubr.bf16.mxu0 0
        %1024 = vmatmul.mubr.bf16.gmra.mrb[0].mxu0 %v761
        %v1025 = vpop.f32.mrb[0].mxu0
        %v1026 = vadd.f32 %v801, %v1025
        %v1027 = vpop.f32.mrb[0].mxu0
        %v1028 = vadd.f32 %v805, %v1027
        %v1029 = vpop.f32.mrb[0].mxu0
        %v1030 = vadd.f32 %v801, %v1029
        %v1031 = vpop.f32.mrb[0].mxu0
        %v1032 = vadd.f32 %v805, %v1031
        %1033 = vmatprep.mubr.bf16.mxu0 0
        %1034 = vmatmul.mubr.bf16.gmra.mrb[0].mxu0 %v762
        %v1035 = vpop.f32.mrb[0].mxu0
        %v1036 = vadd.f32 %v801, %v1035
        %v1037 = vpop.f32.mrb[0].mxu0
        %v1038 = vadd.f32 %v805, %v1037
        %v1039 = vpop.f32.mrb[0].mxu0
        %v1040 = vadd.f32 %v801, %v1039
        %v1041 = vpop.f32.mrb[0].mxu0
        %v1042 = vadd.f32 %v805, %v1041
        %1043 = vmatprep.mubr.bf16.mxu0 0
        %1044 = vmatmul.mubr.bf16.gmra.mrb[0].mxu0 %v763
        %v1045 = vpop.f32.mrb[0].mxu0
        %v1046 = vadd.f32 %v801, %v1045
        %v1047 = vpop.f32.mrb[0].mxu0
        %v1048 = vadd.f32 %v805, %v1047
        %v1049 = vpop.f32.mrb[0].mxu0
        %v1050 = vadd.f32 %v801, %v1049
        %v1051 = vpop.f32.mrb[0].mxu0
        %v1052 = vadd.f32 %v805, %v1051
        %1053 = vdwg.mxu0
        %1054 = vmatprep.subr.bf16.mxu0 0
        %1055 = vmatpush1.bf16.msra.mxu0 %v895
        %1056 = vmatprep.subr.bf16.mxu0 0
        %1057 = vmatpush1.bf16.msra.mxu0 %v898
        %1058 = vmatprep.subr.bf16.mxu0 0
        %1059 = vmatpush1.bf16.msra.mxu0 %v901
        %1060 = vmatprep.subr.bf16.mxu0 0
        %1061 = vmatpush1.bf16.msra.mxu0 %v904
        %1062 = vmatprep.subr.bf16.mxu0 0
        %1063 = vmatpush1.bf16.msra.mxu0 %v907
        %1064 = vmatprep.subr.bf16.mxu0 0
        %1065 = vmatpush1.bf16.msra.mxu0 %v910
        %1066 = vmatprep.subr.bf16.mxu0 0
        %1067 = vmatpush1.bf16.msra.mxu0 %v913
        %1068 = vmatprep.subr.bf16.mxu0 0
        %1069 = vmatpush1.bf16.msra.mxu0 %v916
        %1070 = vmatprep.subr.bf16.mxu0 0
        %1071 = vmatpush1.bf16.msra.mxu0 0
        %1072 = vmatprep.subr.bf16.mxu0 0
        %1073 = vmatpush1.bf16.msra.mxu0 0
        %1074 = vmatprep.subr.bf16.mxu0 0
        %1075 = vmatpush1.bf16.msra.mxu0 0
        %1076 = vmatprep.subr.bf16.mxu0 0
        %1077 = vmatpush1.bf16.msra.mxu0 0
        %1078 = vmatprep.subr.bf16.mxu0 0
        %1079 = vmatpush1.bf16.msra.mxu0 0
        %1080 = vmatprep.subr.bf16.mxu0 0
        %1081 = vmatpush1.bf16.msra.mxu0 0
        %1082 = vmatprep.subr.bf16.mxu0 0
        %1083 = vmatpush1.bf16.msra.mxu0 0
        %1084 = vmatprep.subr.bf16.mxu0 0
        %1085 = vmatpush1.bf16.msra.mxu0 0
        %1086 = vmatprep.mubr.bf16.mxu0 0
        %1087 = vmatmul.mubr.bf16.gmra.mrb[0].mxu0 %v756
        %v1088 = vpop.f32.mrb[0].mxu0
        %v1089 = vadd.f32 %v809, %v1088
        %v1090 = vpop.f32.mrb[0].mxu0
        %v1091 = vpop.f32.mrb[0].mxu0
        %v1092 = vadd.f32 %v809, %v1091
        %v1093 = vpop.f32.mrb[0].mxu0
        %1094 = vmatprep.mubr.bf16.mxu0 0
        %1095 = vmatmul.mubr.bf16.gmra.mrb[0].mxu0 %v757
        %v1096 = vpop.f32.mrb[0].mxu0
        %v1097 = vadd.f32 %v809, %v1096
        %v1098 = vpop.f32.mrb[0].mxu0
        %v1099 = vpop.f32.mrb[0].mxu0
        %v1100 = vadd.f32 %v809, %v1099
        %v1101 = vpop.f32.mrb[0].mxu0
        %1102 = vmatprep.mubr.bf16.mxu0 0
        %1103 = vmatmul.mubr.bf16.gmra.mrb[0].mxu0 %v758
        %v1104 = vpop.f32.mrb[0].mxu0
        %v1105 = vadd.f32 %v809, %v1104
        %v1106 = vpop.f32.mrb[0].mxu0
        %v1107 = vpop.f32.mrb[0].mxu0
        %v1108 = vadd.f32 %v809, %v1107
        %v1109 = vpop.f32.mrb[0].mxu0
        %1110 = vmatprep.mubr.bf16.mxu0 0
        %1111 = vmatmul.mubr.bf16.gmra.mrb[0].mxu0 %v759
        %v1112 = vpop.f32.mrb[0].mxu0
        %v1113 = vadd.f32 %v809, %v1112
        %v1114 = vpop.f32.mrb[0].mxu0
        %v1115 = vpop.f32.mrb[0].mxu0
        %v1116 = vadd.f32 %v809, %v1115
        %v1117 = vpop.f32.mrb[0].mxu0
        %1118 = vmatprep.mubr.bf16.mxu0 0
        %1119 = vmatmul.mubr.bf16.gmra.mrb[0].mxu0 %v760
        %v1120 = vpop.f32.mrb[0].mxu0
        %v1121 = vadd.f32 %v809, %v1120
        %v1122 = vpop.f32.mrb[0].mxu0
        %v1123 = vpop.f32.mrb[0].mxu0
        %v1124 = vadd.f32 %v809, %v1123
        %v1125 = vpop.f32.mrb[0].mxu0
        %1126 = vmatprep.mubr.bf16.mxu0 0
        %1127 = vmatmul.mubr.bf16.gmra.mrb[0].mxu0 %v761
        %v1128 = vpop.f32.mrb[0].mxu0
        %v1129 = vadd.f32 %v809, %v1128
        %v1130 = vpop.f32.mrb[0].mxu0
        %v1131 = vpop.f32.mrb[0].mxu0
        %v1132 = vadd.f32 %v809, %v1131
        %v1133 = vpop.f32.mrb[0].mxu0
        %1134 = vmatprep.mubr.bf16.mxu0 0
        %1135 = vmatmul.mubr.bf16.gmra.mrb[0].mxu0 %v762
        %v1136 = vpop.f32.mrb[0].mxu0
        %v1137 = vadd.f32 %v809, %v1136
        %v1138 = vpop.f32.mrb[0].mxu0
        %v1139 = vpop.f32.mrb[0].mxu0
        %v1140 = vadd.f32 %v809, %v1139
        %v1141 = vpop.f32.mrb[0].mxu0
        %1142 = vmatprep.mubr.bf16.mxu0 0
        %1143 = vmatmul.mubr.bf16.gmra.mrb[0].mxu0 %v763
        %v1144 = vpop.f32.mrb[0].mxu0
        %v1145 = vadd.f32 %v809, %v1144
        %v1146 = vpop.f32.mrb[0].mxu0
        %v1147 = vpop.f32.mrb[0].mxu0
        %v1148 = vadd.f32 %v809, %v1147
        %v1149 = vpop.f32.mrb[0].mxu0
        %1150 = vdwg.mxu0
        %1151 = vxpose.xlu0.b32.start [1/16] %v976, 128
        %1152 = vxpose.xlu0.b32.cont [2/16] %v980, 128
        %1153 = vxpose.xlu0.b32.cont [3/16] %v986, 128
        %1154 = vxpose.xlu0.b32.cont [4/16] %v990, 128
        %1155 = vxpose.xlu0.b32.cont [5/16] %v996, 128
        %1156 = vxpose.xlu0.b32.cont [6/16] %v1000, 128
        %1157 = vxpose.xlu0.b32.cont [7/16] %v1006, 128
        %1158 = vxpose.xlu0.b32.cont [8/16] %v1010, 128
        %1159 = vxpose.xlu0.b32.cont [9/16] %v1016, 128
        %1160 = vxpose.xlu0.b32.cont [10/16] %v1020, 128
        %1161 = vxpose.xlu0.b32.cont [11/16] %v1026, 128
        %1162 = vxpose.xlu0.b32.cont [12/16] %v1030, 128
        %1163 = vxpose.xlu0.b32.cont [13/16] %v1036, 128
        %1164 = vxpose.xlu0.b32.cont [14/16] %v1040, 128
        %1165 = vxpose.xlu0.b32.cont [15/16] %v1046, 128
        %1166 = vxpose.xlu0.b32.end [16/16] %v1050, 128
        %v1167 = vpop.trf.xlu0
        %v1168 = vpop.trf.xlu0
        %v1169 = vpop.trf.xlu0
        %v1170 = vpop.trf.xlu0
        %v1171 = vpop.trf.xlu0
        %v1172 = vpop.trf.xlu0
        %v1173 = vpop.trf.xlu0
        %v1174 = vpop.trf.xlu0
        %v1175 = vpop.trf.xlu0
        %v1176 = vpop.trf.xlu0
        %v1177 = vpop.trf.xlu0
        %v1178 = vpop.trf.xlu0
        %v1179 = vpop.trf.xlu0
        %v1180 = vpop.trf.xlu0
        %v1181 = vpop.trf.xlu0
        %v1182 = vpop.trf.xlu0
        %1183 = vxpose.xlu0.b32.start [1/16] %v978, 128
        %1184 = vxpose.xlu0.b32.cont [2/16] %v982, 128
        %1185 = vxpose.xlu0.b32.cont [3/16] %v988, 128
        %1186 = vxpose.xlu0.b32.cont [4/16] %v992, 128
        %1187 = vxpose.xlu0.b32.cont [5/16] %v998, 128
        %1188 = vxpose.xlu0.b32.cont [6/16] %v1002, 128
        %1189 = vxpose.xlu0.b32.cont [7/16] %v1008, 128
        %1190 = vxpose.xlu0.b32.cont [8/16] %v1012, 128
        %1191 = vxpose.xlu0.b32.cont [9/16] %v1018, 128
        %1192 = vxpose.xlu0.b32.cont [10/16] %v1022, 128
        %1193 = vxpose.xlu0.b32.cont [11/16] %v1028, 128
        %1194 = vxpose.xlu0.b32.cont [12/16] %v1032, 128
        %1195 = vxpose.xlu0.b32.cont [13/16] %v1038, 128
        %1196 = vxpose.xlu0.b32.cont [14/16] %v1042, 128
        %1197 = vxpose.xlu0.b32.cont [15/16] %v1048, 128
        %1198 = vxpose.xlu0.b32.end [16/16] %v1052, 128
        %v1199 = vpop.trf.xlu0
        %v1200 = vpop.trf.xlu0
        %v1201 = vpop.trf.xlu0
        %v1202 = vpop.trf.xlu0
        %v1203 = vpop.trf.xlu0
        %v1204 = vpop.trf.xlu0
        %v1205 = vpop.trf.xlu0
        %v1206 = vpop.trf.xlu0
        %v1207 = vpop.trf.xlu0
        %v1208 = vpop.trf.xlu0
        %v1209 = vpop.trf.xlu0
        %v1210 = vpop.trf.xlu0
        %v1211 = vpop.trf.xlu0
        %v1212 = vpop.trf.xlu0
        %v1213 = vpop.trf.xlu0
        %v1214 = vpop.trf.xlu0
        %1215 = vxpose.xlu0.b32.start [1/16] %v1089, 128
        %1216 = vxpose.xlu0.b32.cont [2/16] %v1092, 128
        %1217 = vxpose.xlu0.b32.cont [3/16] %v1097, 128
        %1218 = vxpose.xlu0.b32.cont [4/16] %v1100, 128
        %1219 = vxpose.xlu0.b32.cont [5/16] %v1105, 128
        %1220 = vxpose.xlu0.b32.cont [6/16] %v1108, 128
        %1221 = vxpose.xlu0.b32.cont [7/16] %v1113, 128
        %1222 = vxpose.xlu0.b32.cont [8/16] %v1116, 128
        %1223 = vxpose.xlu0.b32.cont [9/16] %v1121, 128
        %1224 = vxpose.xlu0.b32.cont [10/16] %v1124, 128
        %1225 = vxpose.xlu0.b32.cont [11/16] %v1129, 128
        %1226 = vxpose.xlu0.b32.cont [12/16] %v1132, 128
        %1227 = vxpose.xlu0.b32.cont [13/16] %v1137, 128
        %1228 = vxpose.xlu0.b32.cont [14/16] %v1140, 128
        %1229 = vxpose.xlu0.b32.cont [15/16] %v1145, 128
        %1230 = vxpose.xlu0.b32.end [16/16] %v1148, 128
        %v1231 = vpop.trf.xlu0
        %v1232 = vpop.trf.xlu0
        %v1233 = vpop.trf.xlu0
        %v1234 = vpop.trf.xlu0
        %v1235 = vpop.trf.xlu0
        %v1236 = vpop.trf.xlu0
        %v1237 = vpop.trf.xlu0
        %v1238 = vpop.trf.xlu0
        %v1239 = vpop.trf.xlu0
        %v1240 = vpop.trf.xlu0
        %v1241 = vpop.trf.xlu0
        %v1242 = vpop.trf.xlu0
        %v1243 = vpop.trf.xlu0
        %v1244 = vpop.trf.xlu0
        %v1245 = vpop.trf.xlu0
        %v1246 = vpop.trf.xlu0
        %1247 = vxpose.xlu0.b32.start [1/16] %v1167, 128
        %1248 = vxpose.xlu0.b32.cont [2/16] %v1168, 128
        %1249 = vxpose.xlu0.b32.cont [3/16] %v1169, 128
        %1250 = vxpose.xlu0.b32.cont [4/16] %v1170, 128
        %1251 = vxpose.xlu0.b32.cont [5/16] 0.0, 128
        %1252 = vxpose.xlu0.b32.cont [6/16] 0.0, 128
        %1253 = vxpose.xlu0.b32.cont [7/16] 0.0, 128
        %1254 = vxpose.xlu0.b32.cont [8/16] 0.0, 128
        %1255 = vxpose.xlu0.b32.cont [9/16] 0.0, 128
        %1256 = vxpose.xlu0.b32.cont [10/16] 0.0, 128
        %1257 = vxpose.xlu0.b32.cont [11/16] 0.0, 128
        %1258 = vxpose.xlu0.b32.cont [12/16] 0.0, 128
        %1259 = vxpose.xlu0.b32.cont [13/16] 0.0, 128
        %1260 = vxpose.xlu0.b32.cont [14/16] 0.0, 128
        %1261 = vxpose.xlu0.b32.cont [15/16] 0.0, 128
        %1262 = vxpose.xlu0.b32.end [16/16] 0.0, 128
        %v1263 = vpop.trf.xlu0
        %v1264 = vpop.trf.xlu0
        %v1265 = vpop.trf.xlu0
        %v1266 = vpop.trf.xlu0
        %v1267 = vpop.trf.xlu0
        %v1268 = vpop.trf.xlu0
        %v1269 = vpop.trf.xlu0
        %v1270 = vpop.trf.xlu0
        %v1271 = vpop.trf.xlu0
        %v1272 = vpop.trf.xlu0
        %v1273 = vpop.trf.xlu0
        %v1274 = vpop.trf.xlu0
        %v1275 = vpop.trf.xlu0
        %v1276 = vpop.trf.xlu0
        %v1277 = vpop.trf.xlu0
        %v1278 = vpop.trf.xlu0
        %1279 = vxpose.xlu0.b32.start [1/16] %v1171, 128
        %1280 = vxpose.xlu0.b32.cont [2/16] %v1172, 128
        %1281 = vxpose.xlu0.b32.cont [3/16] %v1173, 128
        %1282 = vxpose.xlu0.b32.cont [4/16] %v1174, 128
        %1283 = vxpose.xlu0.b32.cont [5/16] 0.0, 128
        %1284 = vxpose.xlu0.b32.cont [6/16] 0.0, 128
        %1285 = vxpose.xlu0.b32.cont [7/16] 0.0, 128
        %1286 = vxpose.xlu0.b32.cont [8/16] 0.0, 128
        %1287 = vxpose.xlu0.b32.cont [9/16] 0.0, 128
        %1288 = vxpose.xlu0.b32.cont [10/16] 0.0, 128
        %1289 = vxpose.xlu0.b32.cont [11/16] 0.0, 128
        %1290 = vxpose.xlu0.b32.cont [12/16] 0.0, 128
        %1291 = vxpose.xlu0.b32.cont [13/16] 0.0, 128
        %1292 = vxpose.xlu0.b32.cont [14/16] 0.0, 128
        %1293 = vxpose.xlu0.b32.cont [15/16] 0.0, 128
        %1294 = vxpose.xlu0.b32.end [16/16] 0.0, 128
        %v1295 = vpop.trf.xlu0
        %v1296 = vpop.trf.xlu0
        %v1297 = vpop.trf.xlu0
        %v1298 = vpop.trf.xlu0
        %v1299 = vpop.trf.xlu0
        %v1300 = vpop.trf.xlu0
        %v1301 = vpop.trf.xlu0
        %v1302 = vpop.trf.xlu0
        %v1303 = vpop.trf.xlu0
        %v1304 = vpop.trf.xlu0
        %v1305 = vpop.trf.xlu0
        %v1306 = vpop.trf.xlu0
        %v1307 = vpop.trf.xlu0
        %v1308 = vpop.trf.xlu0
        %v1309 = vpop.trf.xlu0
        %v1310 = vpop.trf.xlu0
        %1311 = vxpose.xlu0.b32.start [1/16] %v1175, 128
        %1312 = vxpose.xlu0.b32.cont [2/16] %v1176, 128
        %1313 = vxpose.xlu0.b32.cont [3/16] %v1177, 128
        %1314 = vxpose.xlu0.b32.cont [4/16] %v1178, 128
        %1315 = vxpose.xlu0.b32.cont [5/16] 0.0, 128
        %1316 = vxpose.xlu0.b32.cont [6/16] 0.0, 128
        %1317 = vxpose.xlu0.b32.cont [7/16] 0.0, 128
        %1318 = vxpose.xlu0.b32.cont [8/16] 0.0, 128
        %1319 = vxpose.xlu0.b32.cont [9/16] 0.0, 128
        %1320 = vxpose.xlu0.b32.cont [10/16] 0.0, 128
        %1321 = vxpose.xlu0.b32.cont [11/16] 0.0, 128
        %1322 = vxpose.xlu0.b32.cont [12/16] 0.0, 128
        %1323 = vxpose.xlu0.b32.cont [13/16] 0.0, 128
        %1324 = vxpose.xlu0.b32.cont [14/16] 0.0, 128
        %1325 = vxpose.xlu0.b32.cont [15/16] 0.0, 128
        %1326 = vxpose.xlu0.b32.end [16/16] 0.0, 128
        %v1327 = vpop.trf.xlu0
        %v1328 = vpop.trf.xlu0
        %v1329 = vpop.trf.xlu0
        %v1330 = vpop.trf.xlu0
        %v1331 = vpop.trf.xlu0
        %v1332 = vpop.trf.xlu0
        %v1333 = vpop.trf.xlu0
        %v1334 = vpop.trf.xlu0
        %v1335 = vpop.trf.xlu0
        %v1336 = vpop.trf.xlu0
        %v1337 = vpop.trf.xlu0
        %v1338 = vpop.trf.xlu0
        %v1339 = vpop.trf.xlu0
        %v1340 = vpop.trf.xlu0
        %v1341 = vpop.trf.xlu0
        %v1342 = vpop.trf.xlu0
        %1343 = vxpose.xlu0.b32.start [1/16] %v1179, 128
        %1344 = vxpose.xlu0.b32.cont [2/16] %v1180, 128
        %1345 = vxpose.xlu0.b32.cont [3/16] %v1181, 128
        %1346 = vxpose.xlu0.b32.cont [4/16] %v1182, 128
        %1347 = vxpose.xlu0.b32.cont [5/16] 0.0, 128
        %1348 = vxpose.xlu0.b32.cont [6/16] 0.0, 128
        %1349 = vxpose.xlu0.b32.cont [7/16] 0.0, 128
        %1350 = vxpose.xlu0.b32.cont [8/16] 0.0, 128
        %1351 = vxpose.xlu0.b32.cont [9/16] 0.0, 128
        %1352 = vxpose.xlu0.b32.cont [10/16] 0.0, 128
        %1353 = vxpose.xlu0.b32.cont [11/16] 0.0, 128
        %1354 = vxpose.xlu0.b32.cont [12/16] 0.0, 128
        %1355 = vxpose.xlu0.b32.cont [13/16] 0.0, 128
        %1356 = vxpose.xlu0.b32.cont [14/16] 0.0, 128
        %1357 = vxpose.xlu0.b32.cont [15/16] 0.0, 128
        %1358 = vxpose.xlu0.b32.end [16/16] 0.0, 128
        %v1359 = vpop.trf.xlu0
        %v1360 = vpop.trf.xlu0
        %v1361 = vpop.trf.xlu0
        %v1362 = vpop.trf.xlu0
        %v1363 = vpop.trf.xlu0
        %v1364 = vpop.trf.xlu0
        %v1365 = vpop.trf.xlu0
        %v1366 = vpop.trf.xlu0
        %v1367 = vpop.trf.xlu0
        %v1368 = vpop.trf.xlu0
        %v1369 = vpop.trf.xlu0
        %v1370 = vpop.trf.xlu0
        %v1371 = vpop.trf.xlu0
        %v1372 = vpop.trf.xlu0
        %v1373 = vpop.trf.xlu0
        %v1374 = vpop.trf.xlu0
        %v1375 = vmul.f32 %v1263, 0.17677669
        %v1376 = vmul.f32 %v1264, 0.17677669
        %v1377 = vmul.f32 %v1265, 0.17677669
        %v1378 = vmul.f32 %v1266, 0.17677669
        %v1379 = vmul.f32 %v1267, 0.17677669
        %v1380 = vmul.f32 %v1268, 0.17677669
        %v1381 = vmul.f32 %v1269, 0.17677669
        %v1382 = vmul.f32 %v1270, 0.17677669
        %v1383 = vmul.f32 %v1271, 0.17677669
        %v1384 = vmul.f32 %v1272, 0.17677669
        %v1385 = vmul.f32 %v1273, 0.17677669
        %v1386 = vmul.f32 %v1274, 0.17677669
        %v1387 = vmul.f32 %v1275, 0.17677669
        %v1388 = vmul.f32 %v1276, 0.17677669
        %v1389 = vmul.f32 %v1277, 0.17677669
        %v1390 = vmul.f32 %v1278, 0.17677669
        %v1391 = vmul.f32 %v1295, 0.17677669
        %v1392 = vmul.f32 %v1296, 0.17677669
        %v1393 = vmul.f32 %v1297, 0.17677669
        %v1394 = vmul.f32 %v1298, 0.17677669
        %v1395 = vmul.f32 %v1299, 0.17677669
        %v1396 = vmul.f32 %v1300, 0.17677669
        %v1397 = vmul.f32 %v1301, 0.17677669
        %v1398 = vmul.f32 %v1302, 0.17677669
        %v1399 = vmul.f32 %v1303, 0.17677669
        %v1400 = vmul.f32 %v1304, 0.17677669
        %v1401 = vmul.f32 %v1305, 0.17677669
        %v1402 = vmul.f32 %v1306, 0.17677669
        %v1403 = vmul.f32 %v1307, 0.17677669
        %v1404 = vmul.f32 %v1308, 0.17677669
        %v1405 = vmul.f32 %v1309, 0.17677669
        %v1406 = vmul.f32 %v1310, 0.17677669
        %v1407 = vmul.f32 %v1327, 0.17677669
        %v1408 = vmul.f32 %v1328, 0.17677669
        %v1409 = vmul.f32 %v1329, 0.17677669
        %v1410 = vmul.f32 %v1330, 0.17677669
        %v1411 = vmul.f32 %v1331, 0.17677669
        %v1412 = vmul.f32 %v1332, 0.17677669
        %v1413 = vmul.f32 %v1333, 0.17677669
        %v1414 = vmul.f32 %v1334, 0.17677669
        %v1415 = vmul.f32 %v1335, 0.17677669
        %v1416 = vmul.f32 %v1336, 0.17677669
        %v1417 = vmul.f32 %v1337, 0.17677669
        %v1418 = vmul.f32 %v1338, 0.17677669
        %v1419 = vmul.f32 %v1339, 0.17677669
        %v1420 = vmul.f32 %v1340, 0.17677669
        %v1421 = vmul.f32 %v1341, 0.17677669
        %v1422 = vmul.f32 %v1342, 0.17677669
        %v1423 = vmul.f32 %v1359, 0.17677669
        %v1424 = vmul.f32 %v1360, 0.17677669
        %v1425 = vmul.f32 %v1361, 0.17677669
        %v1426 = vmul.f32 %v1362, 0.17677669
        %v1427 = vmul.f32 %v1363, 0.17677669
        %v1428 = vmul.f32 %v1364, 0.17677669
        %v1429 = vmul.f32 %v1365, 0.17677669
        %v1430 = vmul.f32 %v1366, 0.17677669
        %v1431 = vmul.f32 %v1367, 0.17677669
        %v1432 = vmul.f32 %v1368, 0.17677669
        %v1433 = vmul.f32 %v1369, 0.17677669
        %v1434 = vmul.f32 %v1370, 0.17677669
        %v1435 = vmul.f32 %v1371, 0.17677669
        %v1436 = vmul.f32 %v1372, 0.17677669
        %v1437 = vmul.f32 %v1373, 0.17677669
        %v1438 = vmul.f32 %v1374, 0.17677669
        %v1439 = vpack.c.bf16 %v1376, %v1375
        %v1440 = vpack.c.bf16 %v1378, %v1377
        %v1441 = vpack.c.bf16 %v1380, %v1379
        %v1442 = vpack.c.bf16 %v1382, %v1381
        %v1443 = vpack.c.bf16 %v1384, %v1383
        %v1444 = vpack.c.bf16 %v1386, %v1385
        %v1445 = vpack.c.bf16 %v1388, %v1387
        %v1446 = vpack.c.bf16 %v1390, %v1389
        %v1447 = vpack.c.bf16 %v1392, %v1391
        %v1448 = vpack.c.bf16 %v1394, %v1393
        %v1449 = vpack.c.bf16 %v1396, %v1395
        %v1450 = vpack.c.bf16 %v1398, %v1397
        %v1451 = vpack.c.bf16 %v1400, %v1399
        %v1452 = vpack.c.bf16 %v1402, %v1401
        %v1453 = vpack.c.bf16 %v1404, %v1403
        %v1454 = vpack.c.bf16 %v1406, %v1405
        %v1455 = vpack.c.bf16 %v1408, %v1407
        %v1456 = vpack.c.bf16 %v1410, %v1409
        %v1457 = vpack.c.bf16 %v1412, %v1411
        %v1458 = vpack.c.bf16 %v1414, %v1413
        %v1459 = vpack.c.bf16 %v1416, %v1415
        %v1460 = vpack.c.bf16 %v1418, %v1417
        %v1461 = vpack.c.bf16 %v1420, %v1419
        %v1462 = vpack.c.bf16 %v1422, %v1421
        %v1463 = vpack.c.bf16 %v1424, %v1423
        %v1464 = vpack.c.bf16 %v1426, %v1425
        %v1465 = vpack.c.bf16 %v1428, %v1427
        %v1466 = vpack.c.bf16 %v1430, %v1429
        %v1467 = vpack.c.bf16 %v1432, %v1431
        %v1468 = vpack.c.bf16 %v1434, %v1433
        %v1469 = vpack.c.bf16 %v1436, %v1435
        %v1470 = vpack.c.bf16 %v1438, %v1437
        %v1471 = vpack.c.bf16 %v1200, %v1199
        %v1472 = vpack.c.bf16 %v1202, %v1201
        %v1473 = vpack.c.bf16 %v1204, %v1203
        %v1474 = vpack.c.bf16 %v1206, %v1205
        %v1475 = vpack.c.bf16 %v1208, %v1207
        %v1476 = vpack.c.bf16 %v1210, %v1209
        %v1477 = vpack.c.bf16 %v1212, %v1211
        %v1478 = vpack.c.bf16 %v1214, %v1213
        %v1479 = vpack.c.bf16 %v1232, %v1231
        %v1480 = vpack.c.bf16 %v1234, %v1233
        %v1481 = vpack.c.bf16 %v1236, %v1235
        %v1482 = vpack.c.bf16 %v1238, %v1237
        %v1483 = vpack.c.bf16 %v1240, %v1239
        %v1484 = vpack.c.bf16 %v1242, %v1241
        %v1485 = vpack.c.bf16 %v1244, %v1243
        %v1486 = vpack.c.bf16 %v1246, %v1245
        %vm1487 = vcmask 261120
        %v1489 = vsel %vm1487, %v1439, 0
        %v1492 = vsel %vm1487, %v1440, 0
        %v1495 = vsel %vm1487, %v1441, 0
        %v1498 = vsel %vm1487, %v1442, 0
        %v1501 = vsel %vm1487, %v1443, 0
        %v1504 = vsel %vm1487, %v1444, 0
        %v1507 = vsel %vm1487, %v1445, 0
        %v1510 = vsel %vm1487, %v1446, 0
        %1512 = vmatprep.subr.bf16.mxu0 0
        %1513 = vmatpush1.bf16.msra.mxu0 %v1471
        %1514 = vmatprep.subr.bf16.mxu0 0
        %1515 = vmatpush1.bf16.msra.mxu0 %v1472
        %1516 = vmatprep.subr.bf16.mxu0 0
        %1517 = vmatpush1.bf16.msra.mxu0 0
        %1518 = vmatprep.subr.bf16.mxu0 0
        %1519 = vmatpush1.bf16.msra.mxu0 0
        %1520 = vmatprep.subr.bf16.mxu0 0
        %1521 = vmatpush1.bf16.msra.mxu0 0
        %1522 = vmatprep.subr.bf16.mxu0 0
        %1523 = vmatpush1.bf16.msra.mxu0 0
        %1524 = vmatprep.subr.bf16.mxu0 0
        %1525 = vmatpush1.bf16.msra.mxu0 0
        %1526 = vmatprep.subr.bf16.mxu0 0
        %1527 = vmatpush1.bf16.msra.mxu0 0
        %1528 = vmatprep.subr.bf16.mxu0 0
        %1529 = vmatpush1.bf16.msra.mxu0 0
        %1530 = vmatprep.subr.bf16.mxu0 0
        %1531 = vmatpush1.bf16.msra.mxu0 0
        %1532 = vmatprep.subr.bf16.mxu0 0
        %1533 = vmatpush1.bf16.msra.mxu0 0
        %1534 = vmatprep.subr.bf16.mxu0 0
        %1535 = vmatpush1.bf16.msra.mxu0 0
        %1536 = vmatprep.subr.bf16.mxu0 0
        %1537 = vmatpush1.bf16.msra.mxu0 0
        %1538 = vmatprep.subr.bf16.mxu0 0
        %1539 = vmatpush1.bf16.msra.mxu0 0
        %1540 = vmatprep.subr.bf16.mxu0 0
        %1541 = vmatpush1.bf16.msra.mxu0 0
        %1542 = vmatprep.subr.bf16.mxu0 0
        %1543 = vmatpush1.bf16.msra.mxu0 0
        %1544 = vmatprep.mubr.bf16.mxu0 0
        %1545 = vmatmul.mubr.bf16.gmra.mrb[0].mxu0 %v1489
        %v1546 = vpop.f32.mrb[0].mxu0
        %v1547 = vadd.f32 0.0, %v1546
        %v1548 = vpop.f32.mrb[0].mxu0
        %v1549 = vpop.f32.mrb[0].mxu0
        %v1550 = vadd.f32 0.0, %v1549
        %v1551 = vpop.f32.mrb[0].mxu0
        %1552 = vmatprep.mubr.bf16.mxu0 0
        %1553 = vmatmul.mubr.bf16.gmra.mrb[0].mxu0 %v1492
        %v1554 = vpop.f32.mrb[0].mxu0
        %v1555 = vadd.f32 0.0, %v1554
        %v1556 = vpop.f32.mrb[0].mxu0
        %v1557 = vpop.f32.mrb[0].mxu0
        %v1558 = vadd.f32 0.0, %v1557
        %v1559 = vpop.f32.mrb[0].mxu0
        %1560 = vmatprep.mubr.bf16.mxu0 0
        %1561 = vmatmul.mubr.bf16.gmra.mrb[0].mxu0 %v1495
        %v1562 = vpop.f32.mrb[0].mxu0
        %v1563 = vadd.f32 0.0, %v1562
        %v1564 = vpop.f32.mrb[0].mxu0
        %v1565 = vpop.f32.mrb[0].mxu0
        %v1566 = vadd.f32 0.0, %v1565
        %v1567 = vpop.f32.mrb[0].mxu0
        %1568 = vmatprep.mubr.bf16.mxu0 0
        %1569 = vmatmul.mubr.bf16.gmra.mrb[0].mxu0 %v1498
        %v1570 = vpop.f32.mrb[0].mxu0
        %v1571 = vadd.f32 0.0, %v1570
        %v1572 = vpop.f32.mrb[0].mxu0
        %v1573 = vpop.f32.mrb[0].mxu0
        %v1574 = vadd.f32 0.0, %v1573
        %v1575 = vpop.f32.mrb[0].mxu0
        %1576 = vmatprep.mubr.bf16.mxu0 0
        %1577 = vmatmul.mubr.bf16.gmra.mrb[0].mxu0 %v1501
        %v1578 = vpop.f32.mrb[0].mxu0
        %v1579 = vadd.f32 0.0, %v1578
        %v1580 = vpop.f32.mrb[0].mxu0
        %v1581 = vpop.f32.mrb[0].mxu0
        %v1582 = vadd.f32 0.0, %v1581
        %v1583 = vpop.f32.mrb[0].mxu0
        %1584 = vmatprep.mubr.bf16.mxu0 0
        %1585 = vmatmul.mubr.bf16.gmra.mrb[0].mxu0 %v1504
        %v1586 = vpop.f32.mrb[0].mxu0
        %v1587 = vadd.f32 0.0, %v1586
        %v1588 = vpop.f32.mrb[0].mxu0
        %v1589 = vpop.f32.mrb[0].mxu0
        %v1590 = vadd.f32 0.0, %v1589
        %v1591 = vpop.f32.mrb[0].mxu0
        %1592 = vmatprep.mubr.bf16.mxu0 0
        %1593 = vmatmul.mubr.bf16.gmra.mrb[0].mxu0 %v1507
        %v1594 = vpop.f32.mrb[0].mxu0
        %v1595 = vadd.f32 0.0, %v1594
        %v1596 = vpop.f32.mrb[0].mxu0
        %v1597 = vpop.f32.mrb[0].mxu0
        %v1598 = vadd.f32 0.0, %v1597
        %v1599 = vpop.f32.mrb[0].mxu0
        %1600 = vmatprep.mubr.bf16.mxu0 0
        %1601 = vmatmul.mubr.bf16.gmra.mrb[0].mxu0 %v1510
        %v1602 = vpop.f32.mrb[0].mxu0
        %v1603 = vadd.f32 0.0, %v1602
        %v1604 = vpop.f32.mrb[0].mxu0
        %v1605 = vpop.f32.mrb[0].mxu0
        %v1606 = vadd.f32 0.0, %v1605
        %v1607 = vpop.f32.mrb[0].mxu0
        %1608 = vdwg.mxu0
        %v1610 = vsel %vm1487, %v1447, 0
        %v1613 = vsel %vm1487, %v1448, 0
        %v1616 = vsel %vm1487, %v1449, 0
        %v1619 = vsel %vm1487, %v1450, 0
        %v1622 = vsel %vm1487, %v1451, 0
        %v1625 = vsel %vm1487, %v1452, 0
        %v1628 = vsel %vm1487, %v1453, 0
        %v1631 = vsel %vm1487, %v1454, 0
        %1633 = vmatprep.subr.bf16.mxu0 0
        %1634 = vmatpush1.bf16.msra.mxu0 %v1473
        %1635 = vmatprep.subr.bf16.mxu0 0
        %1636 = vmatpush1.bf16.msra.mxu0 %v1474
        %1637 = vmatprep.subr.bf16.mxu0 0
        %1638 = vmatpush1.bf16.msra.mxu0 0
        %1639 = vmatprep.subr.bf16.mxu0 0
        %1640 = vmatpush1.bf16.msra.mxu0 0
        %1641 = vmatprep.subr.bf16.mxu0 0
        %1642 = vmatpush1.bf16.msra.mxu0 0
        %1643 = vmatprep.subr.bf16.mxu0 0
        %1644 = vmatpush1.bf16.msra.mxu0 0
        %1645 = vmatprep.subr.bf16.mxu0 0
        %1646 = vmatpush1.bf16.msra.mxu0 0
        %1647 = vmatprep.subr.bf16.mxu0 0
        %1648 = vmatpush1.bf16.msra.mxu0 0
        %1649 = vmatprep.subr.bf16.mxu0 0
        %1650 = vmatpush1.bf16.msra.mxu0 0
        %1651 = vmatprep.subr.bf16.mxu0 0
        %1652 = vmatpush1.bf16.msra.mxu0 0
        %1653 = vmatprep.subr.bf16.mxu0 0
        %1654 = vmatpush1.bf16.msra.mxu0 0
        %1655 = vmatprep.subr.bf16.mxu0 0
        %1656 = vmatpush1.bf16.msra.mxu0 0
        %1657 = vmatprep.subr.bf16.mxu0 0
        %1658 = vmatpush1.bf16.msra.mxu0 0
        %1659 = vmatprep.subr.bf16.mxu0 0
        %1660 = vmatpush1.bf16.msra.mxu0 0
        %1661 = vmatprep.subr.bf16.mxu0 0
        %1662 = vmatpush1.bf16.msra.mxu0 0
        %1663 = vmatprep.subr.bf16.mxu0 0
        %1664 = vmatpush1.bf16.msra.mxu0 0
        %1665 = vmatprep.mubr.bf16.mxu0 0
        %1666 = vmatmul.mubr.bf16.gmra.mrb[0].mxu0 %v1610
        %v1667 = vpop.f32.mrb[0].mxu0
        %v1668 = vadd.f32 0.0, %v1667
        %v1669 = vpop.f32.mrb[0].mxu0
        %v1670 = vpop.f32.mrb[0].mxu0
        %v1671 = vadd.f32 0.0, %v1670
        %v1672 = vpop.f32.mrb[0].mxu0
        %1673 = vmatprep.mubr.bf16.mxu0 0
        %1674 = vmatmul.mubr.bf16.gmra.mrb[0].mxu0 %v1613
        %v1675 = vpop.f32.mrb[0].mxu0
        %v1676 = vadd.f32 0.0, %v1675
        %v1677 = vpop.f32.mrb[0].mxu0
        %v1678 = vpop.f32.mrb[0].mxu0
        %v1679 = vadd.f32 0.0, %v1678
        %v1680 = vpop.f32.mrb[0].mxu0
        %1681 = vmatprep.mubr.bf16.mxu0 0
        %1682 = vmatmul.mubr.bf16.gmra.mrb[0].mxu0 %v1616
        %v1683 = vpop.f32.mrb[0].mxu0
        %v1684 = vadd.f32 0.0, %v1683
        %v1685 = vpop.f32.mrb[0].mxu0
        %v1686 = vpop.f32.mrb[0].mxu0
        %v1687 = vadd.f32 0.0, %v1686
        %v1688 = vpop.f32.mrb[0].mxu0
        %1689 = vmatprep.mubr.bf16.mxu0 0
        %1690 = vmatmul.mubr.bf16.gmra.mrb[0].mxu0 %v1619
        %v1691 = vpop.f32.mrb[0].mxu0
        %v1692 = vadd.f32 0.0, %v1691
        %v1693 = vpop.f32.mrb[0].mxu0
        %v1694 = vpop.f32.mrb[0].mxu0
        %v1695 = vadd.f32 0.0, %v1694
        %v1696 = vpop.f32.mrb[0].mxu0
        %1697 = vmatprep.mubr.bf16.mxu0 0
        %1698 = vmatmul.mubr.bf16.gmra.mrb[0].mxu0 %v1622
        %v1699 = vpop.f32.mrb[0].mxu0
        %v1700 = vadd.f32 0.0, %v1699
        %v1701 = vpop.f32.mrb[0].mxu0
        %v1702 = vpop.f32.mrb[0].mxu0
        %v1703 = vadd.f32 0.0, %v1702
        %v1704 = vpop.f32.mrb[0].mxu0
        %1705 = vmatprep.mubr.bf16.mxu0 0
        %1706 = vmatmul.mubr.bf16.gmra.mrb[0].mxu0 %v1625
        %v1707 = vpop.f32.mrb[0].mxu0
        %v1708 = vadd.f32 0.0, %v1707
        %v1709 = vpop.f32.mrb[0].mxu0
        %v1710 = vpop.f32.mrb[0].mxu0
        %v1711 = vadd.f32 0.0, %v1710
        %v1712 = vpop.f32.mrb[0].mxu0
        %1713 = vmatprep.mubr.bf16.mxu0 0
        %1714 = vmatmul.mubr.bf16.gmra.mrb[0].mxu0 %v1628
        %v1715 = vpop.f32.mrb[0].mxu0
        %v1716 = vadd.f32 0.0, %v1715
        %v1717 = vpop.f32.mrb[0].mxu0
        %v1718 = vpop.f32.mrb[0].mxu0
        %v1719 = vadd.f32 0.0, %v1718
        %v1720 = vpop.f32.mrb[0].mxu0
        %1721 = vmatprep.mubr.bf16.mxu0 0
        %1722 = vmatmul.mubr.bf16.gmra.mrb[0].mxu0 %v1631
        %v1723 = vpop.f32.mrb[0].mxu0
        %v1724 = vadd.f32 0.0, %v1723
        %v1725 = vpop.f32.mrb[0].mxu0
        %v1726 = vpop.f32.mrb[0].mxu0
        %v1727 = vadd.f32 0.0, %v1726
        %v1728 = vpop.f32.mrb[0].mxu0
        %1729 = vdwg.mxu0
        %v1731 = vsel %vm1487, %v1455, 0
        %v1734 = vsel %vm1487, %v1456, 0
        %v1737 = vsel %vm1487, %v1457, 0
        %v1740 = vsel %vm1487, %v1458, 0
        %v1743 = vsel %vm1487, %v1459, 0
        %v1746 = vsel %vm1487, %v1460, 0
        %v1749 = vsel %vm1487, %v1461, 0
        %v1752 = vsel %vm1487, %v1462, 0
        %1754 = vmatprep.subr.bf16.mxu0 0
        %1755 = vmatpush1.bf16.msra.mxu0 %v1475
        %1756 = vmatprep.subr.bf16.mxu0 0
        %1757 = vmatpush1.bf16.msra.mxu0 %v1476
        %1758 = vmatprep.subr.bf16.mxu0 0
        %1759 = vmatpush1.bf16.msra.mxu0 0
        %1760 = vmatprep.subr.bf16.mxu0 0
        %1761 = vmatpush1.bf16.msra.mxu0 0
        %1762 = vmatprep.subr.bf16.mxu0 0
        %1763 = vmatpush1.bf16.msra.mxu0 0
        %1764 = vmatprep.subr.bf16.mxu0 0
        %1765 = vmatpush1.bf16.msra.mxu0 0
        %1766 = vmatprep.subr.bf16.mxu0 0
        %1767 = vmatpush1.bf16.msra.mxu0 0
        %1768 = vmatprep.subr.bf16.mxu0 0
        %1769 = vmatpush1.bf16.msra.mxu0 0
        %1770 = vmatprep.subr.bf16.mxu0 0
        %1771 = vmatpush1.bf16.msra.mxu0 0
        %1772 = vmatprep.subr.bf16.mxu0 0
        %1773 = vmatpush1.bf16.msra.mxu0 0
        %1774 = vmatprep.subr.bf16.mxu0 0
        %1775 = vmatpush1.bf16.msra.mxu0 0
        %1776 = vmatprep.subr.bf16.mxu0 0
        %1777 = vmatpush1.bf16.msra.mxu0 0
        %1778 = vmatprep.subr.bf16.mxu0 0
        %1779 = vmatpush1.bf16.msra.mxu0 0
        %1780 = vmatprep.subr.bf16.mxu0 0
        %1781 = vmatpush1.bf16.msra.mxu0 0
        %1782 = vmatprep.subr.bf16.mxu0 0
        %1783 = vmatpush1.bf16.msra.mxu0 0
        %1784 = vmatprep.subr.bf16.mxu0 0
        %1785 = vmatpush1.bf16.msra.mxu0 0
        %1786 = vmatprep.mubr.bf16.mxu0 0
        %1787 = vmatmul.mubr.bf16.gmra.mrb[0].mxu0 %v1731
        %v1788 = vpop.f32.mrb[0].mxu0
        %v1789 = vadd.f32 0.0, %v1788
        %v1790 = vpop.f32.mrb[0].mxu0
        %v1791 = vpop.f32.mrb[0].mxu0
        %v1792 = vadd.f32 0.0, %v1791
        %v1793 = vpop.f32.mrb[0].mxu0
        %1794 = vmatprep.mubr.bf16.mxu0 0
        %1795 = vmatmul.mubr.bf16.gmra.mrb[0].mxu0 %v1734
        %v1796 = vpop.f32.mrb[0].mxu0
        %v1797 = vadd.f32 0.0, %v1796
        %v1798 = vpop.f32.mrb[0].mxu0
        %v1799 = vpop.f32.mrb[0].mxu0
        %v1800 = vadd.f32 0.0, %v1799
        %v1801 = vpop.f32.mrb[0].mxu0
        %1802 = vmatprep.mubr.bf16.mxu0 0
        %1803 = vmatmul.mubr.bf16.gmra.mrb[0].mxu0 %v1737
        %v1804 = vpop.f32.mrb[0].mxu0
        %v1805 = vadd.f32 0.0, %v1804
        %v1806 = vpop.f32.mrb[0].mxu0
        %v1807 = vpop.f32.mrb[0].mxu0
        %v1808 = vadd.f32 0.0, %v1807
        %v1809 = vpop.f32.mrb[0].mxu0
        %1810 = vmatprep.mubr.bf16.mxu0 0
        %1811 = vmatmul.mubr.bf16.gmra.mrb[0].mxu0 %v1740
        %v1812 = vpop.f32.mrb[0].mxu0
        %v1813 = vadd.f32 0.0, %v1812
        %v1814 = vpop.f32.mrb[0].mxu0
        %v1815 = vpop.f32.mrb[0].mxu0
        %v1816 = vadd.f32 0.0, %v1815
        %v1817 = vpop.f32.mrb[0].mxu0
        %1818 = vmatprep.mubr.bf16.mxu0 0
        %1819 = vmatmul.mubr.bf16.gmra.mrb[0].mxu0 %v1743
        %v1820 = vpop.f32.mrb[0].mxu0
        %v1821 = vadd.f32 0.0, %v1820
        %v1822 = vpop.f32.mrb[0].mxu0
        %v1823 = vpop.f32.mrb[0].mxu0
        %v1824 = vadd.f32 0.0, %v1823
        %v1825 = vpop.f32.mrb[0].mxu0
        %1826 = vmatprep.mubr.bf16.mxu0 0
        %1827 = vmatmul.mubr.bf16.gmra.mrb[0].mxu0 %v1746
        %v1828 = vpop.f32.mrb[0].mxu0
        %v1829 = vadd.f32 0.0, %v1828
        %v1830 = vpop.f32.mrb[0].mxu0
        %v1831 = vpop.f32.mrb[0].mxu0
        %v1832 = vadd.f32 0.0, %v1831
        %v1833 = vpop.f32.mrb[0].mxu0
        %1834 = vmatprep.mubr.bf16.mxu0 0
        %1835 = vmatmul.mubr.bf16.gmra.mrb[0].mxu0 %v1749
        %v1836 = vpop.f32.mrb[0].mxu0
        %v1837 = vadd.f32 0.0, %v1836
        %v1838 = vpop.f32.mrb[0].mxu0
        %v1839 = vpop.f32.mrb[0].mxu0
        %v1840 = vadd.f32 0.0, %v1839
        %v1841 = vpop.f32.mrb[0].mxu0
        %1842 = vmatprep.mubr.bf16.mxu0 0
        %1843 = vmatmul.mubr.bf16.gmra.mrb[0].mxu0 %v1752
        %v1844 = vpop.f32.mrb[0].mxu0
        %v1845 = vadd.f32 0.0, %v1844
        %v1846 = vpop.f32.mrb[0].mxu0
        %v1847 = vpop.f32.mrb[0].mxu0
        %v1848 = vadd.f32 0.0, %v1847
        %v1849 = vpop.f32.mrb[0].mxu0
        %1850 = vdwg.mxu0
        %v1852 = vsel %vm1487, %v1463, 0
        %v1855 = vsel %vm1487, %v1464, 0
        %v1858 = vsel %vm1487, %v1465, 0
        %v1861 = vsel %vm1487, %v1466, 0
        %v1864 = vsel %vm1487, %v1467, 0
        %v1867 = vsel %vm1487, %v1468, 0
        %v1870 = vsel %vm1487, %v1469, 0
        %v1873 = vsel %vm1487, %v1470, 0
        %1875 = vmatprep.subr.bf16.mxu0 0
        %1876 = vmatpush1.bf16.msra.mxu0 %v1477
        %1877 = vmatprep.subr.bf16.mxu0 0
        %1878 = vmatpush1.bf16.msra.mxu0 %v1478
        %1879 = vmatprep.subr.bf16.mxu0 0
        %1880 = vmatpush1.bf16.msra.mxu0 0
        %1881 = vmatprep.subr.bf16.mxu0 0
        %1882 = vmatpush1.bf16.msra.mxu0 0
        %1883 = vmatprep.subr.bf16.mxu0 0
        %1884 = vmatpush1.bf16.msra.mxu0 0
        %1885 = vmatprep.subr.bf16.mxu0 0
        %1886 = vmatpush1.bf16.msra.mxu0 0
        %1887 = vmatprep.subr.bf16.mxu0 0
        %1888 = vmatpush1.bf16.msra.mxu0 0
        %1889 = vmatprep.subr.bf16.mxu0 0
        %1890 = vmatpush1.bf16.msra.mxu0 0
        %1891 = vmatprep.subr.bf16.mxu0 0
        %1892 = vmatpush1.bf16.msra.mxu0 0
        %1893 = vmatprep.subr.bf16.mxu0 0
        %1894 = vmatpush1.bf16.msra.mxu0 0
        %1895 = vmatprep.subr.bf16.mxu0 0
        %1896 = vmatpush1.bf16.msra.mxu0 0
        %1897 = vmatprep.subr.bf16.mxu0 0
        %1898 = vmatpush1.bf16.msra.mxu0 0
        %1899 = vmatprep.subr.bf16.mxu0 0
        %1900 = vmatpush1.bf16.msra.mxu0 0
        %1901 = vmatprep.subr.bf16.mxu0 0
        %1902 = vmatpush1.bf16.msra.mxu0 0
        %1903 = vmatprep.subr.bf16.mxu0 0
        %1904 = vmatpush1.bf16.msra.mxu0 0
        %1905 = vmatprep.subr.bf16.mxu0 0
        %1906 = vmatpush1.bf16.msra.mxu0 0
        %1907 = vmatprep.mubr.bf16.mxu0 0
        %1908 = vmatmul.mubr.bf16.gmra.mrb[0].mxu0 %v1852
        %v1909 = vpop.f32.mrb[0].mxu0
        %v1910 = vadd.f32 0.0, %v1909
        %v1911 = vpop.f32.mrb[0].mxu0
        %v1912 = vpop.f32.mrb[0].mxu0
        %v1913 = vadd.f32 0.0, %v1912
        %v1914 = vpop.f32.mrb[0].mxu0
        %1915 = vmatprep.mubr.bf16.mxu0 0
        %1916 = vmatmul.mubr.bf16.gmra.mrb[0].mxu0 %v1855
        %v1917 = vpop.f32.mrb[0].mxu0
        %v1918 = vadd.f32 0.0, %v1917
        %v1919 = vpop.f32.mrb[0].mxu0
        %v1920 = vpop.f32.mrb[0].mxu0
        %v1921 = vadd.f32 0.0, %v1920
        %v1922 = vpop.f32.mrb[0].mxu0
        %1923 = vmatprep.mubr.bf16.mxu0 0
        %1924 = vmatmul.mubr.bf16.gmra.mrb[0].mxu0 %v1858
        %v1925 = vpop.f32.mrb[0].mxu0
        %v1926 = vadd.f32 0.0, %v1925
        %v1927 = vpop.f32.mrb[0].mxu0
        %v1928 = vpop.f32.mrb[0].mxu0
        %v1929 = vadd.f32 0.0, %v1928
        %v1930 = vpop.f32.mrb[0].mxu0
        %1931 = vmatprep.mubr.bf16.mxu0 0
        %1932 = vmatmul.mubr.bf16.gmra.mrb[0].mxu0 %v1861
        %v1933 = vpop.f32.mrb[0].mxu0
        %v1934 = vadd.f32 0.0, %v1933
        %v1935 = vpop.f32.mrb[0].mxu0
        %v1936 = vpop.f32.mrb[0].mxu0
        %v1937 = vadd.f32 0.0, %v1936
        %v1938 = vpop.f32.mrb[0].mxu0
        %1939 = vmatprep.mubr.bf16.mxu0 0
        %1940 = vmatmul.mubr.bf16.gmra.mrb[0].mxu0 %v1864
        %v1941 = vpop.f32.mrb[0].mxu0
        %v1942 = vadd.f32 0.0, %v1941
        %v1943 = vpop.f32.mrb[0].mxu0
        %v1944 = vpop.f32.mrb[0].mxu0
        %v1945 = vadd.f32 0.0, %v1944
        %v1946 = vpop.f32.mrb[0].mxu0
        %1947 = vmatprep.mubr.bf16.mxu0 0
        %1948 = vmatmul.mubr.bf16.gmra.mrb[0].mxu0 %v1867
        %v1949 = vpop.f32.mrb[0].mxu0
        %v1950 = vadd.f32 0.0, %v1949
        %v1951 = vpop.f32.mrb[0].mxu0
        %v1952 = vpop.f32.mrb[0].mxu0
        %v1953 = vadd.f32 0.0, %v1952
        %v1954 = vpop.f32.mrb[0].mxu0
        %1955 = vmatprep.mubr.bf16.mxu0 0
        %1956 = vmatmul.mubr.bf16.gmra.mrb[0].mxu0 %v1870
        %v1957 = vpop.f32.mrb[0].mxu0
        %v1958 = vadd.f32 0.0, %v1957
        %v1959 = vpop.f32.mrb[0].mxu0
        %v1960 = vpop.f32.mrb[0].mxu0
        %v1961 = vadd.f32 0.0, %v1960
        %v1962 = vpop.f32.mrb[0].mxu0
        %1963 = vmatprep.mubr.bf16.mxu0 0
        %1964 = vmatmul.mubr.bf16.gmra.mrb[0].mxu0 %v1873
        %v1965 = vpop.f32.mrb[0].mxu0
        %v1966 = vadd.f32 0.0, %v1965
        %v1967 = vpop.f32.mrb[0].mxu0
        %v1968 = vpop.f32.mrb[0].mxu0
        %v1969 = vadd.f32 0.0, %v1968
        %v1970 = vpop.f32.mrb[0].mxu0
        %1971 = vdwg.mxu0
        %1972 = vmax.xlane.f32.xlu0 %v1547
        %v1973 = vpop.xlane.xlu0 %1972
        %1974 = vmax.xlane.f32.xlu0 %v1550
        %v1975 = vpop.xlane.xlu0 %1974
        %1976 = vmax.xlane.f32.xlu0 %v1555
        %v1977 = vpop.xlane.xlu0 %1976
        %1978 = vmax.xlane.f32.xlu0 %v1558
        %v1979 = vpop.xlane.xlu0 %1978
        %1980 = vmax.xlane.f32.xlu0 %v1563
        %v1981 = vpop.xlane.xlu0 %1980
        %1982 = vmax.xlane.f32.xlu0 %v1566
        %v1983 = vpop.xlane.xlu0 %1982
        %1984 = vmax.xlane.f32.xlu0 %v1571
        %v1985 = vpop.xlane.xlu0 %1984
        %1986 = vmax.xlane.f32.xlu0 %v1574
        %v1987 = vpop.xlane.xlu0 %1986
        %1988 = vmax.xlane.f32.xlu0 %v1579
        %v1989 = vpop.xlane.xlu0 %1988
        %1990 = vmax.xlane.f32.xlu0 %v1582
        %v1991 = vpop.xlane.xlu0 %1990
        %1992 = vmax.xlane.f32.xlu0 %v1587
        %v1993 = vpop.xlane.xlu0 %1992
        %1994 = vmax.xlane.f32.xlu0 %v1590
        %v1995 = vpop.xlane.xlu0 %1994
        %1996 = vmax.xlane.f32.xlu0 %v1595
        %v1997 = vpop.xlane.xlu0 %1996
        %1998 = vmax.xlane.f32.xlu0 %v1598
        %v1999 = vpop.xlane.xlu0 %1998
        %2000 = vmax.xlane.f32.xlu0 %v1603
        %v2001 = vpop.xlane.xlu0 %2000
        %2002 = vmax.xlane.f32.xlu0 %v1606
        %v2003 = vpop.xlane.xlu0 %2002
        %2004 = vmax.xlane.f32.xlu0 %v1668
        %v2005 = vpop.xlane.xlu0 %2004
        %2006 = vmax.xlane.f32.xlu0 %v1671
        %v2007 = vpop.xlane.xlu0 %2006
        %2008 = vmax.xlane.f32.xlu0 %v1676
        %v2009 = vpop.xlane.xlu0 %2008
        %2010 = vmax.xlane.f32.xlu0 %v1679
        %v2011 = vpop.xlane.xlu0 %2010
        %2012 = vmax.xlane.f32.xlu0 %v1684
        %v2013 = vpop.xlane.xlu0 %2012
        %2014 = vmax.xlane.f32.xlu0 %v1687
        %v2015 = vpop.xlane.xlu0 %2014
        %2016 = vmax.xlane.f32.xlu0 %v1692
        %v2017 = vpop.xlane.xlu0 %2016
        %2018 = vmax.xlane.f32.xlu0 %v1695
        %v2019 = vpop.xlane.xlu0 %2018
        %2020 = vmax.xlane.f32.xlu0 %v1700
        %v2021 = vpop.xlane.xlu0 %2020
        %2022 = vmax.xlane.f32.xlu0 %v1703
        %v2023 = vpop.xlane.xlu0 %2022
        %2024 = vmax.xlane.f32.xlu0 %v1708
        %v2025 = vpop.xlane.xlu0 %2024
        %2026 = vmax.xlane.f32.xlu0 %v1711
        %v2027 = vpop.xlane.xlu0 %2026
        %2028 = vmax.xlane.f32.xlu0 %v1716
        %v2029 = vpop.xlane.xlu0 %2028
        %2030 = vmax.xlane.f32.xlu0 %v1719
        %v2031 = vpop.xlane.xlu0 %2030
        %2032 = vmax.xlane.f32.xlu0 %v1724
        %v2033 = vpop.xlane.xlu0 %2032
        %2034 = vmax.xlane.f32.xlu0 %v1727
        %v2035 = vpop.xlane.xlu0 %2034
        %2036 = vmax.xlane.f32.xlu0 %v1789
        %v2037 = vpop.xlane.xlu0 %2036
        %2038 = vmax.xlane.f32.xlu0 %v1792
        %v2039 = vpop.xlane.xlu0 %2038
        %2040 = vmax.xlane.f32.xlu0 %v1797
        %v2041 = vpop.xlane.xlu0 %2040
        %2042 = vmax.xlane.f32.xlu0 %v1800
        %v2043 = vpop.xlane.xlu0 %2042
        %2044 = vmax.xlane.f32.xlu0 %v1805
        %v2045 = vpop.xlane.xlu0 %2044
        %2046 = vmax.xlane.f32.xlu0 %v1808
        %v2047 = vpop.xlane.xlu0 %2046
        %2048 = vmax.xlane.f32.xlu0 %v1813
        %v2049 = vpop.xlane.xlu0 %2048
        %2050 = vmax.xlane.f32.xlu0 %v1816
        %v2051 = vpop.xlane.xlu0 %2050
        %2052 = vmax.xlane.f32.xlu0 %v1821
        %v2053 = vpop.xlane.xlu0 %2052
        %2054 = vmax.xlane.f32.xlu0 %v1824
        %v2055 = vpop.xlane.xlu0 %2054
        %2056 = vmax.xlane.f32.xlu0 %v1829
        %v2057 = vpop.xlane.xlu0 %2056
        %2058 = vmax.xlane.f32.xlu0 %v1832
        %v2059 = vpop.xlane.xlu0 %2058
        %2060 = vmax.xlane.f32.xlu0 %v1837
        %v2061 = vpop.xlane.xlu0 %2060
        %2062 = vmax.xlane.f32.xlu0 %v1840
        %v2063 = vpop.xlane.xlu0 %2062
        %2064 = vmax.xlane.f32.xlu0 %v1845
        %v2065 = vpop.xlane.xlu0 %2064
        %2066 = vmax.xlane.f32.xlu0 %v1848
        %v2067 = vpop.xlane.xlu0 %2066
        %2068 = vmax.xlane.f32.xlu0 %v1910
        %v2069 = vpop.xlane.xlu0 %2068
        %2070 = vmax.xlane.f32.xlu0 %v1913
        %v2071 = vpop.xlane.xlu0 %2070
        %2072 = vmax.xlane.f32.xlu0 %v1918
        %v2073 = vpop.xlane.xlu0 %2072
        %2074 = vmax.xlane.f32.xlu0 %v1921
        %v2075 = vpop.xlane.xlu0 %2074
        %2076 = vmax.xlane.f32.xlu0 %v1926
        %v2077 = vpop.xlane.xlu0 %2076
        %2078 = vmax.xlane.f32.xlu0 %v1929
        %v2079 = vpop.xlane.xlu0 %2078
        %2080 = vmax.xlane.f32.xlu0 %v1934
        %v2081 = vpop.xlane.xlu0 %2080
        %2082 = vmax.xlane.f32.xlu0 %v1937
        %v2083 = vpop.xlane.xlu0 %2082
        %2084 = vmax.xlane.f32.xlu0 %v1942
        %v2085 = vpop.xlane.xlu0 %2084
        %2086 = vmax.xlane.f32.xlu0 %v1945
        %v2087 = vpop.xlane.xlu0 %2086
        %2088 = vmax.xlane.f32.xlu0 %v1950
        %v2089 = vpop.xlane.xlu0 %2088
        %2090 = vmax.xlane.f32.xlu0 %v1953
        %v2091 = vpop.xlane.xlu0 %2090
        %2092 = vmax.xlane.f32.xlu0 %v1958
        %v2093 = vpop.xlane.xlu0 %2092
        %2094 = vmax.xlane.f32.xlu0 %v1961
        %v2095 = vpop.xlane.xlu0 %2094
        %2096 = vmax.xlane.f32.xlu0 %v1966
        %v2097 = vpop.xlane.xlu0 %2096
        %2098 = vmax.xlane.f32.xlu0 %v1969
        %v2099 = vpop.xlane.xlu0 %2098
        %v2100 = vsub.f32 %v1547, %v1973
        %v2101 = vsub.f32 %v1550, %v1975
        %v2102 = vsub.f32 %v1555, %v1977
        %v2103 = vsub.f32 %v1558, %v1979
        %v2104 = vsub.f32 %v1563, %v1981
        %v2105 = vsub.f32 %v1566, %v1983
        %v2106 = vsub.f32 %v1571, %v1985
        %v2107 = vsub.f32 %v1574, %v1987
        %v2108 = vsub.f32 %v1579, %v1989
        %v2109 = vsub.f32 %v1582, %v1991
        %v2110 = vsub.f32 %v1587, %v1993
        %v2111 = vsub.f32 %v1590, %v1995
        %v2112 = vsub.f32 %v1595, %v1997
        %v2113 = vsub.f32 %v1598, %v1999
        %v2114 = vsub.f32 %v1603, %v2001
        %v2115 = vsub.f32 %v1606, %v2003
        %v2116 = vsub.f32 %v1668, %v2005
        %v2117 = vsub.f32 %v1671, %v2007
        %v2118 = vsub.f32 %v1676, %v2009
        %v2119 = vsub.f32 %v1679, %v2011
        %v2120 = vsub.f32 %v1684, %v2013
        %v2121 = vsub.f32 %v1687, %v2015
        %v2122 = vsub.f32 %v1692, %v2017
        %v2123 = vsub.f32 %v1695, %v2019
        %v2124 = vsub.f32 %v1700, %v2021
        %v2125 = vsub.f32 %v1703, %v2023
        %v2126 = vsub.f32 %v1708, %v2025
        %v2127 = vsub.f32 %v1711, %v2027
        %v2128 = vsub.f32 %v1716, %v2029
        %v2129 = vsub.f32 %v1719, %v2031
        %v2130 = vsub.f32 %v1724, %v2033
        %v2131 = vsub.f32 %v1727, %v2035
        %v2132 = vsub.f32 %v1789, %v2037
        %v2133 = vsub.f32 %v1792, %v2039
        %v2134 = vsub.f32 %v1797, %v2041
        %v2135 = vsub.f32 %v1800, %v2043
        %v2136 = vsub.f32 %v1805, %v2045
        %v2137 = vsub.f32 %v1808, %v2047
        %v2138 = vsub.f32 %v1813, %v2049
        %v2139 = vsub.f32 %v1816, %v2051
        %v2140 = vsub.f32 %v1821, %v2053
        %v2141 = vsub.f32 %v1824, %v2055
        %v2142 = vsub.f32 %v1829, %v2057
        %v2143 = vsub.f32 %v1832, %v2059
        %v2144 = vsub.f32 %v1837, %v2061
        %v2145 = vsub.f32 %v1840, %v2063
        %v2146 = vsub.f32 %v1845, %v2065
        %v2147 = vsub.f32 %v1848, %v2067
        %v2148 = vsub.f32 %v1910, %v2069
        %v2149 = vsub.f32 %v1913, %v2071
        %v2150 = vsub.f32 %v1918, %v2073
        %v2151 = vsub.f32 %v1921, %v2075
        %v2152 = vsub.f32 %v1926, %v2077
        %v2153 = vsub.f32 %v1929, %v2079
        %v2154 = vsub.f32 %v1934, %v2081
        %v2155 = vsub.f32 %v1937, %v2083
        %v2156 = vsub.f32 %v1942, %v2085
        %v2157 = vsub.f32 %v1945, %v2087
        %v2158 = vsub.f32 %v1950, %v2089
        %v2159 = vsub.f32 %v1953, %v2091
        %v2160 = vsub.f32 %v1958, %v2093
        %v2161 = vsub.f32 %v1961, %v2095
        %v2162 = vsub.f32 %v1966, %v2097
        %v2163 = vsub.f32 %v1969, %v2099
        %v2164 = vmul.f32 %v2100, 1.442695
        %v2165 = vpow.pop %v2164
        %v2166 = vmul.f32 %v2101, 1.442695
        %v2167 = vpow.pop %v2166
        %v2168 = vmul.f32 %v2102, 1.442695
        %v2169 = vpow.pop %v2168
        %v2170 = vmul.f32 %v2103, 1.442695
        %v2171 = vpow.pop %v2170
        %v2172 = vmul.f32 %v2104, 1.442695
        %v2173 = vpow.pop %v2172
        %v2174 = vmul.f32 %v2105, 1.442695
        %v2175 = vpow.pop %v2174
        %v2176 = vmul.f32 %v2106, 1.442695
        %v2177 = vpow.pop %v2176
        %v2178 = vmul.f32 %v2107, 1.442695
        %v2179 = vpow.pop %v2178
        %v2180 = vmul.f32 %v2108, 1.442695
        %v2181 = vpow.pop %v2180
        %v2182 = vmul.f32 %v2109, 1.442695
        %v2183 = vpow.pop %v2182
        %v2184 = vmul.f32 %v2110, 1.442695
        %v2185 = vpow.pop %v2184
        %v2186 = vmul.f32 %v2111, 1.442695
        %v2187 = vpow.pop %v2186
        %v2188 = vmul.f32 %v2112, 1.442695
        %v2189 = vpow.pop %v2188
        %v2190 = vmul.f32 %v2113, 1.442695
        %v2191 = vpow.pop %v2190
        %v2192 = vmul.f32 %v2114, 1.442695
        %v2193 = vpow.pop %v2192
        %v2194 = vmul.f32 %v2115, 1.442695
        %v2195 = vpow.pop %v2194
        %v2196 = vmul.f32 %v2116, 1.442695
        %v2197 = vpow.pop %v2196
        %v2198 = vmul.f32 %v2117, 1.442695
        %v2199 = vpow.pop %v2198
        %v2200 = vmul.f32 %v2118, 1.442695
        %v2201 = vpow.pop %v2200
        %v2202 = vmul.f32 %v2119, 1.442695
        %v2203 = vpow.pop %v2202
        %v2204 = vmul.f32 %v2120, 1.442695
        %v2205 = vpow.pop %v2204
        %v2206 = vmul.f32 %v2121, 1.442695
        %v2207 = vpow.pop %v2206
        %v2208 = vmul.f32 %v2122, 1.442695
        %v2209 = vpow.pop %v2208
        %v2210 = vmul.f32 %v2123, 1.442695
        %v2211 = vpow.pop %v2210
        %v2212 = vmul.f32 %v2124, 1.442695
        %v2213 = vpow.pop %v2212
        %v2214 = vmul.f32 %v2125, 1.442695
        %v2215 = vpow.pop %v2214
        %v2216 = vmul.f32 %v2126, 1.442695
        %v2217 = vpow.pop %v2216
        %v2218 = vmul.f32 %v2127, 1.442695
        %v2219 = vpow.pop %v2218
        %v2220 = vmul.f32 %v2128, 1.442695
        %v2221 = vpow.pop %v2220
        %v2222 = vmul.f32 %v2129, 1.442695
        %v2223 = vpow.pop %v2222
        %v2224 = vmul.f32 %v2130, 1.442695
        %v2225 = vpow.pop %v2224
        %v2226 = vmul.f32 %v2131, 1.442695
        %v2227 = vpow.pop %v2226
        %v2228 = vmul.f32 %v2132, 1.442695
        %v2229 = vpow.pop %v2228
        %v2230 = vmul.f32 %v2133, 1.442695
        %v2231 = vpow.pop %v2230
        %v2232 = vmul.f32 %v2134, 1.442695
        %v2233 = vpow.pop %v2232
        %v2234 = vmul.f32 %v2135, 1.442695
        %v2235 = vpow.pop %v2234
        %v2236 = vmul.f32 %v2136, 1.442695
        %v2237 = vpow.pop %v2236
        %v2238 = vmul.f32 %v2137, 1.442695
        %v2239 = vpow.pop %v2238
        %v2240 = vmul.f32 %v2138, 1.442695
        %v2241 = vpow.pop %v2240
        %v2242 = vmul.f32 %v2139, 1.442695
        %v2243 = vpow.pop %v2242
        %v2244 = vmul.f32 %v2140, 1.442695
        %v2245 = vpow.pop %v2244
        %v2246 = vmul.f32 %v2141, 1.442695
        %v2247 = vpow.pop %v2246
        %v2248 = vmul.f32 %v2142, 1.442695
        %v2249 = vpow.pop %v2248
        %v2250 = vmul.f32 %v2143, 1.442695
        %v2251 = vpow.pop %v2250
        %v2252 = vmul.f32 %v2144, 1.442695
        %v2253 = vpow.pop %v2252
        %v2254 = vmul.f32 %v2145, 1.442695
        %v2255 = vpow.pop %v2254
        %v2256 = vmul.f32 %v2146, 1.442695
        %v2257 = vpow.pop %v2256
        %v2258 = vmul.f32 %v2147, 1.442695
        %v2259 = vpow.pop %v2258
        %v2260 = vmul.f32 %v2148, 1.442695
        %v2261 = vpow.pop %v2260
        %v2262 = vmul.f32 %v2149, 1.442695
        %v2263 = vpow.pop %v2262
        %v2264 = vmul.f32 %v2150, 1.442695
        %v2265 = vpow.pop %v2264
        %v2266 = vmul.f32 %v2151, 1.442695
        %v2267 = vpow.pop %v2266
        %v2268 = vmul.f32 %v2152, 1.442695
        %v2269 = vpow.pop %v2268
        %v2270 = vmul.f32 %v2153, 1.442695
        %v2271 = vpow.pop %v2270
        %v2272 = vmul.f32 %v2154, 1.442695
        %v2273 = vpow.pop %v2272
        %v2274 = vmul.f32 %v2155, 1.442695
        %v2275 = vpow.pop %v2274
        %v2276 = vmul.f32 %v2156, 1.442695
        %v2277 = vpow.pop %v2276
        %v2278 = vmul.f32 %v2157, 1.442695
        %v2279 = vpow.pop %v2278
        %v2280 = vmul.f32 %v2158, 1.442695
        %v2281 = vpow.pop %v2280
        %v2282 = vmul.f32 %v2159, 1.442695
        %v2283 = vpow.pop %v2282
        %v2284 = vmul.f32 %v2160, 1.442695
        %v2285 = vpow.pop %v2284
        %v2286 = vmul.f32 %v2161, 1.442695
        %v2287 = vpow.pop %v2286
        %v2288 = vmul.f32 %v2162, 1.442695
        %v2289 = vpow.pop %v2288
        %v2290 = vmul.f32 %v2163, 1.442695
        %v2291 = vpow.pop %v2290
        %2292 = vadd.xlane.f32.xlu0 %v2165
        %v2293 = vpop.xlane.xlu0 %2292
        %2294 = vadd.xlane.f32.xlu0 %v2167
        %v2295 = vpop.xlane.xlu0 %2294
        %2296 = vadd.xlane.f32.xlu0 %v2169
        %v2297 = vpop.xlane.xlu0 %2296
        %2298 = vadd.xlane.f32.xlu0 %v2171
        %v2299 = vpop.xlane.xlu0 %2298
        %2300 = vadd.xlane.f32.xlu0 %v2173
        %v2301 = vpop.xlane.xlu0 %2300
        %2302 = vadd.xlane.f32.xlu0 %v2175
        %v2303 = vpop.xlane.xlu0 %2302
        %2304 = vadd.xlane.f32.xlu0 %v2177
        %v2305 = vpop.xlane.xlu0 %2304
        %2306 = vadd.xlane.f32.xlu0 %v2179
        %v2307 = vpop.xlane.xlu0 %2306
        %2308 = vadd.xlane.f32.xlu0 %v2181
        %v2309 = vpop.xlane.xlu0 %2308
        %2310 = vadd.xlane.f32.xlu0 %v2183
        %v2311 = vpop.xlane.xlu0 %2310
        %2312 = vadd.xlane.f32.xlu0 %v2185
        %v2313 = vpop.xlane.xlu0 %2312
        %2314 = vadd.xlane.f32.xlu0 %v2187
        %v2315 = vpop.xlane.xlu0 %2314
        %2316 = vadd.xlane.f32.xlu0 %v2189
        %v2317 = vpop.xlane.xlu0 %2316
        %2318 = vadd.xlane.f32.xlu0 %v2191
        %v2319 = vpop.xlane.xlu0 %2318
        %2320 = vadd.xlane.f32.xlu0 %v2193
        %v2321 = vpop.xlane.xlu0 %2320
        %2322 = vadd.xlane.f32.xlu0 %v2195
        %v2323 = vpop.xlane.xlu0 %2322
        %2324 = vadd.xlane.f32.xlu0 %v2197
        %v2325 = vpop.xlane.xlu0 %2324
        %2326 = vadd.xlane.f32.xlu0 %v2199
        %v2327 = vpop.xlane.xlu0 %2326
        %2328 = vadd.xlane.f32.xlu0 %v2201
        %v2329 = vpop.xlane.xlu0 %2328
        %2330 = vadd.xlane.f32.xlu0 %v2203
        %v2331 = vpop.xlane.xlu0 %2330
        %2332 = vadd.xlane.f32.xlu0 %v2205
        %v2333 = vpop.xlane.xlu0 %2332
        %2334 = vadd.xlane.f32.xlu0 %v2207
        %v2335 = vpop.xlane.xlu0 %2334
        %2336 = vadd.xlane.f32.xlu0 %v2209
        %v2337 = vpop.xlane.xlu0 %2336
        %2338 = vadd.xlane.f32.xlu0 %v2211
        %v2339 = vpop.xlane.xlu0 %2338
        %2340 = vadd.xlane.f32.xlu0 %v2213
        %v2341 = vpop.xlane.xlu0 %2340
        %2342 = vadd.xlane.f32.xlu0 %v2215
        %v2343 = vpop.xlane.xlu0 %2342
        %2344 = vadd.xlane.f32.xlu0 %v2217
        %v2345 = vpop.xlane.xlu0 %2344
        %2346 = vadd.xlane.f32.xlu0 %v2219
        %v2347 = vpop.xlane.xlu0 %2346
        %2348 = vadd.xlane.f32.xlu0 %v2221
        %v2349 = vpop.xlane.xlu0 %2348
        %2350 = vadd.xlane.f32.xlu0 %v2223
        %v2351 = vpop.xlane.xlu0 %2350
        %2352 = vadd.xlane.f32.xlu0 %v2225
        %v2353 = vpop.xlane.xlu0 %2352
        %2354 = vadd.xlane.f32.xlu0 %v2227
        %v2355 = vpop.xlane.xlu0 %2354
        %2356 = vadd.xlane.f32.xlu0 %v2229
        %v2357 = vpop.xlane.xlu0 %2356
        %2358 = vadd.xlane.f32.xlu0 %v2231
        %v2359 = vpop.xlane.xlu0 %2358
        %2360 = vadd.xlane.f32.xlu0 %v2233
        %v2361 = vpop.xlane.xlu0 %2360
        %2362 = vadd.xlane.f32.xlu0 %v2235
        %v2363 = vpop.xlane.xlu0 %2362
        %2364 = vadd.xlane.f32.xlu0 %v2237
        %v2365 = vpop.xlane.xlu0 %2364
        %2366 = vadd.xlane.f32.xlu0 %v2239
        %v2367 = vpop.xlane.xlu0 %2366
        %2368 = vadd.xlane.f32.xlu0 %v2241
        %v2369 = vpop.xlane.xlu0 %2368
        %2370 = vadd.xlane.f32.xlu0 %v2243
        %v2371 = vpop.xlane.xlu0 %2370
        %2372 = vadd.xlane.f32.xlu0 %v2245
        %v2373 = vpop.xlane.xlu0 %2372
        %2374 = vadd.xlane.f32.xlu0 %v2247
        %v2375 = vpop.xlane.xlu0 %2374
        %2376 = vadd.xlane.f32.xlu0 %v2249
        %v2377 = vpop.xlane.xlu0 %2376
        %2378 = vadd.xlane.f32.xlu0 %v2251
        %v2379 = vpop.xlane.xlu0 %2378
        %2380 = vadd.xlane.f32.xlu0 %v2253
        %v2381 = vpop.xlane.xlu0 %2380
        %2382 = vadd.xlane.f32.xlu0 %v2255
        %v2383 = vpop.xlane.xlu0 %2382
        %2384 = vadd.xlane.f32.xlu0 %v2257
        %v2385 = vpop.xlane.xlu0 %2384
        %2386 = vadd.xlane.f32.xlu0 %v2259
        %v2387 = vpop.xlane.xlu0 %2386
        %2388 = vadd.xlane.f32.xlu0 %v2261
        %v2389 = vpop.xlane.xlu0 %2388
        %2390 = vadd.xlane.f32.xlu0 %v2263
        %v2391 = vpop.xlane.xlu0 %2390
        %2392 = vadd.xlane.f32.xlu0 %v2265
        %v2393 = vpop.xlane.xlu0 %2392
        %2394 = vadd.xlane.f32.xlu0 %v2267
        %v2395 = vpop.xlane.xlu0 %2394
        %2396 = vadd.xlane.f32.xlu0 %v2269
        %v2397 = vpop.xlane.xlu0 %2396
        %2398 = vadd.xlane.f32.xlu0 %v2271
        %v2399 = vpop.xlane.xlu0 %2398
        %2400 = vadd.xlane.f32.xlu0 %v2273
        %v2401 = vpop.xlane.xlu0 %2400
        %2402 = vadd.xlane.f32.xlu0 %v2275
        %v2403 = vpop.xlane.xlu0 %2402
        %2404 = vadd.xlane.f32.xlu0 %v2277
        %v2405 = vpop.xlane.xlu0 %2404
        %2406 = vadd.xlane.f32.xlu0 %v2279
        %v2407 = vpop.xlane.xlu0 %2406
        %2408 = vadd.xlane.f32.xlu0 %v2281
        %v2409 = vpop.xlane.xlu0 %2408
        %2410 = vadd.xlane.f32.xlu0 %v2283
        %v2411 = vpop.xlane.xlu0 %2410
        %2412 = vadd.xlane.f32.xlu0 %v2285
        %v2413 = vpop.xlane.xlu0 %2412
        %2414 = vadd.xlane.f32.xlu0 %v2287
        %v2415 = vpop.xlane.xlu0 %2414
        %2416 = vadd.xlane.f32.xlu0 %v2289
        %v2417 = vpop.xlane.xlu0 %2416
        %2418 = vadd.xlane.f32.xlu0 %v2291
        %v2419 = vpop.xlane.xlu0 %2418
        %v2420 = vpack.c.bf16 %v2167, %v2165
        %v2421 = vpack.c.bf16 %v2171, %v2169
        %v2422 = vpack.c.bf16 %v2175, %v2173
        %v2423 = vpack.c.bf16 %v2179, %v2177
        %v2424 = vpack.c.bf16 %v2183, %v2181
        %v2425 = vpack.c.bf16 %v2187, %v2185
        %v2426 = vpack.c.bf16 %v2191, %v2189
        %v2427 = vpack.c.bf16 %v2195, %v2193
        %v2428 = vpack.c.bf16 %v2199, %v2197
        %v2429 = vpack.c.bf16 %v2203, %v2201
        %v2430 = vpack.c.bf16 %v2207, %v2205
        %v2431 = vpack.c.bf16 %v2211, %v2209
        %v2432 = vpack.c.bf16 %v2215, %v2213
        %v2433 = vpack.c.bf16 %v2219, %v2217
        %v2434 = vpack.c.bf16 %v2223, %v2221
        %v2435 = vpack.c.bf16 %v2227, %v2225
        %v2436 = vpack.c.bf16 %v2231, %v2229
        %v2437 = vpack.c.bf16 %v2235, %v2233
        %v2438 = vpack.c.bf16 %v2239, %v2237
        %v2439 = vpack.c.bf16 %v2243, %v2241
        %v2440 = vpack.c.bf16 %v2247, %v2245
        %v2441 = vpack.c.bf16 %v2251, %v2249
        %v2442 = vpack.c.bf16 %v2255, %v2253
        %v2443 = vpack.c.bf16 %v2259, %v2257
        %v2444 = vpack.c.bf16 %v2263, %v2261
        %v2445 = vpack.c.bf16 %v2267, %v2265
        %v2446 = vpack.c.bf16 %v2271, %v2269
        %v2447 = vpack.c.bf16 %v2275, %v2273
        %v2448 = vpack.c.bf16 %v2279, %v2277
        %v2449 = vpack.c.bf16 %v2283, %v2281
        %v2450 = vpack.c.bf16 %v2287, %v2285
        %v2451 = vpack.c.bf16 %v2291, %v2289
        %2452 = vmatprep.subr.bf16.mxu0 0
        %2453 = vmatpush1.bf16.xpose.msra.mxu0 %v1479
        %2454 = vmatprep.subr.bf16.mxu0 0
        %2455 = vmatpush1.bf16.xpose.msra.mxu0 %v1480
        %2456 = vmatprep.subr.bf16.mxu0 0
        %2457 = vmatpush1.bf16.xpose.msra.mxu0 0
        %2458 = vmatprep.subr.bf16.mxu0 0
        %2459 = vmatpush1.bf16.xpose.msra.mxu0 0
        %2460 = vmatprep.subr.bf16.mxu0 0
        %2461 = vmatpush1.bf16.xpose.msra.mxu0 0
        %2462 = vmatprep.subr.bf16.mxu0 0
        %2463 = vmatpush1.bf16.xpose.msra.mxu0 0
        %2464 = vmatprep.subr.bf16.mxu0 0
        %2465 = vmatpush1.bf16.xpose.msra.mxu0 0
        %2466 = vmatprep.subr.bf16.mxu0 0
        %2467 = vmatpush1.bf16.xpose.msra.mxu0 0
        %2468 = vmatprep.subr.bf16.mxu0 0
        %2469 = vmatpush1.bf16.xpose.msra.mxu0 0
        %2470 = vmatprep.subr.bf16.mxu0 0
        %2471 = vmatpush1.bf16.xpose.msra.mxu0 0
        %2472 = vmatprep.subr.bf16.mxu0 0
        %2473 = vmatpush1.bf16.xpose.msra.mxu0 0
        %2474 = vmatprep.subr.bf16.mxu0 0
        %2475 = vmatpush1.bf16.xpose.msra.mxu0 0
        %2476 = vmatprep.subr.bf16.mxu0 0
        %2477 = vmatpush1.bf16.xpose.msra.mxu0 0
        %2478 = vmatprep.subr.bf16.mxu0 0
        %2479 = vmatpush1.bf16.xpose.msra.mxu0 0
        %2480 = vmatprep.subr.bf16.mxu0 0
        %2481 = vmatpush1.bf16.xpose.msra.mxu0 0
        %2482 = vmatprep.subr.bf16.mxu0 0
        %2483 = vmatpush1.bf16.xpose.msra.mxu0 0
        %2484 = vmatprep.mubr.bf16.mxu0 0
        %2485 = vmatmul.mubr.bf16.gmra.mrb[0].mxu0 %v2420
        %v2486 = vpop.f32.mrb[0].mxu0
        %v2487 = vadd.f32 0.0, %v2486
        %v2488 = vpop.f32.mrb[0].mxu0
        %v2489 = vpop.f32.mrb[0].mxu0
        %v2490 = vadd.f32 0.0, %v2489
        %v2491 = vpop.f32.mrb[0].mxu0
        %2492 = vmatprep.mubr.bf16.mxu0 0
        %2493 = vmatmul.mubr.bf16.gmra.mrb[0].mxu0 %v2421
        %v2494 = vpop.f32.mrb[0].mxu0
        %v2495 = vadd.f32 0.0, %v2494
        %v2496 = vpop.f32.mrb[0].mxu0
        %v2497 = vpop.f32.mrb[0].mxu0
        %v2498 = vadd.f32 0.0, %v2497
        %v2499 = vpop.f32.mrb[0].mxu0
        %2500 = vmatprep.mubr.bf16.mxu0 0
        %2501 = vmatmul.mubr.bf16.gmra.mrb[0].mxu0 %v2422
        %v2502 = vpop.f32.mrb[0].mxu0
        %v2503 = vadd.f32 0.0, %v2502
        %v2504 = vpop.f32.mrb[0].mxu0
        %v2505 = vpop.f32.mrb[0].mxu0
        %v2506 = vadd.f32 0.0, %v2505
        %v2507 = vpop.f32.mrb[0].mxu0
        %2508 = vmatprep.mubr.bf16.mxu0 0
        %2509 = vmatmul.mubr.bf16.gmra.mrb[0].mxu0 %v2423
        %v2510 = vpop.f32.mrb[0].mxu0
        %v2511 = vadd.f32 0.0, %v2510
        %v2512 = vpop.f32.mrb[0].mxu0
        %v2513 = vpop.f32.mrb[0].mxu0
        %v2514 = vadd.f32 0.0, %v2513
        %v2515 = vpop.f32.mrb[0].mxu0
        %2516 = vmatprep.mubr.bf16.mxu0 0
        %2517 = vmatmul.mubr.bf16.gmra.mrb[0].mxu0 %v2424
        %v2518 = vpop.f32.mrb[0].mxu0
        %v2519 = vadd.f32 0.0, %v2518
        %v2520 = vpop.f32.mrb[0].mxu0
        %v2521 = vpop.f32.mrb[0].mxu0
        %v2522 = vadd.f32 0.0, %v2521
        %v2523 = vpop.f32.mrb[0].mxu0
        %2524 = vmatprep.mubr.bf16.mxu0 0
        %2525 = vmatmul.mubr.bf16.gmra.mrb[0].mxu0 %v2425
        %v2526 = vpop.f32.mrb[0].mxu0
        %v2527 = vadd.f32 0.0, %v2526
        %v2528 = vpop.f32.mrb[0].mxu0
        %v2529 = vpop.f32.mrb[0].mxu0
        %v2530 = vadd.f32 0.0, %v2529
        %v2531 = vpop.f32.mrb[0].mxu0
        %2532 = vmatprep.mubr.bf16.mxu0 0
        %2533 = vmatmul.mubr.bf16.gmra.mrb[0].mxu0 %v2426
        %v2534 = vpop.f32.mrb[0].mxu0
        %v2535 = vadd.f32 0.0, %v2534
        %v2536 = vpop.f32.mrb[0].mxu0
        %v2537 = vpop.f32.mrb[0].mxu0
        %v2538 = vadd.f32 0.0, %v2537
        %v2539 = vpop.f32.mrb[0].mxu0
        %2540 = vmatprep.mubr.bf16.mxu0 0
        %2541 = vmatmul.mubr.bf16.gmra.mrb[0].mxu0 %v2427
        %v2542 = vpop.f32.mrb[0].mxu0
        %v2543 = vadd.f32 0.0, %v2542
        %v2544 = vpop.f32.mrb[0].mxu0
        %v2545 = vpop.f32.mrb[0].mxu0
        %v2546 = vadd.f32 0.0, %v2545
        %v2547 = vpop.f32.mrb[0].mxu0
        %2548 = vdwg.mxu0
        %2549 = vmatprep.subr.bf16.mxu0 0
        %2550 = vmatpush1.bf16.xpose.msra.mxu0 %v1481
        %2551 = vmatprep.subr.bf16.mxu0 0
        %2552 = vmatpush1.bf16.xpose.msra.mxu0 %v1482
        %2553 = vmatprep.subr.bf16.mxu0 0
        %2554 = vmatpush1.bf16.xpose.msra.mxu0 0
        %2555 = vmatprep.subr.bf16.mxu0 0
        %2556 = vmatpush1.bf16.xpose.msra.mxu0 0
        %2557 = vmatprep.subr.bf16.mxu0 0
        %2558 = vmatpush1.bf16.xpose.msra.mxu0 0
        %2559 = vmatprep.subr.bf16.mxu0 0
        %2560 = vmatpush1.bf16.xpose.msra.mxu0 0
        %2561 = vmatprep.subr.bf16.mxu0 0
        %2562 = vmatpush1.bf16.xpose.msra.mxu0 0
        %2563 = vmatprep.subr.bf16.mxu0 0
        %2564 = vmatpush1.bf16.xpose.msra.mxu0 0
        %2565 = vmatprep.subr.bf16.mxu0 0
        %2566 = vmatpush1.bf16.xpose.msra.mxu0 0
        %2567 = vmatprep.subr.bf16.mxu0 0
        %2568 = vmatpush1.bf16.xpose.msra.mxu0 0
        %2569 = vmatprep.subr.bf16.mxu0 0
        %2570 = vmatpush1.bf16.xpose.msra.mxu0 0
        %2571 = vmatprep.subr.bf16.mxu0 0
        %2572 = vmatpush1.bf16.xpose.msra.mxu0 0
        %2573 = vmatprep.subr.bf16.mxu0 0
        %2574 = vmatpush1.bf16.xpose.msra.mxu0 0
        %2575 = vmatprep.subr.bf16.mxu0 0
        %2576 = vmatpush1.bf16.xpose.msra.mxu0 0
        %2577 = vmatprep.subr.bf16.mxu0 0
        %2578 = vmatpush1.bf16.xpose.msra.mxu0 0
        %2579 = vmatprep.subr.bf16.mxu0 0
        %2580 = vmatpush1.bf16.xpose.msra.mxu0 0
        %2581 = vmatprep.mubr.bf16.mxu0 0
        %2582 = vmatmul.mubr.bf16.gmra.mrb[0].mxu0 %v2428
        %v2583 = vpop.f32.mrb[0].mxu0
        %v2584 = vadd.f32 0.0, %v2583
        %v2585 = vpop.f32.mrb[0].mxu0
        %v2586 = vpop.f32.mrb[0].mxu0
        %v2587 = vadd.f32 0.0, %v2586
        %v2588 = vpop.f32.mrb[0].mxu0
        %2589 = vmatprep.mubr.bf16.mxu0 0
        %2590 = vmatmul.mubr.bf16.gmra.mrb[0].mxu0 %v2429
        %v2591 = vpop.f32.mrb[0].mxu0
        %v2592 = vadd.f32 0.0, %v2591
        %v2593 = vpop.f32.mrb[0].mxu0
        %v2594 = vpop.f32.mrb[0].mxu0
        %v2595 = vadd.f32 0.0, %v2594
        %v2596 = vpop.f32.mrb[0].mxu0
        %2597 = vmatprep.mubr.bf16.mxu0 0
        %2598 = vmatmul.mubr.bf16.gmra.mrb[0].mxu0 %v2430
        %v2599 = vpop.f32.mrb[0].mxu0
        %v2600 = vadd.f32 0.0, %v2599
        %v2601 = vpop.f32.mrb[0].mxu0
        %v2602 = vpop.f32.mrb[0].mxu0
        %v2603 = vadd.f32 0.0, %v2602
        %v2604 = vpop.f32.mrb[0].mxu0
        %2605 = vmatprep.mubr.bf16.mxu0 0
        %2606 = vmatmul.mubr.bf16.gmra.mrb[0].mxu0 %v2431
        %v2607 = vpop.f32.mrb[0].mxu0
        %v2608 = vadd.f32 0.0, %v2607
        %v2609 = vpop.f32.mrb[0].mxu0
        %v2610 = vpop.f32.mrb[0].mxu0
        %v2611 = vadd.f32 0.0, %v2610
        %v2612 = vpop.f32.mrb[0].mxu0
        %2613 = vmatprep.mubr.bf16.mxu0 0
        %2614 = vmatmul.mubr.bf16.gmra.mrb[0].mxu0 %v2432
        %v2615 = vpop.f32.mrb[0].mxu0
        %v2616 = vadd.f32 0.0, %v2615
        %v2617 = vpop.f32.mrb[0].mxu0
        %v2618 = vpop.f32.mrb[0].mxu0
        %v2619 = vadd.f32 0.0, %v2618
        %v2620 = vpop.f32.mrb[0].mxu0
        %2621 = vmatprep.mubr.bf16.mxu0 0
        %2622 = vmatmul.mubr.bf16.gmra.mrb[0].mxu0 %v2433
        %v2623 = vpop.f32.mrb[0].mxu0
        %v2624 = vadd.f32 0.0, %v2623
        %v2625 = vpop.f32.mrb[0].mxu0
        %v2626 = vpop.f32.mrb[0].mxu0
        %v2627 = vadd.f32 0.0, %v2626
        %v2628 = vpop.f32.mrb[0].mxu0
        %2629 = vmatprep.mubr.bf16.mxu0 0
        %2630 = vmatmul.mubr.bf16.gmra.mrb[0].mxu0 %v2434
        %v2631 = vpop.f32.mrb[0].mxu0
        %v2632 = vadd.f32 0.0, %v2631
        %v2633 = vpop.f32.mrb[0].mxu0
        %v2634 = vpop.f32.mrb[0].mxu0
        %v2635 = vadd.f32 0.0, %v2634
        %v2636 = vpop.f32.mrb[0].mxu0
        %2637 = vmatprep.mubr.bf16.mxu0 0
        %2638 = vmatmul.mubr.bf16.gmra.mrb[0].mxu0 %v2435
        %v2639 = vpop.f32.mrb[0].mxu0
        %v2640 = vadd.f32 0.0, %v2639
        %v2641 = vpop.f32.mrb[0].mxu0
        %v2642 = vpop.f32.mrb[0].mxu0
        %v2643 = vadd.f32 0.0, %v2642
        %v2644 = vpop.f32.mrb[0].mxu0
        %2645 = vdwg.mxu0
        %2646 = vmatprep.subr.bf16.mxu0 0
        %2647 = vmatpush1.bf16.xpose.msra.mxu0 %v1483
        %2648 = vmatprep.subr.bf16.mxu0 0
        %2649 = vmatpush1.bf16.xpose.msra.mxu0 %v1484
        %2650 = vmatprep.subr.bf16.mxu0 0
        %2651 = vmatpush1.bf16.xpose.msra.mxu0 0
        %2652 = vmatprep.subr.bf16.mxu0 0
        %2653 = vmatpush1.bf16.xpose.msra.mxu0 0
        %2654 = vmatprep.subr.bf16.mxu0 0
        %2655 = vmatpush1.bf16.xpose.msra.mxu0 0
        %2656 = vmatprep.subr.bf16.mxu0 0
        %2657 = vmatpush1.bf16.xpose.msra.mxu0 0
        %2658 = vmatprep.subr.bf16.mxu0 0
        %2659 = vmatpush1.bf16.xpose.msra.mxu0 0
        %2660 = vmatprep.subr.bf16.mxu0 0
        %2661 = vmatpush1.bf16.xpose.msra.mxu0 0
        %2662 = vmatprep.subr.bf16.mxu0 0
        %2663 = vmatpush1.bf16.xpose.msra.mxu0 0
        %2664 = vmatprep.subr.bf16.mxu0 0
        %2665 = vmatpush1.bf16.xpose.msra.mxu0 0
        %2666 = vmatprep.subr.bf16.mxu0 0
        %2667 = vmatpush1.bf16.xpose.msra.mxu0 0
        %2668 = vmatprep.subr.bf16.mxu0 0
        %2669 = vmatpush1.bf16.xpose.msra.mxu0 0
        %2670 = vmatprep.subr.bf16.mxu0 0
        %2671 = vmatpush1.bf16.xpose.msra.mxu0 0
        %2672 = vmatprep.subr.bf16.mxu0 0
        %2673 = vmatpush1.bf16.xpose.msra.mxu0 0
        %2674 = vmatprep.subr.bf16.mxu0 0
        %2675 = vmatpush1.bf16.xpose.msra.mxu0 0
        %2676 = vmatprep.subr.bf16.mxu0 0
        %2677 = vmatpush1.bf16.xpose.msra.mxu0 0
        %2678 = vmatprep.mubr.bf16.mxu0 0
        %2679 = vmatmul.mubr.bf16.gmra.mrb[0].mxu0 %v2436
        %v2680 = vpop.f32.mrb[0].mxu0
        %v2681 = vadd.f32 0.0, %v2680
        %v2682 = vpop.f32.mrb[0].mxu0
        %v2683 = vpop.f32.mrb[0].mxu0
        %v2684 = vadd.f32 0.0, %v2683
        %v2685 = vpop.f32.mrb[0].mxu0
        %2686 = vmatprep.mubr.bf16.mxu0 0
        %2687 = vmatmul.mubr.bf16.gmra.mrb[0].mxu0 %v2437
        %v2688 = vpop.f32.mrb[0].mxu0
        %v2689 = vadd.f32 0.0, %v2688
        %v2690 = vpop.f32.mrb[0].mxu0
        %v2691 = vpop.f32.mrb[0].mxu0
        %v2692 = vadd.f32 0.0, %v2691
        %v2693 = vpop.f32.mrb[0].mxu0
        %2694 = vmatprep.mubr.bf16.mxu0 0
        %2695 = vmatmul.mubr.bf16.gmra.mrb[0].mxu0 %v2438
        %v2696 = vpop.f32.mrb[0].mxu0
        %v2697 = vadd.f32 0.0, %v2696
        %v2698 = vpop.f32.mrb[0].mxu0
        %v2699 = vpop.f32.mrb[0].mxu0
        %v2700 = vadd.f32 0.0, %v2699
        %v2701 = vpop.f32.mrb[0].mxu0
        %2702 = vmatprep.mubr.bf16.mxu0 0
        %2703 = vmatmul.mubr.bf16.gmra.mrb[0].mxu0 %v2439
        %v2704 = vpop.f32.mrb[0].mxu0
        %v2705 = vadd.f32 0.0, %v2704
        %v2706 = vpop.f32.mrb[0].mxu0
        %v2707 = vpop.f32.mrb[0].mxu0
        %v2708 = vadd.f32 0.0, %v2707
        %v2709 = vpop.f32.mrb[0].mxu0
        %2710 = vmatprep.mubr.bf16.mxu0 0
        %2711 = vmatmul.mubr.bf16.gmra.mrb[0].mxu0 %v2440
        %v2712 = vpop.f32.mrb[0].mxu0
        %v2713 = vadd.f32 0.0, %v2712
        %v2714 = vpop.f32.mrb[0].mxu0
        %v2715 = vpop.f32.mrb[0].mxu0
        %v2716 = vadd.f32 0.0, %v2715
        %v2717 = vpop.f32.mrb[0].mxu0
        %2718 = vmatprep.mubr.bf16.mxu0 0
        %2719 = vmatmul.mubr.bf16.gmra.mrb[0].mxu0 %v2441
        %v2720 = vpop.f32.mrb[0].mxu0
        %v2721 = vadd.f32 0.0, %v2720
        %v2722 = vpop.f32.mrb[0].mxu0
        %v2723 = vpop.f32.mrb[0].mxu0
        %v2724 = vadd.f32 0.0, %v2723
        %v2725 = vpop.f32.mrb[0].mxu0
        %2726 = vmatprep.mubr.bf16.mxu0 0
        %2727 = vmatmul.mubr.bf16.gmra.mrb[0].mxu0 %v2442
        %v2728 = vpop.f32.mrb[0].mxu0
        %v2729 = vadd.f32 0.0, %v2728
        %v2730 = vpop.f32.mrb[0].mxu0
        %v2731 = vpop.f32.mrb[0].mxu0
        %v2732 = vadd.f32 0.0, %v2731
        %v2733 = vpop.f32.mrb[0].mxu0
        %2734 = vmatprep.mubr.bf16.mxu0 0
        %2735 = vmatmul.mubr.bf16.gmra.mrb[0].mxu0 %v2443
        %v2736 = vpop.f32.mrb[0].mxu0
        %v2737 = vadd.f32 0.0, %v2736
        %v2738 = vpop.f32.mrb[0].mxu0
        %v2739 = vpop.f32.mrb[0].mxu0
        %v2740 = vadd.f32 0.0, %v2739
        %v2741 = vpop.f32.mrb[0].mxu0
        %2742 = vdwg.mxu0
        %2743 = vmatprep.subr.bf16.mxu0 0
        %2744 = vmatpush1.bf16.xpose.msra.mxu0 %v1485
        %2745 = vmatprep.subr.bf16.mxu0 0
        %2746 = vmatpush1.bf16.xpose.msra.mxu0 %v1486
        %2747 = vmatprep.subr.bf16.mxu0 0
        %2748 = vmatpush1.bf16.xpose.msra.mxu0 0
        %2749 = vmatprep.subr.bf16.mxu0 0
        %2750 = vmatpush1.bf16.xpose.msra.mxu0 0
        %2751 = vmatprep.subr.bf16.mxu0 0
        %2752 = vmatpush1.bf16.xpose.msra.mxu0 0
        %2753 = vmatprep.subr.bf16.mxu0 0
        %2754 = vmatpush1.bf16.xpose.msra.mxu0 0
        %2755 = vmatprep.subr.bf16.mxu0 0
        %2756 = vmatpush1.bf16.xpose.msra.mxu0 0
        %2757 = vmatprep.subr.bf16.mxu0 0
        %2758 = vmatpush1.bf16.xpose.msra.mxu0 0
        %2759 = vmatprep.subr.bf16.mxu0 0
        %2760 = vmatpush1.bf16.xpose.msra.mxu0 0
        %2761 = vmatprep.subr.bf16.mxu0 0
        %2762 = vmatpush1.bf16.xpose.msra.mxu0 0
        %2763 = vmatprep.subr.bf16.mxu0 0
        %2764 = vmatpush1.bf16.xpose.msra.mxu0 0
        %2765 = vmatprep.subr.bf16.mxu0 0
        %2766 = vmatpush1.bf16.xpose.msra.mxu0 0
        %2767 = vmatprep.subr.bf16.mxu0 0
        %2768 = vmatpush1.bf16.xpose.msra.mxu0 0
        %2769 = vmatprep.subr.bf16.mxu0 0
        %2770 = vmatpush1.bf16.xpose.msra.mxu0 0
        %2771 = vmatprep.subr.bf16.mxu0 0
        %2772 = vmatpush1.bf16.xpose.msra.mxu0 0
        %2773 = vmatprep.subr.bf16.mxu0 0
        %2774 = vmatpush1.bf16.xpose.msra.mxu0 0
        %2775 = vmatprep.mubr.bf16.mxu0 0
        %2776 = vmatmul.mubr.bf16.gmra.mrb[0].mxu0 %v2444
        %v2777 = vpop.f32.mrb[0].mxu0
        %v2778 = vadd.f32 0.0, %v2777
        %v2779 = vpop.f32.mrb[0].mxu0
        %v2780 = vpop.f32.mrb[0].mxu0
        %v2781 = vadd.f32 0.0, %v2780
        %v2782 = vpop.f32.mrb[0].mxu0
        %2783 = vmatprep.mubr.bf16.mxu0 0
        %2784 = vmatmul.mubr.bf16.gmra.mrb[0].mxu0 %v2445
        %v2785 = vpop.f32.mrb[0].mxu0
        %v2786 = vadd.f32 0.0, %v2785
        %v2787 = vpop.f32.mrb[0].mxu0
        %v2788 = vpop.f32.mrb[0].mxu0
        %v2789 = vadd.f32 0.0, %v2788
        %v2790 = vpop.f32.mrb[0].mxu0
        %2791 = vmatprep.mubr.bf16.mxu0 0
        %2792 = vmatmul.mubr.bf16.gmra.mrb[0].mxu0 %v2446
        %v2793 = vpop.f32.mrb[0].mxu0
        %v2794 = vadd.f32 0.0, %v2793
        %v2795 = vpop.f32.mrb[0].mxu0
        %v2796 = vpop.f32.mrb[0].mxu0
        %v2797 = vadd.f32 0.0, %v2796
        %v2798 = vpop.f32.mrb[0].mxu0
        %2799 = vmatprep.mubr.bf16.mxu0 0
        %2800 = vmatmul.mubr.bf16.gmra.mrb[0].mxu0 %v2447
        %v2801 = vpop.f32.mrb[0].mxu0
        %v2802 = vadd.f32 0.0, %v2801
        %v2803 = vpop.f32.mrb[0].mxu0
        %v2804 = vpop.f32.mrb[0].mxu0
        %v2805 = vadd.f32 0.0, %v2804
        %v2806 = vpop.f32.mrb[0].mxu0
        %2807 = vmatprep.mubr.bf16.mxu0 0
        %2808 = vmatmul.mubr.bf16.gmra.mrb[0].mxu0 %v2448
        %v2809 = vpop.f32.mrb[0].mxu0
        %v2810 = vadd.f32 0.0, %v2809
        %v2811 = vpop.f32.mrb[0].mxu0
        %v2812 = vpop.f32.mrb[0].mxu0
        %v2813 = vadd.f32 0.0, %v2812
        %v2814 = vpop.f32.mrb[0].mxu0
        %2815 = vmatprep.mubr.bf16.mxu0 0
        %2816 = vmatmul.mubr.bf16.gmra.mrb[0].mxu0 %v2449
        %v2817 = vpop.f32.mrb[0].mxu0
        %v2818 = vadd.f32 0.0, %v2817
        %v2819 = vpop.f32.mrb[0].mxu0
        %v2820 = vpop.f32.mrb[0].mxu0
        %v2821 = vadd.f32 0.0, %v2820
        %v2822 = vpop.f32.mrb[0].mxu0
        %2823 = vmatprep.mubr.bf16.mxu0 0
        %2824 = vmatmul.mubr.bf16.gmra.mrb[0].mxu0 %v2450
        %v2825 = vpop.f32.mrb[0].mxu0
        %v2826 = vadd.f32 0.0, %v2825
        %v2827 = vpop.f32.mrb[0].mxu0
        %v2828 = vpop.f32.mrb[0].mxu0
        %v2829 = vadd.f32 0.0, %v2828
        %v2830 = vpop.f32.mrb[0].mxu0
        %2831 = vmatprep.mubr.bf16.mxu0 0
        %2832 = vmatmul.mubr.bf16.gmra.mrb[0].mxu0 %v2451
        %v2833 = vpop.f32.mrb[0].mxu0
        %v2834 = vadd.f32 0.0, %v2833
        %v2835 = vpop.f32.mrb[0].mxu0
        %v2836 = vpop.f32.mrb[0].mxu0
        %v2837 = vadd.f32 0.0, %v2836
        %v2838 = vpop.f32.mrb[0].mxu0
        %2839 = vdwg.mxu0
        %v2840 = vrcp.pop %v2293
        %v2841 = vrcp.pop %v2295
        %v2842 = vrcp.pop %v2297
        %v2843 = vrcp.pop %v2299
        %v2844 = vrcp.pop %v2301
        %v2845 = vrcp.pop %v2303
        %v2846 = vrcp.pop %v2305
        %v2847 = vrcp.pop %v2307
        %v2848 = vrcp.pop %v2309
        %v2849 = vrcp.pop %v2311
        %v2850 = vrcp.pop %v2313
        %v2851 = vrcp.pop %v2315
        %v2852 = vrcp.pop %v2317
        %v2853 = vrcp.pop %v2319
        %v2854 = vrcp.pop %v2321
        %v2855 = vrcp.pop %v2323
        %v2856 = vrcp.pop %v2325
        %v2857 = vrcp.pop %v2327
        %v2858 = vrcp.pop %v2329
        %v2859 = vrcp.pop %v2331
        %v2860 = vrcp.pop %v2333
        %v2861 = vrcp.pop %v2335
        %v2862 = vrcp.pop %v2337
        %v2863 = vrcp.pop %v2339
        %v2864 = vrcp.pop %v2341
        %v2865 = vrcp.pop %v2343
        %v2866 = vrcp.pop %v2345
        %v2867 = vrcp.pop %v2347
        %v2868 = vrcp.pop %v2349
        %v2869 = vrcp.pop %v2351
        %v2870 = vrcp.pop %v2353
        %v2871 = vrcp.pop %v2355
        %v2872 = vrcp.pop %v2357
        %v2873 = vrcp.pop %v2359
        %v2874 = vrcp.pop %v2361
        %v2875 = vrcp.pop %v2363
        %v2876 = vrcp.pop %v2365
        %v2877 = vrcp.pop %v2367
        %v2878 = vrcp.pop %v2369
        %v2879 = vrcp.pop %v2371
        %v2880 = vrcp.pop %v2373
        %v2881 = vrcp.pop %v2375
        %v2882 = vrcp.pop %v2377
        %v2883 = vrcp.pop %v2379
        %v2884 = vrcp.pop %v2381
        %v2885 = vrcp.pop %v2383
        %v2886 = vrcp.pop %v2385
        %v2887 = vrcp.pop %v2387
        %v2888 = vrcp.pop %v2389
        %v2889 = vrcp.pop %v2391
        %v2890 = vrcp.pop %v2393
        %v2891 = vrcp.pop %v2395
        %v2892 = vrcp.pop %v2397
        %v2893 = vrcp.pop %v2399
        %v2894 = vrcp.pop %v2401
        %v2895 = vrcp.pop %v2403
        %v2896 = vrcp.pop %v2405
        %v2897 = vrcp.pop %v2407
        %v2898 = vrcp.pop %v2409
        %v2899 = vrcp.pop %v2411
        %v2900 = vrcp.pop %v2413
        %v2901 = vrcp.pop %v2415
        %v2902 = vrcp.pop %v2417
        %v2903 = vrcp.pop %v2419
        %v2904 = vmul.f32 %v2487, %v2840
        %v2905 = vmul.f32 %v2490, %v2841
        %v2906 = vmul.f32 %v2495, %v2842
        %v2907 = vmul.f32 %v2498, %v2843
        %v2908 = vmul.f32 %v2503, %v2844
        %v2909 = vmul.f32 %v2506, %v2845
        %v2910 = vmul.f32 %v2511, %v2846
        %v2911 = vmul.f32 %v2514, %v2847
        %v2912 = vmul.f32 %v2519, %v2848
        %v2913 = vmul.f32 %v2522, %v2849
        %v2914 = vmul.f32 %v2527, %v2850
        %v2915 = vmul.f32 %v2530, %v2851
        %v2916 = vmul.f32 %v2535, %v2852
        %v2917 = vmul.f32 %v2538, %v2853
        %v2918 = vmul.f32 %v2543, %v2854
        %v2919 = vmul.f32 %v2546, %v2855
        %v2920 = vmul.f32 %v2584, %v2856
        %v2921 = vmul.f32 %v2587, %v2857
        %v2922 = vmul.f32 %v2592, %v2858
        %v2923 = vmul.f32 %v2595, %v2859
        %v2924 = vmul.f32 %v2600, %v2860
        %v2925 = vmul.f32 %v2603, %v2861
        %v2926 = vmul.f32 %v2608, %v2862
        %v2927 = vmul.f32 %v2611, %v2863
        %v2928 = vmul.f32 %v2616, %v2864
        %v2929 = vmul.f32 %v2619, %v2865
        %v2930 = vmul.f32 %v2624, %v2866
        %v2931 = vmul.f32 %v2627, %v2867
        %v2932 = vmul.f32 %v2632, %v2868
        %v2933 = vmul.f32 %v2635, %v2869
        %v2934 = vmul.f32 %v2640, %v2870
        %v2935 = vmul.f32 %v2643, %v2871
        %v2936 = vmul.f32 %v2681, %v2872
        %v2937 = vmul.f32 %v2684, %v2873
        %v2938 = vmul.f32 %v2689, %v2874
        %v2939 = vmul.f32 %v2692, %v2875
        %v2940 = vmul.f32 %v2697, %v2876
        %v2941 = vmul.f32 %v2700, %v2877
        %v2942 = vmul.f32 %v2705, %v2878
        %v2943 = vmul.f32 %v2708, %v2879
        %v2944 = vmul.f32 %v2713, %v2880
        %v2945 = vmul.f32 %v2716, %v2881
        %v2946 = vmul.f32 %v2721, %v2882
        %v2947 = vmul.f32 %v2724, %v2883
        %v2948 = vmul.f32 %v2729, %v2884
        %v2949 = vmul.f32 %v2732, %v2885
        %v2950 = vmul.f32 %v2737, %v2886
        %v2951 = vmul.f32 %v2740, %v2887
        %v2952 = vmul.f32 %v2778, %v2888
        %v2953 = vmul.f32 %v2781, %v2889
        %v2954 = vmul.f32 %v2786, %v2890
        %v2955 = vmul.f32 %v2789, %v2891
        %v2956 = vmul.f32 %v2794, %v2892
        %v2957 = vmul.f32 %v2797, %v2893
        %v2958 = vmul.f32 %v2802, %v2894
        %v2959 = vmul.f32 %v2805, %v2895
        %v2960 = vmul.f32 %v2810, %v2896
        %v2961 = vmul.f32 %v2813, %v2897
        %v2962 = vmul.f32 %v2818, %v2898
        %v2963 = vmul.f32 %v2821, %v2899
        %v2964 = vmul.f32 %v2826, %v2900
        %v2965 = vmul.f32 %v2829, %v2901
        %v2966 = vmul.f32 %v2834, %v2902
        %v2967 = vmul.f32 %v2837, %v2903
        %v2968 = vpack.c.bf16 %v2905, %v2904
        %v2969 = vpack.c.bf16 %v2907, %v2906
        %v2970 = vpack.c.bf16 %v2909, %v2908
        %v2971 = vpack.c.bf16 %v2911, %v2910
        %v2972 = vpack.c.bf16 %v2913, %v2912
        %v2973 = vpack.c.bf16 %v2915, %v2914
        %v2974 = vpack.c.bf16 %v2917, %v2916
        %v2975 = vpack.c.bf16 %v2919, %v2918
        %v2976 = vpack.c.bf16 %v2921, %v2920
        %v2977 = vpack.c.bf16 %v2923, %v2922
        %v2978 = vpack.c.bf16 %v2925, %v2924
        %v2979 = vpack.c.bf16 %v2927, %v2926
        %v2980 = vpack.c.bf16 %v2929, %v2928
        %v2981 = vpack.c.bf16 %v2931, %v2930
        %v2982 = vpack.c.bf16 %v2933, %v2932
        %v2983 = vpack.c.bf16 %v2935, %v2934
        %v2984 = vpack.c.bf16 %v2937, %v2936
        %v2985 = vpack.c.bf16 %v2939, %v2938
        %v2986 = vpack.c.bf16 %v2941, %v2940
        %v2987 = vpack.c.bf16 %v2943, %v2942
        %v2988 = vpack.c.bf16 %v2945, %v2944
        %v2989 = vpack.c.bf16 %v2947, %v2946
        %v2990 = vpack.c.bf16 %v2949, %v2948
        %v2991 = vpack.c.bf16 %v2951, %v2950
        %v2992 = vpack.c.bf16 %v2953, %v2952
        %v2993 = vpack.c.bf16 %v2955, %v2954
        %v2994 = vpack.c.bf16 %v2957, %v2956
        %v2995 = vpack.c.bf16 %v2959, %v2958
        %v2996 = vpack.c.bf16 %v2961, %v2960
        %v2997 = vpack.c.bf16 %v2963, %v2962
        %v2998 = vpack.c.bf16 %v2965, %v2964
        %v2999 = vpack.c.bf16 %v2967, %v2966
        %v3000 = vld [vmem:[#allocation7] sm:$0xf]
        %v3001 = vld [vmem:[#allocation7 + $0x4] sm:$0xf]
        %v3002 = vld [vmem:[#allocation7 + $0x8] sm:$0xf]
        %v3003 = vld [vmem:[#allocation7 + $0xc] sm:$0xf]
        %v3004 = vld [vmem:[#allocation7 + $0x10] sm:$0xf]
        %v3005 = vld [vmem:[#allocation7 + $0x14] sm:$0xf]
        %v3006 = vld [vmem:[#allocation7 + $0x18] sm:$0xf]
        %v3007 = vld [vmem:[#allocation7 + $0x1c] sm:$0xf]
        %v3008 = vld [vmem:[#allocation7 + $0x20] sm:$0xf]
        %v3009 = vld [vmem:[#allocation7 + $0x24] sm:$0xf]
        %v3010 = vld [vmem:[#allocation7 + $0x28] sm:$0xf]
        %v3011 = vld [vmem:[#allocation7 + $0x2c] sm:$0xf]
        %v3012 = vld [vmem:[#allocation7 + $0x30] sm:$0xf]
        %v3013 = vld [vmem:[#allocation7 + $0x34] sm:$0xf]
        %v3014 = vld [vmem:[#allocation7 + $0x38] sm:$0xf]
        %v3015 = vld [vmem:[#allocation7 + $0x3c] sm:$0xf]
        %v3020 = vunpack.c.l.b16 %v3000
        %v3021 = vunpack.c.l.b16 %v3001
        %v3022 = vunpack.c.l.b16 %v3002
        %v3023 = vunpack.c.l.b16 %v3003
        %v3024 = vpack.c.b16 %v3021, %v3020
        %v3025 = vpack.c.b16 %v3023, %v3022
        %v3029 = vsel %vm1487, %v2968, 0
        %v3032 = vsel %vm1487, %v2969, 0
        %v3035 = vsel %vm1487, %v2970, 0
        %v3038 = vsel %vm1487, %v2971, 0
        %v3041 = vsel %vm1487, %v2972, 0
        %v3044 = vsel %vm1487, %v2973, 0
        %v3047 = vsel %vm1487, %v2974, 0
        %v3050 = vsel %vm1487, %v2975, 0
        %3052 = vmatprep.subr.bf16.mxu0 0
        %3053 = vmatpush1.bf16.msra.mxu0 %v3024
        %3054 = vmatprep.subr.bf16.mxu0 0
        %3055 = vmatpush1.bf16.msra.mxu0 %v3025
        %3056 = vmatprep.subr.bf16.mxu0 0
        %3057 = vmatpush1.bf16.msra.mxu0 0
        %3058 = vmatprep.subr.bf16.mxu0 0
        %3059 = vmatpush1.bf16.msra.mxu0 0
        %3060 = vmatprep.subr.bf16.mxu0 0
        %3061 = vmatpush1.bf16.msra.mxu0 0
        %3062 = vmatprep.subr.bf16.mxu0 0
        %3063 = vmatpush1.bf16.msra.mxu0 0
        %3064 = vmatprep.subr.bf16.mxu0 0
        %3065 = vmatpush1.bf16.msra.mxu0 0
        %3066 = vmatprep.subr.bf16.mxu0 0
        %3067 = vmatpush1.bf16.msra.mxu0 0
        %3068 = vmatprep.subr.bf16.mxu0 0
        %3069 = vmatpush1.bf16.msra.mxu0 0
        %3070 = vmatprep.subr.bf16.mxu0 0
        %3071 = vmatpush1.bf16.msra.mxu0 0
        %3072 = vmatprep.subr.bf16.mxu0 0
        %3073 = vmatpush1.bf16.msra.mxu0 0
        %3074 = vmatprep.subr.bf16.mxu0 0
        %3075 = vmatpush1.bf16.msra.mxu0 0
        %3076 = vmatprep.subr.bf16.mxu0 0
        %3077 = vmatpush1.bf16.msra.mxu0 0
        %3078 = vmatprep.subr.bf16.mxu0 0
        %3079 = vmatpush1.bf16.msra.mxu0 0
        %3080 = vmatprep.subr.bf16.mxu0 0
        %3081 = vmatpush1.bf16.msra.mxu0 0
        %3082 = vmatprep.subr.bf16.mxu0 0
        %3083 = vmatpush1.bf16.msra.mxu0 0
        %3084 = vmatprep.mubr.bf16.mxu0 0
        %3085 = vmatmul.mubr.bf16.gmra.mrb[0].mxu0 %v3029
        %v3086 = vpop.f32.mrb[0].mxu0
        %v3087 = vadd.f32 0.0, %v3086
        %v3088 = vpop.f32.mrb[0].mxu0
        %v3089 = vpop.f32.mrb[0].mxu0
        %v3090 = vadd.f32 0.0, %v3089
        %v3091 = vpop.f32.mrb[0].mxu0
        %3092 = vmatprep.mubr.bf16.mxu0 0
        %3093 = vmatmul.mubr.bf16.gmra.mrb[0].mxu0 %v3032
        %v3094 = vpop.f32.mrb[0].mxu0
        %v3095 = vadd.f32 0.0, %v3094
        %v3096 = vpop.f32.mrb[0].mxu0
        %v3097 = vpop.f32.mrb[0].mxu0
        %v3098 = vadd.f32 0.0, %v3097
        %v3099 = vpop.f32.mrb[0].mxu0
        %3100 = vmatprep.mubr.bf16.mxu0 0
        %3101 = vmatmul.mubr.bf16.gmra.mrb[0].mxu0 %v3035
        %v3102 = vpop.f32.mrb[0].mxu0
        %v3103 = vadd.f32 0.0, %v3102
        %v3104 = vpop.f32.mrb[0].mxu0
        %v3105 = vpop.f32.mrb[0].mxu0
        %v3106 = vadd.f32 0.0, %v3105
        %v3107 = vpop.f32.mrb[0].mxu0
        %3108 = vmatprep.mubr.bf16.mxu0 0
        %3109 = vmatmul.mubr.bf16.gmra.mrb[0].mxu0 %v3038
        %v3110 = vpop.f32.mrb[0].mxu0
        %v3111 = vadd.f32 0.0, %v3110
        %v3112 = vpop.f32.mrb[0].mxu0
        %v3113 = vpop.f32.mrb[0].mxu0
        %v3114 = vadd.f32 0.0, %v3113
        %v3115 = vpop.f32.mrb[0].mxu0
        %3116 = vmatprep.mubr.bf16.mxu0 0
        %3117 = vmatmul.mubr.bf16.gmra.mrb[0].mxu0 %v3041
        %v3118 = vpop.f32.mrb[0].mxu0
        %v3119 = vadd.f32 0.0, %v3118
        %v3120 = vpop.f32.mrb[0].mxu0
        %v3121 = vpop.f32.mrb[0].mxu0
        %v3122 = vadd.f32 0.0, %v3121
        %v3123 = vpop.f32.mrb[0].mxu0
        %3124 = vmatprep.mubr.bf16.mxu0 0
        %3125 = vmatmul.mubr.bf16.gmra.mrb[0].mxu0 %v3044
        %v3126 = vpop.f32.mrb[0].mxu0
        %v3127 = vadd.f32 0.0, %v3126
        %v3128 = vpop.f32.mrb[0].mxu0
        %v3129 = vpop.f32.mrb[0].mxu0
        %v3130 = vadd.f32 0.0, %v3129
        %v3131 = vpop.f32.mrb[0].mxu0
        %3132 = vmatprep.mubr.bf16.mxu0 0
        %3133 = vmatmul.mubr.bf16.gmra.mrb[0].mxu0 %v3047
        %v3134 = vpop.f32.mrb[0].mxu0
        %v3135 = vadd.f32 0.0, %v3134
        %v3136 = vpop.f32.mrb[0].mxu0
        %v3137 = vpop.f32.mrb[0].mxu0
        %v3138 = vadd.f32 0.0, %v3137
        %v3139 = vpop.f32.mrb[0].mxu0
        %3140 = vmatprep.mubr.bf16.mxu0 0
        %3141 = vmatmul.mubr.bf16.gmra.mrb[0].mxu0 %v3050
        %v3142 = vpop.f32.mrb[0].mxu0
        %v3143 = vadd.f32 0.0, %v3142
        %v3144 = vpop.f32.mrb[0].mxu0
        %v3145 = vpop.f32.mrb[0].mxu0
        %v3146 = vadd.f32 0.0, %v3145
        %v3147 = vpop.f32.mrb[0].mxu0
        %3148 = vdwg.mxu0
        %v3153 = vunpack.c.l.b16 %v3004
        %v3154 = vunpack.c.l.b16 %v3005
        %v3155 = vunpack.c.l.b16 %v3006
        %v3156 = vunpack.c.l.b16 %v3007
        %v3157 = vpack.c.b16 %v3154, %v3153
        %v3158 = vpack.c.b16 %v3156, %v3155
        %v3162 = vsel %vm1487, %v2976, 0
        %v3165 = vsel %vm1487, %v2977, 0
        %v3168 = vsel %vm1487, %v2978, 0
        %v3171 = vsel %vm1487, %v2979, 0
        %v3174 = vsel %vm1487, %v2980, 0
        %v3177 = vsel %vm1487, %v2981, 0
        %v3180 = vsel %vm1487, %v2982, 0
        %v3183 = vsel %vm1487, %v2983, 0
        %3185 = vmatprep.subr.bf16.mxu0 0
        %3186 = vmatpush1.bf16.msra.mxu0 %v3157
        %3187 = vmatprep.subr.bf16.mxu0 0
        %3188 = vmatpush1.bf16.msra.mxu0 %v3158
        %3189 = vmatprep.subr.bf16.mxu0 0
        %3190 = vmatpush1.bf16.msra.mxu0 0
        %3191 = vmatprep.subr.bf16.mxu0 0
        %3192 = vmatpush1.bf16.msra.mxu0 0
        %3193 = vmatprep.subr.bf16.mxu0 0
        %3194 = vmatpush1.bf16.msra.mxu0 0
        %3195 = vmatprep.subr.bf16.mxu0 0
        %3196 = vmatpush1.bf16.msra.mxu0 0
        %3197 = vmatprep.subr.bf16.mxu0 0
        %3198 = vmatpush1.bf16.msra.mxu0 0
        %3199 = vmatprep.subr.bf16.mxu0 0
        %3200 = vmatpush1.bf16.msra.mxu0 0
        %3201 = vmatprep.subr.bf16.mxu0 0
        %3202 = vmatpush1.bf16.msra.mxu0 0
        %3203 = vmatprep.subr.bf16.mxu0 0
        %3204 = vmatpush1.bf16.msra.mxu0 0
        %3205 = vmatprep.subr.bf16.mxu0 0
        %3206 = vmatpush1.bf16.msra.mxu0 0
        %3207 = vmatprep.subr.bf16.mxu0 0
        %3208 = vmatpush1.bf16.msra.mxu0 0
        %3209 = vmatprep.subr.bf16.mxu0 0
        %3210 = vmatpush1.bf16.msra.mxu0 0
        %3211 = vmatprep.subr.bf16.mxu0 0
        %3212 = vmatpush1.bf16.msra.mxu0 0
        %3213 = vmatprep.subr.bf16.mxu0 0
        %3214 = vmatpush1.bf16.msra.mxu0 0
        %3215 = vmatprep.subr.bf16.mxu0 0
        %3216 = vmatpush1.bf16.msra.mxu0 0
        %3217 = vmatprep.mubr.bf16.mxu0 0
        %3218 = vmatmul.mubr.bf16.gmra.mrb[0].mxu0 %v3162
        %v3219 = vpop.f32.mrb[0].mxu0
        %v3220 = vadd.f32 0.0, %v3219
        %v3221 = vpop.f32.mrb[0].mxu0
        %v3222 = vpop.f32.mrb[0].mxu0
        %v3223 = vadd.f32 0.0, %v3222
        %v3224 = vpop.f32.mrb[0].mxu0
        %3225 = vmatprep.mubr.bf16.mxu0 0
        %3226 = vmatmul.mubr.bf16.gmra.mrb[0].mxu0 %v3165
        %v3227 = vpop.f32.mrb[0].mxu0
        %v3228 = vadd.f32 0.0, %v3227
        %v3229 = vpop.f32.mrb[0].mxu0
        %v3230 = vpop.f32.mrb[0].mxu0
        %v3231 = vadd.f32 0.0, %v3230
        %v3232 = vpop.f32.mrb[0].mxu0
        %3233 = vmatprep.mubr.bf16.mxu0 0
        %3234 = vmatmul.mubr.bf16.gmra.mrb[0].mxu0 %v3168
        %v3235 = vpop.f32.mrb[0].mxu0
        %v3236 = vadd.f32 0.0, %v3235
        %v3237 = vpop.f32.mrb[0].mxu0
        %v3238 = vpop.f32.mrb[0].mxu0
        %v3239 = vadd.f32 0.0, %v3238
        %v3240 = vpop.f32.mrb[0].mxu0
        %3241 = vmatprep.mubr.bf16.mxu0 0
        %3242 = vmatmul.mubr.bf16.gmra.mrb[0].mxu0 %v3171
        %v3243 = vpop.f32.mrb[0].mxu0
        %v3244 = vadd.f32 0.0, %v3243
        %v3245 = vpop.f32.mrb[0].mxu0
        %v3246 = vpop.f32.mrb[0].mxu0
        %v3247 = vadd.f32 0.0, %v3246
        %v3248 = vpop.f32.mrb[0].mxu0
        %3249 = vmatprep.mubr.bf16.mxu0 0
        %3250 = vmatmul.mubr.bf16.gmra.mrb[0].mxu0 %v3174
        %v3251 = vpop.f32.mrb[0].mxu0
        %v3252 = vadd.f32 0.0, %v3251
        %v3253 = vpop.f32.mrb[0].mxu0
        %v3254 = vpop.f32.mrb[0].mxu0
        %v3255 = vadd.f32 0.0, %v3254
        %v3256 = vpop.f32.mrb[0].mxu0
        %3257 = vmatprep.mubr.bf16.mxu0 0
        %3258 = vmatmul.mubr.bf16.gmra.mrb[0].mxu0 %v3177
        %v3259 = vpop.f32.mrb[0].mxu0
        %v3260 = vadd.f32 0.0, %v3259
        %v3261 = vpop.f32.mrb[0].mxu0
        %v3262 = vpop.f32.mrb[0].mxu0
        %v3263 = vadd.f32 0.0, %v3262
        %v3264 = vpop.f32.mrb[0].mxu0
        %3265 = vmatprep.mubr.bf16.mxu0 0
        %3266 = vmatmul.mubr.bf16.gmra.mrb[0].mxu0 %v3180
        %v3267 = vpop.f32.mrb[0].mxu0
        %v3268 = vadd.f32 0.0, %v3267
        %v3269 = vpop.f32.mrb[0].mxu0
        %v3270 = vpop.f32.mrb[0].mxu0
        %v3271 = vadd.f32 0.0, %v3270
        %v3272 = vpop.f32.mrb[0].mxu0
        %3273 = vmatprep.mubr.bf16.mxu0 0
        %3274 = vmatmul.mubr.bf16.gmra.mrb[0].mxu0 %v3183
        %v3275 = vpop.f32.mrb[0].mxu0
        %v3276 = vadd.f32 0.0, %v3275
        %v3277 = vpop.f32.mrb[0].mxu0
        %v3278 = vpop.f32.mrb[0].mxu0
        %v3279 = vadd.f32 0.0, %v3278
        %v3280 = vpop.f32.mrb[0].mxu0
        %3281 = vdwg.mxu0
        %v3286 = vunpack.c.l.b16 %v3008
        %v3287 = vunpack.c.l.b16 %v3009
        %v3288 = vunpack.c.l.b16 %v3010
        %v3289 = vunpack.c.l.b16 %v3011
        %v3290 = vpack.c.b16 %v3287, %v3286
        %v3291 = vpack.c.b16 %v3289, %v3288
        %v3295 = vsel %vm1487, %v2984, 0
        %v3298 = vsel %vm1487, %v2985, 0
        %v3301 = vsel %vm1487, %v2986, 0
        %v3304 = vsel %vm1487, %v2987, 0
        %v3307 = vsel %vm1487, %v2988, 0
        %v3310 = vsel %vm1487, %v2989, 0
        %v3313 = vsel %vm1487, %v2990, 0
        %v3316 = vsel %vm1487, %v2991, 0
        %3318 = vmatprep.subr.bf16.mxu0 0
        %3319 = vmatpush1.bf16.msra.mxu0 %v3290
        %3320 = vmatprep.subr.bf16.mxu0 0
        %3321 = vmatpush1.bf16.msra.mxu0 %v3291
        %3322 = vmatprep.subr.bf16.mxu0 0
        %3323 = vmatpush1.bf16.msra.mxu0 0
        %3324 = vmatprep.subr.bf16.mxu0 0
        %3325 = vmatpush1.bf16.msra.mxu0 0
        %3326 = vmatprep.subr.bf16.mxu0 0
        %3327 = vmatpush1.bf16.msra.mxu0 0
        %3328 = vmatprep.subr.bf16.mxu0 0
        %3329 = vmatpush1.bf16.msra.mxu0 0
        %3330 = vmatprep.subr.bf16.mxu0 0
        %3331 = vmatpush1.bf16.msra.mxu0 0
        %3332 = vmatprep.subr.bf16.mxu0 0
        %3333 = vmatpush1.bf16.msra.mxu0 0
        %3334 = vmatprep.subr.bf16.mxu0 0
        %3335 = vmatpush1.bf16.msra.mxu0 0
        %3336 = vmatprep.subr.bf16.mxu0 0
        %3337 = vmatpush1.bf16.msra.mxu0 0
        %3338 = vmatprep.subr.bf16.mxu0 0
        %3339 = vmatpush1.bf16.msra.mxu0 0
        %3340 = vmatprep.subr.bf16.mxu0 0
        %3341 = vmatpush1.bf16.msra.mxu0 0
        %3342 = vmatprep.subr.bf16.mxu0 0
        %3343 = vmatpush1.bf16.msra.mxu0 0
        %3344 = vmatprep.subr.bf16.mxu0 0
        %3345 = vmatpush1.bf16.msra.mxu0 0
        %3346 = vmatprep.subr.bf16.mxu0 0
        %3347 = vmatpush1.bf16.msra.mxu0 0
        %3348 = vmatprep.subr.bf16.mxu0 0
        %3349 = vmatpush1.bf16.msra.mxu0 0
        %3350 = vmatprep.mubr.bf16.mxu0 0
        %3351 = vmatmul.mubr.bf16.gmra.mrb[0].mxu0 %v3295
        %v3352 = vpop.f32.mrb[0].mxu0
        %v3353 = vadd.f32 0.0, %v3352
        %v3354 = vpop.f32.mrb[0].mxu0
        %v3355 = vpop.f32.mrb[0].mxu0
        %v3356 = vadd.f32 0.0, %v3355
        %v3357 = vpop.f32.mrb[0].mxu0
        %3358 = vmatprep.mubr.bf16.mxu0 0
        %3359 = vmatmul.mubr.bf16.gmra.mrb[0].mxu0 %v3298
        %v3360 = vpop.f32.mrb[0].mxu0
        %v3361 = vadd.f32 0.0, %v3360
        %v3362 = vpop.f32.mrb[0].mxu0
        %v3363 = vpop.f32.mrb[0].mxu0
        %v3364 = vadd.f32 0.0, %v3363
        %v3365 = vpop.f32.mrb[0].mxu0
        %3366 = vmatprep.mubr.bf16.mxu0 0
        %3367 = vmatmul.mubr.bf16.gmra.mrb[0].mxu0 %v3301
        %v3368 = vpop.f32.mrb[0].mxu0
        %v3369 = vadd.f32 0.0, %v3368
        %v3370 = vpop.f32.mrb[0].mxu0
        %v3371 = vpop.f32.mrb[0].mxu0
        %v3372 = vadd.f32 0.0, %v3371
        %v3373 = vpop.f32.mrb[0].mxu0
        %3374 = vmatprep.mubr.bf16.mxu0 0
        %3375 = vmatmul.mubr.bf16.gmra.mrb[0].mxu0 %v3304
        %v3376 = vpop.f32.mrb[0].mxu0
        %v3377 = vadd.f32 0.0, %v3376
        %v3378 = vpop.f32.mrb[0].mxu0
        %v3379 = vpop.f32.mrb[0].mxu0
        %v3380 = vadd.f32 0.0, %v3379
        %v3381 = vpop.f32.mrb[0].mxu0
        %3382 = vmatprep.mubr.bf16.mxu0 0
        %3383 = vmatmul.mubr.bf16.gmra.mrb[0].mxu0 %v3307
        %v3384 = vpop.f32.mrb[0].mxu0
        %v3385 = vadd.f32 0.0, %v3384
        %v3386 = vpop.f32.mrb[0].mxu0
        %v3387 = vpop.f32.mrb[0].mxu0
        %v3388 = vadd.f32 0.0, %v3387
        %v3389 = vpop.f32.mrb[0].mxu0
        %3390 = vmatprep.mubr.bf16.mxu0 0
        %3391 = vmatmul.mubr.bf16.gmra.mrb[0].mxu0 %v3310
        %v3392 = vpop.f32.mrb[0].mxu0
        %v3393 = vadd.f32 0.0, %v3392
        %v3394 = vpop.f32.mrb[0].mxu0
        %v3395 = vpop.f32.mrb[0].mxu0
        %v3396 = vadd.f32 0.0, %v3395
        %v3397 = vpop.f32.mrb[0].mxu0
        %3398 = vmatprep.mubr.bf16.mxu0 0
        %3399 = vmatmul.mubr.bf16.gmra.mrb[0].mxu0 %v3313
        %v3400 = vpop.f32.mrb[0].mxu0
        %v3401 = vadd.f32 0.0, %v3400
        %v3402 = vpop.f32.mrb[0].mxu0
        %v3403 = vpop.f32.mrb[0].mxu0
        %v3404 = vadd.f32 0.0, %v3403
        %v3405 = vpop.f32.mrb[0].mxu0
        %3406 = vmatprep.mubr.bf16.mxu0 0
        %3407 = vmatmul.mubr.bf16.gmra.mrb[0].mxu0 %v3316
        %v3408 = vpop.f32.mrb[0].mxu0
        %v3409 = vadd.f32 0.0, %v3408
        %v3410 = vpop.f32.mrb[0].mxu0
        %v3411 = vpop.f32.mrb[0].mxu0
        %v3412 = vadd.f32 0.0, %v3411
        %v3413 = vpop.f32.mrb[0].mxu0
        %3414 = vdwg.mxu0
        %v3419 = vunpack.c.l.b16 %v3012
        %v3420 = vunpack.c.l.b16 %v3013
        %v3421 = vunpack.c.l.b16 %v3014
        %v3422 = vunpack.c.l.b16 %v3015
        %v3423 = vpack.c.b16 %v3420, %v3419
        %v3424 = vpack.c.b16 %v3422, %v3421
        %v3428 = vsel %vm1487, %v2992, 0
        %v3431 = vsel %vm1487, %v2993, 0
        %v3434 = vsel %vm1487, %v2994, 0
        %v3437 = vsel %vm1487, %v2995, 0
        %v3440 = vsel %vm1487, %v2996, 0
        %v3443 = vsel %vm1487, %v2997, 0
        %v3446 = vsel %vm1487, %v2998, 0
        %v3449 = vsel %vm1487, %v2999, 0
        %3451 = vmatprep.subr.bf16.mxu0 0
        %3452 = vmatpush1.bf16.msra.mxu0 %v3423
        %3453 = vmatprep.subr.bf16.mxu0 0
        %3454 = vmatpush1.bf16.msra.mxu0 %v3424
        %3455 = vmatprep.subr.bf16.mxu0 0
        %3456 = vmatpush1.bf16.msra.mxu0 0
        %3457 = vmatprep.subr.bf16.mxu0 0
        %3458 = vmatpush1.bf16.msra.mxu0 0
        %3459 = vmatprep.subr.bf16.mxu0 0
        %3460 = vmatpush1.bf16.msra.mxu0 0
        %3461 = vmatprep.subr.bf16.mxu0 0
        %3462 = vmatpush1.bf16.msra.mxu0 0
        %3463 = vmatprep.subr.bf16.mxu0 0
        %3464 = vmatpush1.bf16.msra.mxu0 0
        %3465 = vmatprep.subr.bf16.mxu0 0
        %3466 = vmatpush1.bf16.msra.mxu0 0
        %3467 = vmatprep.subr.bf16.mxu0 0
        %3468 = vmatpush1.bf16.msra.mxu0 0
        %3469 = vmatprep.subr.bf16.mxu0 0
        %3470 = vmatpush1.bf16.msra.mxu0 0
        %3471 = vmatprep.subr.bf16.mxu0 0
        %3472 = vmatpush1.bf16.msra.mxu0 0
        %3473 = vmatprep.subr.bf16.mxu0 0
        %3474 = vmatpush1.bf16.msra.mxu0 0
        %3475 = vmatprep.subr.bf16.mxu0 0
        %3476 = vmatpush1.bf16.msra.mxu0 0
        %3477 = vmatprep.subr.bf16.mxu0 0
        %3478 = vmatpush1.bf16.msra.mxu0 0
        %3479 = vmatprep.subr.bf16.mxu0 0
        %3480 = vmatpush1.bf16.msra.mxu0 0
        %3481 = vmatprep.subr.bf16.mxu0 0
        %3482 = vmatpush1.bf16.msra.mxu0 0
        %3483 = vmatprep.mubr.bf16.mxu0 0
        %3484 = vmatmul.mubr.bf16.gmra.mrb[0].mxu0 %v3428
        %v3485 = vpop.f32.mrb[0].mxu0
        %v3486 = vadd.f32 0.0, %v3485
        %v3487 = vpop.f32.mrb[0].mxu0
        %v3488 = vpop.f32.mrb[0].mxu0
        %v3489 = vadd.f32 0.0, %v3488
        %v3490 = vpop.f32.mrb[0].mxu0
        %3491 = vmatprep.mubr.bf16.mxu0 0
        %3492 = vmatmul.mubr.bf16.gmra.mrb[0].mxu0 %v3431
        %v3493 = vpop.f32.mrb[0].mxu0
        %v3494 = vadd.f32 0.0, %v3493
        %v3495 = vpop.f32.mrb[0].mxu0
        %v3496 = vpop.f32.mrb[0].mxu0
        %v3497 = vadd.f32 0.0, %v3496
        %v3498 = vpop.f32.mrb[0].mxu0
        %3499 = vmatprep.mubr.bf16.mxu0 0
        %3500 = vmatmul.mubr.bf16.gmra.mrb[0].mxu0 %v3434
        %v3501 = vpop.f32.mrb[0].mxu0
        %v3502 = vadd.f32 0.0, %v3501
        %v3503 = vpop.f32.mrb[0].mxu0
        %v3504 = vpop.f32.mrb[0].mxu0
        %v3505 = vadd.f32 0.0, %v3504
        %v3506 = vpop.f32.mrb[0].mxu0
        %3507 = vmatprep.mubr.bf16.mxu0 0
        %3508 = vmatmul.mubr.bf16.gmra.mrb[0].mxu0 %v3437
        %v3509 = vpop.f32.mrb[0].mxu0
        %v3510 = vadd.f32 0.0, %v3509
        %v3511 = vpop.f32.mrb[0].mxu0
        %v3512 = vpop.f32.mrb[0].mxu0
        %v3513 = vadd.f32 0.0, %v3512
        %v3514 = vpop.f32.mrb[0].mxu0
        %3515 = vmatprep.mubr.bf16.mxu0 0
        %3516 = vmatmul.mubr.bf16.gmra.mrb[0].mxu0 %v3440
        %v3517 = vpop.f32.mrb[0].mxu0
        %v3518 = vadd.f32 0.0, %v3517
        %v3519 = vpop.f32.mrb[0].mxu0
        %v3520 = vpop.f32.mrb[0].mxu0
        %v3521 = vadd.f32 0.0, %v3520
        %v3522 = vpop.f32.mrb[0].mxu0
        %3523 = vmatprep.mubr.bf16.mxu0 0
        %3524 = vmatmul.mubr.bf16.gmra.mrb[0].mxu0 %v3443
        %v3525 = vpop.f32.mrb[0].mxu0
        %v3526 = vadd.f32 0.0, %v3525
        %v3527 = vpop.f32.mrb[0].mxu0
        %v3528 = vpop.f32.mrb[0].mxu0
        %v3529 = vadd.f32 0.0, %v3528
        %v3530 = vpop.f32.mrb[0].mxu0
        %3531 = vmatprep.mubr.bf16.mxu0 0
        %3532 = vmatmul.mubr.bf16.gmra.mrb[0].mxu0 %v3446
        %v3533 = vpop.f32.mrb[0].mxu0
        %v3534 = vadd.f32 0.0, %v3533
        %v3535 = vpop.f32.mrb[0].mxu0
        %v3536 = vpop.f32.mrb[0].mxu0
        %v3537 = vadd.f32 0.0, %v3536
        %v3538 = vpop.f32.mrb[0].mxu0
        %3539 = vmatprep.mubr.bf16.mxu0 0
        %3540 = vmatmul.mubr.bf16.gmra.mrb[0].mxu0 %v3449
        %v3541 = vpop.f32.mrb[0].mxu0
        %v3542 = vadd.f32 0.0, %v3541
        %v3543 = vpop.f32.mrb[0].mxu0
        %v3544 = vpop.f32.mrb[0].mxu0
        %v3545 = vadd.f32 0.0, %v3544
        %v3546 = vpop.f32.mrb[0].mxu0
        %3547 = vdwg.mxu0
        %v3548 = vadd.f32 %v3087, %v3220
        %v3549 = vadd.f32 %v3548, %v3353
        %v3550 = vadd.f32 %v3549, %v3486
        %v3551 = vadd.f32 %v3090, %v3223
        %v3552 = vadd.f32 %v3551, %v3356
        %v3553 = vadd.f32 %v3552, %v3489
        %v3554 = vadd.f32 %v3095, %v3228
        %v3555 = vadd.f32 %v3554, %v3361
        %v3556 = vadd.f32 %v3555, %v3494
        %v3557 = vadd.f32 %v3098, %v3231
        %v3558 = vadd.f32 %v3557, %v3364
        %v3559 = vadd.f32 %v3558, %v3497
        %v3560 = vadd.f32 %v3103, %v3236
        %v3561 = vadd.f32 %v3560, %v3369
        %v3562 = vadd.f32 %v3561, %v3502
        %v3563 = vadd.f32 %v3106, %v3239
        %v3564 = vadd.f32 %v3563, %v3372
        %v3565 = vadd.f32 %v3564, %v3505
        %v3566 = vadd.f32 %v3111, %v3244
        %v3567 = vadd.f32 %v3566, %v3377
        %v3568 = vadd.f32 %v3567, %v3510
        %v3569 = vadd.f32 %v3114, %v3247
        %v3570 = vadd.f32 %v3569, %v3380
        %v3571 = vadd.f32 %v3570, %v3513
        %v3572 = vadd.f32 %v3119, %v3252
        %v3573 = vadd.f32 %v3572, %v3385
        %v3574 = vadd.f32 %v3573, %v3518
        %v3575 = vadd.f32 %v3122, %v3255
        %v3576 = vadd.f32 %v3575, %v3388
        %v3577 = vadd.f32 %v3576, %v3521
        %v3578 = vadd.f32 %v3127, %v3260
        %v3579 = vadd.f32 %v3578, %v3393
        %v3580 = vadd.f32 %v3579, %v3526
        %v3581 = vadd.f32 %v3130, %v3263
        %v3582 = vadd.f32 %v3581, %v3396
        %v3583 = vadd.f32 %v3582, %v3529
        %v3584 = vadd.f32 %v3135, %v3268
        %v3585 = vadd.f32 %v3584, %v3401
        %v3586 = vadd.f32 %v3585, %v3534
        %v3587 = vadd.f32 %v3138, %v3271
        %v3588 = vadd.f32 %v3587, %v3404
        %v3589 = vadd.f32 %v3588, %v3537
        %v3590 = vadd.f32 %v3143, %v3276
        %v3591 = vadd.f32 %v3590, %v3409
        %v3592 = vadd.f32 %v3591, %v3542
        %v3593 = vadd.f32 %v3146, %v3279
        %v3594 = vadd.f32 %v3593, %v3412
        %v3595 = vadd.f32 %v3594, %v3545
        %v3596 = vld [vmem:[%s6] sm:$0x1]
        %v3598 = vlaneseq
        %v3599 = vshrl.u32 %v3598, 7
        %v3600 = vsub.s32 0, %v3599
        %v3601 = vrot.slane %v3596, %v3600
        %v3603 = vadd.f32 %v3550, %v3601
        %v3604 = vadd.f32 %v3553, %v3601
        %v3605 = vadd.f32 %v3556, %v3601
        %v3606 = vadd.f32 %v3559, %v3601
        %v3607 = vadd.f32 %v3562, %v3601
        %v3608 = vadd.f32 %v3565, %v3601
        %v3609 = vadd.f32 %v3568, %v3601
        %v3610 = vadd.f32 %v3571, %v3601
        %v3611 = vadd.f32 %v3574, %v3601
        %v3612 = vadd.f32 %v3577, %v3601
        %v3613 = vadd.f32 %v3580, %v3601
        %v3614 = vadd.f32 %v3583, %v3601
        %v3615 = vadd.f32 %v3586, %v3601
        %v3616 = vadd.f32 %v3589, %v3601
        %v3617 = vadd.f32 %v3592, %v3601
        %v3618 = vadd.f32 %v3595, %v3601
        %v3619 = vadd.f32 %v518, %v3603
        %v3620 = vadd.f32 %v519, %v3604
        %v3621 = vadd.f32 %v520, %v3605
        %v3622 = vadd.f32 %v521, %v3606
        %v3623 = vadd.f32 %v522, %v3607
        %v3624 = vadd.f32 %v523, %v3608
        %v3625 = vadd.f32 %v524, %v3609
        %v3626 = vadd.f32 %v525, %v3610
        %v3627 = vadd.f32 %v526, %v3611
        %v3628 = vadd.f32 %v527, %v3612
        %v3629 = vadd.f32 %v528, %v3613
        %v3630 = vadd.f32 %v529, %v3614
        %v3631 = vadd.f32 %v530, %v3615
        %v3632 = vadd.f32 %v531, %v3616
        %v3633 = vadd.f32 %v532, %v3617
        %v3634 = vadd.f32 %v533, %v3618
        %v3635 = vld [vmem:[%s7] sm:$0x1]
        %v3636 = vld [vmem:[%s8] sm:$0x1]
        %3637 = vadd.xlane.f32.xlu0 %v3619
        %v3638 = vpop.xlane.xlu0 %3637
        %3639 = vadd.xlane.f32.xlu0 %v3620
        %v3640 = vpop.xlane.xlu0 %3639
        %3641 = vadd.xlane.f32.xlu0 %v3621
        %v3642 = vpop.xlane.xlu0 %3641
        %3643 = vadd.xlane.f32.xlu0 %v3622
        %v3644 = vpop.xlane.xlu0 %3643
        %3645 = vadd.xlane.f32.xlu0 %v3623
        %v3646 = vpop.xlane.xlu0 %3645
        %3647 = vadd.xlane.f32.xlu0 %v3624
        %v3648 = vpop.xlane.xlu0 %3647
        %3649 = vadd.xlane.f32.xlu0 %v3625
        %v3650 = vpop.xlane.xlu0 %3649
        %3651 = vadd.xlane.f32.xlu0 %v3626
        %v3652 = vpop.xlane.xlu0 %3651
        %3653 = vadd.xlane.f32.xlu0 %v3627
        %v3654 = vpop.xlane.xlu0 %3653
        %3655 = vadd.xlane.f32.xlu0 %v3628
        %v3656 = vpop.xlane.xlu0 %3655
        %3657 = vadd.xlane.f32.xlu0 %v3629
        %v3658 = vpop.xlane.xlu0 %3657
        %3659 = vadd.xlane.f32.xlu0 %v3630
        %v3660 = vpop.xlane.xlu0 %3659
        %3661 = vadd.xlane.f32.xlu0 %v3631
        %v3662 = vpop.xlane.xlu0 %3661
        %3663 = vadd.xlane.f32.xlu0 %v3632
        %v3664 = vpop.xlane.xlu0 %3663
        %3665 = vadd.xlane.f32.xlu0 %v3633
        %v3666 = vpop.xlane.xlu0 %3665
        %3667 = vadd.xlane.f32.xlu0 %v3634
        %v3668 = vpop.xlane.xlu0 %3667
        %v3669 = vmul.f32 %v3638, 0.0078125
        %v3670 = vmul.f32 %v3640, 0.0078125
        %v3671 = vmul.f32 %v3642, 0.0078125
        %v3672 = vmul.f32 %v3644, 0.0078125
        %v3673 = vmul.f32 %v3646, 0.0078125
        %v3674 = vmul.f32 %v3648, 0.0078125
        %v3675 = vmul.f32 %v3650, 0.0078125
        %v3676 = vmul.f32 %v3652, 0.0078125
        %v3677 = vmul.f32 %v3654, 0.0078125
        %v3678 = vmul.f32 %v3656, 0.0078125
        %v3679 = vmul.f32 %v3658, 0.0078125
        %v3680 = vmul.f32 %v3660, 0.0078125
        %v3681 = vmul.f32 %v3662, 0.0078125
        %v3682 = vmul.f32 %v3664, 0.0078125
        %v3683 = vmul.f32 %v3666, 0.0078125
        %v3684 = vmul.f32 %v3668, 0.0078125
        %v3685 = vsub.f32 %v3619, %v3669
        %v3686 = vsub.f32 %v3620, %v3670
        %v3687 = vsub.f32 %v3621, %v3671
        %v3688 = vsub.f32 %v3622, %v3672
        %v3689 = vsub.f32 %v3623, %v3673
        %v3690 = vsub.f32 %v3624, %v3674
        %v3691 = vsub.f32 %v3625, %v3675
        %v3692 = vsub.f32 %v3626, %v3676
        %v3693 = vsub.f32 %v3627, %v3677
        %v3694 = vsub.f32 %v3628, %v3678
        %v3695 = vsub.f32 %v3629, %v3679
        %v3696 = vsub.f32 %v3630, %v3680
        %v3697 = vsub.f32 %v3631, %v3681
        %v3698 = vsub.f32 %v3632, %v3682
        %v3699 = vsub.f32 %v3633, %v3683
        %v3700 = vsub.f32 %v3634, %v3684
        %v3701 = vmul.f32 %v3685, %v3685
        %v3702 = vmul.f32 %v3686, %v3686
        %v3703 = vmul.f32 %v3687, %v3687
        %v3704 = vmul.f32 %v3688, %v3688
        %v3705 = vmul.f32 %v3689, %v3689
        %v3706 = vmul.f32 %v3690, %v3690
        %v3707 = vmul.f32 %v3691, %v3691
        %v3708 = vmul.f32 %v3692, %v3692
        %v3709 = vmul.f32 %v3693, %v3693
        %v3710 = vmul.f32 %v3694, %v3694
        %v3711 = vmul.f32 %v3695, %v3695
        %v3712 = vmul.f32 %v3696, %v3696
        %v3713 = vmul.f32 %v3697, %v3697
        %v3714 = vmul.f32 %v3698, %v3698
        %v3715 = vmul.f32 %v3699, %v3699
        %v3716 = vmul.f32 %v3700, %v3700
        %3717 = vadd.xlane.f32.xlu0 %v3701
        %v3718 = vpop.xlane.xlu0 %3717
        %3719 = vadd.xlane.f32.xlu0 %v3702
        %v3720 = vpop.xlane.xlu0 %3719
        %3721 = vadd.xlane.f32.xlu0 %v3703
        %v3722 = vpop.xlane.xlu0 %3721
        %3723 = vadd.xlane.f32.xlu0 %v3704
        %v3724 = vpop.xlane.xlu0 %3723
        %3725 = vadd.xlane.f32.xlu0 %v3705
        %v3726 = vpop.xlane.xlu0 %3725
        %3727 = vadd.xlane.f32.xlu0 %v3706
        %v3728 = vpop.xlane.xlu0 %3727
        %3729 = vadd.xlane.f32.xlu0 %v3707
        %v3730 = vpop.xlane.xlu0 %3729
        %3731 = vadd.xlane.f32.xlu0 %v3708
        %v3732 = vpop.xlane.xlu0 %3731
        %3733 = vadd.xlane.f32.xlu0 %v3709
        %v3734 = vpop.xlane.xlu0 %3733
        %3735 = vadd.xlane.f32.xlu0 %v3710
        %v3736 = vpop.xlane.xlu0 %3735
        %3737 = vadd.xlane.f32.xlu0 %v3711
        %v3738 = vpop.xlane.xlu0 %3737
        %3739 = vadd.xlane.f32.xlu0 %v3712
        %v3740 = vpop.xlane.xlu0 %3739
        %3741 = vadd.xlane.f32.xlu0 %v3713
        %v3742 = vpop.xlane.xlu0 %3741
        %3743 = vadd.xlane.f32.xlu0 %v3714
        %v3744 = vpop.xlane.xlu0 %3743
        %3745 = vadd.xlane.f32.xlu0 %v3715
        %v3746 = vpop.xlane.xlu0 %3745
        %3747 = vadd.xlane.f32.xlu0 %v3716
        %v3748 = vpop.xlane.xlu0 %3747
        %v3749 = vmul.f32 %v3718, 0.0078125
        %v3750 = vmul.f32 %v3720, 0.0078125
        %v3751 = vmul.f32 %v3722, 0.0078125
        %v3752 = vmul.f32 %v3724, 0.0078125
        %v3753 = vmul.f32 %v3726, 0.0078125
        %v3754 = vmul.f32 %v3728, 0.0078125
        %v3755 = vmul.f32 %v3730, 0.0078125
        %v3756 = vmul.f32 %v3732, 0.0078125
        %v3757 = vmul.f32 %v3734, 0.0078125
        %v3758 = vmul.f32 %v3736, 0.0078125
        %v3759 = vmul.f32 %v3738, 0.0078125
        %v3760 = vmul.f32 %v3740, 0.0078125
        %v3761 = vmul.f32 %v3742, 0.0078125
        %v3762 = vmul.f32 %v3744, 0.0078125
        %v3763 = vmul.f32 %v3746, 0.0078125
        %v3764 = vmul.f32 %v3748, 0.0078125
        %v3765 = vadd.f32 %v3749, 1e-05
        %v3766 = vadd.f32 %v3750, 1e-05
        %v3767 = vadd.f32 %v3751, 1e-05
        %v3768 = vadd.f32 %v3752, 1e-05
        %v3769 = vadd.f32 %v3753, 1e-05
        %v3770 = vadd.f32 %v3754, 1e-05
        %v3771 = vadd.f32 %v3755, 1e-05
        %v3772 = vadd.f32 %v3756, 1e-05
        %v3773 = vadd.f32 %v3757, 1e-05
        %v3774 = vadd.f32 %v3758, 1e-05
        %v3775 = vadd.f32 %v3759, 1e-05
        %v3776 = vadd.f32 %v3760, 1e-05
        %v3777 = vadd.f32 %v3761, 1e-05
        %v3778 = vadd.f32 %v3762, 1e-05
        %v3779 = vadd.f32 %v3763, 1e-05
        %v3780 = vadd.f32 %v3764, 1e-05
        %v3781 = vrsqrt.pop %v3765
        %v3782 = vrsqrt.pop %v3766
        %v3783 = vrsqrt.pop %v3767
        %v3784 = vrsqrt.pop %v3768
        %v3785 = vrsqrt.pop %v3769
        %v3786 = vrsqrt.pop %v3770
        %v3787 = vrsqrt.pop %v3771
        %v3788 = vrsqrt.pop %v3772
        %v3789 = vrsqrt.pop %v3773
        %v3790 = vrsqrt.pop %v3774
        %v3791 = vrsqrt.pop %v3775
        %v3792 = vrsqrt.pop %v3776
        %v3793 = vrsqrt.pop %v3777
        %v3794 = vrsqrt.pop %v3778
        %v3795 = vrsqrt.pop %v3779
        %v3796 = vrsqrt.pop %v3780
        %v3797 = vmul.f32 %v3685, %v3781
        %v3798 = vmul.f32 %v3686, %v3782
        %v3799 = vmul.f32 %v3687, %v3783
        %v3800 = vmul.f32 %v3688, %v3784
        %v3801 = vmul.f32 %v3689, %v3785
        %v3802 = vmul.f32 %v3690, %v3786
        %v3803 = vmul.f32 %v3691, %v3787
        %v3804 = vmul.f32 %v3692, %v3788
        %v3805 = vmul.f32 %v3693, %v3789
        %v3806 = vmul.f32 %v3694, %v3790
        %v3807 = vmul.f32 %v3695, %v3791
        %v3808 = vmul.f32 %v3696, %v3792
        %v3809 = vmul.f32 %v3697, %v3793
        %v3810 = vmul.f32 %v3698, %v3794
        %v3811 = vmul.f32 %v3699, %v3795
        %v3812 = vmul.f32 %v3700, %v3796
        %v3814 = vlaneseq
        %v3815 = vshrl.u32 %v3814, 7
        %v3816 = vsub.s32 0, %v3815
        %v3817 = vrot.slane %v3635, %v3816
        %v3819 = vmul.f32 %v3797, %v3817
        %v3820 = vmul.f32 %v3798, %v3817
        %v3821 = vmul.f32 %v3799, %v3817
        %v3822 = vmul.f32 %v3800, %v3817
        %v3823 = vmul.f32 %v3801, %v3817
        %v3824 = vmul.f32 %v3802, %v3817
        %v3825 = vmul.f32 %v3803, %v3817
        %v3826 = vmul.f32 %v3804, %v3817
        %v3827 = vmul.f32 %v3805, %v3817
        %v3828 = vmul.f32 %v3806, %v3817
        %v3829 = vmul.f32 %v3807, %v3817
        %v3830 = vmul.f32 %v3808, %v3817
        %v3831 = vmul.f32 %v3809, %v3817
        %v3832 = vmul.f32 %v3810, %v3817
        %v3833 = vmul.f32 %v3811, %v3817
        %v3834 = vmul.f32 %v3812, %v3817
        %v3836 = vlaneseq
        %v3837 = vshrl.u32 %v3836, 7
        %v3838 = vsub.s32 0, %v3837
        %v3839 = vrot.slane %v3636, %v3838
        %v3841 = vadd.f32 %v3819, %v3839
        %v3842 = vadd.f32 %v3820, %v3839
        %v3843 = vadd.f32 %v3821, %v3839
        %v3844 = vadd.f32 %v3822, %v3839
        %v3845 = vadd.f32 %v3823, %v3839
        %v3846 = vadd.f32 %v3824, %v3839
        %v3847 = vadd.f32 %v3825, %v3839
        %v3848 = vadd.f32 %v3826, %v3839
        %v3849 = vadd.f32 %v3827, %v3839
        %v3850 = vadd.f32 %v3828, %v3839
        %v3851 = vadd.f32 %v3829, %v3839
        %v3852 = vadd.f32 %v3830, %v3839
        %v3853 = vadd.f32 %v3831, %v3839
        %v3854 = vadd.f32 %v3832, %v3839
        %v3855 = vadd.f32 %v3833, %v3839
        %v3856 = vadd.f32 %v3834, %v3839
        %v3857 = vpack.c.bf16 %v3842, %v3841
        %v3858 = vpack.c.bf16 %v3844, %v3843
        %v3859 = vpack.c.bf16 %v3846, %v3845
        %v3860 = vpack.c.bf16 %v3848, %v3847
        %v3861 = vpack.c.bf16 %v3850, %v3849
        %v3862 = vpack.c.bf16 %v3852, %v3851
        %v3863 = vpack.c.bf16 %v3854, %v3853
        %v3864 = vpack.c.bf16 %v3856, %v3855
        %v3865 = vld [vmem:[#allocation8] sm:$0xff]
        %v3866 = vld [vmem:[#allocation8 + $0x8] sm:$0xff]
        %v3867 = vld [vmem:[#allocation8 + $0x10] sm:$0xff]
        %v3868 = vld [vmem:[#allocation8 + $0x18] sm:$0xff]
        %v3869 = vld [vmem:[#allocation8 + $0x20] sm:$0xff]
        %v3870 = vld [vmem:[#allocation8 + $0x28] sm:$0xff]
        %v3871 = vld [vmem:[#allocation8 + $0x30] sm:$0xff]
        %v3872 = vld [vmem:[#allocation8 + $0x38] sm:$0xff]
        %v3873 = vld [vmem:[#allocation8 + $0x40] sm:$0xff]
        %v3874 = vld [vmem:[#allocation8 + $0x48] sm:$0xff]
        %v3875 = vld [vmem:[#allocation8 + $0x50] sm:$0xff]
        %v3876 = vld [vmem:[#allocation8 + $0x58] sm:$0xff]
        %v3877 = vld [vmem:[#allocation8 + $0x60] sm:$0xff]
        %v3878 = vld [vmem:[#allocation8 + $0x68] sm:$0xff]
        %v3879 = vld [vmem:[#allocation8 + $0x70] sm:$0xff]
        %v3880 = vld [vmem:[#allocation8 + $0x78] sm:$0xff]
        %v3881 = vld [vmem:[%s10] sm:$0x3]
        %v3883 = vlaneseq
        %v3884 = vshrl.u32 %v3883, 7
        %v3885 = vsub.s32 0, %v3884
        %v3886 = vrot.slane %v3881, %v3885
        %v3887 = vlaneseq
        %v3888 = vshrl.u32 %v3887, 7
        %v3889 = vsub.s32 1, %v3888
        %v3890 = vrot.slane %v3881, %v3889
        %v3909 = vunpack.c.l.b16 %v3865
        %v3910 = vunpack.c.h.b16 %v3865
        %v3911 = vunpack.c.l.b16 %v3866
        %v3912 = vunpack.c.h.b16 %v3866
        %v3913 = vunpack.c.l.b16 %v3867
        %v3914 = vunpack.c.h.b16 %v3867
        %v3915 = vunpack.c.l.b16 %v3868
        %v3916 = vunpack.c.h.b16 %v3868
        %v3917 = vunpack.c.l.b16 %v3869
        %v3918 = vunpack.c.h.b16 %v3869
        %v3919 = vunpack.c.l.b16 %v3870
        %v3920 = vunpack.c.h.b16 %v3870
        %v3921 = vunpack.c.l.b16 %v3871
        %v3922 = vunpack.c.h.b16 %v3871
        %v3923 = vunpack.c.l.b16 %v3872
        %v3924 = vunpack.c.h.b16 %v3872
        %v3925 = vunpack.c.l.b16 %v3873
        %v3926 = vunpack.c.h.b16 %v3873
        %v3927 = vunpack.c.l.b16 %v3874
        %v3928 = vunpack.c.h.b16 %v3874
        %v3929 = vunpack.c.l.b16 %v3875
        %v3930 = vunpack.c.h.b16 %v3875
        %v3931 = vunpack.c.l.b16 %v3876
        %v3932 = vunpack.c.h.b16 %v3876
        %v3933 = vunpack.c.l.b16 %v3877
        %v3934 = vunpack.c.h.b16 %v3877
        %v3935 = vunpack.c.l.b16 %v3878
        %v3936 = vunpack.c.h.b16 %v3878
        %v3937 = vunpack.c.l.b16 %v3879
        %v3938 = vunpack.c.h.b16 %v3879
        %v3939 = vunpack.c.l.b16 %v3880
        %v3940 = vunpack.c.h.b16 %v3880
        %v3941 = vpack.c.b16 %v3911, %v3909
        %v3942 = vpack.c.b16 %v3912, %v3910
        %v3943 = vpack.c.b16 %v3915, %v3913
        %v3944 = vpack.c.b16 %v3916, %v3914
        %v3945 = vpack.c.b16 %v3919, %v3917
        %v3946 = vpack.c.b16 %v3920, %v3918
        %v3947 = vpack.c.b16 %v3923, %v3921
        %v3948 = vpack.c.b16 %v3924, %v3922
        %v3949 = vpack.c.b16 %v3927, %v3925
        %v3950 = vpack.c.b16 %v3928, %v3926
        %v3951 = vpack.c.b16 %v3931, %v3929
        %v3952 = vpack.c.b16 %v3932, %v3930
        %v3953 = vpack.c.b16 %v3935, %v3933
        %v3954 = vpack.c.b16 %v3936, %v3934
        %v3955 = vpack.c.b16 %v3939, %v3937
        %v3956 = vpack.c.b16 %v3940, %v3938
        %3973 = vmatprep.subr.bf16.mxu0 %v3942
        %3974 = vmatpush1.bf16.msra.mxu0 %v3941
        %3975 = vmatprep.subr.bf16.mxu0 %v3944
        %3976 = vmatpush1.bf16.msra.mxu0 %v3943
        %3977 = vmatprep.subr.bf16.mxu0 %v3946
        %3978 = vmatpush1.bf16.msra.mxu0 %v3945
        %3979 = vmatprep.subr.bf16.mxu0 %v3948
        %3980 = vmatpush1.bf16.msra.mxu0 %v3947
        %3981 = vmatprep.subr.bf16.mxu0 %v3950
        %3982 = vmatpush1.bf16.msra.mxu0 %v3949
        %3983 = vmatprep.subr.bf16.mxu0 %v3952
        %3984 = vmatpush1.bf16.msra.mxu0 %v3951
        %3985 = vmatprep.subr.bf16.mxu0 %v3954
        %3986 = vmatpush1.bf16.msra.mxu0 %v3953
        %3987 = vmatprep.subr.bf16.mxu0 %v3956
        %3988 = vmatpush1.bf16.msra.mxu0 %v3955
        %3989 = vmatprep.subr.bf16.mxu0 0
        %3990 = vmatpush1.bf16.msra.mxu0 0
        %3991 = vmatprep.subr.bf16.mxu0 0
        %3992 = vmatpush1.bf16.msra.mxu0 0
        %3993 = vmatprep.subr.bf16.mxu0 0
        %3994 = vmatpush1.bf16.msra.mxu0 0
        %3995 = vmatprep.subr.bf16.mxu0 0
        %3996 = vmatpush1.bf16.msra.mxu0 0
        %3997 = vmatprep.subr.bf16.mxu0 0
        %3998 = vmatpush1.bf16.msra.mxu0 0
        %3999 = vmatprep.subr.bf16.mxu0 0
        %4000 = vmatpush1.bf16.msra.mxu0 0
        %4001 = vmatprep.subr.bf16.mxu0 0
        %4002 = vmatpush1.bf16.msra.mxu0 0
        %4003 = vmatprep.subr.bf16.mxu0 0
        %4004 = vmatpush1.bf16.msra.mxu0 0
        %4005 = vmatprep.mubr.bf16.mxu0 0
        %4006 = vmatmul.mubr.bf16.gmra.mrb[0].mxu0 %v3857
        %v4007 = vpop.f32.mrb[0].mxu0
        %v4008 = vadd.f32 %v3886, %v4007
        %v4009 = vpop.f32.mrb[0].mxu0
        %v4010 = vadd.f32 %v3890, %v4009
        %v4011 = vpop.f32.mrb[0].mxu0
        %v4012 = vadd.f32 %v3886, %v4011
        %v4013 = vpop.f32.mrb[0].mxu0
        %v4014 = vadd.f32 %v3890, %v4013
        %4015 = vmatprep.mubr.bf16.mxu0 0
        %4016 = vmatmul.mubr.bf16.gmra.mrb[0].mxu0 %v3858
        %v4017 = vpop.f32.mrb[0].mxu0
        %v4018 = vadd.f32 %v3886, %v4017
        %v4019 = vpop.f32.mrb[0].mxu0
        %v4020 = vadd.f32 %v3890, %v4019
        %v4021 = vpop.f32.mrb[0].mxu0
        %v4022 = vadd.f32 %v3886, %v4021
        %v4023 = vpop.f32.mrb[0].mxu0
        %v4024 = vadd.f32 %v3890, %v4023
        %4025 = vmatprep.mubr.bf16.mxu0 0
        %4026 = vmatmul.mubr.bf16.gmra.mrb[0].mxu0 %v3859
        %v4027 = vpop.f32.mrb[0].mxu0
        %v4028 = vadd.f32 %v3886, %v4027
        %v4029 = vpop.f32.mrb[0].mxu0
        %v4030 = vadd.f32 %v3890, %v4029
        %v4031 = vpop.f32.mrb[0].mxu0
        %v4032 = vadd.f32 %v3886, %v4031
        %v4033 = vpop.f32.mrb[0].mxu0
        %v4034 = vadd.f32 %v3890, %v4033
        %4035 = vmatprep.mubr.bf16.mxu0 0
        %4036 = vmatmul.mubr.bf16.gmra.mrb[0].mxu0 %v3860
        %v4037 = vpop.f32.mrb[0].mxu0
        %v4038 = vadd.f32 %v3886, %v4037
        %v4039 = vpop.f32.mrb[0].mxu0
        %v4040 = vadd.f32 %v3890, %v4039
        %v4041 = vpop.f32.mrb[0].mxu0
        %v4042 = vadd.f32 %v3886, %v4041
        %v4043 = vpop.f32.mrb[0].mxu0
        %v4044 = vadd.f32 %v3890, %v4043
        %4045 = vmatprep.mubr.bf16.mxu0 0
        %4046 = vmatmul.mubr.bf16.gmra.mrb[0].mxu0 %v3861
        %v4047 = vpop.f32.mrb[0].mxu0
        %v4048 = vadd.f32 %v3886, %v4047
        %v4049 = vpop.f32.mrb[0].mxu0
        %v4050 = vadd.f32 %v3890, %v4049
        %v4051 = vpop.f32.mrb[0].mxu0
        %v4052 = vadd.f32 %v3886, %v4051
        %v4053 = vpop.f32.mrb[0].mxu0
        %v4054 = vadd.f32 %v3890, %v4053
        %4055 = vmatprep.mubr.bf16.mxu0 0
        %4056 = vmatmul.mubr.bf16.gmra.mrb[0].mxu0 %v3862
        %v4057 = vpop.f32.mrb[0].mxu0
        %v4058 = vadd.f32 %v3886, %v4057
        %v4059 = vpop.f32.mrb[0].mxu0
        %v4060 = vadd.f32 %v3890, %v4059
        %v4061 = vpop.f32.mrb[0].mxu0
        %v4062 = vadd.f32 %v3886, %v4061
        %v4063 = vpop.f32.mrb[0].mxu0
        %v4064 = vadd.f32 %v3890, %v4063
        %4065 = vmatprep.mubr.bf16.mxu0 0
        %4066 = vmatmul.mubr.bf16.gmra.mrb[0].mxu0 %v3863
        %v4067 = vpop.f32.mrb[0].mxu0
        %v4068 = vadd.f32 %v3886, %v4067
        %v4069 = vpop.f32.mrb[0].mxu0
        %v4070 = vadd.f32 %v3890, %v4069
        %v4071 = vpop.f32.mrb[0].mxu0
        %v4072 = vadd.f32 %v3886, %v4071
        %v4073 = vpop.f32.mrb[0].mxu0
        %v4074 = vadd.f32 %v3890, %v4073
        %4075 = vmatprep.mubr.bf16.mxu0 0
        %4076 = vmatmul.mubr.bf16.gmra.mrb[0].mxu0 %v3864
        %v4077 = vpop.f32.mrb[0].mxu0
        %v4078 = vadd.f32 %v3886, %v4077
        %v4079 = vpop.f32.mrb[0].mxu0
        %v4080 = vadd.f32 %v3890, %v4079
        %v4081 = vpop.f32.mrb[0].mxu0
        %v4082 = vadd.f32 %v3886, %v4081
        %v4083 = vpop.f32.mrb[0].mxu0
        %v4084 = vadd.f32 %v3890, %v4083
        %4085 = vdwg.mxu0
        %v4086 = vmax.f32 %v4008, 0.0
        %v4087 = vmax.f32 %v4010, 0.0
        %v4088 = vmax.f32 %v4012, 0.0
        %v4089 = vmax.f32 %v4014, 0.0
        %v4090 = vmax.f32 %v4018, 0.0
        %v4091 = vmax.f32 %v4020, 0.0
        %v4092 = vmax.f32 %v4022, 0.0
        %v4093 = vmax.f32 %v4024, 0.0
        %v4094 = vmax.f32 %v4028, 0.0
        %v4095 = vmax.f32 %v4030, 0.0
        %v4096 = vmax.f32 %v4032, 0.0
        %v4097 = vmax.f32 %v4034, 0.0
        %v4098 = vmax.f32 %v4038, 0.0
        %v4099 = vmax.f32 %v4040, 0.0
        %v4100 = vmax.f32 %v4042, 0.0
        %v4101 = vmax.f32 %v4044, 0.0
        %v4102 = vmax.f32 %v4048, 0.0
        %v4103 = vmax.f32 %v4050, 0.0
        %v4104 = vmax.f32 %v4052, 0.0
        %v4105 = vmax.f32 %v4054, 0.0
        %v4106 = vmax.f32 %v4058, 0.0
        %v4107 = vmax.f32 %v4060, 0.0
        %v4108 = vmax.f32 %v4062, 0.0
        %v4109 = vmax.f32 %v4064, 0.0
        %v4110 = vmax.f32 %v4068, 0.0
        %v4111 = vmax.f32 %v4070, 0.0
        %v4112 = vmax.f32 %v4072, 0.0
        %v4113 = vmax.f32 %v4074, 0.0
        %v4114 = vmax.f32 %v4078, 0.0
        %v4115 = vmax.f32 %v4080, 0.0
        %v4116 = vmax.f32 %v4082, 0.0
        %v4117 = vmax.f32 %v4084, 0.0
        %v4118 = vpack.c.bf16 %v4088, %v4086
        %v4119 = vpack.c.bf16 %v4089, %v4087
        %v4120 = vpack.c.bf16 %v4092, %v4090
        %v4121 = vpack.c.bf16 %v4093, %v4091
        %v4122 = vpack.c.bf16 %v4096, %v4094
        %v4123 = vpack.c.bf16 %v4097, %v4095
        %v4124 = vpack.c.bf16 %v4100, %v4098
        %v4125 = vpack.c.bf16 %v4101, %v4099
        %v4126 = vpack.c.bf16 %v4104, %v4102
        %v4127 = vpack.c.bf16 %v4105, %v4103
        %v4128 = vpack.c.bf16 %v4108, %v4106
        %v4129 = vpack.c.bf16 %v4109, %v4107
        %v4130 = vpack.c.bf16 %v4112, %v4110
        %v4131 = vpack.c.bf16 %v4113, %v4111
        %v4132 = vpack.c.bf16 %v4116, %v4114
        %v4133 = vpack.c.bf16 %v4117, %v4115
        %v4134 = vld [vmem:[#allocation10] sm:$0xf]
        %v4135 = vld [vmem:[#allocation10 + $0x4] sm:$0xf]
        %v4136 = vld [vmem:[#allocation10 + $0x8] sm:$0xf]
        %v4137 = vld [vmem:[#allocation10 + $0xc] sm:$0xf]
        %v4138 = vld [vmem:[#allocation10 + $0x10] sm:$0xf]
        %v4139 = vld [vmem:[#allocation10 + $0x14] sm:$0xf]
        %v4140 = vld [vmem:[#allocation10 + $0x18] sm:$0xf]
        %v4141 = vld [vmem:[#allocation10 + $0x1c] sm:$0xf]
        %v4142 = vld [vmem:[#allocation10 + $0x20] sm:$0xf]
        %v4143 = vld [vmem:[#allocation10 + $0x24] sm:$0xf]
        %v4144 = vld [vmem:[#allocation10 + $0x28] sm:$0xf]
        %v4145 = vld [vmem:[#allocation10 + $0x2c] sm:$0xf]
        %v4146 = vld [vmem:[#allocation10 + $0x30] sm:$0xf]
        %v4147 = vld [vmem:[#allocation10 + $0x34] sm:$0xf]
        %v4148 = vld [vmem:[#allocation10 + $0x38] sm:$0xf]
        %v4149 = vld [vmem:[#allocation10 + $0x3c] sm:$0xf]
        %v4150 = vld [vmem:[#allocation10 + $0x40] sm:$0xf]
        %v4151 = vld [vmem:[#allocation10 + $0x44] sm:$0xf]
        %v4152 = vld [vmem:[#allocation10 + $0x48] sm:$0xf]
        %v4153 = vld [vmem:[#allocation10 + $0x4c] sm:$0xf]
        %v4154 = vld [vmem:[#allocation10 + $0x50] sm:$0xf]
        %v4155 = vld [vmem:[#allocation10 + $0x54] sm:$0xf]
        %v4156 = vld [vmem:[#allocation10 + $0x58] sm:$0xf]
        %v4157 = vld [vmem:[#allocation10 + $0x5c] sm:$0xf]
        %v4158 = vld [vmem:[#allocation10 + $0x60] sm:$0xf]
        %v4159 = vld [vmem:[#allocation10 + $0x64] sm:$0xf]
        %v4160 = vld [vmem:[#allocation10 + $0x68] sm:$0xf]
        %v4161 = vld [vmem:[#allocation10 + $0x6c] sm:$0xf]
        %v4162 = vld [vmem:[#allocation10 + $0x70] sm:$0xf]
        %v4163 = vld [vmem:[#allocation10 + $0x74] sm:$0xf]
        %v4164 = vld [vmem:[#allocation10 + $0x78] sm:$0xf]
        %v4165 = vld [vmem:[#allocation10 + $0x7c] sm:$0xf]
        %v4166 = vld [vmem:[%s12] sm:$0x1]
        %v4168 = vlaneseq
        %v4169 = vshrl.u32 %v4168, 7
        %v4170 = vsub.s32 0, %v4169
        %v4171 = vrot.slane %v4166, %v4170
        %v4205 = vunpack.c.l.b16 %v4134
        %v4206 = vunpack.c.l.b16 %v4135
        %v4207 = vunpack.c.l.b16 %v4136
        %v4208 = vunpack.c.l.b16 %v4137
        %v4209 = vunpack.c.l.b16 %v4138
        %v4210 = vunpack.c.l.b16 %v4139
        %v4211 = vunpack.c.l.b16 %v4140
        %v4212 = vunpack.c.l.b16 %v4141
        %v4213 = vunpack.c.l.b16 %v4142
        %v4214 = vunpack.c.l.b16 %v4143
        %v4215 = vunpack.c.l.b16 %v4144
        %v4216 = vunpack.c.l.b16 %v4145
        %v4217 = vunpack.c.l.b16 %v4146
        %v4218 = vunpack.c.l.b16 %v4147
        %v4219 = vunpack.c.l.b16 %v4148
        %v4220 = vunpack.c.l.b16 %v4149
        %v4221 = vunpack.c.l.b16 %v4150
        %v4222 = vunpack.c.l.b16 %v4151
        %v4223 = vunpack.c.l.b16 %v4152
        %v4224 = vunpack.c.l.b16 %v4153
        %v4225 = vunpack.c.l.b16 %v4154
        %v4226 = vunpack.c.l.b16 %v4155
        %v4227 = vunpack.c.l.b16 %v4156
        %v4228 = vunpack.c.l.b16 %v4157
        %v4229 = vunpack.c.l.b16 %v4158
        %v4230 = vunpack.c.l.b16 %v4159
        %v4231 = vunpack.c.l.b16 %v4160
        %v4232 = vunpack.c.l.b16 %v4161
        %v4233 = vunpack.c.l.b16 %v4162
        %v4234 = vunpack.c.l.b16 %v4163
        %v4235 = vunpack.c.l.b16 %v4164
        %v4236 = vunpack.c.l.b16 %v4165
        %v4237 = vpack.c.b16 %v4206, %v4205
        %v4238 = vpack.c.b16 %v4208, %v4207
        %v4239 = vpack.c.b16 %v4210, %v4209
        %v4240 = vpack.c.b16 %v4212, %v4211
        %v4241 = vpack.c.b16 %v4214, %v4213
        %v4242 = vpack.c.b16 %v4216, %v4215
        %v4243 = vpack.c.b16 %v4218, %v4217
        %v4244 = vpack.c.b16 %v4220, %v4219
        %v4245 = vpack.c.b16 %v4222, %v4221
        %v4246 = vpack.c.b16 %v4224, %v4223
        %v4247 = vpack.c.b16 %v4226, %v4225
        %v4248 = vpack.c.b16 %v4228, %v4227
        %v4249 = vpack.c.b16 %v4230, %v4229
        %v4250 = vpack.c.b16 %v4232, %v4231
        %v4251 = vpack.c.b16 %v4234, %v4233
        %v4252 = vpack.c.b16 %v4236, %v4235
        %4269 = vmatprep.subr.bf16.mxu0 0
        %4270 = vmatpush1.bf16.msra.mxu0 %v4237
        %4271 = vmatprep.subr.bf16.mxu0 0
        %4272 = vmatpush1.bf16.msra.mxu0 %v4238
        %4273 = vmatprep.subr.bf16.mxu0 0
        %4274 = vmatpush1.bf16.msra.mxu0 %v4239
        %4275 = vmatprep.subr.bf16.mxu0 0
        %4276 = vmatpush1.bf16.msra.mxu0 %v4240
        %4277 = vmatprep.subr.bf16.mxu0 0
        %4278 = vmatpush1.bf16.msra.mxu0 %v4241
        %4279 = vmatprep.subr.bf16.mxu0 0
        %4280 = vmatpush1.bf16.msra.mxu0 %v4242
        %4281 = vmatprep.subr.bf16.mxu0 0
        %4282 = vmatpush1.bf16.msra.mxu0 %v4243
        %4283 = vmatprep.subr.bf16.mxu0 0
        %4284 = vmatpush1.bf16.msra.mxu0 %v4244
        %4285 = vmatprep.subr.bf16.mxu0 0
        %4286 = vmatpush1.bf16.msra.mxu0 %v4245
        %4287 = vmatprep.subr.bf16.mxu0 0
        %4288 = vmatpush1.bf16.msra.mxu0 %v4246
        %4289 = vmatprep.subr.bf16.mxu0 0
        %4290 = vmatpush1.bf16.msra.mxu0 %v4247
        %4291 = vmatprep.subr.bf16.mxu0 0
        %4292 = vmatpush1.bf16.msra.mxu0 %v4248
        %4293 = vmatprep.subr.bf16.mxu0 0
        %4294 = vmatpush1.bf16.msra.mxu0 %v4249
        %4295 = vmatprep.subr.bf16.mxu0 0
        %4296 = vmatpush1.bf16.msra.mxu0 %v4250
        %4297 = vmatprep.subr.bf16.mxu0 0
        %4298 = vmatpush1.bf16.msra.mxu0 %v4251
        %4299 = vmatprep.subr.bf16.mxu0 0
        %4300 = vmatpush1.bf16.msra.mxu0 %v4252
        %4301 = vmatprep.mubr.bf16.mxu0 %v4119
        %4302 = vmatmul.mubr.bf16.gmra.mrb[0].mxu0 %v4118
        %v4303 = vpop.f32.mrb[0].mxu0
        %v4304 = vadd.f32 %v4171, %v4303
        %v4305 = vpop.f32.mrb[0].mxu0
        %v4306 = vpop.f32.mrb[0].mxu0
        %v4307 = vadd.f32 %v4171, %v4306
        %v4308 = vpop.f32.mrb[0].mxu0
        %4309 = vmatprep.mubr.bf16.mxu0 %v4121
        %4310 = vmatmul.mubr.bf16.gmra.mrb[0].mxu0 %v4120
        %v4311 = vpop.f32.mrb[0].mxu0
        %v4312 = vadd.f32 %v4171, %v4311
        %v4313 = vpop.f32.mrb[0].mxu0
        %v4314 = vpop.f32.mrb[0].mxu0
        %v4315 = vadd.f32 %v4171, %v4314
        %v4316 = vpop.f32.mrb[0].mxu0
        %4317 = vmatprep.mubr.bf16.mxu0 %v4123
        %4318 = vmatmul.mubr.bf16.gmra.mrb[0].mxu0 %v4122
        %v4319 = vpop.f32.mrb[0].mxu0
        %v4320 = vadd.f32 %v4171, %v4319
        %v4321 = vpop.f32.mrb[0].mxu0
        %v4322 = vpop.f32.mrb[0].mxu0
        %v4323 = vadd.f32 %v4171, %v4322
        %v4324 = vpop.f32.mrb[0].mxu0
        %4325 = vmatprep.mubr.bf16.mxu0 %v4125
        %4326 = vmatmul.mubr.bf16.gmra.mrb[0].mxu0 %v4124
        %v4327 = vpop.f32.mrb[0].mxu0
        %v4328 = vadd.f32 %v4171, %v4327
        %v4329 = vpop.f32.mrb[0].mxu0
        %v4330 = vpop.f32.mrb[0].mxu0
        %v4331 = vadd.f32 %v4171, %v4330
        %v4332 = vpop.f32.mrb[0].mxu0
        %4333 = vmatprep.mubr.bf16.mxu0 %v4127
        %4334 = vmatmul.mubr.bf16.gmra.mrb[0].mxu0 %v4126
        %v4335 = vpop.f32.mrb[0].mxu0
        %v4336 = vadd.f32 %v4171, %v4335
        %v4337 = vpop.f32.mrb[0].mxu0
        %v4338 = vpop.f32.mrb[0].mxu0
        %v4339 = vadd.f32 %v4171, %v4338
        %v4340 = vpop.f32.mrb[0].mxu0
        %4341 = vmatprep.mubr.bf16.mxu0 %v4129
        %4342 = vmatmul.mubr.bf16.gmra.mrb[0].mxu0 %v4128
        %v4343 = vpop.f32.mrb[0].mxu0
        %v4344 = vadd.f32 %v4171, %v4343
        %v4345 = vpop.f32.mrb[0].mxu0
        %v4346 = vpop.f32.mrb[0].mxu0
        %v4347 = vadd.f32 %v4171, %v4346
        %v4348 = vpop.f32.mrb[0].mxu0
        %4349 = vmatprep.mubr.bf16.mxu0 %v4131
        %4350 = vmatmul.mubr.bf16.gmra.mrb[0].mxu0 %v4130
        %v4351 = vpop.f32.mrb[0].mxu0
        %v4352 = vadd.f32 %v4171, %v4351
        %v4353 = vpop.f32.mrb[0].mxu0
        %v4354 = vpop.f32.mrb[0].mxu0
        %v4355 = vadd.f32 %v4171, %v4354
        %v4356 = vpop.f32.mrb[0].mxu0
        %4357 = vmatprep.mubr.bf16.mxu0 %v4133
        %4358 = vmatmul.mubr.bf16.gmra.mrb[0].mxu0 %v4132
        %v4359 = vpop.f32.mrb[0].mxu0
        %v4360 = vadd.f32 %v4171, %v4359
        %v4361 = vpop.f32.mrb[0].mxu0
        %v4362 = vpop.f32.mrb[0].mxu0
        %v4363 = vadd.f32 %v4171, %v4362
        %v4364 = vpop.f32.mrb[0].mxu0
        %4365 = vdwg.mxu0
        %v4366 = vadd.f32 %v3619, %v4304
        %v4367 = vadd.f32 %v3620, %v4307
        %v4368 = vadd.f32 %v3621, %v4312
        %v4369 = vadd.f32 %v3622, %v4315
        %v4370 = vadd.f32 %v3623, %v4320
        %v4371 = vadd.f32 %v3624, %v4323
        %v4372 = vadd.f32 %v3625, %v4328
        %v4373 = vadd.f32 %v3626, %v4331
        %v4374 = vadd.f32 %v3627, %v4336
        %v4375 = vadd.f32 %v3628, %v4339
        %v4376 = vadd.f32 %v3629, %v4344
        %v4377 = vadd.f32 %v3630, %v4347
        %v4378 = vadd.f32 %v3631, %v4352
        %v4379 = vadd.f32 %v3632, %v4355
        %v4380 = vadd.f32 %v3633, %v4360
        %v4381 = vadd.f32 %v3634, %v4363
        %4382 = vst [vmem:[%s516] sm:$0xff] %v4366
        %4383 = vst [vmem:[%s516 + $0x8] sm:$0xff] %v4367
        %4384 = vst [vmem:[%s516 + $0x10] sm:$0xff] %v4368
        %4385 = vst [vmem:[%s516 + $0x18] sm:$0xff] %v4369
        %4386 = vst [vmem:[%s516 + $0x20] sm:$0xff] %v4370
        %4387 = vst [vmem:[%s516 + $0x28] sm:$0xff] %v4371
        %4388 = vst [vmem:[%s516 + $0x30] sm:$0xff] %v4372
        %4389 = vst [vmem:[%s516 + $0x38] sm:$0xff] %v4373
        %4390 = vst [vmem:[%s516 + $0x40] sm:$0xff] %v4374
        %4391 = vst [vmem:[%s516 + $0x48] sm:$0xff] %v4375
        %4392 = vst [vmem:[%s516 + $0x50] sm:$0xff] %v4376
        %4393 = vst [vmem:[%s516 + $0x58] sm:$0xff] %v4377
        %4394 = vst [vmem:[%s516 + $0x60] sm:$0xff] %v4378
        %4395 = vst [vmem:[%s516 + $0x68] sm:$0xff] %v4379
        %4396 = vst [vmem:[%s516 + $0x70] sm:$0xff] %v4380
        %4397 = vst [vmem:[%s516 + $0x78] sm:$0xff] %v4381
        %s4398 = sand.u32 %s318, 1
        %s4399 = scalar_lea.sflag [#allocation4], %s4398
        %s4400 = sand.u32 %s318, 1
        %s4401 = smul.addr %s4400, 128
        %s4402 = scalar_lea.vmem [#allocation11], %s4401
        // Predicated region
        $region93: #{tpu_custom_call.1} parent=71 // pred_check
          %p4403 = pneg %p328
        $region94: #{tpu_custom_call.1} parent=71 // pred_check_branch
          %4405 = sbr.rel (%p4403) target = $region96
        $region95: #{tpu_custom_call.1} parent=71 // pred_region
          %s4407 = ssub.s32 2048, 2048
          %4408 = vsyncadd %s4399, %s4407
          %s4409 = smul.addr %s32, 16
          %s4410 = smul.addr %s4409, 128
          %s4411 = scalar_lea.hbm %s13, %s4410
          %s4412 = sshll.u32 %s4402, 4
          %s4413 = int_to_ptr.vmem [resolvable:$true] %s4412
          %4418 = dma.vmem_to_hbm [thread:$0]  %s4413, 2048, %s4411, %s4399, 128, 128, 8
        $region96: #{tpu_custom_call.1} parent=71 // pred_fallthru
          _
      $region72: #{tpu_custom_call.1} parent=5 // pred_fallthru
        _
      %p4419 = scmp.le.s32.totalorder 2, %s27
      // Predicated region
      $region97: #{tpu_custom_call.1} parent=5 // pred_check
        %p4420 = pneg %p4419
      $region98: #{tpu_custom_call.1} parent=5 // pred_check_branch
        %4422 = sbr.rel (%p4420) target = $region100
      $region99: #{tpu_custom_call.1} parent=5 // pred_region
        %s4423 = ssub.s32 %s27, 2
        // Predicated region
        $region101: #{tpu_custom_call.1} parent=99 // pred_check
          %p4424 = pneg %p334
        $region102: #{tpu_custom_call.1} parent=99 // pred_check_branch
          %4426 = sbr.rel (%p4424) target = $region104
        $region103: #{tpu_custom_call.1} parent=99 // pred_region
          %s4427 = sand.u32 %s319, 1
          %s4428 = scalar_lea.sflag [#allocation4], %s4427
          %s4429 = sand.u32 %s319, 1
          %s4430 = smul.addr %s4429, 128
          %s4431 = scalar_lea.vmem [#allocation11], %s4430
          %4432 = dma.done %s4428, 2048
        $region104: #{tpu_custom_call.1} parent=99 // pred_fallthru
          _
      $region100: #{tpu_custom_call.1} parent=5 // pred_fallthru
        _
    $region6: #{tpu_custom_call.1} parent=1 // loop_footer
      %s31 = sadd.s32 1, %s27
    $region7: #{tpu_custom_call.1} parent=1 // loop_footer_branch
      %26 = sbr.rel target = $region3
    $region8: #{tpu_custom_call.1} parent=1 // loop_exit
      _
    %4433 = vsyncpa [#allocation3], 1
    %s4434 = scalar_lea.sflag [#allocation3], 1
    %4435 = vsyncpa %s4434, 1
    %4436 = vsyncpa [#allocation6], 1
    %4437 = vsyncpa [#allocation9], 1
    %4438 = vsyncpa [#allocation4], 1
    %s4439 = scalar_lea.sflag [#allocation4], 1
    %4440 = vsyncpa %s4439, 1

</llo_original>
